<compile_context>
chip_gen: v7x
topology: tpu7x:2x2x1
jax: 0.10.0
libtpu: 0.0.40
codegen_flags: <defaults>
</compile_context>

<pallas_src>
import functools

import jax
import jax.numpy as jnp
from jax.experimental import pallas as pl
from jax.experimental.pallas import tpu as pltpu

ACT_DTYPE = jnp.bfloat16   # GEMM operand dtype (accumulation stays f32)
BN_EPS = 1e-5              # nn.BatchNorm2d default
LRELU_SLOPE = 0.01         # F.leaky_relu default


# --------------------------------------------------------------------------
# Pallas kernels
# --------------------------------------------------------------------------

def _conv_bn_act_kernel(x_ref, w_ref, b_ref, gam_ref, bet_ref, g_ref, gt_ref,
                        o_ref, *, n, h2, w2, cin, cout, use_bn, act):
    """Fused Conv2d(k=3, s=2, p=1) + bias + BatchNorm(batch stats) + act.

    x_ref : (n*(h2+1), 4*(w2+1)*cin) phase-packed input, top/left zero padded
            lane = ((pr*2+pc)*(w2+1) + j)*cin + c
    w_ref : (9, w2*cin, w2*cout)     per-tap width-block-diagonal weights
    b_ref : (1, w2*cout)             bias tiled over width
    gam/bet : (1, cout)              BN affine params
    g_ref : (w2*cout, cout), gt_ref : (cout, w2*cout)  channel fold/unfold
    o_ref : (n*h2, w2*cout)          lane-dense output
    """
    row_pitch = h2 + 1
    acc = jnp.zeros((n * h2, w2 * cout), jnp.float32)
    tap = 0
    for di in range(3):
        pr = 0 if di == 1 else 1          # row phase of this tap
        rb = 0 if di == 0 else 1          # row offset inside padded phase grid
        for dj in range(3):
            pc = 0 if dj == 1 else 1
            cb = 0 if dj == 0 else 1
            lane0 = ((pr * 2 + pc) * (w2 + 1) + cb) * cin
            slabs = [
                x_ref[s * row_pitch + rb:s * row_pitch + rb + h2,
                      lane0:lane0 + w2 * cin]
                for s in range(n)
            ]
            lhs = slabs[0] if n == 1 else jnp.concatenate(slabs, axis=0)
            acc = acc + jnp.dot(lhs, w_ref[tap],
                                preferred_element_type=jnp.float32)
            tap += 1
    acc = acc + b_ref[...]

    if use_bn:
        cnt = float(n * h2 * w2)
        csum = jnp.dot(jnp.sum(acc, axis=0, keepdims=True), g_ref[...],
                       preferred_element_type=jnp.float32)
        csq = jnp.dot(jnp.sum(acc * acc, axis=0, keepdims=True), g_ref[...],
                      preferred_element_type=jnp.float32)
        mean = csum / cnt
        var = csq / cnt - mean * mean          # biased variance (torch BN train)
        scale_c = gam_ref[...] * jax.lax.rsqrt(var + BN_EPS)
        shift_c = bet_ref[...] - mean * scale_c
        scale_l = jnp.dot(scale_c, gt_ref[...],
                          preferred_element_type=jnp.float32)
        shift_l = jnp.dot(shift_c, gt_ref[...],
                          preferred_element_type=jnp.float32)
        acc = acc * scale_l + shift_l

    if act == "leaky_relu":
        acc = jnp.where(acc >= 0, acc, LRELU_SLOPE * acc)
    elif act == "sigmoid":
        acc = jax.nn.sigmoid(acc)
    o_ref[...] = acc.astype(o_ref.dtype)


# (phase_index, row_shift, col_shift, kh, kw) for the sub-pixel decomposition
# of ConvTranspose2d(k=3, stride=2, padding=1, output_padding=1).
_DECONV_TAPS = (
    (0, 0, 0, 1, 1),                                    # phase (0,0)
    (1, 0, 0, 1, 2), (1, 0, 1, 1, 0),                   # phase (0,1)
    (2, 0, 0, 2, 1), (2, 1, 0, 0, 1),                   # phase (1,0)
    (3, 0, 0, 2, 2), (3, 0, 1, 2, 0),
    (3, 1, 0, 0, 2), (3, 1, 1, 0, 0),                   # phase (1,1)
)


def _deconv_bn_act_kernel(x_ref, w_ref, b_ref, gam_ref, bet_ref, g_ref, gt_ref,
                          o_ref, *, n, hi, wi, cin, cout, use_bn, act):
    """Fused ConvTranspose2d(k=3, s=2, p=1, op=1) + bias (+BN) + act.

    x_ref : (n*(hi+1), (wi+1)*cin)   input, bottom/right zero padded
    w_ref : (9, wi*cin, wi*cout)     per-tap width-block-diagonal weights
    o_ref : (4*n*hi, wi*cout)        4 output phases stacked along rows
    """
    row_pitch = hi + 1
    accs = [jnp.zeros((n * hi, wi * cout), jnp.float32) for _ in range(4)]
    for t, (p, sr, sc, _, _) in enumerate(_DECONV_TAPS):
        lane0 = sc * cin
        slabs = [
            x_ref[s * row_pitch + sr:s * row_pitch + sr + hi,
                  lane0:lane0 + wi * cin]
            for s in range(n)
        ]
        lhs = slabs[0] if n == 1 else jnp.concatenate(slabs, axis=0)
        accs[p] = accs[p] + jnp.dot(lhs, w_ref[t],
                                    preferred_element_type=jnp.float32)
    accs = [a + b_ref[...] for a in accs]

    if use_bn:
        cnt = float(4 * n * hi * wi)      # BN stats over all 4 output phases
        csum = jnp.zeros((1, cout), jnp.float32)
        csq = jnp.zeros((1, cout), jnp.float32)
        for a in accs:
            csum = csum + jnp.dot(jnp.sum(a, axis=0, keepdims=True), g_ref[...],
                                  preferred_element_type=jnp.float32)
            csq = csq + jnp.dot(jnp.sum(a * a, axis=0, keepdims=True), g_ref[...],
                                preferred_element_type=jnp.float32)
        mean = csum / cnt
        var = csq / cnt - mean * mean
        scale_c = gam_ref[...] * jax.lax.rsqrt(var + BN_EPS)
        shift_c = bet_ref[...] - mean * scale_c
        scale_l = jnp.dot(scale_c, gt_ref[...],
                          preferred_element_type=jnp.float32)
        shift_l = jnp.dot(shift_c, gt_ref[...],
                          preferred_element_type=jnp.float32)
        accs = [a * scale_l + shift_l for a in accs]

    if act == "leaky_relu":
        accs = [jnp.where(a >= 0, a, LRELU_SLOPE * a) for a in accs]
    elif act == "sigmoid":
        accs = [jax.nn.sigmoid(a) for a in accs]
    o_ref[...] = jnp.concatenate(accs, axis=0).astype(o_ref.dtype)


def _head_kernel(x_ref, wh_ref, bh_ref, eps_ref, wl_ref, bl_ref,
                 d_ref, kl_ref, *, latent):
    """Fused mu/logvar heads + reparameterization (+KL) + decoder Linear."""
    h = jnp.dot(x_ref[...], wh_ref[...], preferred_element_type=jnp.float32)
    h = h + bh_ref[...]
    mu = h[:, :latent]
    logvar = h[:, latent:]
    sigma = jnp.exp(0.5 * logvar)
    z = mu + eps_ref[...] * sigma
    var = sigma * sigma                        # == exp(logvar), reused for KL
    kl_ref[0, 0] = -0.5 * jnp.sum(1.0 + logvar - mu * mu - var)
    d = jnp.dot(z, wl_ref[...], preferred_element_type=jnp.float32)
    d_ref[...] = d + bl_ref[...]


# --------------------------------------------------------------------------
# Host-side packing helpers (pure layout plumbing, no data expansion)
# --------------------------------------------------------------------------

def _block_diag(w_tap, width):
    """(Cin, Cout) tap weight -> (width*Cin, width*Cout) block-diagonal."""
    cin, cout = w_tap.shape
    eye = jnp.eye(width, dtype=w_tap.dtype)
    return jnp.einsum("ab,cd->acbd", eye, w_tap).reshape(width * cin,
                                                         width * cout)


def _channel_fold_mats(width, cout):
    g = jnp.tile(jnp.eye(cout, dtype=jnp.float32), (width, 1))  # (width*cout, cout)
    return g, g.T


# --------------------------------------------------------------------------
# Layer wrappers (one pallas_call each)
# --------------------------------------------------------------------------

def conv_bn_lrelu(x_nhwc, w, b, gamma, beta):
    """PyTorch Conv2d(k=3,s=2,p=1) + BatchNorm2d(train) + LeakyReLU, fused."""
    N, H, W, Cin = x_nhwc.shape
    H2, W2 = H // 2, W // 2
    Cout = w.shape[0]

    # space-to-depth (phase) packing; the zero row/col at top/left is the
    # pad=1 halo.  rows = (n, h2+1), lanes = (pr, pc, w2+1, cin).
    ph = x_nhwc.astype(ACT_DTYPE).reshape(N, H2, 2, W2, 2, Cin)
    ph = jnp.transpose(ph, (0, 1, 2, 4, 3, 5))              # n, i, pr, pc, j, c
    ph = jnp.pad(ph, ((0, 0), (1, 0), (0, 0), (0, 0), (1, 0), (0, 0)))
    x2d = ph.reshape(N * (H2 + 1), 4 * (W2 + 1) * Cin)

    taps = [jnp.transpose(w[:, :, di, dj])                  # (Cin, Cout)
            for di in range(3) for dj in range(3)]
    wbd = jnp.stack([_block_diag(t, W2) for t in taps]).astype(ACT_DTYPE)
    blanes = jnp.tile(b.astype(jnp.float32), W2).reshape(1, W2 * Cout)
    g, gt = _channel_fold_mats(W2, Cout)

    # TODO(synk): at these sizes the whole batch fits in one VMEM block; for
    # large N*H*W this kernel needs an M-grid with globally-accumulated BN
    # statistics (two-pass or accumulator + pl.when finalize).
    out2d = pl.pallas_call(
        functools.partial(_conv_bn_act_kernel, n=N, h2=H2, w2=W2, cin=Cin,
                          cout=Cout, use_bn=True, act="leaky_relu"),
        out_shape=jax.ShapeDtypeStruct((N * H2, W2 * Cout), ACT_DTYPE),
    )(x2d, wbd, blanes,
      gamma.reshape(1, Cout).astype(jnp.float32),
      beta.reshape(1, Cout).astype(jnp.float32), g, gt)
    return out2d.reshape(N, H2, W2, Cout)


def deconv_bn_act(x_nhwc, w, b, gamma, beta, *, use_bn, act, out_dtype=None):
    """PyTorch ConvTranspose2d(k=3,s=2,p=1,op=1) (+BN) (+act), fused."""
    N, Hi, Wi, Cin = x_nhwc.shape
    Cout = w.shape[1]

    xp = jnp.pad(x_nhwc.astype(ACT_DTYPE), ((0, 0), (0, 1), (0, 1), (0, 0)))
    x2d = xp.reshape(N * (Hi + 1), (Wi + 1) * Cin)

    wbd = jnp.stack([_block_diag(w[:, :, kh, kw], Wi)
                     for (_, _, _, kh, kw) in _DECONV_TAPS]).astype(ACT_DTYPE)
    blanes = jnp.tile(b.astype(jnp.float32), Wi).reshape(1, Wi * Cout)
    g, gt = _channel_fold_mats(Wi, Cout)
    if gamma is None:
        gamma = jnp.ones((Cout,), jnp.float32)
        beta = jnp.zeros((Cout,), jnp.float32)
    odt = out_dtype or ACT_DTYPE

    out2d = pl.pallas_call(
        functools.partial(_deconv_bn_act_kernel, n=N, hi=Hi, wi=Wi, cin=Cin,
                          cout=Cout, use_bn=use_bn, act=act),
        out_shape=jax.ShapeDtypeStruct((4 * N * Hi, Wi * Cout), odt),
    )(x2d, wbd, blanes,
      gamma.reshape(1, Cout).astype(jnp.float32),
      beta.reshape(1, Cout).astype(jnp.float32), g, gt)

    # interleave the 4 output phases into the 2x-upsampled NHWC grid
    out = out2d.reshape(2, 2, N, Hi, Wi, Cout)
    out = jnp.transpose(out, (2, 3, 0, 4, 1, 5)).reshape(N, 2 * Hi, 2 * Wi, Cout)
    return out


def fused_head(flat, e_mu_w, e_mu_b, e_lv_w, e_lv_b, eps, d_lin1_w, d_lin1_b):
    """proj_mu + proj_log_var + reparameterize (+KL) + decoder lin1, fused."""
    N = flat.shape[0]
    L = e_mu_w.shape[0]
    wh = jnp.concatenate([e_mu_w, e_lv_w], axis=0).T.astype(jnp.float32)
    bh = jnp.concatenate([e_mu_b, e_lv_b]).reshape(1, 2 * L).astype(jnp.float32)
    wl = d_lin1_w.T.astype(jnp.float32)
    bl = d_lin1_b.reshape(1, -1).astype(jnp.float32)
    d, kl = pl.pallas_call(
        functools.partial(_head_kernel, latent=L),
        out_shape=(jax.ShapeDtypeStruct((N, wl.shape[1]), jnp.float32),
                   jax.ShapeDtypeStruct((1, 1), jnp.float32)),
        in_specs=[pl.BlockSpec(memory_space=pltpu.MemorySpace.VMEM)] * 6,
        out_specs=(pl.BlockSpec(memory_space=pltpu.MemorySpace.VMEM),
                   pl.BlockSpec(memory_space=pltpu.MemorySpace.SMEM)),
    )(flat.astype(jnp.float32), wh, bh, eps.astype(jnp.float32), wl, bl)
    return d, kl[0, 0]


# --------------------------------------------------------------------------
# Parameters (deterministic synthetic init; shapes mirror the nn.Module)
# --------------------------------------------------------------------------

def init_params(key, num_latent_dims, num_img_channels, max_num_filters, img_size):
    f1 = max_num_filters // 4
    f2 = max_num_filters // 2
    f3 = max_num_filters
    s8 = img_size // 8
    flat = f3 * s8 * s8

    def nrm(k, shape, scale=0.05):
        return scale * jax.random.normal(k, shape, jnp.float32)

    keys = jax.random.split(key, 18)
    p = {}
    # Encoder (shortcut convs exist in __init__ but are unused in forward)
    p["e_conv1_w"] = nrm(keys[0], (f1, num_img_channels, 3, 3))
    p["e_conv1_b"] = nrm(keys[1], (f1,))
    p["e_conv2_w"] = nrm(keys[2], (f2, f1, 3, 3))
    p["e_conv2_b"] = nrm(keys[3], (f2,))
    p["e_conv3_w"] = nrm(keys[4], (f3, f2, 3, 3))
    p["e_conv3_b"] = nrm(keys[5], (f3,))
    p["e_bn1_g"] = jnp.ones((f1,), jnp.float32); p["e_bn1_b"] = jnp.zeros((f1,), jnp.float32)
    p["e_bn2_g"] = jnp.ones((f2,), jnp.float32); p["e_bn2_b"] = jnp.zeros((f2,), jnp.float32)
    p["e_bn3_g"] = jnp.ones((f3,), jnp.float32); p["e_bn3_b"] = jnp.zeros((f3,), jnp.float32)
    p["e_mu_w"] = nrm(keys[6], (num_latent_dims, flat))
    p["e_mu_b"] = nrm(keys[7], (num_latent_dims,))
    p["e_lv_w"] = nrm(keys[8], (num_latent_dims, flat))
    p["e_lv_b"] = nrm(keys[9], (num_latent_dims,))
    # Decoder
    p["d_lin1_w"] = nrm(keys[10], (flat, num_latent_dims))
    p["d_lin1_b"] = nrm(keys[11], (flat,))
    p["d_conv1_w"] = nrm(keys[12], (f3, f2, 3, 3))     # ConvTranspose2d: (Cin, Cout, k, k)
    p["d_conv1_b"] = nrm(keys[13], (f2,))
    p["d_conv2_w"] = nrm(keys[14], (f2, f1, 3, 3))
    p["d_conv2_b"] = nrm(keys[15], (f1,))
    p["d_conv3_w"] = nrm(keys[16], (f1, num_img_channels, 3, 3))
    p["d_conv3_b"] = nrm(keys[17], (num_img_channels,))
    p["d_bn1_g"] = jnp.ones((f2,), jnp.float32); p["d_bn1_b"] = jnp.zeros((f2,), jnp.float32)
    p["d_bn2_g"] = jnp.ones((f1,), jnp.float32); p["d_bn2_b"] = jnp.zeros((f1,), jnp.float32)
    return p


# --------------------------------------------------------------------------
# Forward pass (mirrors VAE.forward)
# --------------------------------------------------------------------------

def vae_forward(params, x_nchw, eps, *, max_num_filters, img_size):
    f3 = max_num_filters
    s8 = img_size // 8

    # ---- Encoder ----
    h = jnp.transpose(x_nchw, (0, 2, 3, 1))                     # NCHW -> NHWC
    h = conv_bn_lrelu(h, params["e_conv1_w"], params["e_conv1_b"],
                      params["e_bn1_g"], params["e_bn1_b"])
    h = conv_bn_lrelu(h, params["e_conv2_w"], params["e_conv2_b"],
                      params["e_bn2_g"], params["e_bn2_b"])
    h = conv_bn_lrelu(h, params["e_conv3_w"], params["e_conv3_b"],
                      params["e_bn3_g"], params["e_bn3_b"])
    Nb = h.shape[0]
    flat = jnp.transpose(h, (0, 3, 1, 2)).reshape(Nb, -1)       # torch.flatten(x, 1) on NCHW

    # ---- mu/logvar + reparameterization (+KL) + decoder Linear (one kernel) ----
    d, kl_div = fused_head(flat, params["e_mu_w"], params["e_mu_b"],
                           params["e_lv_w"], params["e_lv_b"], eps,
                           params["d_lin1_w"], params["d_lin1_b"])

    # ---- Decoder ----
    d = d.reshape(Nb, f3, s8, s8)              # torch .view(-1, C, H, W)
    d = jnp.transpose(d, (0, 2, 3, 1))         # -> NHWC
    d = deconv_bn_act(d, params["d_conv1_w"], params["d_conv1_b"],
                      params["d_bn1_g"], params["d_bn1_b"],
                      use_bn=True, act="leaky_relu")
    d = deconv_bn_act(d, params["d_conv2_w"], params["d_conv2_b"],
                      params["d_bn2_g"], params["d_bn2_b"],
                      use_bn=True, act="leaky_relu")
    d = deconv_bn_act(d, params["d_conv3_w"], params["d_conv3_b"], None, None,
                      use_bn=False, act="sigmoid", out_dtype=jnp.float32)
    x_recon = jnp.transpose(d, (0, 3, 1, 2)).astype(jnp.float32)  # NHWC -> NCHW
    return x_recon, kl_div


if __name__ == "__main__":
    # TODO(synk): torch.randn_like RNG and BatchNorm running-stat buffers have no
    # in-kernel equivalent here; eps is supplied explicitly and BN uses batch stats.
    num_latent_dims = 8
    num_img_channels = 3
    max_num_filters = 32
    img_size = 16
    batch = 2

    key = jax.random.PRNGKey(0)
    kp, kx, ke = jax.random.split(key, 3)
    params = init_params(kp, num_latent_dims, num_img_channels, max_num_filters, img_size)
    x = jax.random.normal(kx, (batch, num_img_channels, img_size, img_size), jnp.float32)
    eps = jax.random.normal(ke, (batch, num_latent_dims), jnp.float32)

    fwd = jax.jit(functools.partial(vae_forward,
                                    max_num_filters=max_num_filters,
                                    img_size=img_size))
    x_recon, kl_div = fwd(params, x, eps)
    jax.block_until_ready((x_recon, kl_div))

    assert x_recon.shape == (batch, num_img_channels, img_size, img_size), x_recon.shape
    assert jnp.all(jnp.isfinite(x_recon)) and jnp.isfinite(kl_div)
    assert jnp.all(x_recon >= 0) and jnp.all(x_recon <= 1)  # sigmoid output
    print("KERNEL_OK")
</pallas_src>

<mosaic_0001>
module attributes {stable_mosaic.version = 11 : i64} {
  func.func @_conv_bn_act_kernel(%arg0: memref<18x108xbf16, #tpu.memory_space<vmem>>, %arg1: memref<9x24x64xbf16, #tpu.memory_space<vmem>>, %arg2: memref<1x64xf32, #tpu.memory_space<vmem>>, %arg3: memref<1x8xf32, #tpu.memory_space<vmem>>, %arg4: memref<1x8xf32, #tpu.memory_space<vmem>>, %arg5: memref<64x8xf32, #tpu.memory_space<vmem>>, %arg6: memref<8x64xf32, #tpu.memory_space<vmem>>, %arg7: memref<16x64xbf16, #tpu.memory_space<vmem>>) attributes {dimension_semantics = [], scalar_prefetch = 0 : i64, scratch_operands = 0 : i64, tpu.core_type = #tpu.core_type<tc>} {
    %cst = arith.constant 0.000000e+00 : f32
    %0 = vector.broadcast %cst : f32 to vector<16x64xf32>
    %c0 = arith.constant 0 : index
    %c81 = arith.constant 81 : index
    %1 = vector.load %arg0[%c0, %c81] : memref<18x108xbf16, #tpu.memory_space<vmem>>, vector<8x24xbf16>
    %c9 = arith.constant 9 : index
    %c81_0 = arith.constant 81 : index
    %2 = vector.load %arg0[%c9, %c81_0] : memref<18x108xbf16, #tpu.memory_space<vmem>>, vector<8x24xbf16>
    %3 = tpu.concatenate %1, %2 in 0 : vector<8x24xbf16>, vector<8x24xbf16> -> vector<16x24xbf16>
    %c0_1 = arith.constant 0 : index
    %c0_2 = arith.constant 0 : index
    %c0_3 = arith.constant 0 : index
    %4 = vector.load %arg1[%c0_1, %c0_2, %c0_3] : memref<9x24x64xbf16, #tpu.memory_space<vmem>>, vector<1x24x64xbf16>
    %5 = vector.shape_cast %4 : vector<1x24x64xbf16> to vector<24x64xbf16>
    %cst_4 = arith.constant dense<0.000000e+00> : vector<16x64xf32>
    %6 = tpu.matmul %3, %5, %cst_4 {dimension_numbers = #tpu.dot_dimension_numbers<[1], [0], [0], [1], [0, 0, 1, 1], [], []>} : vector<16x24xbf16>, vector<24x64xbf16>, vector<16x64xf32> -> vector<16x64xf32>
    %7 = arith.addf %0, %6 : vector<16x64xf32>
    %c0_5 = arith.constant 0 : index
    %c57 = arith.constant 57 : index
    %8 = vector.load %arg0[%c0_5, %c57] : memref<18x108xbf16, #tpu.memory_space<vmem>>, vector<8x24xbf16>
    %c9_6 = arith.constant 9 : index
    %c57_7 = arith.constant 57 : index
    %9 = vector.load %arg0[%c9_6, %c57_7] : memref<18x108xbf16, #tpu.memory_space<vmem>>, vector<8x24xbf16>
    %10 = tpu.concatenate %8, %9 in 0 : vector<8x24xbf16>, vector<8x24xbf16> -> vector<16x24xbf16>
    %c1 = arith.constant 1 : index
    %c0_8 = arith.constant 0 : index
    %c0_9 = arith.constant 0 : index
    %11 = vector.load %arg1[%c1, %c0_8, %c0_9] : memref<9x24x64xbf16, #tpu.memory_space<vmem>>, vector<1x24x64xbf16>
    %12 = vector.shape_cast %11 : vector<1x24x64xbf16> to vector<24x64xbf16>
    %cst_10 = arith.constant dense<0.000000e+00> : vector<16x64xf32>
    %13 = tpu.matmul %10, %12, %cst_10 {dimension_numbers = #tpu.dot_dimension_numbers<[1], [0], [0], [1], [0, 0, 1, 1], [], []>} : vector<16x24xbf16>, vector<24x64xbf16>, vector<16x64xf32> -> vector<16x64xf32>
    %14 = arith.addf %7, %13 : vector<16x64xf32>
    %c0_11 = arith.constant 0 : index
    %c84 = arith.constant 84 : index
    %15 = vector.load %arg0[%c0_11, %c84] : memref<18x108xbf16, #tpu.memory_space<vmem>>, vector<8x24xbf16>
    %c9_12 = arith.constant 9 : index
    %c84_13 = arith.constant 84 : index
    %16 = vector.load %arg0[%c9_12, %c84_13] : memref<18x108xbf16, #tpu.memory_space<vmem>>, vector<8x24xbf16>
    %17 = tpu.concatenate %15, %16 in 0 : vector<8x24xbf16>, vector<8x24xbf16> -> vector<16x24xbf16>
    %c2 = arith.constant 2 : index
    %c0_14 = arith.constant 0 : index
    %c0_15 = arith.constant 0 : index
    %18 = vector.load %arg1[%c2, %c0_14, %c0_15] : memref<9x24x64xbf16, #tpu.memory_space<vmem>>, vector<1x24x64xbf16>
    %19 = vector.shape_cast %18 : vector<1x24x64xbf16> to vector<24x64xbf16>
    %cst_16 = arith.constant dense<0.000000e+00> : vector<16x64xf32>
    %20 = tpu.matmul %17, %19, %cst_16 {dimension_numbers = #tpu.dot_dimension_numbers<[1], [0], [0], [1], [0, 0, 1, 1], [], []>} : vector<16x24xbf16>, vector<24x64xbf16>, vector<16x64xf32> -> vector<16x64xf32>
    %21 = arith.addf %14, %20 : vector<16x64xf32>
    %c1_17 = arith.constant 1 : index
    %c27 = arith.constant 27 : index
    %22 = vector.load %arg0[%c1_17, %c27] : memref<18x108xbf16, #tpu.memory_space<vmem>>, vector<8x24xbf16>
    %c10 = arith.constant 10 : index
    %c27_18 = arith.constant 27 : index
    %23 = vector.load %arg0[%c10, %c27_18] : memref<18x108xbf16, #tpu.memory_space<vmem>>, vector<8x24xbf16>
    %24 = tpu.concatenate %22, %23 in 0 : vector<8x24xbf16>, vector<8x24xbf16> -> vector<16x24xbf16>
    %c3 = arith.constant 3 : index
    %c0_19 = arith.constant 0 : index
    %c0_20 = arith.constant 0 : index
    %25 = vector.load %arg1[%c3, %c0_19, %c0_20] : memref<9x24x64xbf16, #tpu.memory_space<vmem>>, vector<1x24x64xbf16>
    %26 = vector.shape_cast %25 : vector<1x24x64xbf16> to vector<24x64xbf16>
    %cst_21 = arith.constant dense<0.000000e+00> : vector<16x64xf32>
    %27 = tpu.matmul %24, %26, %cst_21 {dimension_numbers = #tpu.dot_dimension_numbers<[1], [0], [0], [1], [0, 0, 1, 1], [], []>} : vector<16x24xbf16>, vector<24x64xbf16>, vector<16x64xf32> -> vector<16x64xf32>
    %28 = arith.addf %21, %27 : vector<16x64xf32>
    %c1_22 = arith.constant 1 : index
    %c3_23 = arith.constant 3 : index
    %29 = vector.load %arg0[%c1_22, %c3_23] : memref<18x108xbf16, #tpu.memory_space<vmem>>, vector<8x24xbf16>
    %c10_24 = arith.constant 10 : index
    %c3_25 = arith.constant 3 : index
    %30 = vector.load %arg0[%c10_24, %c3_25] : memref<18x108xbf16, #tpu.memory_space<vmem>>, vector<8x24xbf16>
    %31 = tpu.concatenate %29, %30 in 0 : vector<8x24xbf16>, vector<8x24xbf16> -> vector<16x24xbf16>
    %c4 = arith.constant 4 : index
    %c0_26 = arith.constant 0 : index
    %c0_27 = arith.constant 0 : index
    %32 = vector.load %arg1[%c4, %c0_26, %c0_27] : memref<9x24x64xbf16, #tpu.memory_space<vmem>>, vector<1x24x64xbf16>
    %33 = vector.shape_cast %32 : vector<1x24x64xbf16> to vector<24x64xbf16>
    %cst_28 = arith.constant dense<0.000000e+00> : vector<16x64xf32>
    %34 = tpu.matmul %31, %33, %cst_28 {dimension_numbers = #tpu.dot_dimension_numbers<[1], [0], [0], [1], [0, 0, 1, 1], [], []>} : vector<16x24xbf16>, vector<24x64xbf16>, vector<16x64xf32> -> vector<16x64xf32>
    %35 = arith.addf %28, %34 : vector<16x64xf32>
    %c1_29 = arith.constant 1 : index
    %c30 = arith.constant 30 : index
    %36 = vector.load %arg0[%c1_29, %c30] : memref<18x108xbf16, #tpu.memory_space<vmem>>, vector<8x24xbf16>
    %c10_30 = arith.constant 10 : index
    %c30_31 = arith.constant 30 : index
    %37 = vector.load %arg0[%c10_30, %c30_31] : memref<18x108xbf16, #tpu.memory_space<vmem>>, vector<8x24xbf16>
    %38 = tpu.concatenate %36, %37 in 0 : vector<8x24xbf16>, vector<8x24xbf16> -> vector<16x24xbf16>
    %c5 = arith.constant 5 : index
    %c0_32 = arith.constant 0 : index
    %c0_33 = arith.constant 0 : index
    %39 = vector.load %arg1[%c5, %c0_32, %c0_33] : memref<9x24x64xbf16, #tpu.memory_space<vmem>>, vector<1x24x64xbf16>
    %40 = vector.shape_cast %39 : vector<1x24x64xbf16> to vector<24x64xbf16>
    %cst_34 = arith.constant dense<0.000000e+00> : vector<16x64xf32>
    %41 = tpu.matmul %38, %40, %cst_34 {dimension_numbers = #tpu.dot_dimension_numbers<[1], [0], [0], [1], [0, 0, 1, 1], [], []>} : vector<16x24xbf16>, vector<24x64xbf16>, vector<16x64xf32> -> vector<16x64xf32>
    %42 = arith.addf %35, %41 : vector<16x64xf32>
    %c1_35 = arith.constant 1 : index
    %c81_36 = arith.constant 81 : index
    %43 = vector.load %arg0[%c1_35, %c81_36] : memref<18x108xbf16, #tpu.memory_space<vmem>>, vector<8x24xbf16>
    %c10_37 = arith.constant 10 : index
    %c81_38 = arith.constant 81 : index
    %44 = vector.load %arg0[%c10_37, %c81_38] : memref<18x108xbf16, #tpu.memory_space<vmem>>, vector<8x24xbf16>
    %45 = tpu.concatenate %43, %44 in 0 : vector<8x24xbf16>, vector<8x24xbf16> -> vector<16x24xbf16>
    %c6 = arith.constant 6 : index
    %c0_39 = arith.constant 0 : index
    %c0_40 = arith.constant 0 : index
    %46 = vector.load %arg1[%c6, %c0_39, %c0_40] : memref<9x24x64xbf16, #tpu.memory_space<vmem>>, vector<1x24x64xbf16>
    %47 = vector.shape_cast %46 : vector<1x24x64xbf16> to vector<24x64xbf16>
    %cst_41 = arith.constant dense<0.000000e+00> : vector<16x64xf32>
    %48 = tpu.matmul %45, %47, %cst_41 {dimension_numbers = #tpu.dot_dimension_numbers<[1], [0], [0], [1], [0, 0, 1, 1], [], []>} : vector<16x24xbf16>, vector<24x64xbf16>, vector<16x64xf32> -> vector<16x64xf32>
    %49 = arith.addf %42, %48 : vector<16x64xf32>
    %c1_42 = arith.constant 1 : index
    %c57_43 = arith.constant 57 : index
    %50 = vector.load %arg0[%c1_42, %c57_43] : memref<18x108xbf16, #tpu.memory_space<vmem>>, vector<8x24xbf16>
    %c10_44 = arith.constant 10 : index
    %c57_45 = arith.constant 57 : index
    %51 = vector.load %arg0[%c10_44, %c57_45] : memref<18x108xbf16, #tpu.memory_space<vmem>>, vector<8x24xbf16>
    %52 = tpu.concatenate %50, %51 in 0 : vector<8x24xbf16>, vector<8x24xbf16> -> vector<16x24xbf16>
    %c7 = arith.constant 7 : index
    %c0_46 = arith.constant 0 : index
    %c0_47 = arith.constant 0 : index
    %53 = vector.load %arg1[%c7, %c0_46, %c0_47] : memref<9x24x64xbf16, #tpu.memory_space<vmem>>, vector<1x24x64xbf16>
    %54 = vector.shape_cast %53 : vector<1x24x64xbf16> to vector<24x64xbf16>
    %cst_48 = arith.constant dense<0.000000e+00> : vector<16x64xf32>
    %55 = tpu.matmul %52, %54, %cst_48 {dimension_numbers = #tpu.dot_dimension_numbers<[1], [0], [0], [1], [0, 0, 1, 1], [], []>} : vector<16x24xbf16>, vector<24x64xbf16>, vector<16x64xf32> -> vector<16x64xf32>
    %56 = arith.addf %49, %55 : vector<16x64xf32>
    %c1_49 = arith.constant 1 : index
    %c84_50 = arith.constant 84 : index
    %57 = vector.load %arg0[%c1_49, %c84_50] : memref<18x108xbf16, #tpu.memory_space<vmem>>, vector<8x24xbf16>
    %c10_51 = arith.constant 10 : index
    %c84_52 = arith.constant 84 : index
    %58 = vector.load %arg0[%c10_51, %c84_52] : memref<18x108xbf16, #tpu.memory_space<vmem>>, vector<8x24xbf16>
    %59 = tpu.concatenate %57, %58 in 0 : vector<8x24xbf16>, vector<8x24xbf16> -> vector<16x24xbf16>
    %c8 = arith.constant 8 : index
    %c0_53 = arith.constant 0 : index
    %c0_54 = arith.constant 0 : index
    %60 = vector.load %arg1[%c8, %c0_53, %c0_54] : memref<9x24x64xbf16, #tpu.memory_space<vmem>>, vector<1x24x64xbf16>
    %61 = vector.shape_cast %60 : vector<1x24x64xbf16> to vector<24x64xbf16>
    %cst_55 = arith.constant dense<0.000000e+00> : vector<16x64xf32>
    %62 = tpu.matmul %59, %61, %cst_55 {dimension_numbers = #tpu.dot_dimension_numbers<[1], [0], [0], [1], [0, 0, 1, 1], [], []>} : vector<16x24xbf16>, vector<24x64xbf16>, vector<16x64xf32> -> vector<16x64xf32>
    %63 = arith.addf %56, %62 : vector<16x64xf32>
    %c0_56 = arith.constant 0 : index
    %c0_57 = arith.constant 0 : index
    %64 = vector.load %arg2[%c0_56, %c0_57] : memref<1x64xf32, #tpu.memory_space<vmem>>, vector<1x64xf32>
    %65 = vector.broadcast %64 : vector<1x64xf32> to vector<16x64xf32>
    %66 = arith.addf %63, %65 : vector<16x64xf32>
    %cst_58 = arith.constant dense<0.000000e+00> : vector<64xf32>
    %67 = vector.multi_reduction <add>, %66, %cst_58 [0] : vector<16x64xf32> to vector<64xf32>
    %68 = vector.shape_cast %67 : vector<64xf32> to vector<1x64xf32>
    %c0_59 = arith.constant 0 : index
    %c0_60 = arith.constant 0 : index
    %69 = vector.load %arg5[%c0_59, %c0_60] : memref<64x8xf32, #tpu.memory_space<vmem>>, vector<64x8xf32>
    %cst_61 = arith.constant dense<0.000000e+00> : vector<1x8xf32>
    %70 = tpu.matmul %68, %69, %cst_61 {dimension_numbers = #tpu.dot_dimension_numbers<[1], [0], [0], [1], [0, 0, 1, 1], [], []>} : vector<1x64xf32>, vector<64x8xf32>, vector<1x8xf32> -> vector<1x8xf32>
    %71 = arith.mulf %66, %66 : vector<16x64xf32>
    %cst_62 = arith.constant dense<0.000000e+00> : vector<64xf32>
    %72 = vector.multi_reduction <add>, %71, %cst_62 [0] : vector<16x64xf32> to vector<64xf32>
    %73 = vector.shape_cast %72 : vector<64xf32> to vector<1x64xf32>
    %c0_63 = arith.constant 0 : index
    %c0_64 = arith.constant 0 : index
    %74 = vector.load %arg5[%c0_63, %c0_64] : memref<64x8xf32, #tpu.memory_space<vmem>>, vector<64x8xf32>
    %cst_65 = arith.constant dense<0.000000e+00> : vector<1x8xf32>
    %75 = tpu.matmul %73, %74, %cst_65 {dimension_numbers = #tpu.dot_dimension_numbers<[1], [0], [0], [1], [0, 0, 1, 1], [], []>} : vector<1x64xf32>, vector<64x8xf32>, vector<1x8xf32> -> vector<1x8xf32>
    %cst_66 = arith.constant 1.280000e+02 : f32
    %76 = vector.broadcast %cst_66 : f32 to vector<1x8xf32>
    %77 = arith.divf %70, %76 : vector<1x8xf32>
    %cst_67 = arith.constant 1.280000e+02 : f32
    %78 = vector.broadcast %cst_67 : f32 to vector<1x8xf32>
    %79 = arith.divf %75, %78 : vector<1x8xf32>
    %80 = arith.mulf %77, %77 : vector<1x8xf32>
    %81 = arith.subf %79, %80 : vector<1x8xf32>
    %c0_68 = arith.constant 0 : index
    %c0_69 = arith.constant 0 : index
    %82 = vector.load %arg3[%c0_68, %c0_69] : memref<1x8xf32, #tpu.memory_space<vmem>>, vector<1x8xf32>
    %cst_70 = arith.constant 9.99999974E-6 : f32
    %83 = vector.broadcast %cst_70 : f32 to vector<1x8xf32>
    %84 = arith.addf %81, %83 : vector<1x8xf32>
    %85 = math.rsqrt %84 : vector<1x8xf32>
    %86 = arith.mulf %82, %85 : vector<1x8xf32>
    %c0_71 = arith.constant 0 : index
    %c0_72 = arith.constant 0 : index
    %87 = vector.load %arg4[%c0_71, %c0_72] : memref<1x8xf32, #tpu.memory_space<vmem>>, vector<1x8xf32>
    %88 = arith.mulf %77, %86 : vector<1x8xf32>
    %89 = arith.subf %87, %88 : vector<1x8xf32>
    %c0_73 = arith.constant 0 : index
    %c0_74 = arith.constant 0 : index
    %90 = vector.load %arg6[%c0_73, %c0_74] : memref<8x64xf32, #tpu.memory_space<vmem>>, vector<8x64xf32>
    %cst_75 = arith.constant dense<0.000000e+00> : vector<1x64xf32>
    %91 = tpu.matmul %86, %90, %cst_75 {dimension_numbers = #tpu.dot_dimension_numbers<[1], [0], [0], [1], [0, 0, 1, 1], [], []>} : vector<1x8xf32>, vector<8x64xf32>, vector<1x64xf32> -> vector<1x64xf32>
    %c0_76 = arith.constant 0 : index
    %c0_77 = arith.constant 0 : index
    %92 = vector.load %arg6[%c0_76, %c0_77] : memref<8x64xf32, #tpu.memory_space<vmem>>, vector<8x64xf32>
    %cst_78 = arith.constant dense<0.000000e+00> : vector<1x64xf32>
    %93 = tpu.matmul %89, %92, %cst_78 {dimension_numbers = #tpu.dot_dimension_numbers<[1], [0], [0], [1], [0, 0, 1, 1], [], []>} : vector<1x8xf32>, vector<8x64xf32>, vector<1x64xf32> -> vector<1x64xf32>
    %94 = vector.broadcast %91 : vector<1x64xf32> to vector<16x64xf32>
    %95 = arith.mulf %66, %94 : vector<16x64xf32>
    %96 = vector.broadcast %93 : vector<1x64xf32> to vector<16x64xf32>
    %97 = arith.addf %95, %96 : vector<16x64xf32>
    %cst_79 = arith.constant 0.000000e+00 : f32
    %98 = vector.broadcast %cst_79 : f32 to vector<16x64xf32>
    %99 = arith.cmpf oge, %97, %98 : vector<16x64xf32>
    %cst_80 = arith.constant 0.00999999977 : f32
    %100 = vector.broadcast %cst_80 : f32 to vector<16x64xf32>
    %101 = arith.mulf %100, %97 : vector<16x64xf32>
    %102 = arith.select %99, %97, %101 : vector<16x64xi1>, vector<16x64xf32>
    %103 = arith.truncf %102 : vector<16x64xf32> to vector<16x64xbf16>
    %c0_81 = arith.constant 0 : index
    %c0_82 = arith.constant 0 : index
    %104 = vector.load %arg7[%c0_81, %c0_82] : memref<16x64xbf16, #tpu.memory_space<vmem>>, vector<16x64xbf16>
    tpu.vector_store %arg7[%c0_81, %c0_82], %103 {strides = array<i32>} : memref<16x64xbf16, #tpu.memory_space<vmem>>, vector<16x64xbf16>,
    return
  }
}

module attributes {stable_mosaic.version = 11 : i64} {
  func.func @_conv_bn_act_kernel(%arg0: memref<10x160xbf16, #tpu.memory_space<vmem>>, %arg1: memref<9x32x64xbf16, #tpu.memory_space<vmem>>, %arg2: memref<1x64xf32, #tpu.memory_space<vmem>>, %arg3: memref<1x16xf32, #tpu.memory_space<vmem>>, %arg4: memref<1x16xf32, #tpu.memory_space<vmem>>, %arg5: memref<64x16xf32, #tpu.memory_space<vmem>>, %arg6: memref<16x64xf32, #tpu.memory_space<vmem>>, %arg7: memref<8x64xbf16, #tpu.memory_space<vmem>>) attributes {dimension_semantics = [], scalar_prefetch = 0 : i64, scratch_operands = 0 : i64, tpu.core_type = #tpu.core_type<tc>} {
    %cst = arith.constant 0.000000e+00 : f32
    %0 = vector.broadcast %cst : f32 to vector<8x64xf32>
    %c0 = arith.constant 0 : index
    %c120 = arith.constant 120 : index
    %1 = vector.load %arg0[%c0, %c120] : memref<10x160xbf16, #tpu.memory_space<vmem>>, vector<4x32xbf16>
    %c5 = arith.constant 5 : index
    %c120_0 = arith.constant 120 : index
    %2 = vector.load %arg0[%c5, %c120_0] : memref<10x160xbf16, #tpu.memory_space<vmem>>, vector<4x32xbf16>
    %3 = tpu.concatenate %1, %2 in 0 : vector<4x32xbf16>, vector<4x32xbf16> -> vector<8x32xbf16>
    %c0_1 = arith.constant 0 : index
    %c0_2 = arith.constant 0 : index
    %c0_3 = arith.constant 0 : index
    %4 = vector.load %arg1[%c0_1, %c0_2, %c0_3] : memref<9x32x64xbf16, #tpu.memory_space<vmem>>, vector<1x32x64xbf16>
    %5 = vector.shape_cast %4 : vector<1x32x64xbf16> to vector<32x64xbf16>
    %cst_4 = arith.constant dense<0.000000e+00> : vector<8x64xf32>
    %6 = tpu.matmul %3, %5, %cst_4 {dimension_numbers = #tpu.dot_dimension_numbers<[1], [0], [0], [1], [0, 0, 1, 1], [], []>} : vector<8x32xbf16>, vector<32x64xbf16>, vector<8x64xf32> -> vector<8x64xf32>
    %7 = arith.addf %0, %6 : vector<8x64xf32>
    %c0_5 = arith.constant 0 : index
    %c88 = arith.constant 88 : index
    %8 = vector.load %arg0[%c0_5, %c88] : memref<10x160xbf16, #tpu.memory_space<vmem>>, vector<4x32xbf16>
    %c5_6 = arith.constant 5 : index
    %c88_7 = arith.constant 88 : index
    %9 = vector.load %arg0[%c5_6, %c88_7] : memref<10x160xbf16, #tpu.memory_space<vmem>>, vector<4x32xbf16>
    %10 = tpu.concatenate %8, %9 in 0 : vector<4x32xbf16>, vector<4x32xbf16> -> vector<8x32xbf16>
    %c1 = arith.constant 1 : index
    %c0_8 = arith.constant 0 : index
    %c0_9 = arith.constant 0 : index
    %11 = vector.load %arg1[%c1, %c0_8, %c0_9] : memref<9x32x64xbf16, #tpu.memory_space<vmem>>, vector<1x32x64xbf16>
    %12 = vector.shape_cast %11 : vector<1x32x64xbf16> to vector<32x64xbf16>
    %cst_10 = arith.constant dense<0.000000e+00> : vector<8x64xf32>
    %13 = tpu.matmul %10, %12, %cst_10 {dimension_numbers = #tpu.dot_dimension_numbers<[1], [0], [0], [1], [0, 0, 1, 1], [], []>} : vector<8x32xbf16>, vector<32x64xbf16>, vector<8x64xf32> -> vector<8x64xf32>
    %14 = arith.addf %7, %13 : vector<8x64xf32>
    %c0_11 = arith.constant 0 : index
    %c128 = arith.constant 128 : index
    %15 = vector.load %arg0[%c0_11, %c128] : memref<10x160xbf16, #tpu.memory_space<vmem>>, vector<4x32xbf16>
    %c5_12 = arith.constant 5 : index
    %c128_13 = arith.constant 128 : index
    %16 = vector.load %arg0[%c5_12, %c128_13] : memref<10x160xbf16, #tpu.memory_space<vmem>>, vector<4x32xbf16>
    %17 = tpu.concatenate %15, %16 in 0 : vector<4x32xbf16>, vector<4x32xbf16> -> vector<8x32xbf16>
    %c2 = arith.constant 2 : index
    %c0_14 = arith.constant 0 : index
    %c0_15 = arith.constant 0 : index
    %18 = vector.load %arg1[%c2, %c0_14, %c0_15] : memref<9x32x64xbf16, #tpu.memory_space<vmem>>, vector<1x32x64xbf16>
    %19 = vector.shape_cast %18 : vector<1x32x64xbf16> to vector<32x64xbf16>
    %cst_16 = arith.constant dense<0.000000e+00> : vector<8x64xf32>
    %20 = tpu.matmul %17, %19, %cst_16 {dimension_numbers = #tpu.dot_dimension_numbers<[1], [0], [0], [1], [0, 0, 1, 1], [], []>} : vector<8x32xbf16>, vector<32x64xbf16>, vector<8x64xf32> -> vector<8x64xf32>
    %21 = arith.addf %14, %20 : vector<8x64xf32>
    %c1_17 = arith.constant 1 : index
    %c40 = arith.constant 40 : index
    %22 = vector.load %arg0[%c1_17, %c40] : memref<10x160xbf16, #tpu.memory_space<vmem>>, vector<4x32xbf16>
    %c6 = arith.constant 6 : index
    %c40_18 = arith.constant 40 : index
    %23 = vector.load %arg0[%c6, %c40_18] : memref<10x160xbf16, #tpu.memory_space<vmem>>, vector<4x32xbf16>
    %24 = tpu.concatenate %22, %23 in 0 : vector<4x32xbf16>, vector<4x32xbf16> -> vector<8x32xbf16>
    %c3 = arith.constant 3 : index
    %c0_19 = arith.constant 0 : index
    %c0_20 = arith.constant 0 : index
    %25 = vector.load %arg1[%c3, %c0_19, %c0_20] : memref<9x32x64xbf16, #tpu.memory_space<vmem>>, vector<1x32x64xbf16>
    %26 = vector.shape_cast %25 : vector<1x32x64xbf16> to vector<32x64xbf16>
    %cst_21 = arith.constant dense<0.000000e+00> : vector<8x64xf32>
    %27 = tpu.matmul %24, %26, %cst_21 {dimension_numbers = #tpu.dot_dimension_numbers<[1], [0], [0], [1], [0, 0, 1, 1], [], []>} : vector<8x32xbf16>, vector<32x64xbf16>, vector<8x64xf32> -> vector<8x64xf32>
    %28 = arith.addf %21, %27 : vector<8x64xf32>
    %c1_22 = arith.constant 1 : index
    %c8 = arith.constant 8 : index
    %29 = vector.load %arg0[%c1_22, %c8] : memref<10x160xbf16, #tpu.memory_space<vmem>>, vector<4x32xbf16>
    %c6_23 = arith.constant 6 : index
    %c8_24 = arith.constant 8 : index
    %30 = vector.load %arg0[%c6_23, %c8_24] : memref<10x160xbf16, #tpu.memory_space<vmem>>, vector<4x32xbf16>
    %31 = tpu.concatenate %29, %30 in 0 : vector<4x32xbf16>, vector<4x32xbf16> -> vector<8x32xbf16>
    %c4 = arith.constant 4 : index
    %c0_25 = arith.constant 0 : index
    %c0_26 = arith.constant 0 : index
    %32 = vector.load %arg1[%c4, %c0_25, %c0_26] : memref<9x32x64xbf16, #tpu.memory_space<vmem>>, vector<1x32x64xbf16>
    %33 = vector.shape_cast %32 : vector<1x32x64xbf16> to vector<32x64xbf16>
    %cst_27 = arith.constant dense<0.000000e+00> : vector<8x64xf32>
    %34 = tpu.matmul %31, %33, %cst_27 {dimension_numbers = #tpu.dot_dimension_numbers<[1], [0], [0], [1], [0, 0, 1, 1], [], []>} : vector<8x32xbf16>, vector<32x64xbf16>, vector<8x64xf32> -> vector<8x64xf32>
    %35 = arith.addf %28, %34 : vector<8x64xf32>
    %c1_28 = arith.constant 1 : index
    %c48 = arith.constant 48 : index
    %36 = vector.load %arg0[%c1_28, %c48] : memref<10x160xbf16, #tpu.memory_space<vmem>>, vector<4x32xbf16>
    %c6_29 = arith.constant 6 : index
    %c48_30 = arith.constant 48 : index
    %37 = vector.load %arg0[%c6_29, %c48_30] : memref<10x160xbf16, #tpu.memory_space<vmem>>, vector<4x32xbf16>
    %38 = tpu.concatenate %36, %37 in 0 : vector<4x32xbf16>, vector<4x32xbf16> -> vector<8x32xbf16>
    %c5_31 = arith.constant 5 : index
    %c0_32 = arith.constant 0 : index
    %c0_33 = arith.constant 0 : index
    %39 = vector.load %arg1[%c5_31, %c0_32, %c0_33] : memref<9x32x64xbf16, #tpu.memory_space<vmem>>, vector<1x32x64xbf16>
    %40 = vector.shape_cast %39 : vector<1x32x64xbf16> to vector<32x64xbf16>
    %cst_34 = arith.constant dense<0.000000e+00> : vector<8x64xf32>
    %41 = tpu.matmul %38, %40, %cst_34 {dimension_numbers = #tpu.dot_dimension_numbers<[1], [0], [0], [1], [0, 0, 1, 1], [], []>} : vector<8x32xbf16>, vector<32x64xbf16>, vector<8x64xf32> -> vector<8x64xf32>
    %42 = arith.addf %35, %41 : vector<8x64xf32>
    %c1_35 = arith.constant 1 : index
    %c120_36 = arith.constant 120 : index
    %43 = vector.load %arg0[%c1_35, %c120_36] : memref<10x160xbf16, #tpu.memory_space<vmem>>, vector<4x32xbf16>
    %c6_37 = arith.constant 6 : index
    %c120_38 = arith.constant 120 : index
    %44 = vector.load %arg0[%c6_37, %c120_38] : memref<10x160xbf16, #tpu.memory_space<vmem>>, vector<4x32xbf16>
    %45 = tpu.concatenate %43, %44 in 0 : vector<4x32xbf16>, vector<4x32xbf16> -> vector<8x32xbf16>
    %c6_39 = arith.constant 6 : index
    %c0_40 = arith.constant 0 : index
    %c0_41 = arith.constant 0 : index
    %46 = vector.load %arg1[%c6_39, %c0_40, %c0_41] : memref<9x32x64xbf16, #tpu.memory_space<vmem>>, vector<1x32x64xbf16>
    %47 = vector.shape_cast %46 : vector<1x32x64xbf16> to vector<32x64xbf16>
    %cst_42 = arith.constant dense<0.000000e+00> : vector<8x64xf32>
    %48 = tpu.matmul %45, %47, %cst_42 {dimension_numbers = #tpu.dot_dimension_numbers<[1], [0], [0], [1], [0, 0, 1, 1], [], []>} : vector<8x32xbf16>, vector<32x64xbf16>, vector<8x64xf32> -> vector<8x64xf32>
    %49 = arith.addf %42, %48 : vector<8x64xf32>
    %c1_43 = arith.constant 1 : index
    %c88_44 = arith.constant 88 : index
    %50 = vector.load %arg0[%c1_43, %c88_44] : memref<10x160xbf16, #tpu.memory_space<vmem>>, vector<4x32xbf16>
    %c6_45 = arith.constant 6 : index
    %c88_46 = arith.constant 88 : index
    %51 = vector.load %arg0[%c6_45, %c88_46] : memref<10x160xbf16, #tpu.memory_space<vmem>>, vector<4x32xbf16>
    %52 = tpu.concatenate %50, %51 in 0 : vector<4x32xbf16>, vector<4x32xbf16> -> vector<8x32xbf16>
    %c7 = arith.constant 7 : index
    %c0_47 = arith.constant 0 : index
    %c0_48 = arith.constant 0 : index
    %53 = vector.load %arg1[%c7, %c0_47, %c0_48] : memref<9x32x64xbf16, #tpu.memory_space<vmem>>, vector<1x32x64xbf16>
    %54 = vector.shape_cast %53 : vector<1x32x64xbf16> to vector<32x64xbf16>
    %cst_49 = arith.constant dense<0.000000e+00> : vector<8x64xf32>
    %55 = tpu.matmul %52, %54, %cst_49 {dimension_numbers = #tpu.dot_dimension_numbers<[1], [0], [0], [1], [0, 0, 1, 1], [], []>} : vector<8x32xbf16>, vector<32x64xbf16>, vector<8x64xf32> -> vector<8x64xf32>
    %56 = arith.addf %49, %55 : vector<8x64xf32>
    %c1_50 = arith.constant 1 : index
    %c128_51 = arith.constant 128 : index
    %57 = vector.load %arg0[%c1_50, %c128_51] : memref<10x160xbf16, #tpu.memory_space<vmem>>, vector<4x32xbf16>
    %c6_52 = arith.constant 6 : index
    %c128_53 = arith.constant 128 : index
    %58 = vector.load %arg0[%c6_52, %c128_53] : memref<10x160xbf16, #tpu.memory_space<vmem>>, vector<4x32xbf16>
    %59 = tpu.concatenate %57, %58 in 0 : vector<4x32xbf16>, vector<4x32xbf16> -> vector<8x32xbf16>
    %c8_54 = arith.constant 8 : index
    %c0_55 = arith.constant 0 : index
    %c0_56 = arith.constant 0 : index
    %60 = vector.load %arg1[%c8_54, %c0_55, %c0_56] : memref<9x32x64xbf16, #tpu.memory_space<vmem>>, vector<1x32x64xbf16>
    %61 = vector.shape_cast %60 : vector<1x32x64xbf16> to vector<32x64xbf16>
    %cst_57 = arith.constant dense<0.000000e+00> : vector<8x64xf32>
    %62 = tpu.matmul %59, %61, %cst_57 {dimension_numbers = #tpu.dot_dimension_numbers<[1], [0], [0], [1], [0, 0, 1, 1], [], []>} : vector<8x32xbf16>, vector<32x64xbf16>, vector<8x64xf32> -> vector<8x64xf32>
    %63 = arith.addf %56, %62 : vector<8x64xf32>
    %c0_58 = arith.constant 0 : index
    %c0_59 = arith.constant 0 : index
    %64 = vector.load %arg2[%c0_58, %c0_59] : memref<1x64xf32, #tpu.memory_space<vmem>>, vector<1x64xf32>
    %65 = vector.broadcast %64 : vector<1x64xf32> to vector<8x64xf32>
    %66 = arith.addf %63, %65 : vector<8x64xf32>
    %cst_60 = arith.constant dense<0.000000e+00> : vector<64xf32>
    %67 = vector.multi_reduction <add>, %66, %cst_60 [0] : vector<8x64xf32> to vector<64xf32>
    %68 = vector.shape_cast %67 : vector<64xf32> to vector<1x64xf32>
    %c0_61 = arith.constant 0 : index
    %c0_62 = arith.constant 0 : index
    %69 = vector.load %arg5[%c0_61, %c0_62] : memref<64x16xf32, #tpu.memory_space<vmem>>, vector<64x16xf32>
    %cst_63 = arith.constant dense<0.000000e+00> : vector<1x16xf32>
    %70 = tpu.matmul %68, %69, %cst_63 {dimension_numbers = #tpu.dot_dimension_numbers<[1], [0], [0], [1], [0, 0, 1, 1], [], []>} : vector<1x64xf32>, vector<64x16xf32>, vector<1x16xf32> -> vector<1x16xf32>
    %71 = arith.mulf %66, %66 : vector<8x64xf32>
    %cst_64 = arith.constant dense<0.000000e+00> : vector<64xf32>
    %72 = vector.multi_reduction <add>, %71, %cst_64 [0] : vector<8x64xf32> to vector<64xf32>
    %73 = vector.shape_cast %72 : vector<64xf32> to vector<1x64xf32>
    %c0_65 = arith.constant 0 : index
    %c0_66 = arith.constant 0 : index
    %74 = vector.load %arg5[%c0_65, %c0_66] : memref<64x16xf32, #tpu.memory_space<vmem>>, vector<64x16xf32>
    %cst_67 = arith.constant dense<0.000000e+00> : vector<1x16xf32>
    %75 = tpu.matmul %73, %74, %cst_67 {dimension_numbers = #tpu.dot_dimension_numbers<[1], [0], [0], [1], [0, 0, 1, 1], [], []>} : vector<1x64xf32>, vector<64x16xf32>, vector<1x16xf32> -> vector<1x16xf32>
    %cst_68 = arith.constant 3.200000e+01 : f32
    %76 = vector.broadcast %cst_68 : f32 to vector<1x16xf32>
    %77 = arith.divf %70, %76 : vector<1x16xf32>
    %cst_69 = arith.constant 3.200000e+01 : f32
    %78 = vector.broadcast %cst_69 : f32 to vector<1x16xf32>
    %79 = arith.divf %75, %78 : vector<1x16xf32>
    %80 = arith.mulf %77, %77 : vector<1x16xf32>
    %81 = arith.subf %79, %80 : vector<1x16xf32>
    %c0_70 = arith.constant 0 : index
    %c0_71 = arith.constant 0 : index
    %82 = vector.load %arg3[%c0_70, %c0_71] : memref<1x16xf32, #tpu.memory_space<vmem>>, vector<1x16xf32>
    %cst_72 = arith.constant 9.99999974E-6 : f32
    %83 = vector.broadcast %cst_72 : f32 to vector<1x16xf32>
    %84 = arith.addf %81, %83 : vector<1x16xf32>
    %85 = math.rsqrt %84 : vector<1x16xf32>
    %86 = arith.mulf %82, %85 : vector<1x16xf32>
    %c0_73 = arith.constant 0 : index
    %c0_74 = arith.constant 0 : index
    %87 = vector.load %arg4[%c0_73, %c0_74] : memref<1x16xf32, #tpu.memory_space<vmem>>, vector<1x16xf32>
    %88 = arith.mulf %77, %86 : vector<1x16xf32>
    %89 = arith.subf %87, %88 : vector<1x16xf32>
    %c0_75 = arith.constant 0 : index
    %c0_76 = arith.constant 0 : index
    %90 = vector.load %arg6[%c0_75, %c0_76] : memref<16x64xf32, #tpu.memory_space<vmem>>, vector<16x64xf32>
    %cst_77 = arith.constant dense<0.000000e+00> : vector<1x64xf32>
    %91 = tpu.matmul %86, %90, %cst_77 {dimension_numbers = #tpu.dot_dimension_numbers<[1], [0], [0], [1], [0, 0, 1, 1], [], []>} : vector<1x16xf32>, vector<16x64xf32>, vector<1x64xf32> -> vector<1x64xf32>
    %c0_78 = arith.constant 0 : index
    %c0_79 = arith.constant 0 : index
    %92 = vector.load %arg6[%c0_78, %c0_79] : memref<16x64xf32, #tpu.memory_space<vmem>>, vector<16x64xf32>
    %cst_80 = arith.constant dense<0.000000e+00> : vector<1x64xf32>
    %93 = tpu.matmul %89, %92, %cst_80 {dimension_numbers = #tpu.dot_dimension_numbers<[1], [0], [0], [1], [0, 0, 1, 1], [], []>} : vector<1x16xf32>, vector<16x64xf32>, vector<1x64xf32> -> vector<1x64xf32>
    %94 = vector.broadcast %91 : vector<1x64xf32> to vector<8x64xf32>
    %95 = arith.mulf %66, %94 : vector<8x64xf32>
    %96 = vector.broadcast %93 : vector<1x64xf32> to vector<8x64xf32>
    %97 = arith.addf %95, %96 : vector<8x64xf32>
    %cst_81 = arith.constant 0.000000e+00 : f32
    %98 = vector.broadcast %cst_81 : f32 to vector<8x64xf32>
    %99 = arith.cmpf oge, %97, %98 : vector<8x64xf32>
    %cst_82 = arith.constant 0.00999999977 : f32
    %100 = vector.broadcast %cst_82 : f32 to vector<8x64xf32>
    %101 = arith.mulf %100, %97 : vector<8x64xf32>
    %102 = arith.select %99, %97, %101 : vector<8x64xi1>, vector<8x64xf32>
    %103 = arith.truncf %102 : vector<8x64xf32> to vector<8x64xbf16>
    %c0_83 = arith.constant 0 : index
    %c0_84 = arith.constant 0 : index
    %104 = vector.load %arg7[%c0_83, %c0_84] : memref<8x64xbf16, #tpu.memory_space<vmem>>, vector<8x64xbf16>
    tpu.vector_store %arg7[%c0_83, %c0_84], %103 {strides = array<i32>} : memref<8x64xbf16, #tpu.memory_space<vmem>>, vector<8x64xbf16>,
    return
  }
}

module attributes {stable_mosaic.version = 11 : i64} {
  func.func @_conv_bn_act_kernel(%arg0: memref<6x192xbf16, #tpu.memory_space<vmem>>, %arg1: memref<9x32x64xbf16, #tpu.memory_space<vmem>>, %arg2: memref<1x64xf32, #tpu.memory_space<vmem>>, %arg3: memref<1x32xf32, #tpu.memory_space<vmem>>, %arg4: memref<1x32xf32, #tpu.memory_space<vmem>>, %arg5: memref<64x32xf32, #tpu.memory_space<vmem>>, %arg6: memref<32x64xf32, #tpu.memory_space<vmem>>, %arg7: memref<4x64xbf16, #tpu.memory_space<vmem>>) attributes {dimension_semantics = [], scalar_prefetch = 0 : i64, scratch_operands = 0 : i64, tpu.core_type = #tpu.core_type<tc>} {
    %cst = arith.constant 0.000000e+00 : f32
    %0 = vector.broadcast %cst : f32 to vector<4x64xf32>
    %c0 = arith.constant 0 : index
    %c144 = arith.constant 144 : index
    %1 = vector.load %arg0[%c0, %c144] : memref<6x192xbf16, #tpu.memory_space<vmem>>, vector<2x32xbf16>
    %c3 = arith.constant 3 : index
    %c144_0 = arith.constant 144 : index
    %2 = vector.load %arg0[%c3, %c144_0] : memref<6x192xbf16, #tpu.memory_space<vmem>>, vector<2x32xbf16>
    %3 = tpu.concatenate %1, %2 in 0 : vector<2x32xbf16>, vector<2x32xbf16> -> vector<4x32xbf16>
    %c0_1 = arith.constant 0 : index
    %c0_2 = arith.constant 0 : index
    %c0_3 = arith.constant 0 : index
    %4 = vector.load %arg1[%c0_1, %c0_2, %c0_3] : memref<9x32x64xbf16, #tpu.memory_space<vmem>>, vector<1x32x64xbf16>
    %5 = vector.shape_cast %4 : vector<1x32x64xbf16> to vector<32x64xbf16>
    %cst_4 = arith.constant dense<0.000000e+00> : vector<4x64xf32>
    %6 = tpu.matmul %3, %5, %cst_4 {dimension_numbers = #tpu.dot_dimension_numbers<[1], [0], [0], [1], [0, 0, 1, 1], [], []>} : vector<4x32xbf16>, vector<32x64xbf16>, vector<4x64xf32> -> vector<4x64xf32>
    %7 = arith.addf %0, %6 : vector<4x64xf32>
    %c0_5 = arith.constant 0 : index
    %c112 = arith.constant 112 : index
    %8 = vector.load %arg0[%c0_5, %c112] : memref<6x192xbf16, #tpu.memory_space<vmem>>, vector<2x32xbf16>
    %c3_6 = arith.constant 3 : index
    %c112_7 = arith.constant 112 : index
    %9 = vector.load %arg0[%c3_6, %c112_7] : memref<6x192xbf16, #tpu.memory_space<vmem>>, vector<2x32xbf16>
    %10 = tpu.concatenate %8, %9 in 0 : vector<2x32xbf16>, vector<2x32xbf16> -> vector<4x32xbf16>
    %c1 = arith.constant 1 : index
    %c0_8 = arith.constant 0 : index
    %c0_9 = arith.constant 0 : index
    %11 = vector.load %arg1[%c1, %c0_8, %c0_9] : memref<9x32x64xbf16, #tpu.memory_space<vmem>>, vector<1x32x64xbf16>
    %12 = vector.shape_cast %11 : vector<1x32x64xbf16> to vector<32x64xbf16>
    %cst_10 = arith.constant dense<0.000000e+00> : vector<4x64xf32>
    %13 = tpu.matmul %10, %12, %cst_10 {dimension_numbers = #tpu.dot_dimension_numbers<[1], [0], [0], [1], [0, 0, 1, 1], [], []>} : vector<4x32xbf16>, vector<32x64xbf16>, vector<4x64xf32> -> vector<4x64xf32>
    %14 = arith.addf %7, %13 : vector<4x64xf32>
    %c0_11 = arith.constant 0 : index
    %c160 = arith.constant 160 : index
    %15 = vector.load %arg0[%c0_11, %c160] : memref<6x192xbf16, #tpu.memory_space<vmem>>, vector<2x32xbf16>
    %c3_12 = arith.constant 3 : index
    %c160_13 = arith.constant 160 : index
    %16 = vector.load %arg0[%c3_12, %c160_13] : memref<6x192xbf16, #tpu.memory_space<vmem>>, vector<2x32xbf16>
    %17 = tpu.concatenate %15, %16 in 0 : vector<2x32xbf16>, vector<2x32xbf16> -> vector<4x32xbf16>
    %c2 = arith.constant 2 : index
    %c0_14 = arith.constant 0 : index
    %c0_15 = arith.constant 0 : index
    %18 = vector.load %arg1[%c2, %c0_14, %c0_15] : memref<9x32x64xbf16, #tpu.memory_space<vmem>>, vector<1x32x64xbf16>
    %19 = vector.shape_cast %18 : vector<1x32x64xbf16> to vector<32x64xbf16>
    %cst_16 = arith.constant dense<0.000000e+00> : vector<4x64xf32>
    %20 = tpu.matmul %17, %19, %cst_16 {dimension_numbers = #tpu.dot_dimension_numbers<[1], [0], [0], [1], [0, 0, 1, 1], [], []>} : vector<4x32xbf16>, vector<32x64xbf16>, vector<4x64xf32> -> vector<4x64xf32>
    %21 = arith.addf %14, %20 : vector<4x64xf32>
    %c1_17 = arith.constant 1 : index
    %c48 = arith.constant 48 : index
    %22 = vector.load %arg0[%c1_17, %c48] : memref<6x192xbf16, #tpu.memory_space<vmem>>, vector<2x32xbf16>
    %c4 = arith.constant 4 : index
    %c48_18 = arith.constant 48 : index
    %23 = vector.load %arg0[%c4, %c48_18] : memref<6x192xbf16, #tpu.memory_space<vmem>>, vector<2x32xbf16>
    %24 = tpu.concatenate %22, %23 in 0 : vector<2x32xbf16>, vector<2x32xbf16> -> vector<4x32xbf16>
    %c3_19 = arith.constant 3 : index
    %c0_20 = arith.constant 0 : index
    %c0_21 = arith.constant 0 : index
    %25 = vector.load %arg1[%c3_19, %c0_20, %c0_21] : memref<9x32x64xbf16, #tpu.memory_space<vmem>>, vector<1x32x64xbf16>
    %26 = vector.shape_cast %25 : vector<1x32x64xbf16> to vector<32x64xbf16>
    %cst_22 = arith.constant dense<0.000000e+00> : vector<4x64xf32>
    %27 = tpu.matmul %24, %26, %cst_22 {dimension_numbers = #tpu.dot_dimension_numbers<[1], [0], [0], [1], [0, 0, 1, 1], [], []>} : vector<4x32xbf16>, vector<32x64xbf16>, vector<4x64xf32> -> vector<4x64xf32>
    %28 = arith.addf %21, %27 : vector<4x64xf32>
    %c1_23 = arith.constant 1 : index
    %c16 = arith.constant 16 : index
    %29 = vector.load %arg0[%c1_23, %c16] : memref<6x192xbf16, #tpu.memory_space<vmem>>, vector<2x32xbf16>
    %c4_24 = arith.constant 4 : index
    %c16_25 = arith.constant 16 : index
    %30 = vector.load %arg0[%c4_24, %c16_25] : memref<6x192xbf16, #tpu.memory_space<vmem>>, vector<2x32xbf16>
    %31 = tpu.concatenate %29, %30 in 0 : vector<2x32xbf16>, vector<2x32xbf16> -> vector<4x32xbf16>
    %c4_26 = arith.constant 4 : index
    %c0_27 = arith.constant 0 : index
    %c0_28 = arith.constant 0 : index
    %32 = vector.load %arg1[%c4_26, %c0_27, %c0_28] : memref<9x32x64xbf16, #tpu.memory_space<vmem>>, vector<1x32x64xbf16>
    %33 = vector.shape_cast %32 : vector<1x32x64xbf16> to vector<32x64xbf16>
    %cst_29 = arith.constant dense<0.000000e+00> : vector<4x64xf32>
    %34 = tpu.matmul %31, %33, %cst_29 {dimension_numbers = #tpu.dot_dimension_numbers<[1], [0], [0], [1], [0, 0, 1, 1], [], []>} : vector<4x32xbf16>, vector<32x64xbf16>, vector<4x64xf32> -> vector<4x64xf32>
    %35 = arith.addf %28, %34 : vector<4x64xf32>
    %c1_30 = arith.constant 1 : index
    %c64 = arith.constant 64 : index
    %36 = vector.load %arg0[%c1_30, %c64] : memref<6x192xbf16, #tpu.memory_space<vmem>>, vector<2x32xbf16>
    %c4_31 = arith.constant 4 : index
    %c64_32 = arith.constant 64 : index
    %37 = vector.load %arg0[%c4_31, %c64_32] : memref<6x192xbf16, #tpu.memory_space<vmem>>, vector<2x32xbf16>
    %38 = tpu.concatenate %36, %37 in 0 : vector<2x32xbf16>, vector<2x32xbf16> -> vector<4x32xbf16>
    %c5 = arith.constant 5 : index
    %c0_33 = arith.constant 0 : index
    %c0_34 = arith.constant 0 : index
    %39 = vector.load %arg1[%c5, %c0_33, %c0_34] : memref<9x32x64xbf16, #tpu.memory_space<vmem>>, vector<1x32x64xbf16>
    %40 = vector.shape_cast %39 : vector<1x32x64xbf16> to vector<32x64xbf16>
    %cst_35 = arith.constant dense<0.000000e+00> : vector<4x64xf32>
    %41 = tpu.matmul %38, %40, %cst_35 {dimension_numbers = #tpu.dot_dimension_numbers<[1], [0], [0], [1], [0, 0, 1, 1], [], []>} : vector<4x32xbf16>, vector<32x64xbf16>, vector<4x64xf32> -> vector<4x64xf32>
    %42 = arith.addf %35, %41 : vector<4x64xf32>
    %c1_36 = arith.constant 1 : index
    %c144_37 = arith.constant 144 : index
    %43 = vector.load %arg0[%c1_36, %c144_37] : memref<6x192xbf16, #tpu.memory_space<vmem>>, vector<2x32xbf16>
    %c4_38 = arith.constant 4 : index
    %c144_39 = arith.constant 144 : index
    %44 = vector.load %arg0[%c4_38, %c144_39] : memref<6x192xbf16, #tpu.memory_space<vmem>>, vector<2x32xbf16>
    %45 = tpu.concatenate %43, %44 in 0 : vector<2x32xbf16>, vector<2x32xbf16> -> vector<4x32xbf16>
    %c6 = arith.constant 6 : index
    %c0_40 = arith.constant 0 : index
    %c0_41 = arith.constant 0 : index
    %46 = vector.load %arg1[%c6, %c0_40, %c0_41] : memref<9x32x64xbf16, #tpu.memory_space<vmem>>, vector<1x32x64xbf16>
    %47 = vector.shape_cast %46 : vector<1x32x64xbf16> to vector<32x64xbf16>
    %cst_42 = arith.constant dense<0.000000e+00> : vector<4x64xf32>
    %48 = tpu.matmul %45, %47, %cst_42 {dimension_numbers = #tpu.dot_dimension_numbers<[1], [0], [0], [1], [0, 0, 1, 1], [], []>} : vector<4x32xbf16>, vector<32x64xbf16>, vector<4x64xf32> -> vector<4x64xf32>
    %49 = arith.addf %42, %48 : vector<4x64xf32>
    %c1_43 = arith.constant 1 : index
    %c112_44 = arith.constant 112 : index
    %50 = vector.load %arg0[%c1_43, %c112_44] : memref<6x192xbf16, #tpu.memory_space<vmem>>, vector<2x32xbf16>
    %c4_45 = arith.constant 4 : index
    %c112_46 = arith.constant 112 : index
    %51 = vector.load %arg0[%c4_45, %c112_46] : memref<6x192xbf16, #tpu.memory_space<vmem>>, vector<2x32xbf16>
    %52 = tpu.concatenate %50, %51 in 0 : vector<2x32xbf16>, vector<2x32xbf16> -> vector<4x32xbf16>
    %c7 = arith.constant 7 : index
    %c0_47 = arith.constant 0 : index
    %c0_48 = arith.constant 0 : index
    %53 = vector.load %arg1[%c7, %c0_47, %c0_48] : memref<9x32x64xbf16, #tpu.memory_space<vmem>>, vector<1x32x64xbf16>
    %54 = vector.shape_cast %53 : vector<1x32x64xbf16> to vector<32x64xbf16>
    %cst_49 = arith.constant dense<0.000000e+00> : vector<4x64xf32>
    %55 = tpu.matmul %52, %54, %cst_49 {dimension_numbers = #tpu.dot_dimension_numbers<[1], [0], [0], [1], [0, 0, 1, 1], [], []>} : vector<4x32xbf16>, vector<32x64xbf16>, vector<4x64xf32> -> vector<4x64xf32>
    %56 = arith.addf %49, %55 : vector<4x64xf32>
    %c1_50 = arith.constant 1 : index
    %c160_51 = arith.constant 160 : index
    %57 = vector.load %arg0[%c1_50, %c160_51] : memref<6x192xbf16, #tpu.memory_space<vmem>>, vector<2x32xbf16>
    %c4_52 = arith.constant 4 : index
    %c160_53 = arith.constant 160 : index
    %58 = vector.load %arg0[%c4_52, %c160_53] : memref<6x192xbf16, #tpu.memory_space<vmem>>, vector<2x32xbf16>
    %59 = tpu.concatenate %57, %58 in 0 : vector<2x32xbf16>, vector<2x32xbf16> -> vector<4x32xbf16>
    %c8 = arith.constant 8 : index
    %c0_54 = arith.constant 0 : index
    %c0_55 = arith.constant 0 : index
    %60 = vector.load %arg1[%c8, %c0_54, %c0_55] : memref<9x32x64xbf16, #tpu.memory_space<vmem>>, vector<1x32x64xbf16>
    %61 = vector.shape_cast %60 : vector<1x32x64xbf16> to vector<32x64xbf16>
    %cst_56 = arith.constant dense<0.000000e+00> : vector<4x64xf32>
    %62 = tpu.matmul %59, %61, %cst_56 {dimension_numbers = #tpu.dot_dimension_numbers<[1], [0], [0], [1], [0, 0, 1, 1], [], []>} : vector<4x32xbf16>, vector<32x64xbf16>, vector<4x64xf32> -> vector<4x64xf32>
    %63 = arith.addf %56, %62 : vector<4x64xf32>
    %c0_57 = arith.constant 0 : index
    %c0_58 = arith.constant 0 : index
    %64 = vector.load %arg2[%c0_57, %c0_58] : memref<1x64xf32, #tpu.memory_space<vmem>>, vector<1x64xf32>
    %65 = vector.broadcast %64 : vector<1x64xf32> to vector<4x64xf32>
    %66 = arith.addf %63, %65 : vector<4x64xf32>
    %cst_59 = arith.constant dense<0.000000e+00> : vector<64xf32>
    %67 = vector.multi_reduction <add>, %66, %cst_59 [0] : vector<4x64xf32> to vector<64xf32>
    %68 = vector.shape_cast %67 : vector<64xf32> to vector<1x64xf32>
    %c0_60 = arith.constant 0 : index
    %c0_61 = arith.constant 0 : index
    %69 = vector.load %arg5[%c0_60, %c0_61] : memref<64x32xf32, #tpu.memory_space<vmem>>, vector<64x32xf32>
    %cst_62 = arith.constant dense<0.000000e+00> : vector<1x32xf32>
    %70 = tpu.matmul %68, %69, %cst_62 {dimension_numbers = #tpu.dot_dimension_numbers<[1], [0], [0], [1], [0, 0, 1, 1], [], []>} : vector<1x64xf32>, vector<64x32xf32>, vector<1x32xf32> -> vector<1x32xf32>
    %71 = arith.mulf %66, %66 : vector<4x64xf32>
    %cst_63 = arith.constant dense<0.000000e+00> : vector<64xf32>
    %72 = vector.multi_reduction <add>, %71, %cst_63 [0] : vector<4x64xf32> to vector<64xf32>
    %73 = vector.shape_cast %72 : vector<64xf32> to vector<1x64xf32>
    %c0_64 = arith.constant 0 : index
    %c0_65 = arith.constant 0 : index
    %74 = vector.load %arg5[%c0_64, %c0_65] : memref<64x32xf32, #tpu.memory_space<vmem>>, vector<64x32xf32>
    %cst_66 = arith.constant dense<0.000000e+00> : vector<1x32xf32>
    %75 = tpu.matmul %73, %74, %cst_66 {dimension_numbers = #tpu.dot_dimension_numbers<[1], [0], [0], [1], [0, 0, 1, 1], [], []>} : vector<1x64xf32>, vector<64x32xf32>, vector<1x32xf32> -> vector<1x32xf32>
    %cst_67 = arith.constant 8.000000e+00 : f32
    %76 = vector.broadcast %cst_67 : f32 to vector<1x32xf32>
    %77 = arith.divf %70, %76 : vector<1x32xf32>
    %cst_68 = arith.constant 8.000000e+00 : f32
    %78 = vector.broadcast %cst_68 : f32 to vector<1x32xf32>
    %79 = arith.divf %75, %78 : vector<1x32xf32>
    %80 = arith.mulf %77, %77 : vector<1x32xf32>
    %81 = arith.subf %79, %80 : vector<1x32xf32>
    %c0_69 = arith.constant 0 : index
    %c0_70 = arith.constant 0 : index
    %82 = vector.load %arg3[%c0_69, %c0_70] : memref<1x32xf32, #tpu.memory_space<vmem>>, vector<1x32xf32>
    %cst_71 = arith.constant 9.99999974E-6 : f32
    %83 = vector.broadcast %cst_71 : f32 to vector<1x32xf32>
    %84 = arith.addf %81, %83 : vector<1x32xf32>
    %85 = math.rsqrt %84 : vector<1x32xf32>
    %86 = arith.mulf %82, %85 : vector<1x32xf32>
    %c0_72 = arith.constant 0 : index
    %c0_73 = arith.constant 0 : index
    %87 = vector.load %arg4[%c0_72, %c0_73] : memref<1x32xf32, #tpu.memory_space<vmem>>, vector<1x32xf32>
    %88 = arith.mulf %77, %86 : vector<1x32xf32>
    %89 = arith.subf %87, %88 : vector<1x32xf32>
    %c0_74 = arith.constant 0 : index
    %c0_75 = arith.constant 0 : index
    %90 = vector.load %arg6[%c0_74, %c0_75] : memref<32x64xf32, #tpu.memory_space<vmem>>, vector<32x64xf32>
    %cst_76 = arith.constant dense<0.000000e+00> : vector<1x64xf32>
    %91 = tpu.matmul %86, %90, %cst_76 {dimension_numbers = #tpu.dot_dimension_numbers<[1], [0], [0], [1], [0, 0, 1, 1], [], []>} : vector<1x32xf32>, vector<32x64xf32>, vector<1x64xf32> -> vector<1x64xf32>
    %c0_77 = arith.constant 0 : index
    %c0_78 = arith.constant 0 : index
    %92 = vector.load %arg6[%c0_77, %c0_78] : memref<32x64xf32, #tpu.memory_space<vmem>>, vector<32x64xf32>
    %cst_79 = arith.constant dense<0.000000e+00> : vector<1x64xf32>
    %93 = tpu.matmul %89, %92, %cst_79 {dimension_numbers = #tpu.dot_dimension_numbers<[1], [0], [0], [1], [0, 0, 1, 1], [], []>} : vector<1x32xf32>, vector<32x64xf32>, vector<1x64xf32> -> vector<1x64xf32>
    %94 = vector.broadcast %91 : vector<1x64xf32> to vector<4x64xf32>
    %95 = arith.mulf %66, %94 : vector<4x64xf32>
    %96 = vector.broadcast %93 : vector<1x64xf32> to vector<4x64xf32>
    %97 = arith.addf %95, %96 : vector<4x64xf32>
    %cst_80 = arith.constant 0.000000e+00 : f32
    %98 = vector.broadcast %cst_80 : f32 to vector<4x64xf32>
    %99 = arith.cmpf oge, %97, %98 : vector<4x64xf32>
    %cst_81 = arith.constant 0.00999999977 : f32
    %100 = vector.broadcast %cst_81 : f32 to vector<4x64xf32>
    %101 = arith.mulf %100, %97 : vector<4x64xf32>
    %102 = arith.select %99, %97, %101 : vector<4x64xi1>, vector<4x64xf32>
    %103 = arith.truncf %102 : vector<4x64xf32> to vector<4x64xbf16>
    %c0_82 = arith.constant 0 : index
    %c0_83 = arith.constant 0 : index
    %104 = vector.load %arg7[%c0_82, %c0_83] : memref<4x64xbf16, #tpu.memory_space<vmem>>, vector<4x64xbf16>
    tpu.vector_store %arg7[%c0_82, %c0_83], %103 {strides = array<i32>} : memref<4x64xbf16, #tpu.memory_space<vmem>>, vector<4x64xbf16>,
    return
  }
}

module attributes {stable_mosaic.version = 11 : i64} {
  func.func @_head_kernel(%arg0: memref<2x128xf32, #tpu.memory_space<vmem>>, %arg1: memref<128x16xf32, #tpu.memory_space<vmem>>, %arg2: memref<1x16xf32, #tpu.memory_space<vmem>>, %arg3: memref<2x8xf32, #tpu.memory_space<vmem>>, %arg4: memref<8x128xf32, #tpu.memory_space<vmem>>, %arg5: memref<1x128xf32, #tpu.memory_space<vmem>>, %arg6: memref<2x128xf32, #tpu.memory_space<vmem>>, %arg7: memref<1x1xf32, #tpu.memory_space<smem>>) attributes {dimension_semantics = [], scalar_prefetch = 0 : i64, scratch_operands = 0 : i64, tpu.core_type = #tpu.core_type<tc>} {
    %c0 = arith.constant 0 : index
    %c0_0 = arith.constant 0 : index
    %0 = vector.load %arg0[%c0, %c0_0] : memref<2x128xf32, #tpu.memory_space<vmem>>, vector<2x128xf32>
    %c0_1 = arith.constant 0 : index
    %c0_2 = arith.constant 0 : index
    %1 = vector.load %arg1[%c0_1, %c0_2] : memref<128x16xf32, #tpu.memory_space<vmem>>, vector<128x16xf32>
    %cst = arith.constant dense<0.000000e+00> : vector<2x16xf32>
    %2 = tpu.matmul %0, %1, %cst {dimension_numbers = #tpu.dot_dimension_numbers<[1], [0], [0], [1], [0, 0, 1, 1], [], []>} : vector<2x128xf32>, vector<128x16xf32>, vector<2x16xf32> -> vector<2x16xf32>
    %c0_3 = arith.constant 0 : index
    %c0_4 = arith.constant 0 : index
    %3 = vector.load %arg2[%c0_3, %c0_4] : memref<1x16xf32, #tpu.memory_space<vmem>>, vector<1x16xf32>
    %4 = vector.broadcast %3 : vector<1x16xf32> to vector<2x16xf32>
    %5 = arith.addf %2, %4 : vector<2x16xf32>
    %6 = vector.extract_strided_slice %5 {offsets = [0, 0], sizes = [2, 8], strides = [1, 1]} : vector<2x16xf32> to vector<2x8xf32>
    %7 = vector.extract_strided_slice %5 {offsets = [0, 8], sizes = [2, 8], strides = [1, 1]} : vector<2x16xf32> to vector<2x8xf32>
    %cst_5 = arith.constant 5.000000e-01 : f32
    %8 = vector.broadcast %cst_5 : f32 to vector<2x8xf32>
    %9 = arith.mulf %8, %7 : vector<2x8xf32>
    %10 = math.exp %9 : vector<2x8xf32>
    %c0_6 = arith.constant 0 : index
    %c0_7 = arith.constant 0 : index
    %11 = vector.load %arg3[%c0_6, %c0_7] : memref<2x8xf32, #tpu.memory_space<vmem>>, vector<2x8xf32>
    %12 = arith.mulf %11, %10 : vector<2x8xf32>
    %13 = arith.addf %6, %12 : vector<2x8xf32>
    %14 = arith.mulf %10, %10 : vector<2x8xf32>
    %cst_8 = arith.constant 1.000000e+00 : f32
    %15 = vector.broadcast %cst_8 : f32 to vector<2x8xf32>
    %16 = arith.addf %15, %7 : vector<2x8xf32>
    %17 = arith.mulf %6, %6 : vector<2x8xf32>
    %18 = arith.subf %16, %17 : vector<2x8xf32>
    %19 = arith.subf %18, %14 : vector<2x8xf32>
    %20 = vector.shape_cast %19 : vector<2x8xf32> to vector<1x2x8xf32>
    %cst_9 = arith.constant dense<0.000000e+00> : vector<1xf32>
    %21 = vector.multi_reduction <add>, %20, %cst_9 [1, 2] : vector<1x2x8xf32> to vector<1xf32>
    %22 = vector.shape_cast %21 : vector<1xf32> to vector<1x1x1xf32>
    %23 = vector.extract %22[0, 0, 0] : f32 from vector<1x1x1xf32>
    %cst_10 = arith.constant -5.000000e-01 : f32
    %24 = arith.mulf %cst_10, %23 : f32
    %c0_11 = arith.constant 0 : index
    %c0_12 = arith.constant 0 : index
    %25 = memref.load %arg7[%c0_11, %c0_12] : memref<1x1xf32, #tpu.memory_space<smem>>
    memref.store %24, %arg7[%c0_11, %c0_12] : memref<1x1xf32, #tpu.memory_space<smem>>
    %c0_13 = arith.constant 0 : index
    %c0_14 = arith.constant 0 : index
    %26 = vector.load %arg4[%c0_13, %c0_14] : memref<8x128xf32, #tpu.memory_space<vmem>>, vector<8x128xf32>
    %cst_15 = arith.constant dense<0.000000e+00> : vector<2x128xf32>
    %27 = tpu.matmul %13, %26, %cst_15 {dimension_numbers = #tpu.dot_dimension_numbers<[1], [0], [0], [1], [0, 0, 1, 1], [], []>} : vector<2x8xf32>, vector<8x128xf32>, vector<2x128xf32> -> vector<2x128xf32>
    %c0_16 = arith.constant 0 : index
    %c0_17 = arith.constant 0 : index
    %28 = vector.load %arg5[%c0_16, %c0_17] : memref<1x128xf32, #tpu.memory_space<vmem>>, vector<1x128xf32>
    %29 = vector.broadcast %28 : vector<1x128xf32> to vector<2x128xf32>
    %30 = arith.addf %27, %29 : vector<2x128xf32>
    %c0_18 = arith.constant 0 : index
    %c0_19 = arith.constant 0 : index
    %31 = vector.load %arg6[%c0_18, %c0_19] : memref<2x128xf32, #tpu.memory_space<vmem>>, vector<2x128xf32>
    tpu.vector_store %arg6[%c0_18, %c0_19], %30 {strides = array<i32>} : memref<2x128xf32, #tpu.memory_space<vmem>>, vector<2x128xf32>,
    return
  }
}

module attributes {stable_mosaic.version = 11 : i64} {
  func.func @_deconv_bn_act_kernel(%arg0: memref<6x96xbf16, #tpu.memory_space<vmem>>, %arg1: memref<9x64x32xbf16, #tpu.memory_space<vmem>>, %arg2: memref<1x32xf32, #tpu.memory_space<vmem>>, %arg3: memref<1x16xf32, #tpu.memory_space<vmem>>, %arg4: memref<1x16xf32, #tpu.memory_space<vmem>>, %arg5: memref<32x16xf32, #tpu.memory_space<vmem>>, %arg6: memref<16x32xf32, #tpu.memory_space<vmem>>, %arg7: memref<16x32xbf16, #tpu.memory_space<vmem>>) attributes {dimension_semantics = [], scalar_prefetch = 0 : i64, scratch_operands = 0 : i64, tpu.core_type = #tpu.core_type<tc>} {
    %cst = arith.constant 0.000000e+00 : f32
    %0 = vector.broadcast %cst : f32 to vector<4x32xf32>
    %cst_0 = arith.constant 0.000000e+00 : f32
    %1 = vector.broadcast %cst_0 : f32 to vector<4x32xf32>
    %cst_1 = arith.constant 0.000000e+00 : f32
    %2 = vector.broadcast %cst_1 : f32 to vector<4x32xf32>
    %cst_2 = arith.constant 0.000000e+00 : f32
    %3 = vector.broadcast %cst_2 : f32 to vector<4x32xf32>
    %c0 = arith.constant 0 : index
    %c0_3 = arith.constant 0 : index
    %4 = vector.load %arg0[%c0, %c0_3] : memref<6x96xbf16, #tpu.memory_space<vmem>>, vector<2x64xbf16>
    %c3 = arith.constant 3 : index
    %c0_4 = arith.constant 0 : index
    %5 = vector.load %arg0[%c3, %c0_4] : memref<6x96xbf16, #tpu.memory_space<vmem>>, vector<2x64xbf16>
    %6 = tpu.concatenate %4, %5 in 0 : vector<2x64xbf16>, vector<2x64xbf16> -> vector<4x64xbf16>
    %c0_5 = arith.constant 0 : index
    %c0_6 = arith.constant 0 : index
    %c0_7 = arith.constant 0 : index
    %7 = vector.load %arg1[%c0_5, %c0_6, %c0_7] : memref<9x64x32xbf16, #tpu.memory_space<vmem>>, vector<1x64x32xbf16>
    %8 = vector.shape_cast %7 : vector<1x64x32xbf16> to vector<64x32xbf16>
    %cst_8 = arith.constant dense<0.000000e+00> : vector<4x32xf32>
    %9 = tpu.matmul %6, %8, %cst_8 {dimension_numbers = #tpu.dot_dimension_numbers<[1], [0], [0], [1], [0, 0, 1, 1], [], []>} : vector<4x64xbf16>, vector<64x32xbf16>, vector<4x32xf32> -> vector<4x32xf32>
    %10 = arith.addf %0, %9 : vector<4x32xf32>
    %c0_9 = arith.constant 0 : index
    %c0_10 = arith.constant 0 : index
    %11 = vector.load %arg0[%c0_9, %c0_10] : memref<6x96xbf16, #tpu.memory_space<vmem>>, vector<2x64xbf16>
    %c3_11 = arith.constant 3 : index
    %c0_12 = arith.constant 0 : index
    %12 = vector.load %arg0[%c3_11, %c0_12] : memref<6x96xbf16, #tpu.memory_space<vmem>>, vector<2x64xbf16>
    %13 = tpu.concatenate %11, %12 in 0 : vector<2x64xbf16>, vector<2x64xbf16> -> vector<4x64xbf16>
    %c1 = arith.constant 1 : index
    %c0_13 = arith.constant 0 : index
    %c0_14 = arith.constant 0 : index
    %14 = vector.load %arg1[%c1, %c0_13, %c0_14] : memref<9x64x32xbf16, #tpu.memory_space<vmem>>, vector<1x64x32xbf16>
    %15 = vector.shape_cast %14 : vector<1x64x32xbf16> to vector<64x32xbf16>
    %cst_15 = arith.constant dense<0.000000e+00> : vector<4x32xf32>
    %16 = tpu.matmul %13, %15, %cst_15 {dimension_numbers = #tpu.dot_dimension_numbers<[1], [0], [0], [1], [0, 0, 1, 1], [], []>} : vector<4x64xbf16>, vector<64x32xbf16>, vector<4x32xf32> -> vector<4x32xf32>
    %17 = arith.addf %1, %16 : vector<4x32xf32>
    %c0_16 = arith.constant 0 : index
    %c32 = arith.constant 32 : index
    %18 = vector.load %arg0[%c0_16, %c32] : memref<6x96xbf16, #tpu.memory_space<vmem>>, vector<2x64xbf16>
    %c3_17 = arith.constant 3 : index
    %c32_18 = arith.constant 32 : index
    %19 = vector.load %arg0[%c3_17, %c32_18] : memref<6x96xbf16, #tpu.memory_space<vmem>>, vector<2x64xbf16>
    %20 = tpu.concatenate %18, %19 in 0 : vector<2x64xbf16>, vector<2x64xbf16> -> vector<4x64xbf16>
    %c2 = arith.constant 2 : index
    %c0_19 = arith.constant 0 : index
    %c0_20 = arith.constant 0 : index
    %21 = vector.load %arg1[%c2, %c0_19, %c0_20] : memref<9x64x32xbf16, #tpu.memory_space<vmem>>, vector<1x64x32xbf16>
    %22 = vector.shape_cast %21 : vector<1x64x32xbf16> to vector<64x32xbf16>
    %cst_21 = arith.constant dense<0.000000e+00> : vector<4x32xf32>
    %23 = tpu.matmul %20, %22, %cst_21 {dimension_numbers = #tpu.dot_dimension_numbers<[1], [0], [0], [1], [0, 0, 1, 1], [], []>} : vector<4x64xbf16>, vector<64x32xbf16>, vector<4x32xf32> -> vector<4x32xf32>
    %24 = arith.addf %17, %23 : vector<4x32xf32>
    %c0_22 = arith.constant 0 : index
    %c0_23 = arith.constant 0 : index
    %25 = vector.load %arg0[%c0_22, %c0_23] : memref<6x96xbf16, #tpu.memory_space<vmem>>, vector<2x64xbf16>
    %c3_24 = arith.constant 3 : index
    %c0_25 = arith.constant 0 : index
    %26 = vector.load %arg0[%c3_24, %c0_25] : memref<6x96xbf16, #tpu.memory_space<vmem>>, vector<2x64xbf16>
    %27 = tpu.concatenate %25, %26 in 0 : vector<2x64xbf16>, vector<2x64xbf16> -> vector<4x64xbf16>
    %c3_26 = arith.constant 3 : index
    %c0_27 = arith.constant 0 : index
    %c0_28 = arith.constant 0 : index
    %28 = vector.load %arg1[%c3_26, %c0_27, %c0_28] : memref<9x64x32xbf16, #tpu.memory_space<vmem>>, vector<1x64x32xbf16>
    %29 = vector.shape_cast %28 : vector<1x64x32xbf16> to vector<64x32xbf16>
    %cst_29 = arith.constant dense<0.000000e+00> : vector<4x32xf32>
    %30 = tpu.matmul %27, %29, %cst_29 {dimension_numbers = #tpu.dot_dimension_numbers<[1], [0], [0], [1], [0, 0, 1, 1], [], []>} : vector<4x64xbf16>, vector<64x32xbf16>, vector<4x32xf32> -> vector<4x32xf32>
    %31 = arith.addf %2, %30 : vector<4x32xf32>
    %c1_30 = arith.constant 1 : index
    %c0_31 = arith.constant 0 : index
    %32 = vector.load %arg0[%c1_30, %c0_31] : memref<6x96xbf16, #tpu.memory_space<vmem>>, vector<2x64xbf16>
    %c4 = arith.constant 4 : index
    %c0_32 = arith.constant 0 : index
    %33 = vector.load %arg0[%c4, %c0_32] : memref<6x96xbf16, #tpu.memory_space<vmem>>, vector<2x64xbf16>
    %34 = tpu.concatenate %32, %33 in 0 : vector<2x64xbf16>, vector<2x64xbf16> -> vector<4x64xbf16>
    %c4_33 = arith.constant 4 : index
    %c0_34 = arith.constant 0 : index
    %c0_35 = arith.constant 0 : index
    %35 = vector.load %arg1[%c4_33, %c0_34, %c0_35] : memref<9x64x32xbf16, #tpu.memory_space<vmem>>, vector<1x64x32xbf16>
    %36 = vector.shape_cast %35 : vector<1x64x32xbf16> to vector<64x32xbf16>
    %cst_36 = arith.constant dense<0.000000e+00> : vector<4x32xf32>
    %37 = tpu.matmul %34, %36, %cst_36 {dimension_numbers = #tpu.dot_dimension_numbers<[1], [0], [0], [1], [0, 0, 1, 1], [], []>} : vector<4x64xbf16>, vector<64x32xbf16>, vector<4x32xf32> -> vector<4x32xf32>
    %38 = arith.addf %31, %37 : vector<4x32xf32>
    %c0_37 = arith.constant 0 : index
    %c0_38 = arith.constant 0 : index
    %39 = vector.load %arg0[%c0_37, %c0_38] : memref<6x96xbf16, #tpu.memory_space<vmem>>, vector<2x64xbf16>
    %c3_39 = arith.constant 3 : index
    %c0_40 = arith.constant 0 : index
    %40 = vector.load %arg0[%c3_39, %c0_40] : memref<6x96xbf16, #tpu.memory_space<vmem>>, vector<2x64xbf16>
    %41 = tpu.concatenate %39, %40 in 0 : vector<2x64xbf16>, vector<2x64xbf16> -> vector<4x64xbf16>
    %c5 = arith.constant 5 : index
    %c0_41 = arith.constant 0 : index
    %c0_42 = arith.constant 0 : index
    %42 = vector.load %arg1[%c5, %c0_41, %c0_42] : memref<9x64x32xbf16, #tpu.memory_space<vmem>>, vector<1x64x32xbf16>
    %43 = vector.shape_cast %42 : vector<1x64x32xbf16> to vector<64x32xbf16>
    %cst_43 = arith.constant dense<0.000000e+00> : vector<4x32xf32>
    %44 = tpu.matmul %41, %43, %cst_43 {dimension_numbers = #tpu.dot_dimension_numbers<[1], [0], [0], [1], [0, 0, 1, 1], [], []>} : vector<4x64xbf16>, vector<64x32xbf16>, vector<4x32xf32> -> vector<4x32xf32>
    %45 = arith.addf %3, %44 : vector<4x32xf32>
    %c0_44 = arith.constant 0 : index
    %c32_45 = arith.constant 32 : index
    %46 = vector.load %arg0[%c0_44, %c32_45] : memref<6x96xbf16, #tpu.memory_space<vmem>>, vector<2x64xbf16>
    %c3_46 = arith.constant 3 : index
    %c32_47 = arith.constant 32 : index
    %47 = vector.load %arg0[%c3_46, %c32_47] : memref<6x96xbf16, #tpu.memory_space<vmem>>, vector<2x64xbf16>
    %48 = tpu.concatenate %46, %47 in 0 : vector<2x64xbf16>, vector<2x64xbf16> -> vector<4x64xbf16>
    %c6 = arith.constant 6 : index
    %c0_48 = arith.constant 0 : index
    %c0_49 = arith.constant 0 : index
    %49 = vector.load %arg1[%c6, %c0_48, %c0_49] : memref<9x64x32xbf16, #tpu.memory_space<vmem>>, vector<1x64x32xbf16>
    %50 = vector.shape_cast %49 : vector<1x64x32xbf16> to vector<64x32xbf16>
    %cst_50 = arith.constant dense<0.000000e+00> : vector<4x32xf32>
    %51 = tpu.matmul %48, %50, %cst_50 {dimension_numbers = #tpu.dot_dimension_numbers<[1], [0], [0], [1], [0, 0, 1, 1], [], []>} : vector<4x64xbf16>, vector<64x32xbf16>, vector<4x32xf32> -> vector<4x32xf32>
    %52 = arith.addf %45, %51 : vector<4x32xf32>
    %c1_51 = arith.constant 1 : index
    %c0_52 = arith.constant 0 : index
    %53 = vector.load %arg0[%c1_51, %c0_52] : memref<6x96xbf16, #tpu.memory_space<vmem>>, vector<2x64xbf16>
    %c4_53 = arith.constant 4 : index
    %c0_54 = arith.constant 0 : index
    %54 = vector.load %arg0[%c4_53, %c0_54] : memref<6x96xbf16, #tpu.memory_space<vmem>>, vector<2x64xbf16>
    %55 = tpu.concatenate %53, %54 in 0 : vector<2x64xbf16>, vector<2x64xbf16> -> vector<4x64xbf16>
    %c7 = arith.constant 7 : index
    %c0_55 = arith.constant 0 : index
    %c0_56 = arith.constant 0 : index
    %56 = vector.load %arg1[%c7, %c0_55, %c0_56] : memref<9x64x32xbf16, #tpu.memory_space<vmem>>, vector<1x64x32xbf16>
    %57 = vector.shape_cast %56 : vector<1x64x32xbf16> to vector<64x32xbf16>
    %cst_57 = arith.constant dense<0.000000e+00> : vector<4x32xf32>
    %58 = tpu.matmul %55, %57, %cst_57 {dimension_numbers = #tpu.dot_dimension_numbers<[1], [0], [0], [1], [0, 0, 1, 1], [], []>} : vector<4x64xbf16>, vector<64x32xbf16>, vector<4x32xf32> -> vector<4x32xf32>
    %59 = arith.addf %52, %58 : vector<4x32xf32>
    %c1_58 = arith.constant 1 : index
    %c32_59 = arith.constant 32 : index
    %60 = vector.load %arg0[%c1_58, %c32_59] : memref<6x96xbf16, #tpu.memory_space<vmem>>, vector<2x64xbf16>
    %c4_60 = arith.constant 4 : index
    %c32_61 = arith.constant 32 : index
    %61 = vector.load %arg0[%c4_60, %c32_61] : memref<6x96xbf16, #tpu.memory_space<vmem>>, vector<2x64xbf16>
    %62 = tpu.concatenate %60, %61 in 0 : vector<2x64xbf16>, vector<2x64xbf16> -> vector<4x64xbf16>
    %c8 = arith.constant 8 : index
    %c0_62 = arith.constant 0 : index
    %c0_63 = arith.constant 0 : index
    %63 = vector.load %arg1[%c8, %c0_62, %c0_63] : memref<9x64x32xbf16, #tpu.memory_space<vmem>>, vector<1x64x32xbf16>
    %64 = vector.shape_cast %63 : vector<1x64x32xbf16> to vector<64x32xbf16>
    %cst_64 = arith.constant dense<0.000000e+00> : vector<4x32xf32>
    %65 = tpu.matmul %62, %64, %cst_64 {dimension_numbers = #tpu.dot_dimension_numbers<[1], [0], [0], [1], [0, 0, 1, 1], [], []>} : vector<4x64xbf16>, vector<64x32xbf16>, vector<4x32xf32> -> vector<4x32xf32>
    %66 = arith.addf %59, %65 : vector<4x32xf32>
    %c0_65 = arith.constant 0 : index
    %c0_66 = arith.constant 0 : index
    %67 = vector.load %arg2[%c0_65, %c0_66] : memref<1x32xf32, #tpu.memory_space<vmem>>, vector<1x32xf32>
    %68 = vector.broadcast %67 : vector<1x32xf32> to vector<4x32xf32>
    %69 = arith.addf %10, %68 : vector<4x32xf32>
    %c0_67 = arith.constant 0 : index
    %c0_68 = arith.constant 0 : index
    %70 = vector.load %arg2[%c0_67, %c0_68] : memref<1x32xf32, #tpu.memory_space<vmem>>, vector<1x32xf32>
    %71 = vector.broadcast %70 : vector<1x32xf32> to vector<4x32xf32>
    %72 = arith.addf %24, %71 : vector<4x32xf32>
    %c0_69 = arith.constant 0 : index
    %c0_70 = arith.constant 0 : index
    %73 = vector.load %arg2[%c0_69, %c0_70] : memref<1x32xf32, #tpu.memory_space<vmem>>, vector<1x32xf32>
    %74 = vector.broadcast %73 : vector<1x32xf32> to vector<4x32xf32>
    %75 = arith.addf %38, %74 : vector<4x32xf32>
    %c0_71 = arith.constant 0 : index
    %c0_72 = arith.constant 0 : index
    %76 = vector.load %arg2[%c0_71, %c0_72] : memref<1x32xf32, #tpu.memory_space<vmem>>, vector<1x32xf32>
    %77 = vector.broadcast %76 : vector<1x32xf32> to vector<4x32xf32>
    %78 = arith.addf %66, %77 : vector<4x32xf32>
    %cst_73 = arith.constant 0.000000e+00 : f32
    %79 = vector.broadcast %cst_73 : f32 to vector<1x16xf32>
    %cst_74 = arith.constant 0.000000e+00 : f32
    %80 = vector.broadcast %cst_74 : f32 to vector<1x16xf32>
    %cst_75 = arith.constant dense<0.000000e+00> : vector<32xf32>
    %81 = vector.multi_reduction <add>, %69, %cst_75 [0] : vector<4x32xf32> to vector<32xf32>
    %82 = vector.shape_cast %81 : vector<32xf32> to vector<1x32xf32>
    %c0_76 = arith.constant 0 : index
    %c0_77 = arith.constant 0 : index
    %83 = vector.load %arg5[%c0_76, %c0_77] : memref<32x16xf32, #tpu.memory_space<vmem>>, vector<32x16xf32>
    %cst_78 = arith.constant dense<0.000000e+00> : vector<1x16xf32>
    %84 = tpu.matmul %82, %83, %cst_78 {dimension_numbers = #tpu.dot_dimension_numbers<[1], [0], [0], [1], [0, 0, 1, 1], [], []>} : vector<1x32xf32>, vector<32x16xf32>, vector<1x16xf32> -> vector<1x16xf32>
    %85 = arith.addf %79, %84 : vector<1x16xf32>
    %86 = arith.mulf %69, %69 : vector<4x32xf32>
    %cst_79 = arith.constant dense<0.000000e+00> : vector<32xf32>
    %87 = vector.multi_reduction <add>, %86, %cst_79 [0] : vector<4x32xf32> to vector<32xf32>
    %88 = vector.shape_cast %87 : vector<32xf32> to vector<1x32xf32>
    %c0_80 = arith.constant 0 : index
    %c0_81 = arith.constant 0 : index
    %89 = vector.load %arg5[%c0_80, %c0_81] : memref<32x16xf32, #tpu.memory_space<vmem>>, vector<32x16xf32>
    %cst_82 = arith.constant dense<0.000000e+00> : vector<1x16xf32>
    %90 = tpu.matmul %88, %89, %cst_82 {dimension_numbers = #tpu.dot_dimension_numbers<[1], [0], [0], [1], [0, 0, 1, 1], [], []>} : vector<1x32xf32>, vector<32x16xf32>, vector<1x16xf32> -> vector<1x16xf32>
    %91 = arith.addf %80, %90 : vector<1x16xf32>
    %cst_83 = arith.constant dense<0.000000e+00> : vector<32xf32>
    %92 = vector.multi_reduction <add>, %72, %cst_83 [0] : vector<4x32xf32> to vector<32xf32>
    %93 = vector.shape_cast %92 : vector<32xf32> to vector<1x32xf32>
    %c0_84 = arith.constant 0 : index
    %c0_85 = arith.constant 0 : index
    %94 = vector.load %arg5[%c0_84, %c0_85] : memref<32x16xf32, #tpu.memory_space<vmem>>, vector<32x16xf32>
    %cst_86 = arith.constant dense<0.000000e+00> : vector<1x16xf32>
    %95 = tpu.matmul %93, %94, %cst_86 {dimension_numbers = #tpu.dot_dimension_numbers<[1], [0], [0], [1], [0, 0, 1, 1], [], []>} : vector<1x32xf32>, vector<32x16xf32>, vector<1x16xf32> -> vector<1x16xf32>
    %96 = arith.addf %85, %95 : vector<1x16xf32>
    %97 = arith.mulf %72, %72 : vector<4x32xf32>
    %cst_87 = arith.constant dense<0.000000e+00> : vector<32xf32>
    %98 = vector.multi_reduction <add>, %97, %cst_87 [0] : vector<4x32xf32> to vector<32xf32>
    %99 = vector.shape_cast %98 : vector<32xf32> to vector<1x32xf32>
    %c0_88 = arith.constant 0 : index
    %c0_89 = arith.constant 0 : index
    %100 = vector.load %arg5[%c0_88, %c0_89] : memref<32x16xf32, #tpu.memory_space<vmem>>, vector<32x16xf32>
    %cst_90 = arith.constant dense<0.000000e+00> : vector<1x16xf32>
    %101 = tpu.matmul %99, %100, %cst_90 {dimension_numbers = #tpu.dot_dimension_numbers<[1], [0], [0], [1], [0, 0, 1, 1], [], []>} : vector<1x32xf32>, vector<32x16xf32>, vector<1x16xf32> -> vector<1x16xf32>
    %102 = arith.addf %91, %101 : vector<1x16xf32>
    %cst_91 = arith.constant dense<0.000000e+00> : vector<32xf32>
    %103 = vector.multi_reduction <add>, %75, %cst_91 [0] : vector<4x32xf32> to vector<32xf32>
    %104 = vector.shape_cast %103 : vector<32xf32> to vector<1x32xf32>
    %c0_92 = arith.constant 0 : index
    %c0_93 = arith.constant 0 : index
    %105 = vector.load %arg5[%c0_92, %c0_93] : memref<32x16xf32, #tpu.memory_space<vmem>>, vector<32x16xf32>
    %cst_94 = arith.constant dense<0.000000e+00> : vector<1x16xf32>
    %106 = tpu.matmul %104, %105, %cst_94 {dimension_numbers = #tpu.dot_dimension_numbers<[1], [0], [0], [1], [0, 0, 1, 1], [], []>} : vector<1x32xf32>, vector<32x16xf32>, vector<1x16xf32> -> vector<1x16xf32>
    %107 = arith.addf %96, %106 : vector<1x16xf32>
    %108 = arith.mulf %75, %75 : vector<4x32xf32>
    %cst_95 = arith.constant dense<0.000000e+00> : vector<32xf32>
    %109 = vector.multi_reduction <add>, %108, %cst_95 [0] : vector<4x32xf32> to vector<32xf32>
    %110 = vector.shape_cast %109 : vector<32xf32> to vector<1x32xf32>
    %c0_96 = arith.constant 0 : index
    %c0_97 = arith.constant 0 : index
    %111 = vector.load %arg5[%c0_96, %c0_97] : memref<32x16xf32, #tpu.memory_space<vmem>>, vector<32x16xf32>
    %cst_98 = arith.constant dense<0.000000e+00> : vector<1x16xf32>
    %112 = tpu.matmul %110, %111, %cst_98 {dimension_numbers = #tpu.dot_dimension_numbers<[1], [0], [0], [1], [0, 0, 1, 1], [], []>} : vector<1x32xf32>, vector<32x16xf32>, vector<1x16xf32> -> vector<1x16xf32>
    %113 = arith.addf %102, %112 : vector<1x16xf32>
    %cst_99 = arith.constant dense<0.000000e+00> : vector<32xf32>
    %114 = vector.multi_reduction <add>, %78, %cst_99 [0] : vector<4x32xf32> to vector<32xf32>
    %115 = vector.shape_cast %114 : vector<32xf32> to vector<1x32xf32>
    %c0_100 = arith.constant 0 : index
    %c0_101 = arith.constant 0 : index
    %116 = vector.load %arg5[%c0_100, %c0_101] : memref<32x16xf32, #tpu.memory_space<vmem>>, vector<32x16xf32>
    %cst_102 = arith.constant dense<0.000000e+00> : vector<1x16xf32>
    %117 = tpu.matmul %115, %116, %cst_102 {dimension_numbers = #tpu.dot_dimension_numbers<[1], [0], [0], [1], [0, 0, 1, 1], [], []>} : vector<1x32xf32>, vector<32x16xf32>, vector<1x16xf32> -> vector<1x16xf32>
    %118 = arith.addf %107, %117 : vector<1x16xf32>
    %119 = arith.mulf %78, %78 : vector<4x32xf32>
    %cst_103 = arith.constant dense<0.000000e+00> : vector<32xf32>
    %120 = vector.multi_reduction <add>, %119, %cst_103 [0] : vector<4x32xf32> to vector<32xf32>
    %121 = vector.shape_cast %120 : vector<32xf32> to vector<1x32xf32>
    %c0_104 = arith.constant 0 : index
    %c0_105 = arith.constant 0 : index
    %122 = vector.load %arg5[%c0_104, %c0_105] : memref<32x16xf32, #tpu.memory_space<vmem>>, vector<32x16xf32>
    %cst_106 = arith.constant dense<0.000000e+00> : vector<1x16xf32>
    %123 = tpu.matmul %121, %122, %cst_106 {dimension_numbers = #tpu.dot_dimension_numbers<[1], [0], [0], [1], [0, 0, 1, 1], [], []>} : vector<1x32xf32>, vector<32x16xf32>, vector<1x16xf32> -> vector<1x16xf32>
    %124 = arith.addf %113, %123 : vector<1x16xf32>
    %cst_107 = arith.constant 3.200000e+01 : f32
    %125 = vector.broadcast %cst_107 : f32 to vector<1x16xf32>
    %126 = arith.divf %118, %125 : vector<1x16xf32>
    %cst_108 = arith.constant 3.200000e+01 : f32
    %127 = vector.broadcast %cst_108 : f32 to vector<1x16xf32>
    %128 = arith.divf %124, %127 : vector<1x16xf32>
    %129 = arith.mulf %126, %126 : vector<1x16xf32>
    %130 = arith.subf %128, %129 : vector<1x16xf32>
    %c0_109 = arith.constant 0 : index
    %c0_110 = arith.constant 0 : index
    %131 = vector.load %arg3[%c0_109, %c0_110] : memref<1x16xf32, #tpu.memory_space<vmem>>, vector<1x16xf32>
    %cst_111 = arith.constant 9.99999974E-6 : f32
    %132 = vector.broadcast %cst_111 : f32 to vector<1x16xf32>
    %133 = arith.addf %130, %132 : vector<1x16xf32>
    %134 = math.rsqrt %133 : vector<1x16xf32>
    %135 = arith.mulf %131, %134 : vector<1x16xf32>
    %c0_112 = arith.constant 0 : index
    %c0_113 = arith.constant 0 : index
    %136 = vector.load %arg4[%c0_112, %c0_113] : memref<1x16xf32, #tpu.memory_space<vmem>>, vector<1x16xf32>
    %137 = arith.mulf %126, %135 : vector<1x16xf32>
    %138 = arith.subf %136, %137 : vector<1x16xf32>
    %c0_114 = arith.constant 0 : index
    %c0_115 = arith.constant 0 : index
    %139 = vector.load %arg6[%c0_114, %c0_115] : memref<16x32xf32, #tpu.memory_space<vmem>>, vector<16x32xf32>
    %cst_116 = arith.constant dense<0.000000e+00> : vector<1x32xf32>
    %140 = tpu.matmul %135, %139, %cst_116 {dimension_numbers = #tpu.dot_dimension_numbers<[1], [0], [0], [1], [0, 0, 1, 1], [], []>} : vector<1x16xf32>, vector<16x32xf32>, vector<1x32xf32> -> vector<1x32xf32>
    %c0_117 = arith.constant 0 : index
    %c0_118 = arith.constant 0 : index
    %141 = vector.load %arg6[%c0_117, %c0_118] : memref<16x32xf32, #tpu.memory_space<vmem>>, vector<16x32xf32>
    %cst_119 = arith.constant dense<0.000000e+00> : vector<1x32xf32>
    %142 = tpu.matmul %138, %141, %cst_119 {dimension_numbers = #tpu.dot_dimension_numbers<[1], [0], [0], [1], [0, 0, 1, 1], [], []>} : vector<1x16xf32>, vector<16x32xf32>, vector<1x32xf32> -> vector<1x32xf32>
    %143 = vector.broadcast %140 : vector<1x32xf32> to vector<4x32xf32>
    %144 = arith.mulf %69, %143 : vector<4x32xf32>
    %145 = vector.broadcast %142 : vector<1x32xf32> to vector<4x32xf32>
    %146 = arith.addf %144, %145 : vector<4x32xf32>
    %147 = vector.broadcast %140 : vector<1x32xf32> to vector<4x32xf32>
    %148 = arith.mulf %72, %147 : vector<4x32xf32>
    %149 = vector.broadcast %142 : vector<1x32xf32> to vector<4x32xf32>
    %150 = arith.addf %148, %149 : vector<4x32xf32>
    %151 = vector.broadcast %140 : vector<1x32xf32> to vector<4x32xf32>
    %152 = arith.mulf %75, %151 : vector<4x32xf32>
    %153 = vector.broadcast %142 : vector<1x32xf32> to vector<4x32xf32>
    %154 = arith.addf %152, %153 : vector<4x32xf32>
    %155 = vector.broadcast %140 : vector<1x32xf32> to vector<4x32xf32>
    %156 = arith.mulf %78, %155 : vector<4x32xf32>
    %157 = vector.broadcast %142 : vector<1x32xf32> to vector<4x32xf32>
    %158 = arith.addf %156, %157 : vector<4x32xf32>
    %cst_120 = arith.constant 0.000000e+00 : f32
    %159 = vector.broadcast %cst_120 : f32 to vector<4x32xf32>
    %160 = arith.cmpf oge, %146, %159 : vector<4x32xf32>
    %cst_121 = arith.constant 0.00999999977 : f32
    %161 = vector.broadcast %cst_121 : f32 to vector<4x32xf32>
    %162 = arith.mulf %161, %146 : vector<4x32xf32>
    %163 = arith.select %160, %146, %162 : vector<4x32xi1>, vector<4x32xf32>
    %cst_122 = arith.constant 0.000000e+00 : f32
    %164 = vector.broadcast %cst_122 : f32 to vector<4x32xf32>
    %165 = arith.cmpf oge, %150, %164 : vector<4x32xf32>
    %cst_123 = arith.constant 0.00999999977 : f32
    %166 = vector.broadcast %cst_123 : f32 to vector<4x32xf32>
    %167 = arith.mulf %166, %150 : vector<4x32xf32>
    %168 = arith.select %165, %150, %167 : vector<4x32xi1>, vector<4x32xf32>
    %cst_124 = arith.constant 0.000000e+00 : f32
    %169 = vector.broadcast %cst_124 : f32 to vector<4x32xf32>
    %170 = arith.cmpf oge, %154, %169 : vector<4x32xf32>
    %cst_125 = arith.constant 0.00999999977 : f32
    %171 = vector.broadcast %cst_125 : f32 to vector<4x32xf32>
    %172 = arith.mulf %171, %154 : vector<4x32xf32>
    %173 = arith.select %170, %154, %172 : vector<4x32xi1>, vector<4x32xf32>
    %cst_126 = arith.constant 0.000000e+00 : f32
    %174 = vector.broadcast %cst_126 : f32 to vector<4x32xf32>
    %175 = arith.cmpf oge, %158, %174 : vector<4x32xf32>
    %cst_127 = arith.constant 0.00999999977 : f32
    %176 = vector.broadcast %cst_127 : f32 to vector<4x32xf32>
    %177 = arith.mulf %176, %158 : vector<4x32xf32>
    %178 = arith.select %175, %158, %177 : vector<4x32xi1>, vector<4x32xf32>
    %179 = tpu.concatenate %163, %168, %173, %178 in 0 : vector<4x32xf32>, vector<4x32xf32>, vector<4x32xf32>, vector<4x32xf32> -> vector<16x32xf32>
    %180 = arith.truncf %179 : vector<16x32xf32> to vector<16x32xbf16>
    %c0_128 = arith.constant 0 : index
    %c0_129 = arith.constant 0 : index
    %181 = vector.load %arg7[%c0_128, %c0_129] : memref<16x32xbf16, #tpu.memory_space<vmem>>, vector<16x32xbf16>
    tpu.vector_store %arg7[%c0_128, %c0_129], %180 {strides = array<i32>} : memref<16x32xbf16, #tpu.memory_space<vmem>>, vector<16x32xbf16>,
    return
  }
}

module attributes {stable_mosaic.version = 11 : i64} {
  func.func @_deconv_bn_act_kernel(%arg0: memref<10x80xbf16, #tpu.memory_space<vmem>>, %arg1: memref<9x64x32xbf16, #tpu.memory_space<vmem>>, %arg2: memref<1x32xf32, #tpu.memory_space<vmem>>, %arg3: memref<1x8xf32, #tpu.memory_space<vmem>>, %arg4: memref<1x8xf32, #tpu.memory_space<vmem>>, %arg5: memref<32x8xf32, #tpu.memory_space<vmem>>, %arg6: memref<8x32xf32, #tpu.memory_space<vmem>>, %arg7: memref<32x32xbf16, #tpu.memory_space<vmem>>) attributes {dimension_semantics = [], scalar_prefetch = 0 : i64, scratch_operands = 0 : i64, tpu.core_type = #tpu.core_type<tc>} {
    %cst = arith.constant 0.000000e+00 : f32
    %0 = vector.broadcast %cst : f32 to vector<8x32xf32>
    %cst_0 = arith.constant 0.000000e+00 : f32
    %1 = vector.broadcast %cst_0 : f32 to vector<8x32xf32>
    %cst_1 = arith.constant 0.000000e+00 : f32
    %2 = vector.broadcast %cst_1 : f32 to vector<8x32xf32>
    %cst_2 = arith.constant 0.000000e+00 : f32
    %3 = vector.broadcast %cst_2 : f32 to vector<8x32xf32>
    %c0 = arith.constant 0 : index
    %c0_3 = arith.constant 0 : index
    %4 = vector.load %arg0[%c0, %c0_3] : memref<10x80xbf16, #tpu.memory_space<vmem>>, vector<4x64xbf16>
    %c5 = arith.constant 5 : index
    %c0_4 = arith.constant 0 : index
    %5 = vector.load %arg0[%c5, %c0_4] : memref<10x80xbf16, #tpu.memory_space<vmem>>, vector<4x64xbf16>
    %6 = tpu.concatenate %4, %5 in 0 : vector<4x64xbf16>, vector<4x64xbf16> -> vector<8x64xbf16>
    %c0_5 = arith.constant 0 : index
    %c0_6 = arith.constant 0 : index
    %c0_7 = arith.constant 0 : index
    %7 = vector.load %arg1[%c0_5, %c0_6, %c0_7] : memref<9x64x32xbf16, #tpu.memory_space<vmem>>, vector<1x64x32xbf16>
    %8 = vector.shape_cast %7 : vector<1x64x32xbf16> to vector<64x32xbf16>
    %cst_8 = arith.constant dense<0.000000e+00> : vector<8x32xf32>
    %9 = tpu.matmul %6, %8, %cst_8 {dimension_numbers = #tpu.dot_dimension_numbers<[1], [0], [0], [1], [0, 0, 1, 1], [], []>} : vector<8x64xbf16>, vector<64x32xbf16>, vector<8x32xf32> -> vector<8x32xf32>
    %10 = arith.addf %0, %9 : vector<8x32xf32>
    %c0_9 = arith.constant 0 : index
    %c0_10 = arith.constant 0 : index
    %11 = vector.load %arg0[%c0_9, %c0_10] : memref<10x80xbf16, #tpu.memory_space<vmem>>, vector<4x64xbf16>
    %c5_11 = arith.constant 5 : index
    %c0_12 = arith.constant 0 : index
    %12 = vector.load %arg0[%c5_11, %c0_12] : memref<10x80xbf16, #tpu.memory_space<vmem>>, vector<4x64xbf16>
    %13 = tpu.concatenate %11, %12 in 0 : vector<4x64xbf16>, vector<4x64xbf16> -> vector<8x64xbf16>
    %c1 = arith.constant 1 : index
    %c0_13 = arith.constant 0 : index
    %c0_14 = arith.constant 0 : index
    %14 = vector.load %arg1[%c1, %c0_13, %c0_14] : memref<9x64x32xbf16, #tpu.memory_space<vmem>>, vector<1x64x32xbf16>
    %15 = vector.shape_cast %14 : vector<1x64x32xbf16> to vector<64x32xbf16>
    %cst_15 = arith.constant dense<0.000000e+00> : vector<8x32xf32>
    %16 = tpu.matmul %13, %15, %cst_15 {dimension_numbers = #tpu.dot_dimension_numbers<[1], [0], [0], [1], [0, 0, 1, 1], [], []>} : vector<8x64xbf16>, vector<64x32xbf16>, vector<8x32xf32> -> vector<8x32xf32>
    %17 = arith.addf %1, %16 : vector<8x32xf32>
    %c0_16 = arith.constant 0 : index
    %c16 = arith.constant 16 : index
    %18 = vector.load %arg0[%c0_16, %c16] : memref<10x80xbf16, #tpu.memory_space<vmem>>, vector<4x64xbf16>
    %c5_17 = arith.constant 5 : index
    %c16_18 = arith.constant 16 : index
    %19 = vector.load %arg0[%c5_17, %c16_18] : memref<10x80xbf16, #tpu.memory_space<vmem>>, vector<4x64xbf16>
    %20 = tpu.concatenate %18, %19 in 0 : vector<4x64xbf16>, vector<4x64xbf16> -> vector<8x64xbf16>
    %c2 = arith.constant 2 : index
    %c0_19 = arith.constant 0 : index
    %c0_20 = arith.constant 0 : index
    %21 = vector.load %arg1[%c2, %c0_19, %c0_20] : memref<9x64x32xbf16, #tpu.memory_space<vmem>>, vector<1x64x32xbf16>
    %22 = vector.shape_cast %21 : vector<1x64x32xbf16> to vector<64x32xbf16>
    %cst_21 = arith.constant dense<0.000000e+00> : vector<8x32xf32>
    %23 = tpu.matmul %20, %22, %cst_21 {dimension_numbers = #tpu.dot_dimension_numbers<[1], [0], [0], [1], [0, 0, 1, 1], [], []>} : vector<8x64xbf16>, vector<64x32xbf16>, vector<8x32xf32> -> vector<8x32xf32>
    %24 = arith.addf %17, %23 : vector<8x32xf32>
    %c0_22 = arith.constant 0 : index
    %c0_23 = arith.constant 0 : index
    %25 = vector.load %arg0[%c0_22, %c0_23] : memref<10x80xbf16, #tpu.memory_space<vmem>>, vector<4x64xbf16>
    %c5_24 = arith.constant 5 : index
    %c0_25 = arith.constant 0 : index
    %26 = vector.load %arg0[%c5_24, %c0_25] : memref<10x80xbf16, #tpu.memory_space<vmem>>, vector<4x64xbf16>
    %27 = tpu.concatenate %25, %26 in 0 : vector<4x64xbf16>, vector<4x64xbf16> -> vector<8x64xbf16>
    %c3 = arith.constant 3 : index
    %c0_26 = arith.constant 0 : index
    %c0_27 = arith.constant 0 : index
    %28 = vector.load %arg1[%c3, %c0_26, %c0_27] : memref<9x64x32xbf16, #tpu.memory_space<vmem>>, vector<1x64x32xbf16>
    %29 = vector.shape_cast %28 : vector<1x64x32xbf16> to vector<64x32xbf16>
    %cst_28 = arith.constant dense<0.000000e+00> : vector<8x32xf32>
    %30 = tpu.matmul %27, %29, %cst_28 {dimension_numbers = #tpu.dot_dimension_numbers<[1], [0], [0], [1], [0, 0, 1, 1], [], []>} : vector<8x64xbf16>, vector<64x32xbf16>, vector<8x32xf32> -> vector<8x32xf32>
    %31 = arith.addf %2, %30 : vector<8x32xf32>
    %c1_29 = arith.constant 1 : index
    %c0_30 = arith.constant 0 : index
    %32 = vector.load %arg0[%c1_29, %c0_30] : memref<10x80xbf16, #tpu.memory_space<vmem>>, vector<4x64xbf16>
    %c6 = arith.constant 6 : index
    %c0_31 = arith.constant 0 : index
    %33 = vector.load %arg0[%c6, %c0_31] : memref<10x80xbf16, #tpu.memory_space<vmem>>, vector<4x64xbf16>
    %34 = tpu.concatenate %32, %33 in 0 : vector<4x64xbf16>, vector<4x64xbf16> -> vector<8x64xbf16>
    %c4 = arith.constant 4 : index
    %c0_32 = arith.constant 0 : index
    %c0_33 = arith.constant 0 : index
    %35 = vector.load %arg1[%c4, %c0_32, %c0_33] : memref<9x64x32xbf16, #tpu.memory_space<vmem>>, vector<1x64x32xbf16>
    %36 = vector.shape_cast %35 : vector<1x64x32xbf16> to vector<64x32xbf16>
    %cst_34 = arith.constant dense<0.000000e+00> : vector<8x32xf32>
    %37 = tpu.matmul %34, %36, %cst_34 {dimension_numbers = #tpu.dot_dimension_numbers<[1], [0], [0], [1], [0, 0, 1, 1], [], []>} : vector<8x64xbf16>, vector<64x32xbf16>, vector<8x32xf32> -> vector<8x32xf32>
    %38 = arith.addf %31, %37 : vector<8x32xf32>
    %c0_35 = arith.constant 0 : index
    %c0_36 = arith.constant 0 : index
    %39 = vector.load %arg0[%c0_35, %c0_36] : memref<10x80xbf16, #tpu.memory_space<vmem>>, vector<4x64xbf16>
    %c5_37 = arith.constant 5 : index
    %c0_38 = arith.constant 0 : index
    %40 = vector.load %arg0[%c5_37, %c0_38] : memref<10x80xbf16, #tpu.memory_space<vmem>>, vector<4x64xbf16>
    %41 = tpu.concatenate %39, %40 in 0 : vector<4x64xbf16>, vector<4x64xbf16> -> vector<8x64xbf16>
    %c5_39 = arith.constant 5 : index
    %c0_40 = arith.constant 0 : index
    %c0_41 = arith.constant 0 : index
    %42 = vector.load %arg1[%c5_39, %c0_40, %c0_41] : memref<9x64x32xbf16, #tpu.memory_space<vmem>>, vector<1x64x32xbf16>
    %43 = vector.shape_cast %42 : vector<1x64x32xbf16> to vector<64x32xbf16>
    %cst_42 = arith.constant dense<0.000000e+00> : vector<8x32xf32>
    %44 = tpu.matmul %41, %43, %cst_42 {dimension_numbers = #tpu.dot_dimension_numbers<[1], [0], [0], [1], [0, 0, 1, 1], [], []>} : vector<8x64xbf16>, vector<64x32xbf16>, vector<8x32xf32> -> vector<8x32xf32>
    %45 = arith.addf %3, %44 : vector<8x32xf32>
    %c0_43 = arith.constant 0 : index
    %c16_44 = arith.constant 16 : index
    %46 = vector.load %arg0[%c0_43, %c16_44] : memref<10x80xbf16, #tpu.memory_space<vmem>>, vector<4x64xbf16>
    %c5_45 = arith.constant 5 : index
    %c16_46 = arith.constant 16 : index
    %47 = vector.load %arg0[%c5_45, %c16_46] : memref<10x80xbf16, #tpu.memory_space<vmem>>, vector<4x64xbf16>
    %48 = tpu.concatenate %46, %47 in 0 : vector<4x64xbf16>, vector<4x64xbf16> -> vector<8x64xbf16>
    %c6_47 = arith.constant 6 : index
    %c0_48 = arith.constant 0 : index
    %c0_49 = arith.constant 0 : index
    %49 = vector.load %arg1[%c6_47, %c0_48, %c0_49] : memref<9x64x32xbf16, #tpu.memory_space<vmem>>, vector<1x64x32xbf16>
    %50 = vector.shape_cast %49 : vector<1x64x32xbf16> to vector<64x32xbf16>
    %cst_50 = arith.constant dense<0.000000e+00> : vector<8x32xf32>
    %51 = tpu.matmul %48, %50, %cst_50 {dimension_numbers = #tpu.dot_dimension_numbers<[1], [0], [0], [1], [0, 0, 1, 1], [], []>} : vector<8x64xbf16>, vector<64x32xbf16>, vector<8x32xf32> -> vector<8x32xf32>
    %52 = arith.addf %45, %51 : vector<8x32xf32>
    %c1_51 = arith.constant 1 : index
    %c0_52 = arith.constant 0 : index
    %53 = vector.load %arg0[%c1_51, %c0_52] : memref<10x80xbf16, #tpu.memory_space<vmem>>, vector<4x64xbf16>
    %c6_53 = arith.constant 6 : index
    %c0_54 = arith.constant 0 : index
    %54 = vector.load %arg0[%c6_53, %c0_54] : memref<10x80xbf16, #tpu.memory_space<vmem>>, vector<4x64xbf16>
    %55 = tpu.concatenate %53, %54 in 0 : vector<4x64xbf16>, vector<4x64xbf16> -> vector<8x64xbf16>
    %c7 = arith.constant 7 : index
    %c0_55 = arith.constant 0 : index
    %c0_56 = arith.constant 0 : index
    %56 = vector.load %arg1[%c7, %c0_55, %c0_56] : memref<9x64x32xbf16, #tpu.memory_space<vmem>>, vector<1x64x32xbf16>
    %57 = vector.shape_cast %56 : vector<1x64x32xbf16> to vector<64x32xbf16>
    %cst_57 = arith.constant dense<0.000000e+00> : vector<8x32xf32>
    %58 = tpu.matmul %55, %57, %cst_57 {dimension_numbers = #tpu.dot_dimension_numbers<[1], [0], [0], [1], [0, 0, 1, 1], [], []>} : vector<8x64xbf16>, vector<64x32xbf16>, vector<8x32xf32> -> vector<8x32xf32>
    %59 = arith.addf %52, %58 : vector<8x32xf32>
    %c1_58 = arith.constant 1 : index
    %c16_59 = arith.constant 16 : index
    %60 = vector.load %arg0[%c1_58, %c16_59] : memref<10x80xbf16, #tpu.memory_space<vmem>>, vector<4x64xbf16>
    %c6_60 = arith.constant 6 : index
    %c16_61 = arith.constant 16 : index
    %61 = vector.load %arg0[%c6_60, %c16_61] : memref<10x80xbf16, #tpu.memory_space<vmem>>, vector<4x64xbf16>
    %62 = tpu.concatenate %60, %61 in 0 : vector<4x64xbf16>, vector<4x64xbf16> -> vector<8x64xbf16>
    %c8 = arith.constant 8 : index
    %c0_62 = arith.constant 0 : index
    %c0_63 = arith.constant 0 : index
    %63 = vector.load %arg1[%c8, %c0_62, %c0_63] : memref<9x64x32xbf16, #tpu.memory_space<vmem>>, vector<1x64x32xbf16>
    %64 = vector.shape_cast %63 : vector<1x64x32xbf16> to vector<64x32xbf16>
    %cst_64 = arith.constant dense<0.000000e+00> : vector<8x32xf32>
    %65 = tpu.matmul %62, %64, %cst_64 {dimension_numbers = #tpu.dot_dimension_numbers<[1], [0], [0], [1], [0, 0, 1, 1], [], []>} : vector<8x64xbf16>, vector<64x32xbf16>, vector<8x32xf32> -> vector<8x32xf32>
    %66 = arith.addf %59, %65 : vector<8x32xf32>
    %c0_65 = arith.constant 0 : index
    %c0_66 = arith.constant 0 : index
    %67 = vector.load %arg2[%c0_65, %c0_66] : memref<1x32xf32, #tpu.memory_space<vmem>>, vector<1x32xf32>
    %68 = vector.broadcast %67 : vector<1x32xf32> to vector<8x32xf32>
    %69 = arith.addf %10, %68 : vector<8x32xf32>
    %c0_67 = arith.constant 0 : index
    %c0_68 = arith.constant 0 : index
    %70 = vector.load %arg2[%c0_67, %c0_68] : memref<1x32xf32, #tpu.memory_space<vmem>>, vector<1x32xf32>
    %71 = vector.broadcast %70 : vector<1x32xf32> to vector<8x32xf32>
    %72 = arith.addf %24, %71 : vector<8x32xf32>
    %c0_69 = arith.constant 0 : index
    %c0_70 = arith.constant 0 : index
    %73 = vector.load %arg2[%c0_69, %c0_70] : memref<1x32xf32, #tpu.memory_space<vmem>>, vector<1x32xf32>
    %74 = vector.broadcast %73 : vector<1x32xf32> to vector<8x32xf32>
    %75 = arith.addf %38, %74 : vector<8x32xf32>
    %c0_71 = arith.constant 0 : index
    %c0_72 = arith.constant 0 : index
    %76 = vector.load %arg2[%c0_71, %c0_72] : memref<1x32xf32, #tpu.memory_space<vmem>>, vector<1x32xf32>
    %77 = vector.broadcast %76 : vector<1x32xf32> to vector<8x32xf32>
    %78 = arith.addf %66, %77 : vector<8x32xf32>
    %cst_73 = arith.constant 0.000000e+00 : f32
    %79 = vector.broadcast %cst_73 : f32 to vector<1x8xf32>
    %cst_74 = arith.constant 0.000000e+00 : f32
    %80 = vector.broadcast %cst_74 : f32 to vector<1x8xf32>
    %cst_75 = arith.constant dense<0.000000e+00> : vector<32xf32>
    %81 = vector.multi_reduction <add>, %69, %cst_75 [0] : vector<8x32xf32> to vector<32xf32>
    %82 = vector.shape_cast %81 : vector<32xf32> to vector<1x32xf32>
    %c0_76 = arith.constant 0 : index
    %c0_77 = arith.constant 0 : index
    %83 = vector.load %arg5[%c0_76, %c0_77] : memref<32x8xf32, #tpu.memory_space<vmem>>, vector<32x8xf32>
    %cst_78 = arith.constant dense<0.000000e+00> : vector<1x8xf32>
    %84 = tpu.matmul %82, %83, %cst_78 {dimension_numbers = #tpu.dot_dimension_numbers<[1], [0], [0], [1], [0, 0, 1, 1], [], []>} : vector<1x32xf32>, vector<32x8xf32>, vector<1x8xf32> -> vector<1x8xf32>
    %85 = arith.addf %79, %84 : vector<1x8xf32>
    %86 = arith.mulf %69, %69 : vector<8x32xf32>
    %cst_79 = arith.constant dense<0.000000e+00> : vector<32xf32>
    %87 = vector.multi_reduction <add>, %86, %cst_79 [0] : vector<8x32xf32> to vector<32xf32>
    %88 = vector.shape_cast %87 : vector<32xf32> to vector<1x32xf32>
    %c0_80 = arith.constant 0 : index
    %c0_81 = arith.constant 0 : index
    %89 = vector.load %arg5[%c0_80, %c0_81] : memref<32x8xf32, #tpu.memory_space<vmem>>, vector<32x8xf32>
    %cst_82 = arith.constant dense<0.000000e+00> : vector<1x8xf32>
    %90 = tpu.matmul %88, %89, %cst_82 {dimension_numbers = #tpu.dot_dimension_numbers<[1], [0], [0], [1], [0, 0, 1, 1], [], []>} : vector<1x32xf32>, vector<32x8xf32>, vector<1x8xf32> -> vector<1x8xf32>
    %91 = arith.addf %80, %90 : vector<1x8xf32>
    %cst_83 = arith.constant dense<0.000000e+00> : vector<32xf32>
    %92 = vector.multi_reduction <add>, %72, %cst_83 [0] : vector<8x32xf32> to vector<32xf32>
    %93 = vector.shape_cast %92 : vector<32xf32> to vector<1x32xf32>
    %c0_84 = arith.constant 0 : index
    %c0_85 = arith.constant 0 : index
    %94 = vector.load %arg5[%c0_84, %c0_85] : memref<32x8xf32, #tpu.memory_space<vmem>>, vector<32x8xf32>
    %cst_86 = arith.constant dense<0.000000e+00> : vector<1x8xf32>
    %95 = tpu.matmul %93, %94, %cst_86 {dimension_numbers = #tpu.dot_dimension_numbers<[1], [0], [0], [1], [0, 0, 1, 1], [], []>} : vector<1x32xf32>, vector<32x8xf32>, vector<1x8xf32> -> vector<1x8xf32>
    %96 = arith.addf %85, %95 : vector<1x8xf32>
    %97 = arith.mulf %72, %72 : vector<8x32xf32>
    %cst_87 = arith.constant dense<0.000000e+00> : vector<32xf32>
    %98 = vector.multi_reduction <add>, %97, %cst_87 [0] : vector<8x32xf32> to vector<32xf32>
    %99 = vector.shape_cast %98 : vector<32xf32> to vector<1x32xf32>
    %c0_88 = arith.constant 0 : index
    %c0_89 = arith.constant 0 : index
    %100 = vector.load %arg5[%c0_88, %c0_89] : memref<32x8xf32, #tpu.memory_space<vmem>>, vector<32x8xf32>
    %cst_90 = arith.constant dense<0.000000e+00> : vector<1x8xf32>
    %101 = tpu.matmul %99, %100, %cst_90 {dimension_numbers = #tpu.dot_dimension_numbers<[1], [0], [0], [1], [0, 0, 1, 1], [], []>} : vector<1x32xf32>, vector<32x8xf32>, vector<1x8xf32> -> vector<1x8xf32>
    %102 = arith.addf %91, %101 : vector<1x8xf32>
    %cst_91 = arith.constant dense<0.000000e+00> : vector<32xf32>
    %103 = vector.multi_reduction <add>, %75, %cst_91 [0] : vector<8x32xf32> to vector<32xf32>
    %104 = vector.shape_cast %103 : vector<32xf32> to vector<1x32xf32>
    %c0_92 = arith.constant 0 : index
    %c0_93 = arith.constant 0 : index
    %105 = vector.load %arg5[%c0_92, %c0_93] : memref<32x8xf32, #tpu.memory_space<vmem>>, vector<32x8xf32>
    %cst_94 = arith.constant dense<0.000000e+00> : vector<1x8xf32>
    %106 = tpu.matmul %104, %105, %cst_94 {dimension_numbers = #tpu.dot_dimension_numbers<[1], [0], [0], [1], [0, 0, 1, 1], [], []>} : vector<1x32xf32>, vector<32x8xf32>, vector<1x8xf32> -> vector<1x8xf32>
    %107 = arith.addf %96, %106 : vector<1x8xf32>
    %108 = arith.mulf %75, %75 : vector<8x32xf32>
    %cst_95 = arith.constant dense<0.000000e+00> : vector<32xf32>
    %109 = vector.multi_reduction <add>, %108, %cst_95 [0] : vector<8x32xf32> to vector<32xf32>
    %110 = vector.shape_cast %109 : vector<32xf32> to vector<1x32xf32>
    %c0_96 = arith.constant 0 : index
    %c0_97 = arith.constant 0 : index
    %111 = vector.load %arg5[%c0_96, %c0_97] : memref<32x8xf32, #tpu.memory_space<vmem>>, vector<32x8xf32>
    %cst_98 = arith.constant dense<0.000000e+00> : vector<1x8xf32>
    %112 = tpu.matmul %110, %111, %cst_98 {dimension_numbers = #tpu.dot_dimension_numbers<[1], [0], [0], [1], [0, 0, 1, 1], [], []>} : vector<1x32xf32>, vector<32x8xf32>, vector<1x8xf32> -> vector<1x8xf32>
    %113 = arith.addf %102, %112 : vector<1x8xf32>
    %cst_99 = arith.constant dense<0.000000e+00> : vector<32xf32>
    %114 = vector.multi_reduction <add>, %78, %cst_99 [0] : vector<8x32xf32> to vector<32xf32>
    %115 = vector.shape_cast %114 : vector<32xf32> to vector<1x32xf32>
    %c0_100 = arith.constant 0 : index
    %c0_101 = arith.constant 0 : index
    %116 = vector.load %arg5[%c0_100, %c0_101] : memref<32x8xf32, #tpu.memory_space<vmem>>, vector<32x8xf32>
    %cst_102 = arith.constant dense<0.000000e+00> : vector<1x8xf32>
    %117 = tpu.matmul %115, %116, %cst_102 {dimension_numbers = #tpu.dot_dimension_numbers<[1], [0], [0], [1], [0, 0, 1, 1], [], []>} : vector<1x32xf32>, vector<32x8xf32>, vector<1x8xf32> -> vector<1x8xf32>
    %118 = arith.addf %107, %117 : vector<1x8xf32>
    %119 = arith.mulf %78, %78 : vector<8x32xf32>
    %cst_103 = arith.constant dense<0.000000e+00> : vector<32xf32>
    %120 = vector.multi_reduction <add>, %119, %cst_103 [0] : vector<8x32xf32> to vector<32xf32>
    %121 = vector.shape_cast %120 : vector<32xf32> to vector<1x32xf32>
    %c0_104 = arith.constant 0 : index
    %c0_105 = arith.constant 0 : index
    %122 = vector.load %arg5[%c0_104, %c0_105] : memref<32x8xf32, #tpu.memory_space<vmem>>, vector<32x8xf32>
    %cst_106 = arith.constant dense<0.000000e+00> : vector<1x8xf32>
    %123 = tpu.matmul %121, %122, %cst_106 {dimension_numbers = #tpu.dot_dimension_numbers<[1], [0], [0], [1], [0, 0, 1, 1], [], []>} : vector<1x32xf32>, vector<32x8xf32>, vector<1x8xf32> -> vector<1x8xf32>
    %124 = arith.addf %113, %123 : vector<1x8xf32>
    %cst_107 = arith.constant 1.280000e+02 : f32
    %125 = vector.broadcast %cst_107 : f32 to vector<1x8xf32>
    %126 = arith.divf %118, %125 : vector<1x8xf32>
    %cst_108 = arith.constant 1.280000e+02 : f32
    %127 = vector.broadcast %cst_108 : f32 to vector<1x8xf32>
    %128 = arith.divf %124, %127 : vector<1x8xf32>
    %129 = arith.mulf %126, %126 : vector<1x8xf32>
    %130 = arith.subf %128, %129 : vector<1x8xf32>
    %c0_109 = arith.constant 0 : index
    %c0_110 = arith.constant 0 : index
    %131 = vector.load %arg3[%c0_109, %c0_110] : memref<1x8xf32, #tpu.memory_space<vmem>>, vector<1x8xf32>
    %cst_111 = arith.constant 9.99999974E-6 : f32
    %132 = vector.broadcast %cst_111 : f32 to vector<1x8xf32>
    %133 = arith.addf %130, %132 : vector<1x8xf32>
    %134 = math.rsqrt %133 : vector<1x8xf32>
    %135 = arith.mulf %131, %134 : vector<1x8xf32>
    %c0_112 = arith.constant 0 : index
    %c0_113 = arith.constant 0 : index
    %136 = vector.load %arg4[%c0_112, %c0_113] : memref<1x8xf32, #tpu.memory_space<vmem>>, vector<1x8xf32>
    %137 = arith.mulf %126, %135 : vector<1x8xf32>
    %138 = arith.subf %136, %137 : vector<1x8xf32>
    %c0_114 = arith.constant 0 : index
    %c0_115 = arith.constant 0 : index
    %139 = vector.load %arg6[%c0_114, %c0_115] : memref<8x32xf32, #tpu.memory_space<vmem>>, vector<8x32xf32>
    %cst_116 = arith.constant dense<0.000000e+00> : vector<1x32xf32>
    %140 = tpu.matmul %135, %139, %cst_116 {dimension_numbers = #tpu.dot_dimension_numbers<[1], [0], [0], [1], [0, 0, 1, 1], [], []>} : vector<1x8xf32>, vector<8x32xf32>, vector<1x32xf32> -> vector<1x32xf32>
    %c0_117 = arith.constant 0 : index
    %c0_118 = arith.constant 0 : index
    %141 = vector.load %arg6[%c0_117, %c0_118] : memref<8x32xf32, #tpu.memory_space<vmem>>, vector<8x32xf32>
    %cst_119 = arith.constant dense<0.000000e+00> : vector<1x32xf32>
    %142 = tpu.matmul %138, %141, %cst_119 {dimension_numbers = #tpu.dot_dimension_numbers<[1], [0], [0], [1], [0, 0, 1, 1], [], []>} : vector<1x8xf32>, vector<8x32xf32>, vector<1x32xf32> -> vector<1x32xf32>
    %143 = vector.broadcast %140 : vector<1x32xf32> to vector<8x32xf32>
    %144 = arith.mulf %69, %143 : vector<8x32xf32>
    %145 = vector.broadcast %142 : vector<1x32xf32> to vector<8x32xf32>
    %146 = arith.addf %144, %145 : vector<8x32xf32>
    %147 = vector.broadcast %140 : vector<1x32xf32> to vector<8x32xf32>
    %148 = arith.mulf %72, %147 : vector<8x32xf32>
    %149 = vector.broadcast %142 : vector<1x32xf32> to vector<8x32xf32>
    %150 = arith.addf %148, %149 : vector<8x32xf32>
    %151 = vector.broadcast %140 : vector<1x32xf32> to vector<8x32xf32>
    %152 = arith.mulf %75, %151 : vector<8x32xf32>
    %153 = vector.broadcast %142 : vector<1x32xf32> to vector<8x32xf32>
    %154 = arith.addf %152, %153 : vector<8x32xf32>
    %155 = vector.broadcast %140 : vector<1x32xf32> to vector<8x32xf32>
    %156 = arith.mulf %78, %155 : vector<8x32xf32>
    %157 = vector.broadcast %142 : vector<1x32xf32> to vector<8x32xf32>
    %158 = arith.addf %156, %157 : vector<8x32xf32>
    %cst_120 = arith.constant 0.000000e+00 : f32
    %159 = vector.broadcast %cst_120 : f32 to vector<8x32xf32>
    %160 = arith.cmpf oge, %146, %159 : vector<8x32xf32>
    %cst_121 = arith.constant 0.00999999977 : f32
    %161 = vector.broadcast %cst_121 : f32 to vector<8x32xf32>
    %162 = arith.mulf %161, %146 : vector<8x32xf32>
    %163 = arith.select %160, %146, %162 : vector<8x32xi1>, vector<8x32xf32>
    %cst_122 = arith.constant 0.000000e+00 : f32
    %164 = vector.broadcast %cst_122 : f32 to vector<8x32xf32>
    %165 = arith.cmpf oge, %150, %164 : vector<8x32xf32>
    %cst_123 = arith.constant 0.00999999977 : f32
    %166 = vector.broadcast %cst_123 : f32 to vector<8x32xf32>
    %167 = arith.mulf %166, %150 : vector<8x32xf32>
    %168 = arith.select %165, %150, %167 : vector<8x32xi1>, vector<8x32xf32>
    %cst_124 = arith.constant 0.000000e+00 : f32
    %169 = vector.broadcast %cst_124 : f32 to vector<8x32xf32>
    %170 = arith.cmpf oge, %154, %169 : vector<8x32xf32>
    %cst_125 = arith.constant 0.00999999977 : f32
    %171 = vector.broadcast %cst_125 : f32 to vector<8x32xf32>
    %172 = arith.mulf %171, %154 : vector<8x32xf32>
    %173 = arith.select %170, %154, %172 : vector<8x32xi1>, vector<8x32xf32>
    %cst_126 = arith.constant 0.000000e+00 : f32
    %174 = vector.broadcast %cst_126 : f32 to vector<8x32xf32>
    %175 = arith.cmpf oge, %158, %174 : vector<8x32xf32>
    %cst_127 = arith.constant 0.00999999977 : f32
    %176 = vector.broadcast %cst_127 : f32 to vector<8x32xf32>
    %177 = arith.mulf %176, %158 : vector<8x32xf32>
    %178 = arith.select %175, %158, %177 : vector<8x32xi1>, vector<8x32xf32>
    %179 = tpu.concatenate %163, %168, %173, %178 in 0 : vector<8x32xf32>, vector<8x32xf32>, vector<8x32xf32>, vector<8x32xf32> -> vector<32x32xf32>
    %180 = arith.truncf %179 : vector<32x32xf32> to vector<32x32xbf16>
    %c0_128 = arith.constant 0 : index
    %c0_129 = arith.constant 0 : index
    %181 = vector.load %arg7[%c0_128, %c0_129] : memref<32x32xbf16, #tpu.memory_space<vmem>>, vector<32x32xbf16>
    tpu.vector_store %arg7[%c0_128, %c0_129], %180 {strides = array<i32>} : memref<32x32xbf16, #tpu.memory_space<vmem>>, vector<32x32xbf16>,
    return
  }
}

module attributes {stable_mosaic.version = 11 : i64} {
  func.func @_deconv_bn_act_kernel(%arg0: memref<18x72xbf16, #tpu.memory_space<vmem>>, %arg1: memref<9x64x24xbf16, #tpu.memory_space<vmem>>, %arg2: memref<1x24xf32, #tpu.memory_space<vmem>>, %arg3: memref<1x3xf32, #tpu.memory_space<vmem>>, %arg4: memref<1x3xf32, #tpu.memory_space<vmem>>, %arg5: memref<24x3xf32, #tpu.memory_space<vmem>>, %arg6: memref<3x24xf32, #tpu.memory_space<vmem>>, %arg7: memref<64x24xf32, #tpu.memory_space<vmem>>) attributes {dimension_semantics = [], scalar_prefetch = 0 : i64, scratch_operands = 0 : i64, tpu.core_type = #tpu.core_type<tc>} {
    %cst = arith.constant 0.000000e+00 : f32
    %0 = vector.broadcast %cst : f32 to vector<16x24xf32>
    %cst_0 = arith.constant 0.000000e+00 : f32
    %1 = vector.broadcast %cst_0 : f32 to vector<16x24xf32>
    %cst_1 = arith.constant 0.000000e+00 : f32
    %2 = vector.broadcast %cst_1 : f32 to vector<16x24xf32>
    %cst_2 = arith.constant 0.000000e+00 : f32
    %3 = vector.broadcast %cst_2 : f32 to vector<16x24xf32>
    %c0 = arith.constant 0 : index
    %c0_3 = arith.constant 0 : index
    %4 = vector.load %arg0[%c0, %c0_3] : memref<18x72xbf16, #tpu.memory_space<vmem>>, vector<8x64xbf16>
    %c9 = arith.constant 9 : index
    %c0_4 = arith.constant 0 : index
    %5 = vector.load %arg0[%c9, %c0_4] : memref<18x72xbf16, #tpu.memory_space<vmem>>, vector<8x64xbf16>
    %6 = tpu.concatenate %4, %5 in 0 : vector<8x64xbf16>, vector<8x64xbf16> -> vector<16x64xbf16>
    %c0_5 = arith.constant 0 : index
    %c0_6 = arith.constant 0 : index
    %c0_7 = arith.constant 0 : index
    %7 = vector.load %arg1[%c0_5, %c0_6, %c0_7] : memref<9x64x24xbf16, #tpu.memory_space<vmem>>, vector<1x64x24xbf16>
    %8 = vector.shape_cast %7 : vector<1x64x24xbf16> to vector<64x24xbf16>
    %cst_8 = arith.constant dense<0.000000e+00> : vector<16x24xf32>
    %9 = tpu.matmul %6, %8, %cst_8 {dimension_numbers = #tpu.dot_dimension_numbers<[1], [0], [0], [1], [0, 0, 1, 1], [], []>} : vector<16x64xbf16>, vector<64x24xbf16>, vector<16x24xf32> -> vector<16x24xf32>
    %10 = arith.addf %0, %9 : vector<16x24xf32>
    %c0_9 = arith.constant 0 : index
    %c0_10 = arith.constant 0 : index
    %11 = vector.load %arg0[%c0_9, %c0_10] : memref<18x72xbf16, #tpu.memory_space<vmem>>, vector<8x64xbf16>
    %c9_11 = arith.constant 9 : index
    %c0_12 = arith.constant 0 : index
    %12 = vector.load %arg0[%c9_11, %c0_12] : memref<18x72xbf16, #tpu.memory_space<vmem>>, vector<8x64xbf16>
    %13 = tpu.concatenate %11, %12 in 0 : vector<8x64xbf16>, vector<8x64xbf16> -> vector<16x64xbf16>
    %c1 = arith.constant 1 : index
    %c0_13 = arith.constant 0 : index
    %c0_14 = arith.constant 0 : index
    %14 = vector.load %arg1[%c1, %c0_13, %c0_14] : memref<9x64x24xbf16, #tpu.memory_space<vmem>>, vector<1x64x24xbf16>
    %15 = vector.shape_cast %14 : vector<1x64x24xbf16> to vector<64x24xbf16>
    %cst_15 = arith.constant dense<0.000000e+00> : vector<16x24xf32>
    %16 = tpu.matmul %13, %15, %cst_15 {dimension_numbers = #tpu.dot_dimension_numbers<[1], [0], [0], [1], [0, 0, 1, 1], [], []>} : vector<16x64xbf16>, vector<64x24xbf16>, vector<16x24xf32> -> vector<16x24xf32>
    %17 = arith.addf %1, %16 : vector<16x24xf32>
    %c0_16 = arith.constant 0 : index
    %c8 = arith.constant 8 : index
    %18 = vector.load %arg0[%c0_16, %c8] : memref<18x72xbf16, #tpu.memory_space<vmem>>, vector<8x64xbf16>
    %c9_17 = arith.constant 9 : index
    %c8_18 = arith.constant 8 : index
    %19 = vector.load %arg0[%c9_17, %c8_18] : memref<18x72xbf16, #tpu.memory_space<vmem>>, vector<8x64xbf16>
    %20 = tpu.concatenate %18, %19 in 0 : vector<8x64xbf16>, vector<8x64xbf16> -> vector<16x64xbf16>
    %c2 = arith.constant 2 : index
    %c0_19 = arith.constant 0 : index
    %c0_20 = arith.constant 0 : index
    %21 = vector.load %arg1[%c2, %c0_19, %c0_20] : memref<9x64x24xbf16, #tpu.memory_space<vmem>>, vector<1x64x24xbf16>
    %22 = vector.shape_cast %21 : vector<1x64x24xbf16> to vector<64x24xbf16>
    %cst_21 = arith.constant dense<0.000000e+00> : vector<16x24xf32>
    %23 = tpu.matmul %20, %22, %cst_21 {dimension_numbers = #tpu.dot_dimension_numbers<[1], [0], [0], [1], [0, 0, 1, 1], [], []>} : vector<16x64xbf16>, vector<64x24xbf16>, vector<16x24xf32> -> vector<16x24xf32>
    %24 = arith.addf %17, %23 : vector<16x24xf32>
    %c0_22 = arith.constant 0 : index
    %c0_23 = arith.constant 0 : index
    %25 = vector.load %arg0[%c0_22, %c0_23] : memref<18x72xbf16, #tpu.memory_space<vmem>>, vector<8x64xbf16>
    %c9_24 = arith.constant 9 : index
    %c0_25 = arith.constant 0 : index
    %26 = vector.load %arg0[%c9_24, %c0_25] : memref<18x72xbf16, #tpu.memory_space<vmem>>, vector<8x64xbf16>
    %27 = tpu.concatenate %25, %26 in 0 : vector<8x64xbf16>, vector<8x64xbf16> -> vector<16x64xbf16>
    %c3 = arith.constant 3 : index
    %c0_26 = arith.constant 0 : index
    %c0_27 = arith.constant 0 : index
    %28 = vector.load %arg1[%c3, %c0_26, %c0_27] : memref<9x64x24xbf16, #tpu.memory_space<vmem>>, vector<1x64x24xbf16>
    %29 = vector.shape_cast %28 : vector<1x64x24xbf16> to vector<64x24xbf16>
    %cst_28 = arith.constant dense<0.000000e+00> : vector<16x24xf32>
    %30 = tpu.matmul %27, %29, %cst_28 {dimension_numbers = #tpu.dot_dimension_numbers<[1], [0], [0], [1], [0, 0, 1, 1], [], []>} : vector<16x64xbf16>, vector<64x24xbf16>, vector<16x24xf32> -> vector<16x24xf32>
    %31 = arith.addf %2, %30 : vector<16x24xf32>
    %c1_29 = arith.constant 1 : index
    %c0_30 = arith.constant 0 : index
    %32 = vector.load %arg0[%c1_29, %c0_30] : memref<18x72xbf16, #tpu.memory_space<vmem>>, vector<8x64xbf16>
    %c10 = arith.constant 10 : index
    %c0_31 = arith.constant 0 : index
    %33 = vector.load %arg0[%c10, %c0_31] : memref<18x72xbf16, #tpu.memory_space<vmem>>, vector<8x64xbf16>
    %34 = tpu.concatenate %32, %33 in 0 : vector<8x64xbf16>, vector<8x64xbf16> -> vector<16x64xbf16>
    %c4 = arith.constant 4 : index
    %c0_32 = arith.constant 0 : index
    %c0_33 = arith.constant 0 : index
    %35 = vector.load %arg1[%c4, %c0_32, %c0_33] : memref<9x64x24xbf16, #tpu.memory_space<vmem>>, vector<1x64x24xbf16>
    %36 = vector.shape_cast %35 : vector<1x64x24xbf16> to vector<64x24xbf16>
    %cst_34 = arith.constant dense<0.000000e+00> : vector<16x24xf32>
    %37 = tpu.matmul %34, %36, %cst_34 {dimension_numbers = #tpu.dot_dimension_numbers<[1], [0], [0], [1], [0, 0, 1, 1], [], []>} : vector<16x64xbf16>, vector<64x24xbf16>, vector<16x24xf32> -> vector<16x24xf32>
    %38 = arith.addf %31, %37 : vector<16x24xf32>
    %c0_35 = arith.constant 0 : index
    %c0_36 = arith.constant 0 : index
    %39 = vector.load %arg0[%c0_35, %c0_36] : memref<18x72xbf16, #tpu.memory_space<vmem>>, vector<8x64xbf16>
    %c9_37 = arith.constant 9 : index
    %c0_38 = arith.constant 0 : index
    %40 = vector.load %arg0[%c9_37, %c0_38] : memref<18x72xbf16, #tpu.memory_space<vmem>>, vector<8x64xbf16>
    %41 = tpu.concatenate %39, %40 in 0 : vector<8x64xbf16>, vector<8x64xbf16> -> vector<16x64xbf16>
    %c5 = arith.constant 5 : index
    %c0_39 = arith.constant 0 : index
    %c0_40 = arith.constant 0 : index
    %42 = vector.load %arg1[%c5, %c0_39, %c0_40] : memref<9x64x24xbf16, #tpu.memory_space<vmem>>, vector<1x64x24xbf16>
    %43 = vector.shape_cast %42 : vector<1x64x24xbf16> to vector<64x24xbf16>
    %cst_41 = arith.constant dense<0.000000e+00> : vector<16x24xf32>
    %44 = tpu.matmul %41, %43, %cst_41 {dimension_numbers = #tpu.dot_dimension_numbers<[1], [0], [0], [1], [0, 0, 1, 1], [], []>} : vector<16x64xbf16>, vector<64x24xbf16>, vector<16x24xf32> -> vector<16x24xf32>
    %45 = arith.addf %3, %44 : vector<16x24xf32>
    %c0_42 = arith.constant 0 : index
    %c8_43 = arith.constant 8 : index
    %46 = vector.load %arg0[%c0_42, %c8_43] : memref<18x72xbf16, #tpu.memory_space<vmem>>, vector<8x64xbf16>
    %c9_44 = arith.constant 9 : index
    %c8_45 = arith.constant 8 : index
    %47 = vector.load %arg0[%c9_44, %c8_45] : memref<18x72xbf16, #tpu.memory_space<vmem>>, vector<8x64xbf16>
    %48 = tpu.concatenate %46, %47 in 0 : vector<8x64xbf16>, vector<8x64xbf16> -> vector<16x64xbf16>
    %c6 = arith.constant 6 : index
    %c0_46 = arith.constant 0 : index
    %c0_47 = arith.constant 0 : index
    %49 = vector.load %arg1[%c6, %c0_46, %c0_47] : memref<9x64x24xbf16, #tpu.memory_space<vmem>>, vector<1x64x24xbf16>
    %50 = vector.shape_cast %49 : vector<1x64x24xbf16> to vector<64x24xbf16>
    %cst_48 = arith.constant dense<0.000000e+00> : vector<16x24xf32>
    %51 = tpu.matmul %48, %50, %cst_48 {dimension_numbers = #tpu.dot_dimension_numbers<[1], [0], [0], [1], [0, 0, 1, 1], [], []>} : vector<16x64xbf16>, vector<64x24xbf16>, vector<16x24xf32> -> vector<16x24xf32>
    %52 = arith.addf %45, %51 : vector<16x24xf32>
    %c1_49 = arith.constant 1 : index
    %c0_50 = arith.constant 0 : index
    %53 = vector.load %arg0[%c1_49, %c0_50] : memref<18x72xbf16, #tpu.memory_space<vmem>>, vector<8x64xbf16>
    %c10_51 = arith.constant 10 : index
    %c0_52 = arith.constant 0 : index
    %54 = vector.load %arg0[%c10_51, %c0_52] : memref<18x72xbf16, #tpu.memory_space<vmem>>, vector<8x64xbf16>
    %55 = tpu.concatenate %53, %54 in 0 : vector<8x64xbf16>, vector<8x64xbf16> -> vector<16x64xbf16>
    %c7 = arith.constant 7 : index
    %c0_53 = arith.constant 0 : index
    %c0_54 = arith.constant 0 : index
    %56 = vector.load %arg1[%c7, %c0_53, %c0_54] : memref<9x64x24xbf16, #tpu.memory_space<vmem>>, vector<1x64x24xbf16>
    %57 = vector.shape_cast %56 : vector<1x64x24xbf16> to vector<64x24xbf16>
    %cst_55 = arith.constant dense<0.000000e+00> : vector<16x24xf32>
    %58 = tpu.matmul %55, %57, %cst_55 {dimension_numbers = #tpu.dot_dimension_numbers<[1], [0], [0], [1], [0, 0, 1, 1], [], []>} : vector<16x64xbf16>, vector<64x24xbf16>, vector<16x24xf32> -> vector<16x24xf32>
    %59 = arith.addf %52, %58 : vector<16x24xf32>
    %c1_56 = arith.constant 1 : index
    %c8_57 = arith.constant 8 : index
    %60 = vector.load %arg0[%c1_56, %c8_57] : memref<18x72xbf16, #tpu.memory_space<vmem>>, vector<8x64xbf16>
    %c10_58 = arith.constant 10 : index
    %c8_59 = arith.constant 8 : index
    %61 = vector.load %arg0[%c10_58, %c8_59] : memref<18x72xbf16, #tpu.memory_space<vmem>>, vector<8x64xbf16>
    %62 = tpu.concatenate %60, %61 in 0 : vector<8x64xbf16>, vector<8x64xbf16> -> vector<16x64xbf16>
    %c8_60 = arith.constant 8 : index
    %c0_61 = arith.constant 0 : index
    %c0_62 = arith.constant 0 : index
    %63 = vector.load %arg1[%c8_60, %c0_61, %c0_62] : memref<9x64x24xbf16, #tpu.memory_space<vmem>>, vector<1x64x24xbf16>
    %64 = vector.shape_cast %63 : vector<1x64x24xbf16> to vector<64x24xbf16>
    %cst_63 = arith.constant dense<0.000000e+00> : vector<16x24xf32>
    %65 = tpu.matmul %62, %64, %cst_63 {dimension_numbers = #tpu.dot_dimension_numbers<[1], [0], [0], [1], [0, 0, 1, 1], [], []>} : vector<16x64xbf16>, vector<64x24xbf16>, vector<16x24xf32> -> vector<16x24xf32>
    %66 = arith.addf %59, %65 : vector<16x24xf32>
    %c0_64 = arith.constant 0 : index
    %c0_65 = arith.constant 0 : index
    %67 = vector.load %arg2[%c0_64, %c0_65] : memref<1x24xf32, #tpu.memory_space<vmem>>, vector<1x24xf32>
    %68 = vector.broadcast %67 : vector<1x24xf32> to vector<16x24xf32>
    %69 = arith.addf %10, %68 : vector<16x24xf32>
    %c0_66 = arith.constant 0 : index
    %c0_67 = arith.constant 0 : index
    %70 = vector.load %arg2[%c0_66, %c0_67] : memref<1x24xf32, #tpu.memory_space<vmem>>, vector<1x24xf32>
    %71 = vector.broadcast %70 : vector<1x24xf32> to vector<16x24xf32>
    %72 = arith.addf %24, %71 : vector<16x24xf32>
    %c0_68 = arith.constant 0 : index
    %c0_69 = arith.constant 0 : index
    %73 = vector.load %arg2[%c0_68, %c0_69] : memref<1x24xf32, #tpu.memory_space<vmem>>, vector<1x24xf32>
    %74 = vector.broadcast %73 : vector<1x24xf32> to vector<16x24xf32>
    %75 = arith.addf %38, %74 : vector<16x24xf32>
    %c0_70 = arith.constant 0 : index
    %c0_71 = arith.constant 0 : index
    %76 = vector.load %arg2[%c0_70, %c0_71] : memref<1x24xf32, #tpu.memory_space<vmem>>, vector<1x24xf32>
    %77 = vector.broadcast %76 : vector<1x24xf32> to vector<16x24xf32>
    %78 = arith.addf %66, %77 : vector<16x24xf32>
    %79 = arith.negf %69 : vector<16x24xf32>
    %80 = math.exp %79 : vector<16x24xf32>
    %cst_72 = arith.constant 1.000000e+00 : f32
    %81 = vector.broadcast %cst_72 : f32 to vector<16x24xf32>
    %82 = arith.addf %81, %80 : vector<16x24xf32>
    %83 = arith.divf %81, %82 : vector<16x24xf32>
    %84 = arith.negf %72 : vector<16x24xf32>
    %85 = math.exp %84 : vector<16x24xf32>
    %cst_73 = arith.constant 1.000000e+00 : f32
    %86 = vector.broadcast %cst_73 : f32 to vector<16x24xf32>
    %87 = arith.addf %86, %85 : vector<16x24xf32>
    %88 = arith.divf %86, %87 : vector<16x24xf32>
    %89 = arith.negf %75 : vector<16x24xf32>
    %90 = math.exp %89 : vector<16x24xf32>
    %cst_74 = arith.constant 1.000000e+00 : f32
    %91 = vector.broadcast %cst_74 : f32 to vector<16x24xf32>
    %92 = arith.addf %91, %90 : vector<16x24xf32>
    %93 = arith.divf %91, %92 : vector<16x24xf32>
    %94 = arith.negf %78 : vector<16x24xf32>
    %95 = math.exp %94 : vector<16x24xf32>
    %cst_75 = arith.constant 1.000000e+00 : f32
    %96 = vector.broadcast %cst_75 : f32 to vector<16x24xf32>
    %97 = arith.addf %96, %95 : vector<16x24xf32>
    %98 = arith.divf %96, %97 : vector<16x24xf32>
    %99 = tpu.concatenate %83, %88, %93, %98 in 0 : vector<16x24xf32>, vector<16x24xf32>, vector<16x24xf32>, vector<16x24xf32> -> vector<64x24xf32>
    %c0_76 = arith.constant 0 : index
    %c0_77 = arith.constant 0 : index
    %100 = vector.load %arg7[%c0_76, %c0_77] : memref<64x24xf32, #tpu.memory_space<vmem>>, vector<64x24xf32>
    tpu.vector_store %arg7[%c0_76, %c0_77], %99 {strides = array<i32>} : memref<64x24xf32, #tpu.memory_space<vmem>>, vector<64x24xf32>,
    return
  }
}

</mosaic_0001>

<llo_original>
// kernel: tile.63
$region0: #{tile.63}
  #allocation0 [shape = 's32[1]{0}', space=sflag, size = 0x4, scoped, tag = 'scoped memory for tile.63']
  %s0 = inlined_call_operand.vmem [shape: f32[8], index: 0, kind: input, shape index: {}]
  %s1 = inlined_call_operand.vmem [shape: f32[8,8], index: 1, kind: output, shape index: {}]
  // Predicated region
  $region2: #{tile.63} parent=0 // pred_check
    _
  $region3: #{tile.63} parent=0 // pred_check_branch
    %3 = sbr.rel (0) target = $region5
  $region4: #{tile.63} parent=0 // pred_region
    _
  $region5: #{tile.63} parent=0 // pred_fallthru
    _
  %v4 = vld [vmem:[%s0] ss:$0 sm:$0xff]
  %5 = vst [vmem:[%s1] sm:$0xff] %v4

// kernel: tile.64
$region0: #{tile.64}
  %s0 = inlined_call_operand.vmem [shape: f32[8,8], index: 0, kind: input, shape index: {}]
  %s1 = inlined_call_operand.vmem [shape: f32[1,64], index: 1, kind: output, shape index: {}]
  $region1: #{tile.64} parent=0
    #allocation0 [shape = 'u8[4096]{0}', space=vmem, size = 0x1000, scoped, tag = 'scoped mem for output reshape']
    %v2 = vld [vmem:[%s0] sm:$0x1]
    %vm3 = vcmask 64512
    %4 = vst.msk [vmem:[#allocation0] sm:$0x1] %vm3, %v2
    %s5 = scalar_lea.vmem %s0, 7
    %v6 = vld [vmem:[%s5] sm:$0x1]
    %7 = vrot.lane.b32.xlu0 %v6, 56
    %v8 = vpop.permute.xlu0 %7
    %vm9 = vcmask 523712
    %10 = vst.msk [vmem:[#allocation0] sm:$0x1] %vm9, %v8
    %s11 = scalar_lea.vmem %s0, 6
    %v12 = vld [vmem:[%s11] sm:$0x1]
    %13 = vrot.lane.b32.xlu0 %v12, 48
    %v14 = vpop.permute.xlu0 %13
    %vm15 = vcmask 458112
    %16 = vst.msk [vmem:[#allocation0] sm:$0x1] %vm15, %v14
    %s17 = scalar_lea.vmem %s0, 5
    %v18 = vld [vmem:[%s17] sm:$0x1]
    %19 = vrot.lane.b32.xlu0 %v18, 40
    %v20 = vpop.permute.xlu0 %19
    %vm21 = vcmask 392512
    %22 = vst.msk [vmem:[#allocation0] sm:$0x1] %vm21, %v20
    %s23 = scalar_lea.vmem %s0, 4
    %v24 = vld [vmem:[%s23] sm:$0x1]
    %25 = vrot.lane.b32.xlu0 %v24, 32
    %v26 = vpop.permute.xlu0 %25
    %vm27 = vcmask 326912
    %28 = vst.msk [vmem:[#allocation0] sm:$0x1] %vm27, %v26
    %s29 = scalar_lea.vmem %s0, 3
    %v30 = vld [vmem:[%s29] sm:$0x1]
    %31 = vrot.lane.b32.xlu0 %v30, 24
    %v32 = vpop.permute.xlu0 %31
    %vm33 = vcmask 261312
    %34 = vst.msk [vmem:[#allocation0] sm:$0x1] %vm33, %v32
    %s35 = scalar_lea.vmem %s0, 2
    %v36 = vld [vmem:[%s35] sm:$0x1]
    %37 = vrot.lane.b32.xlu0 %v36, 16
    %v38 = vpop.permute.xlu0 %37
    %vm39 = vcmask 195712
    %40 = vst.msk [vmem:[#allocation0] sm:$0x1] %vm39, %v38
    %s41 = scalar_lea.vmem %s0, 1
    %v42 = vld [vmem:[%s41] sm:$0x1]
    %43 = vrot.lane.b32.xlu0 %v42, 8
    %v44 = vpop.permute.xlu0 %43
    %vm45 = vcmask 130112
    %46 = vst.msk [vmem:[#allocation0] sm:$0x1] %vm45, %v44
    %s48 = sshllo.u32 0, 1
    %v50 = vld [vmem:[#allocation0] sm:%s48]
    %s51 = sshllo.u32 0, 1
    %52 = vst [vmem:[%s1] sm:%s51] %v50

// kernel: tile.69
$region0: #{tile.69}
  %s0 = inlined_call_operand.vmem [shape: f32[8,8,8], index: 0, kind: input, shape index: {}]
  %s1 = inlined_call_operand.vmem [shape: f32[64,8], index: 1, kind: output, shape index: {}]
  %v2 = vld [vmem:[%s0] ss:$8 sm:$0xf]
  %v3 = vld [vmem:[%s0] ss:$8 sm:$0xf0]
  %vm4 = vcmask 1047556
  %v5 = vsel %vm4, %v3, %v2
  %vm6 = vcmask 64512
  %7 = vst.msk [vmem:[%s1] sm:$0xff] %vm6, %v5
  %s8 = scalar_lea.vmem %s0, 7
  %v9 = vld [vmem:[%s8] ss:$8 sm:$0xf]
  %s10 = scalar_lea.vmem %s0, 7
  %v11 = vld [vmem:[%s10] ss:$8 sm:$0xf0]
  %vm12 = vcmask 1047556
  %v13 = vsel %vm12, %v11, %v9
  %14 = vrot.lane.b32.xlu0 %v13, 56
  %v15 = vpop.permute.xlu0 %14
  %vm16 = vcmask 523712
  %17 = vst.msk [vmem:[%s1] sm:$0xff] %vm16, %v15
  %s18 = scalar_lea.vmem %s0, 6
  %v19 = vld [vmem:[%s18] ss:$8 sm:$0xf]
  %s20 = scalar_lea.vmem %s0, 6
  %v21 = vld [vmem:[%s20] ss:$8 sm:$0xf0]
  %vm22 = vcmask 1047556
  %v23 = vsel %vm22, %v21, %v19
  %24 = vrot.lane.b32.xlu0 %v23, 48
  %v25 = vpop.permute.xlu0 %24
  %vm26 = vcmask 458112
  %27 = vst.msk [vmem:[%s1] sm:$0xff] %vm26, %v25
  %s28 = scalar_lea.vmem %s0, 5
  %v29 = vld [vmem:[%s28] ss:$8 sm:$0xf]
  %s30 = scalar_lea.vmem %s0, 5
  %v31 = vld [vmem:[%s30] ss:$8 sm:$0xf0]
  %vm32 = vcmask 1047556
  %v33 = vsel %vm32, %v31, %v29
  %34 = vrot.lane.b32.xlu0 %v33, 40
  %v35 = vpop.permute.xlu0 %34
  %vm36 = vcmask 392512
  %37 = vst.msk [vmem:[%s1] sm:$0xff] %vm36, %v35
  %s38 = scalar_lea.vmem %s0, 4
  %v39 = vld [vmem:[%s38] ss:$8 sm:$0xf]
  %s40 = scalar_lea.vmem %s0, 4
  %v41 = vld [vmem:[%s40] ss:$8 sm:$0xf0]
  %vm42 = vcmask 1047556
  %v43 = vsel %vm42, %v41, %v39
  %44 = vrot.lane.b32.xlu0 %v43, 32
  %v45 = vpop.permute.xlu0 %44
  %vm46 = vcmask 326912
  %47 = vst.msk [vmem:[%s1] sm:$0xff] %vm46, %v45
  %s48 = scalar_lea.vmem %s0, 3
  %v49 = vld [vmem:[%s48] ss:$8 sm:$0xf]
  %s50 = scalar_lea.vmem %s0, 3
  %v51 = vld [vmem:[%s50] ss:$8 sm:$0xf0]
  %vm52 = vcmask 1047556
  %v53 = vsel %vm52, %v51, %v49
  %54 = vrot.lane.b32.xlu0 %v53, 24
  %v55 = vpop.permute.xlu0 %54
  %vm56 = vcmask 261312
  %57 = vst.msk [vmem:[%s1] sm:$0xff] %vm56, %v55
  %s58 = scalar_lea.vmem %s0, 2
  %v59 = vld [vmem:[%s58] ss:$8 sm:$0xf]
  %s60 = scalar_lea.vmem %s0, 2
  %v61 = vld [vmem:[%s60] ss:$8 sm:$0xf0]
  %vm62 = vcmask 1047556
  %v63 = vsel %vm62, %v61, %v59
  %64 = vrot.lane.b32.xlu0 %v63, 16
  %v65 = vpop.permute.xlu0 %64
  %vm66 = vcmask 195712
  %67 = vst.msk [vmem:[%s1] sm:$0xff] %vm66, %v65
  %s68 = scalar_lea.vmem %s0, 1
  %v69 = vld [vmem:[%s68] ss:$8 sm:$0xf]
  %s70 = scalar_lea.vmem %s0, 1
  %v71 = vld [vmem:[%s70] ss:$8 sm:$0xf0]
  %vm72 = vcmask 1047556
  %v73 = vsel %vm72, %v71, %v69
  %74 = vrot.lane.b32.xlu0 %v73, 8
  %v75 = vpop.permute.xlu0 %74
  %vm76 = vcmask 130112
  %77 = vst.msk [vmem:[%s1] sm:$0xff] %vm76, %v75

// kernel: tile.74
$region0: #{tile.74}
  %s0 = inlined_call_operand.vmem [shape: f32[4,16], index: 0, kind: input, shape index: {}]
  %s1 = inlined_call_operand.vmem [shape: f32[1,64], index: 1, kind: output, shape index: {}]
  $region1: #{tile.74} parent=0
    #allocation0 [shape = 'u8[4096]{0}', space=vmem, size = 0x1000, scoped, tag = 'scoped mem for output reshape']
    #allocation1 [shape = 'u8[4096]{0}', space=vmem, size = 0x1000, scoped, tag = 'scoped mem for input reshape']
    %s3 = sshllo.u32 0, 4
    %v4 = vld [vmem:[%s0] sm:%s3]
    %5 = vst [vmem:[#allocation1] sm:%s3] %v4
    %v6 = vld [vmem:[#allocation1] sm:$0x1]
    %vm7 = vcmask 130048
    %8 = vst.msk [vmem:[#allocation0] sm:$0x1] %vm7, %v6
    %s9 = scalar_lea.vmem [#allocation1], 3
    %v10 = vld [vmem:[%s9] sm:$0x1]
    %11 = vrot.lane.b32.xlu0 %v10, 48
    %v12 = vpop.permute.xlu0 %11
    %vm13 = vcmask 523648
    %14 = vst.msk [vmem:[#allocation0] sm:$0x1] %vm13, %v12
    %s15 = scalar_lea.vmem [#allocation1], 2
    %v16 = vld [vmem:[%s15] sm:$0x1]
    %17 = vrot.lane.b32.xlu0 %v16, 32
    %v18 = vpop.permute.xlu0 %17
    %vm19 = vcmask 392448
    %20 = vst.msk [vmem:[#allocation0] sm:$0x1] %vm19, %v18
    %s21 = scalar_lea.vmem [#allocation1], 1
    %v22 = vld [vmem:[%s21] sm:$0x1]
    %23 = vrot.lane.b32.xlu0 %v22, 16
    %v24 = vpop.permute.xlu0 %23
    %vm25 = vcmask 261248
    %26 = vst.msk [vmem:[#allocation0] sm:$0x1] %vm25, %v24
    %s28 = sshllo.u32 0, 1
    %v30 = vld [vmem:[#allocation0] sm:%s28]
    %s31 = sshllo.u32 0, 1
    %32 = vst [vmem:[%s1] sm:%s31] %v30

// kernel: tile.73
$region0: #{tile.73}
  #allocation0 [shape = 's32[1]{0}', space=sflag, size = 0x4, scoped, tag = 'scoped memory for tile.73']
  %s0 = inlined_call_operand.vmem [shape: f32[16], index: 0, kind: input, shape index: {}]
  %s1 = inlined_call_operand.vmem [shape: f32[4,16], index: 1, kind: output, shape index: {}]
  // Predicated region
  $region2: #{tile.73} parent=0 // pred_check
    _
  $region3: #{tile.73} parent=0 // pred_check_branch
    %3 = sbr.rel (0) target = $region5
  $region4: #{tile.73} parent=0 // pred_region
    _
  $region5: #{tile.73} parent=0 // pred_fallthru
    _
  %v4 = vld [vmem:[%s0] ss:$0 sm:$0xff]
  %5 = vst [vmem:[%s1] sm:$0xf] %v4

// kernel: tile.79
$region0: #{tile.79}
  %s0 = inlined_call_operand.vmem [shape: f32[4,16,16], index: 0, kind: input, shape index: {}]
  %s1 = inlined_call_operand.vmem [shape: f32[64,16], index: 1, kind: output, shape index: {}]
  $region1: #{tile.79} parent=0
    #allocation0 [shape = 'u8[65536]{0}', space=vmem, size = 0x10000, scoped, tag = 'scoped mem for input reshape']
    %s3 = sshllo.u32 0, 4
    %s4 = smul.addr 4, 15
    %s5 = scalar_lea.vmem %s0, %s4
    %v6 = vld [vmem:[%s5] sm:%s3]
    %s7 = scalar_lea.vmem [#allocation0], 120
    %8 = vst [vmem:[%s7] sm:%s3] %v6
    %s9 = smul.addr 4, 14
    %s10 = scalar_lea.vmem %s0, %s9
    %v11 = vld [vmem:[%s10] sm:%s3]
    %s12 = scalar_lea.vmem [#allocation0], 112
    %13 = vst [vmem:[%s12] sm:%s3] %v11
    %s14 = smul.addr 4, 13
    %s15 = scalar_lea.vmem %s0, %s14
    %v16 = vld [vmem:[%s15] sm:%s3]
    %s17 = scalar_lea.vmem [#allocation0], 104
    %18 = vst [vmem:[%s17] sm:%s3] %v16
    %s19 = smul.addr 4, 12
    %s20 = scalar_lea.vmem %s0, %s19
    %v21 = vld [vmem:[%s20] sm:%s3]
    %s22 = scalar_lea.vmem [#allocation0], 96
    %23 = vst [vmem:[%s22] sm:%s3] %v21
    %s24 = smul.addr 4, 11
    %s25 = scalar_lea.vmem %s0, %s24
    %v26 = vld [vmem:[%s25] sm:%s3]
    %s27 = scalar_lea.vmem [#allocation0], 88
    %28 = vst [vmem:[%s27] sm:%s3] %v26
    %s29 = smul.addr 4, 10
    %s30 = scalar_lea.vmem %s0, %s29
    %v31 = vld [vmem:[%s30] sm:%s3]
    %s32 = scalar_lea.vmem [#allocation0], 80
    %33 = vst [vmem:[%s32] sm:%s3] %v31
    %s34 = smul.addr 4, 9
    %s35 = scalar_lea.vmem %s0, %s34
    %v36 = vld [vmem:[%s35] sm:%s3]
    %s37 = scalar_lea.vmem [#allocation0], 72
    %38 = vst [vmem:[%s37] sm:%s3] %v36
    %s39 = smul.addr 4, 8
    %s40 = scalar_lea.vmem %s0, %s39
    %v41 = vld [vmem:[%s40] sm:%s3]
    %s42 = scalar_lea.vmem [#allocation0], 64
    %43 = vst [vmem:[%s42] sm:%s3] %v41
    %s44 = smul.addr 4, 7
    %s45 = scalar_lea.vmem %s0, %s44
    %v46 = vld [vmem:[%s45] sm:%s3]
    %s47 = scalar_lea.vmem [#allocation0], 56
    %48 = vst [vmem:[%s47] sm:%s3] %v46
    %s49 = smul.addr 4, 6
    %s50 = scalar_lea.vmem %s0, %s49
    %v51 = vld [vmem:[%s50] sm:%s3]
    %s52 = scalar_lea.vmem [#allocation0], 48
    %53 = vst [vmem:[%s52] sm:%s3] %v51
    %s54 = smul.addr 4, 5
    %s55 = scalar_lea.vmem %s0, %s54
    %v56 = vld [vmem:[%s55] sm:%s3]
    %s57 = scalar_lea.vmem [#allocation0], 40
    %58 = vst [vmem:[%s57] sm:%s3] %v56
    %s59 = smul.addr 4, 4
    %s60 = scalar_lea.vmem %s0, %s59
    %v61 = vld [vmem:[%s60] sm:%s3]
    %s62 = scalar_lea.vmem [#allocation0], 32
    %63 = vst [vmem:[%s62] sm:%s3] %v61
    %s64 = smul.addr 4, 3
    %s65 = scalar_lea.vmem %s0, %s64
    %v66 = vld [vmem:[%s65] sm:%s3]
    %s67 = scalar_lea.vmem [#allocation0], 24
    %68 = vst [vmem:[%s67] sm:%s3] %v66
    %s69 = smul.addr 4, 2
    %s70 = scalar_lea.vmem %s0, %s69
    %v71 = vld [vmem:[%s70] sm:%s3]
    %s72 = scalar_lea.vmem [#allocation0], 16
    %73 = vst [vmem:[%s72] sm:%s3] %v71
    %s74 = scalar_lea.vmem %s0, 4
    %v75 = vld [vmem:[%s74] sm:%s3]
    %s76 = scalar_lea.vmem [#allocation0], 8
    %77 = vst [vmem:[%s76] sm:%s3] %v75
    %v78 = vld [vmem:[%s0] sm:%s3]
    %79 = vst [vmem:[#allocation0] sm:%s3] %v78
    %v80 = vld [vmem:[#allocation0] ss:$8 sm:$0xf]
    %v81 = vld [vmem:[#allocation0] ss:$8 sm:$0xf0]
    %vm82 = vcmask 1047556
    %v83 = vsel %vm82, %v81, %v80
    %vm84 = vcmask 130048
    %85 = vst.msk [vmem:[%s1] sm:$0xff] %vm84, %v83
    %s86 = scalar_lea.vmem [#allocation0], 64
    %v87 = vld [vmem:[%s86] ss:$8 sm:$0xf]
    %s88 = scalar_lea.vmem [#allocation0], 64
    %v89 = vld [vmem:[%s88] ss:$8 sm:$0xf0]
    %vm90 = vcmask 1047556
    %v91 = vsel %vm90, %v89, %v87
    %vm92 = vcmask 130048
    %s93 = scalar_lea.vmem %s1, 8
    %94 = vst.msk [vmem:[%s93] sm:$0xff] %vm92, %v91
    %s95 = scalar_lea.vmem [#allocation0], 3
    %v96 = vld [vmem:[%s95] ss:$8 sm:$0xf]
    %s97 = scalar_lea.vmem [#allocation0], 3
    %v98 = vld [vmem:[%s97] ss:$8 sm:$0xf0]
    %vm99 = vcmask 1047556
    %v100 = vsel %vm99, %v98, %v96
    %101 = vrot.lane.b32.xlu0 %v100, 48
    %v102 = vpop.permute.xlu0 %101
    %vm103 = vcmask 523648
    %104 = vst.msk [vmem:[%s1] sm:$0xff] %vm103, %v102
    %s105 = scalar_lea.vmem [#allocation0], 67
    %v106 = vld [vmem:[%s105] ss:$8 sm:$0xf]
    %s107 = scalar_lea.vmem [#allocation0], 67
    %v108 = vld [vmem:[%s107] ss:$8 sm:$0xf0]
    %vm109 = vcmask 1047556
    %v110 = vsel %vm109, %v108, %v106
    %111 = vrot.lane.b32.xlu0 %v110, 48
    %v112 = vpop.permute.xlu0 %111
    %vm113 = vcmask 523648
    %s114 = scalar_lea.vmem %s1, 8
    %115 = vst.msk [vmem:[%s114] sm:$0xff] %vm113, %v112
    %s116 = scalar_lea.vmem [#allocation0], 2
    %v117 = vld [vmem:[%s116] ss:$8 sm:$0xf]
    %s118 = scalar_lea.vmem [#allocation0], 2
    %v119 = vld [vmem:[%s118] ss:$8 sm:$0xf0]
    %vm120 = vcmask 1047556
    %v121 = vsel %vm120, %v119, %v117
    %122 = vrot.lane.b32.xlu0 %v121, 32
    %v123 = vpop.permute.xlu0 %122
    %vm124 = vcmask 392448
    %125 = vst.msk [vmem:[%s1] sm:$0xff] %vm124, %v123
    %s126 = scalar_lea.vmem [#allocation0], 66
    %v127 = vld [vmem:[%s126] ss:$8 sm:$0xf]
    %s128 = scalar_lea.vmem [#allocation0], 66
    %v129 = vld [vmem:[%s128] ss:$8 sm:$0xf0]
    %vm130 = vcmask 1047556
    %v131 = vsel %vm130, %v129, %v127
    %132 = vrot.lane.b32.xlu0 %v131, 32
    %v133 = vpop.permute.xlu0 %132
    %vm134 = vcmask 392448
    %s135 = scalar_lea.vmem %s1, 8
    %136 = vst.msk [vmem:[%s135] sm:$0xff] %vm134, %v133
    %s137 = scalar_lea.vmem [#allocation0], 1
    %v138 = vld [vmem:[%s137] ss:$8 sm:$0xf]
    %s139 = scalar_lea.vmem [#allocation0], 1
    %v140 = vld [vmem:[%s139] ss:$8 sm:$0xf0]
    %vm141 = vcmask 1047556
    %v142 = vsel %vm141, %v140, %v138
    %143 = vrot.lane.b32.xlu0 %v142, 16
    %v144 = vpop.permute.xlu0 %143
    %vm145 = vcmask 261248
    %146 = vst.msk [vmem:[%s1] sm:$0xff] %vm145, %v144
    %s147 = scalar_lea.vmem [#allocation0], 65
    %v148 = vld [vmem:[%s147] ss:$8 sm:$0xf]
    %s149 = scalar_lea.vmem [#allocation0], 65
    %v150 = vld [vmem:[%s149] ss:$8 sm:$0xf0]
    %vm151 = vcmask 1047556
    %v152 = vsel %vm151, %v150, %v148
    %153 = vrot.lane.b32.xlu0 %v152, 16
    %v154 = vpop.permute.xlu0 %153
    %vm155 = vcmask 261248
    %s156 = scalar_lea.vmem %s1, 8
    %157 = vst.msk [vmem:[%s156] sm:$0xff] %vm155, %v154

// kernel: vae_forward.7
$region0: #{vae_forward.7}
  #allocation0 [shape = 'u32[]', space=smem, size = 0x4, offset = 0x4, fixed_abs, tag = 'smem constant byte address 0x4 - core index']
  #allocation1 [shape = 'u32[144,128]{1,0:T(1,128)}', space=vmem, size = 0x12000, scoped, tag = 'internal scratch']
  %s0 = inlined_call_operand.vmem [shape: bf16[18,108], index: 0, kind: input, shape index: {}]
  %s1 = inlined_call_operand.vmem [shape: bf16[9,24,64], index: 1, kind: input, shape index: {}]
  %s2 = inlined_call_operand.vmem [shape: f32[1,64], index: 2, kind: input, shape index: {}]
  %s3 = inlined_call_operand.vmem [shape: f32[1,8], index: 3, kind: input, shape index: {}]
  %s4 = inlined_call_operand.vmem [shape: f32[1,8], index: 4, kind: input, shape index: {}]
  %s5 = inlined_call_operand.vmem [shape: f32[64,8], index: 5, kind: input, shape index: {}]
  %s6 = inlined_call_operand.vmem [shape: f32[8,64], index: 6, kind: input, shape index: {}]
  %s7 = inlined_call_operand.vmem [shape: bf16[16,64], index: 7, kind: output, shape index: {}]
  %s8 = sld [smem:[#allocation0]]
  $region38: #{vae_forward.7} parent=0
    _
  %s10 = ssub.s32 1, %s8
  %s11 = scalar_select 0, %s10, %s8
  // Predicated region
  $region2: #{vae_forward.7} parent=0 // pred_check
    _
  $region3: #{vae_forward.7} parent=0 // pred_check_branch
    %13 = sbr.rel (0) target = $region5
  $region4: #{vae_forward.7} parent=0 // pred_region
    _
  $region5: #{vae_forward.7} parent=0 // pred_fallthru
    _
  // Predicated region
  $region6: #{vae_forward.7} parent=0 // pred_check
    _
  $region7: #{vae_forward.7} parent=0 // pred_check_branch
    %15 = sbr.rel (0) target = $region9
  $region8: #{vae_forward.7} parent=0 // pred_region
    _
  $region9: #{vae_forward.7} parent=0 // pred_fallthru
    _
  // Predicated region
  $region10: #{vae_forward.7} parent=0 // pred_check
    _
  $region11: #{vae_forward.7} parent=0 // pred_check_branch
    %17 = sbr.rel (0) target = $region13
  $region12: #{vae_forward.7} parent=0 // pred_region
    _
  $region13: #{vae_forward.7} parent=0 // pred_fallthru
    _
  // Predicated region
  $region14: #{vae_forward.7} parent=0 // pred_check
    _
  $region15: #{vae_forward.7} parent=0 // pred_check_branch
    %19 = sbr.rel (0) target = $region17
  $region16: #{vae_forward.7} parent=0 // pred_region
    _
  $region17: #{vae_forward.7} parent=0 // pred_fallthru
    _
  // Predicated region
  $region18: #{vae_forward.7} parent=0 // pred_check
    _
  $region19: #{vae_forward.7} parent=0 // pred_check_branch
    %21 = sbr.rel (0) target = $region21
  $region20: #{vae_forward.7} parent=0 // pred_region
    _
  $region21: #{vae_forward.7} parent=0 // pred_fallthru
    _
  // Predicated region
  $region22: #{vae_forward.7} parent=0 // pred_check
    _
  $region23: #{vae_forward.7} parent=0 // pred_check_branch
    %23 = sbr.rel (0) target = $region25
  $region24: #{vae_forward.7} parent=0 // pred_region
    _
  $region25: #{vae_forward.7} parent=0 // pred_fallthru
    _
  // Predicated region
  $region26: #{vae_forward.7} parent=0 // pred_check
    _
  $region27: #{vae_forward.7} parent=0 // pred_check_branch
    %25 = sbr.rel (0) target = $region29
  $region28: #{vae_forward.7} parent=0 // pred_region
    _
  $region29: #{vae_forward.7} parent=0 // pred_fallthru
    _
  %v27 = vld [vmem:[%s0] sm:$0xf]
  %v28 = vld [vmem:[%s0 + $0x4] sm:$0xf]
  %v29 = vld [vmem:[%s0 + $0x8] sm:$0x1]
  %v32 = vunpack.c.l.b16 %v28
  %v33 = vunpack.c.l.b16 %v29
  %v34 = vpack.c.b16 %v33, %v32
  %v36 = vshrl.u32 %v34, 16
  %v38 = vrot.slane %v36, 4
  %v39 = vshll.u32 %v34, 16
  %v41 = vrot.slane %v39, 5
  %v42 = vor.u32 %v38, %v41
  %vm43 = vcmask 1043456
  %v46 = vsel %vm43, %v27, %v42
  %v47 = vld [vmem:[%s1] sm:$0xf]
  %v48 = vld [vmem:[%s1 + $0x4] sm:$0xf]
  %v49 = vld [vmem:[%s1 + $0x8] sm:$0xf]
  %s50 = scalar_lea.vmem %s1, 12
  %v51 = vld [vmem:[%s50] sm:$0xf]
  %v52 = vld [vmem:[%s50 + $0x4] sm:$0xf]
  %v53 = vld [vmem:[%s50 + $0x8] sm:$0xf]
  %55 = vrot.lane.b32.xlu0 %v46, 71
  %v56 = vpop.permute.xlu0 %55
  %v60 = vunpack.c.l.b16 %v51
  %v61 = vunpack.c.l.b16 %v52
  %v62 = vunpack.c.l.b16 %v53
  %v63 = vpack.c.b16 %v61, %v60
  %v64 = vpack.c.b16 %v62, %v62
  %vm66 = vcmask 195584
  %v68 = vsel %vm66, %v56, 0
  %v71 = vsel %vm43, %v64, 0
  %73 = vmatprep.subr.bf16.mxu0 0
  %74 = vmatpush1.bf16.msra.mxu0 %v63
  %75 = vmatprep.subr.bf16.mxu0 0
  %76 = vmatpush1.bf16.msra.mxu0 %v71
  %77 = vmatprep.subr.bf16.mxu0 0
  %78 = vmatpush1.bf16.msra.mxu0 0
  %79 = vmatprep.subr.bf16.mxu0 0
  %80 = vmatpush1.bf16.msra.mxu0 0
  %81 = vmatprep.subr.bf16.mxu0 0
  %82 = vmatpush1.bf16.msra.mxu0 0
  %83 = vmatprep.subr.bf16.mxu0 0
  %84 = vmatpush1.bf16.msra.mxu0 0
  %85 = vmatprep.subr.bf16.mxu0 0
  %86 = vmatpush1.bf16.msra.mxu0 0
  %87 = vmatprep.subr.bf16.mxu0 0
  %88 = vmatpush1.bf16.msra.mxu0 0
  %89 = vmatprep.subr.bf16.mxu0 0
  %90 = vmatpush1.bf16.msra.mxu0 0
  %91 = vmatprep.subr.bf16.mxu0 0
  %92 = vmatpush1.bf16.msra.mxu0 0
  %93 = vmatprep.subr.bf16.mxu0 0
  %94 = vmatpush1.bf16.msra.mxu0 0
  %95 = vmatprep.subr.bf16.mxu0 0
  %96 = vmatpush1.bf16.msra.mxu0 0
  %97 = vmatprep.subr.bf16.mxu0 0
  %98 = vmatpush1.bf16.msra.mxu0 0
  %99 = vmatprep.subr.bf16.mxu0 0
  %100 = vmatpush1.bf16.msra.mxu0 0
  %101 = vmatprep.subr.bf16.mxu0 0
  %102 = vmatpush1.bf16.msra.mxu0 0
  %103 = vmatprep.subr.bf16.mxu0 0
  %104 = vmatpush1.bf16.msra.mxu0 0
  %105 = vmatprep.mubr.bf16.mxu0 0
  %106 = vmatmul.mubr.bf16.gmra.mrb[0].mxu0 %v68
  %v107 = vpop.f32.mrb[0].mxu0
  %v108 = vadd.f32 0.0, %v107
  %v109 = vpop.f32.mrb[0].mxu0
  %v110 = vpop.f32.mrb[0].mxu0
  %v111 = vadd.f32 0.0, %v110
  %v112 = vpop.f32.mrb[0].mxu0
  %113 = vdwg.mxu0
  %114 = vrot.lane.b32.xlu0 %v46, 47
  %v115 = vpop.permute.xlu0 %114
  %v119 = vunpack.c.l.b16 %v47
  %v120 = vunpack.c.l.b16 %v48
  %v121 = vunpack.c.l.b16 %v49
  %v122 = vpack.c.b16 %v120, %v119
  %v123 = vpack.c.b16 %v121, %v121
  %v126 = vsel %vm66, %v115, 0
  %v129 = vsel %vm43, %v123, 0
  %131 = vmatprep.subr.bf16.mxu0 0
  %132 = vmatpush1.bf16.msra.mxu0 %v122
  %133 = vmatprep.subr.bf16.mxu0 0
  %134 = vmatpush1.bf16.msra.mxu0 %v129
  %135 = vmatprep.subr.bf16.mxu0 0
  %136 = vmatpush1.bf16.msra.mxu0 0
  %137 = vmatprep.subr.bf16.mxu0 0
  %138 = vmatpush1.bf16.msra.mxu0 0
  %139 = vmatprep.subr.bf16.mxu0 0
  %140 = vmatpush1.bf16.msra.mxu0 0
  %141 = vmatprep.subr.bf16.mxu0 0
  %142 = vmatpush1.bf16.msra.mxu0 0
  %143 = vmatprep.subr.bf16.mxu0 0
  %144 = vmatpush1.bf16.msra.mxu0 0
  %145 = vmatprep.subr.bf16.mxu0 0
  %146 = vmatpush1.bf16.msra.mxu0 0
  %147 = vmatprep.subr.bf16.mxu0 0
  %148 = vmatpush1.bf16.msra.mxu0 0
  %149 = vmatprep.subr.bf16.mxu0 0
  %150 = vmatpush1.bf16.msra.mxu0 0
  %151 = vmatprep.subr.bf16.mxu0 0
  %152 = vmatpush1.bf16.msra.mxu0 0
  %153 = vmatprep.subr.bf16.mxu0 0
  %154 = vmatpush1.bf16.msra.mxu0 0
  %155 = vmatprep.subr.bf16.mxu0 0
  %156 = vmatpush1.bf16.msra.mxu0 0
  %157 = vmatprep.subr.bf16.mxu0 0
  %158 = vmatpush1.bf16.msra.mxu0 0
  %159 = vmatprep.subr.bf16.mxu0 0
  %160 = vmatpush1.bf16.msra.mxu0 0
  %161 = vmatprep.subr.bf16.mxu0 0
  %162 = vmatpush1.bf16.msra.mxu0 0
  %163 = vmatprep.mubr.bf16.mxu0 0
  %164 = vmatmul.mubr.bf16.gmra.mrb[0].mxu0 %v126
  %v165 = vpop.f32.mrb[0].mxu0
  %v166 = vadd.f32 %v108, %v165
  %v167 = vpop.f32.mrb[0].mxu0
  %v168 = vpop.f32.mrb[0].mxu0
  %v169 = vadd.f32 %v111, %v168
  %v170 = vpop.f32.mrb[0].mxu0
  %171 = vdwg.mxu0
  %s172 = scalar_lea.vmem %s1, 24
  %v173 = vld [vmem:[%s172] sm:$0xf]
  %v174 = vld [vmem:[%s172 + $0x4] sm:$0xf]
  %v175 = vld [vmem:[%s172 + $0x8] sm:$0xf]
  %176 = vrot.lane.b32.xlu0 %v46, 44
  %v177 = vpop.permute.xlu0 %176
  %v181 = vunpack.c.l.b16 %v173
  %v182 = vunpack.c.l.b16 %v174
  %v183 = vunpack.c.l.b16 %v175
  %v184 = vpack.c.b16 %v182, %v181
  %v185 = vpack.c.b16 %v183, %v183
  %v188 = vsel %vm66, %v177, 0
  %v191 = vsel %vm43, %v185, 0
  %193 = vmatprep.subr.bf16.mxu0 0
  %194 = vmatpush1.bf16.msra.mxu0 %v184
  %195 = vmatprep.subr.bf16.mxu0 0
  %196 = vmatpush1.bf16.msra.mxu0 %v191
  %197 = vmatprep.subr.bf16.mxu0 0
  %198 = vmatpush1.bf16.msra.mxu0 0
  %199 = vmatprep.subr.bf16.mxu0 0
  %200 = vmatpush1.bf16.msra.mxu0 0
  %201 = vmatprep.subr.bf16.mxu0 0
  %202 = vmatpush1.bf16.msra.mxu0 0
  %203 = vmatprep.subr.bf16.mxu0 0
  %204 = vmatpush1.bf16.msra.mxu0 0
  %205 = vmatprep.subr.bf16.mxu0 0
  %206 = vmatpush1.bf16.msra.mxu0 0
  %207 = vmatprep.subr.bf16.mxu0 0
  %208 = vmatpush1.bf16.msra.mxu0 0
  %209 = vmatprep.subr.bf16.mxu0 0
  %210 = vmatpush1.bf16.msra.mxu0 0
  %211 = vmatprep.subr.bf16.mxu0 0
  %212 = vmatpush1.bf16.msra.mxu0 0
  %213 = vmatprep.subr.bf16.mxu0 0
  %214 = vmatpush1.bf16.msra.mxu0 0
  %215 = vmatprep.subr.bf16.mxu0 0
  %216 = vmatpush1.bf16.msra.mxu0 0
  %217 = vmatprep.subr.bf16.mxu0 0
  %218 = vmatpush1.bf16.msra.mxu0 0
  %219 = vmatprep.subr.bf16.mxu0 0
  %220 = vmatpush1.bf16.msra.mxu0 0
  %221 = vmatprep.subr.bf16.mxu0 0
  %222 = vmatpush1.bf16.msra.mxu0 0
  %223 = vmatprep.subr.bf16.mxu0 0
  %224 = vmatpush1.bf16.msra.mxu0 0
  %225 = vmatprep.mubr.bf16.mxu0 0
  %226 = vmatmul.mubr.bf16.gmra.mrb[0].mxu0 %v188
  %v227 = vpop.f32.mrb[0].mxu0
  %v228 = vadd.f32 0.0, %v227
  %v229 = vpop.f32.mrb[0].mxu0
  %v230 = vpop.f32.mrb[0].mxu0
  %v231 = vadd.f32 0.0, %v230
  %v232 = vpop.f32.mrb[0].mxu0
  %233 = vdwg.mxu0
  %v234 = vadd.f32 %v166, %v228
  %v235 = vadd.f32 %v169, %v231
  %v236 = vld [vmem:[%s0] sm:$0xf]
  %v237 = vld [vmem:[%s0 + $0x4] sm:$0x1]
  %v238 = vld [vmem:[%s0 + $0x4] sm:$0xe]
  %v241 = vunpack.c.l.b16 %v236
  %v242 = vunpack.c.l.b16 %v237
  %v243 = vpack.c.b16 %v242, %v241
  %v245 = vshrl.u32 %v243, 16
  %v247 = vshll.u32 %v243, 16
  %v249 = vrot.slane %v247, 1
  %v250 = vor.u32 %v245, %v249
  %v252 = vunpack.c.l.b16 %v238
  %v253 = vpack.c.b16 %v33, %v252
  %v254 = vrot.slane %v253, 5
  %v257 = vsel %vm43, %v250, %v254
  %s258 = scalar_lea.vmem %s1, 36
  %v259 = vld [vmem:[%s258] sm:$0xf]
  %v260 = vld [vmem:[%s258 + $0x4] sm:$0xf]
  %v261 = vld [vmem:[%s258 + $0x8] sm:$0xf]
  %263 = vrot.lane.b32.xlu0 %v257, 101
  %v264 = vpop.permute.xlu0 %263
  %v268 = vunpack.c.l.b16 %v259
  %v269 = vunpack.c.l.b16 %v260
  %v270 = vunpack.c.l.b16 %v261
  %v271 = vpack.c.b16 %v269, %v268
  %v272 = vpack.c.b16 %v270, %v270
  %v275 = vsel %vm66, %v264, 0
  %v278 = vsel %vm43, %v272, 0
  %280 = vmatprep.subr.bf16.mxu0 0
  %281 = vmatpush1.bf16.msra.mxu0 %v271
  %282 = vmatprep.subr.bf16.mxu0 0
  %283 = vmatpush1.bf16.msra.mxu0 %v278
  %284 = vmatprep.subr.bf16.mxu0 0
  %285 = vmatpush1.bf16.msra.mxu0 0
  %286 = vmatprep.subr.bf16.mxu0 0
  %287 = vmatpush1.bf16.msra.mxu0 0
  %288 = vmatprep.subr.bf16.mxu0 0
  %289 = vmatpush1.bf16.msra.mxu0 0
  %290 = vmatprep.subr.bf16.mxu0 0
  %291 = vmatpush1.bf16.msra.mxu0 0
  %292 = vmatprep.subr.bf16.mxu0 0
  %293 = vmatpush1.bf16.msra.mxu0 0
  %294 = vmatprep.subr.bf16.mxu0 0
  %295 = vmatpush1.bf16.msra.mxu0 0
  %296 = vmatprep.subr.bf16.mxu0 0
  %297 = vmatpush1.bf16.msra.mxu0 0
  %298 = vmatprep.subr.bf16.mxu0 0
  %299 = vmatpush1.bf16.msra.mxu0 0
  %300 = vmatprep.subr.bf16.mxu0 0
  %301 = vmatpush1.bf16.msra.mxu0 0
  %302 = vmatprep.subr.bf16.mxu0 0
  %303 = vmatpush1.bf16.msra.mxu0 0
  %304 = vmatprep.subr.bf16.mxu0 0
  %305 = vmatpush1.bf16.msra.mxu0 0
  %306 = vmatprep.subr.bf16.mxu0 0
  %307 = vmatpush1.bf16.msra.mxu0 0
  %308 = vmatprep.subr.bf16.mxu0 0
  %309 = vmatpush1.bf16.msra.mxu0 0
  %310 = vmatprep.subr.bf16.mxu0 0
  %311 = vmatpush1.bf16.msra.mxu0 0
  %312 = vmatprep.mubr.bf16.mxu0 0
  %313 = vmatmul.mubr.bf16.gmra.mrb[0].mxu0 %v275
  %v314 = vpop.f32.mrb[0].mxu0
  %v315 = vadd.f32 0.0, %v314
  %v316 = vpop.f32.mrb[0].mxu0
  %v317 = vpop.f32.mrb[0].mxu0
  %v318 = vadd.f32 0.0, %v317
  %v319 = vpop.f32.mrb[0].mxu0
  %320 = vdwg.mxu0
  %v321 = vadd.f32 %v234, %v315
  %v322 = vadd.f32 %v235, %v318
  %s323 = scalar_lea.vmem %s1, 48
  %v324 = vld [vmem:[%s323] sm:$0xf]
  %v325 = vld [vmem:[%s323 + $0x4] sm:$0xf]
  %v326 = vld [vmem:[%s323 + $0x8] sm:$0xf]
  %327 = vrot.lane.b32.xlu0 %v257, 125
  %v328 = vpop.permute.xlu0 %327
  %v332 = vunpack.c.l.b16 %v324
  %v333 = vunpack.c.l.b16 %v325
  %v334 = vunpack.c.l.b16 %v326
  %v335 = vpack.c.b16 %v333, %v332
  %v336 = vpack.c.b16 %v334, %v334
  %v339 = vsel %vm66, %v328, 0
  %v342 = vsel %vm43, %v336, 0
  %344 = vmatprep.subr.bf16.mxu0 0
  %345 = vmatpush1.bf16.msra.mxu0 %v335
  %346 = vmatprep.subr.bf16.mxu0 0
  %347 = vmatpush1.bf16.msra.mxu0 %v342
  %348 = vmatprep.subr.bf16.mxu0 0
  %349 = vmatpush1.bf16.msra.mxu0 0
  %350 = vmatprep.subr.bf16.mxu0 0
  %351 = vmatpush1.bf16.msra.mxu0 0
  %352 = vmatprep.subr.bf16.mxu0 0
  %353 = vmatpush1.bf16.msra.mxu0 0
  %354 = vmatprep.subr.bf16.mxu0 0
  %355 = vmatpush1.bf16.msra.mxu0 0
  %356 = vmatprep.subr.bf16.mxu0 0
  %357 = vmatpush1.bf16.msra.mxu0 0
  %358 = vmatprep.subr.bf16.mxu0 0
  %359 = vmatpush1.bf16.msra.mxu0 0
  %360 = vmatprep.subr.bf16.mxu0 0
  %361 = vmatpush1.bf16.msra.mxu0 0
  %362 = vmatprep.subr.bf16.mxu0 0
  %363 = vmatpush1.bf16.msra.mxu0 0
  %364 = vmatprep.subr.bf16.mxu0 0
  %365 = vmatpush1.bf16.msra.mxu0 0
  %366 = vmatprep.subr.bf16.mxu0 0
  %367 = vmatpush1.bf16.msra.mxu0 0
  %368 = vmatprep.subr.bf16.mxu0 0
  %369 = vmatpush1.bf16.msra.mxu0 0
  %370 = vmatprep.subr.bf16.mxu0 0
  %371 = vmatpush1.bf16.msra.mxu0 0
  %372 = vmatprep.subr.bf16.mxu0 0
  %373 = vmatpush1.bf16.msra.mxu0 0
  %374 = vmatprep.subr.bf16.mxu0 0
  %375 = vmatpush1.bf16.msra.mxu0 0
  %376 = vmatprep.mubr.bf16.mxu0 0
  %377 = vmatmul.mubr.bf16.gmra.mrb[0].mxu0 %v339
  %v378 = vpop.f32.mrb[0].mxu0
  %v379 = vadd.f32 0.0, %v378
  %v380 = vpop.f32.mrb[0].mxu0
  %v381 = vpop.f32.mrb[0].mxu0
  %v382 = vadd.f32 0.0, %v381
  %v383 = vpop.f32.mrb[0].mxu0
  %384 = vdwg.mxu0
  %v385 = vadd.f32 %v321, %v379
  %v386 = vadd.f32 %v322, %v382
  %s387 = scalar_lea.vmem %s1, 60
  %v388 = vld [vmem:[%s387] sm:$0xf]
  %v389 = vld [vmem:[%s387 + $0x4] sm:$0xf]
  %v390 = vld [vmem:[%s387 + $0x8] sm:$0xf]
  %391 = vrot.lane.b32.xlu0 %v257, 98
  %v392 = vpop.permute.xlu0 %391
  %v396 = vunpack.c.l.b16 %v388
  %v397 = vunpack.c.l.b16 %v389
  %v398 = vunpack.c.l.b16 %v390
  %v399 = vpack.c.b16 %v397, %v396
  %v400 = vpack.c.b16 %v398, %v398
  %v403 = vsel %vm66, %v392, 0
  %v406 = vsel %vm43, %v400, 0
  %408 = vmatprep.subr.bf16.mxu0 0
  %409 = vmatpush1.bf16.msra.mxu0 %v399
  %410 = vmatprep.subr.bf16.mxu0 0
  %411 = vmatpush1.bf16.msra.mxu0 %v406
  %412 = vmatprep.subr.bf16.mxu0 0
  %413 = vmatpush1.bf16.msra.mxu0 0
  %414 = vmatprep.subr.bf16.mxu0 0
  %415 = vmatpush1.bf16.msra.mxu0 0
  %416 = vmatprep.subr.bf16.mxu0 0
  %417 = vmatpush1.bf16.msra.mxu0 0
  %418 = vmatprep.subr.bf16.mxu0 0
  %419 = vmatpush1.bf16.msra.mxu0 0
  %420 = vmatprep.subr.bf16.mxu0 0
  %421 = vmatpush1.bf16.msra.mxu0 0
  %422 = vmatprep.subr.bf16.mxu0 0
  %423 = vmatpush1.bf16.msra.mxu0 0
  %424 = vmatprep.subr.bf16.mxu0 0
  %425 = vmatpush1.bf16.msra.mxu0 0
  %426 = vmatprep.subr.bf16.mxu0 0
  %427 = vmatpush1.bf16.msra.mxu0 0
  %428 = vmatprep.subr.bf16.mxu0 0
  %429 = vmatpush1.bf16.msra.mxu0 0
  %430 = vmatprep.subr.bf16.mxu0 0
  %431 = vmatpush1.bf16.msra.mxu0 0
  %432 = vmatprep.subr.bf16.mxu0 0
  %433 = vmatpush1.bf16.msra.mxu0 0
  %434 = vmatprep.subr.bf16.mxu0 0
  %435 = vmatpush1.bf16.msra.mxu0 0
  %436 = vmatprep.subr.bf16.mxu0 0
  %437 = vmatpush1.bf16.msra.mxu0 0
  %438 = vmatprep.subr.bf16.mxu0 0
  %439 = vmatpush1.bf16.msra.mxu0 0
  %440 = vmatprep.mubr.bf16.mxu0 0
  %441 = vmatmul.mubr.bf16.gmra.mrb[0].mxu0 %v403
  %v442 = vpop.f32.mrb[0].mxu0
  %v443 = vadd.f32 0.0, %v442
  %v444 = vpop.f32.mrb[0].mxu0
  %v445 = vpop.f32.mrb[0].mxu0
  %v446 = vadd.f32 0.0, %v445
  %v447 = vpop.f32.mrb[0].mxu0
  %448 = vdwg.mxu0
  %v449 = vadd.f32 %v385, %v443
  %v450 = vadd.f32 %v386, %v446
  %s451 = scalar_lea.vmem %s1, 72
  %v452 = vld [vmem:[%s451] sm:$0xf]
  %v453 = vld [vmem:[%s451 + $0x4] sm:$0xf]
  %v454 = vld [vmem:[%s451 + $0x8] sm:$0xf]
  %455 = vrot.lane.b32.xlu0 %v257, 47
  %v456 = vpop.permute.xlu0 %455
  %v460 = vunpack.c.l.b16 %v452
  %v461 = vunpack.c.l.b16 %v453
  %v462 = vunpack.c.l.b16 %v454
  %v463 = vpack.c.b16 %v461, %v460
  %v464 = vpack.c.b16 %v462, %v462
  %v467 = vsel %vm66, %v456, 0
  %v470 = vsel %vm43, %v464, 0
  %472 = vmatprep.subr.bf16.mxu0 0
  %473 = vmatpush1.bf16.msra.mxu0 %v463
  %474 = vmatprep.subr.bf16.mxu0 0
  %475 = vmatpush1.bf16.msra.mxu0 %v470
  %476 = vmatprep.subr.bf16.mxu0 0
  %477 = vmatpush1.bf16.msra.mxu0 0
  %478 = vmatprep.subr.bf16.mxu0 0
  %479 = vmatpush1.bf16.msra.mxu0 0
  %480 = vmatprep.subr.bf16.mxu0 0
  %481 = vmatpush1.bf16.msra.mxu0 0
  %482 = vmatprep.subr.bf16.mxu0 0
  %483 = vmatpush1.bf16.msra.mxu0 0
  %484 = vmatprep.subr.bf16.mxu0 0
  %485 = vmatpush1.bf16.msra.mxu0 0
  %486 = vmatprep.subr.bf16.mxu0 0
  %487 = vmatpush1.bf16.msra.mxu0 0
  %488 = vmatprep.subr.bf16.mxu0 0
  %489 = vmatpush1.bf16.msra.mxu0 0
  %490 = vmatprep.subr.bf16.mxu0 0
  %491 = vmatpush1.bf16.msra.mxu0 0
  %492 = vmatprep.subr.bf16.mxu0 0
  %493 = vmatpush1.bf16.msra.mxu0 0
  %494 = vmatprep.subr.bf16.mxu0 0
  %495 = vmatpush1.bf16.msra.mxu0 0
  %496 = vmatprep.subr.bf16.mxu0 0
  %497 = vmatpush1.bf16.msra.mxu0 0
  %498 = vmatprep.subr.bf16.mxu0 0
  %499 = vmatpush1.bf16.msra.mxu0 0
  %500 = vmatprep.subr.bf16.mxu0 0
  %501 = vmatpush1.bf16.msra.mxu0 0
  %502 = vmatprep.subr.bf16.mxu0 0
  %503 = vmatpush1.bf16.msra.mxu0 0
  %504 = vmatprep.mubr.bf16.mxu0 0
  %505 = vmatmul.mubr.bf16.gmra.mrb[0].mxu0 %v467
  %v506 = vpop.f32.mrb[0].mxu0
  %v507 = vadd.f32 0.0, %v506
  %v508 = vpop.f32.mrb[0].mxu0
  %v509 = vpop.f32.mrb[0].mxu0
  %v510 = vadd.f32 0.0, %v509
  %v511 = vpop.f32.mrb[0].mxu0
  %512 = vdwg.mxu0
  %v513 = vadd.f32 %v449, %v507
  %v514 = vadd.f32 %v450, %v510
  %s515 = scalar_lea.vmem %s1, 84
  %v516 = vld [vmem:[%s515] sm:$0xf]
  %v517 = vld [vmem:[%s515 + $0x4] sm:$0xf]
  %v518 = vld [vmem:[%s515 + $0x8] sm:$0xf]
  %519 = vrot.lane.b32.xlu0 %v257, 71
  %v520 = vpop.permute.xlu0 %519
  %v524 = vunpack.c.l.b16 %v516
  %v525 = vunpack.c.l.b16 %v517
  %v526 = vunpack.c.l.b16 %v518
  %v527 = vpack.c.b16 %v525, %v524
  %v528 = vpack.c.b16 %v526, %v526
  %v531 = vsel %vm66, %v520, 0
  %v534 = vsel %vm43, %v528, 0
  %536 = vmatprep.subr.bf16.mxu0 0
  %537 = vmatpush1.bf16.msra.mxu0 %v527
  %538 = vmatprep.subr.bf16.mxu0 0
  %539 = vmatpush1.bf16.msra.mxu0 %v534
  %540 = vmatprep.subr.bf16.mxu0 0
  %541 = vmatpush1.bf16.msra.mxu0 0
  %542 = vmatprep.subr.bf16.mxu0 0
  %543 = vmatpush1.bf16.msra.mxu0 0
  %544 = vmatprep.subr.bf16.mxu0 0
  %545 = vmatpush1.bf16.msra.mxu0 0
  %546 = vmatprep.subr.bf16.mxu0 0
  %547 = vmatpush1.bf16.msra.mxu0 0
  %548 = vmatprep.subr.bf16.mxu0 0
  %549 = vmatpush1.bf16.msra.mxu0 0
  %550 = vmatprep.subr.bf16.mxu0 0
  %551 = vmatpush1.bf16.msra.mxu0 0
  %552 = vmatprep.subr.bf16.mxu0 0
  %553 = vmatpush1.bf16.msra.mxu0 0
  %554 = vmatprep.subr.bf16.mxu0 0
  %555 = vmatpush1.bf16.msra.mxu0 0
  %556 = vmatprep.subr.bf16.mxu0 0
  %557 = vmatpush1.bf16.msra.mxu0 0
  %558 = vmatprep.subr.bf16.mxu0 0
  %559 = vmatpush1.bf16.msra.mxu0 0
  %560 = vmatprep.subr.bf16.mxu0 0
  %561 = vmatpush1.bf16.msra.mxu0 0
  %562 = vmatprep.subr.bf16.mxu0 0
  %563 = vmatpush1.bf16.msra.mxu0 0
  %564 = vmatprep.subr.bf16.mxu0 0
  %565 = vmatpush1.bf16.msra.mxu0 0
  %566 = vmatprep.subr.bf16.mxu0 0
  %567 = vmatpush1.bf16.msra.mxu0 0
  %568 = vmatprep.mubr.bf16.mxu0 0
  %569 = vmatmul.mubr.bf16.gmra.mrb[0].mxu0 %v531
  %v570 = vpop.f32.mrb[0].mxu0
  %v571 = vadd.f32 0.0, %v570
  %v572 = vpop.f32.mrb[0].mxu0
  %v573 = vpop.f32.mrb[0].mxu0
  %v574 = vadd.f32 0.0, %v573
  %v575 = vpop.f32.mrb[0].mxu0
  %576 = vdwg.mxu0
  %v577 = vadd.f32 %v513, %v571
  %v578 = vadd.f32 %v514, %v574
  %s579 = scalar_lea.vmem %s1, 96
  %v580 = vld [vmem:[%s579] sm:$0xf]
  %v581 = vld [vmem:[%s579 + $0x4] sm:$0xf]
  %v582 = vld [vmem:[%s579 + $0x8] sm:$0xf]
  %583 = vrot.lane.b32.xlu0 %v257, 44
  %v584 = vpop.permute.xlu0 %583
  %v588 = vunpack.c.l.b16 %v580
  %v589 = vunpack.c.l.b16 %v581
  %v590 = vunpack.c.l.b16 %v582
  %v591 = vpack.c.b16 %v589, %v588
  %v592 = vpack.c.b16 %v590, %v590
  %v595 = vsel %vm66, %v584, 0
  %v598 = vsel %vm43, %v592, 0
  %600 = vmatprep.subr.bf16.mxu0 0
  %601 = vmatpush1.bf16.msra.mxu0 %v591
  %602 = vmatprep.subr.bf16.mxu0 0
  %603 = vmatpush1.bf16.msra.mxu0 %v598
  %604 = vmatprep.subr.bf16.mxu0 0
  %605 = vmatpush1.bf16.msra.mxu0 0
  %606 = vmatprep.subr.bf16.mxu0 0
  %607 = vmatpush1.bf16.msra.mxu0 0
  %608 = vmatprep.subr.bf16.mxu0 0
  %609 = vmatpush1.bf16.msra.mxu0 0
  %610 = vmatprep.subr.bf16.mxu0 0
  %611 = vmatpush1.bf16.msra.mxu0 0
  %612 = vmatprep.subr.bf16.mxu0 0
  %613 = vmatpush1.bf16.msra.mxu0 0
  %614 = vmatprep.subr.bf16.mxu0 0
  %615 = vmatpush1.bf16.msra.mxu0 0
  %616 = vmatprep.subr.bf16.mxu0 0
  %617 = vmatpush1.bf16.msra.mxu0 0
  %618 = vmatprep.subr.bf16.mxu0 0
  %619 = vmatpush1.bf16.msra.mxu0 0
  %620 = vmatprep.subr.bf16.mxu0 0
  %621 = vmatpush1.bf16.msra.mxu0 0
  %622 = vmatprep.subr.bf16.mxu0 0
  %623 = vmatpush1.bf16.msra.mxu0 0
  %624 = vmatprep.subr.bf16.mxu0 0
  %625 = vmatpush1.bf16.msra.mxu0 0
  %626 = vmatprep.subr.bf16.mxu0 0
  %627 = vmatpush1.bf16.msra.mxu0 0
  %628 = vmatprep.subr.bf16.mxu0 0
  %629 = vmatpush1.bf16.msra.mxu0 0
  %630 = vmatprep.subr.bf16.mxu0 0
  %631 = vmatpush1.bf16.msra.mxu0 0
  %632 = vmatprep.mubr.bf16.mxu0 0
  %633 = vmatmul.mubr.bf16.gmra.mrb[0].mxu0 %v595
  %v634 = vpop.f32.mrb[0].mxu0
  %v635 = vadd.f32 0.0, %v634
  %v636 = vpop.f32.mrb[0].mxu0
  %v637 = vpop.f32.mrb[0].mxu0
  %v638 = vadd.f32 0.0, %v637
  %v639 = vpop.f32.mrb[0].mxu0
  %640 = vdwg.mxu0
  %v641 = vadd.f32 %v577, %v635
  %v642 = vadd.f32 %v578, %v638
  %v643 = vld [vmem:[%s2] sm:$0x1]
  %v645 = vlaneseq
  %v646 = vshrl.u32 %v645, 7
  %v647 = vsub.s32 0, %v646
  %v648 = vrot.slane %v643, %v647
  %v650 = vadd.f32 %v641, %v648
  %v651 = vadd.f32 %v642, %v648
  %vm652 = vcmask 523264
  %v653 = vsel %vm652, %v650, 0.0
  %v654 = vsel %vm652, %v651, 0.0
  %v655 = vadd.f32 %v653, %v654
  %v656 = vrot.slane %v655, 4
  %v657 = vadd.f32 %v655, %v656
  %v658 = vrot.slane %v657, 2
  %v659 = vadd.f32 %v657, %v658
  %v660 = vrot.slane %v659, 1
  %v661 = vadd.f32 %v659, %v660
  %v662 = vld [vmem:[%s5] sm:$0xff]
  %v663 = vld [vmem:[%s5 + $0x8] sm:$0xff]
  %v664 = vld [vmem:[%s5 + $0x10] sm:$0xff]
  %v665 = vld [vmem:[%s5 + $0x18] sm:$0xff]
  %v666 = vld [vmem:[%s5 + $0x20] sm:$0xff]
  %v667 = vld [vmem:[%s5 + $0x28] sm:$0xff]
  %v668 = vld [vmem:[%s5 + $0x30] sm:$0xff]
  %v669 = vld [vmem:[%s5 + $0x38] sm:$0xff]
  %v671 = vsel %vm652, %v661, 0
  %673 = vmatprep.subr.mxu0 0.0
  %674 = vmatpush1.msra.mxu0 %v662
  %675 = vmatprep.subr.mxu0 0.0
  %676 = vmatpush1.msra.mxu0 %v663
  %677 = vmatprep.subr.mxu0 0.0
  %678 = vmatpush1.msra.mxu0 %v664
  %679 = vmatprep.subr.mxu0 0.0
  %680 = vmatpush1.msra.mxu0 %v665
  %681 = vmatprep.subr.mxu0 0.0
  %682 = vmatpush1.msra.mxu0 %v666
  %683 = vmatprep.subr.mxu0 0.0
  %684 = vmatpush1.msra.mxu0 %v667
  %685 = vmatprep.subr.mxu0 0.0
  %686 = vmatpush1.msra.mxu0 %v668
  %687 = vmatprep.subr.mxu0 0.0
  %688 = vmatpush1.msra.mxu0 %v669
  %689 = vmatprep.subr.mxu0 0.0
  %690 = vmatpush1.msra.mxu0 0.0
  %691 = vmatprep.subr.mxu0 0.0
  %692 = vmatpush1.msra.mxu0 0.0
  %693 = vmatprep.subr.mxu0 0.0
  %694 = vmatpush1.msra.mxu0 0.0
  %695 = vmatprep.subr.mxu0 0.0
  %696 = vmatpush1.msra.mxu0 0.0
  %697 = vmatprep.subr.mxu0 0.0
  %698 = vmatpush1.msra.mxu0 0.0
  %699 = vmatprep.subr.mxu0 0.0
  %700 = vmatpush1.msra.mxu0 0.0
  %701 = vmatprep.subr.mxu0 0.0
  %702 = vmatpush1.msra.mxu0 0.0
  %703 = vmatprep.subr.mxu0 0.0
  %704 = vmatpush1.msra.mxu0 0.0
  %705 = vmatprep.subr.mxu0 0.0
  %706 = vmatpush1.msra.mxu0 0.0
  %707 = vmatprep.subr.mxu0 0.0
  %708 = vmatpush1.msra.mxu0 0.0
  %709 = vmatprep.subr.mxu0 0.0
  %710 = vmatpush1.msra.mxu0 0.0
  %711 = vmatprep.subr.mxu0 0.0
  %712 = vmatpush1.msra.mxu0 0.0
  %713 = vmatprep.subr.mxu0 0.0
  %714 = vmatpush1.msra.mxu0 0.0
  %715 = vmatprep.subr.mxu0 0.0
  %716 = vmatpush1.msra.mxu0 0.0
  %717 = vmatprep.subr.mxu0 0.0
  %718 = vmatpush1.msra.mxu0 0.0
  %719 = vmatprep.subr.mxu0 0.0
  %720 = vmatpush1.msra.mxu0 0.0
  %721 = vmatprep.subr.mxu0 0.0
  %722 = vmatpush1.msra.mxu0 0.0
  %723 = vmatprep.subr.mxu0 0.0
  %724 = vmatpush1.msra.mxu0 0.0
  %725 = vmatprep.subr.mxu0 0.0
  %726 = vmatpush1.msra.mxu0 0.0
  %727 = vmatprep.subr.mxu0 0.0
  %728 = vmatpush1.msra.mxu0 0.0
  %729 = vmatprep.subr.mxu0 0.0
  %730 = vmatpush1.msra.mxu0 0.0
  %731 = vmatprep.subr.mxu0 0.0
  %732 = vmatpush1.msra.mxu0 0.0
  %733 = vmatprep.subr.mxu0 0.0
  %734 = vmatpush1.msra.mxu0 0.0
  %735 = vmatprep.subr.mxu0 0.0
  %736 = vmatpush1.msra.mxu0 0.0
  %737 = vmatprep.mubr.f32.mxu0 0.0
  %738 = vmatmul.mubr.f32.gmra.mrb[0].mxu0 %v671
  %v739 = vpop.f32.mrb[0].mxu0
  %v740 = vadd.f32 0.0, %v739
  %v741 = vpop.f32.mrb[0].mxu0
  %742 = vdwg.mxu0
  %v743 = vmul.f32 %v650, %v650
  %v744 = vmul.f32 %v651, %v651
  %v745 = vsel %vm652, %v743, 0.0
  %v746 = vsel %vm652, %v744, 0.0
  %v747 = vadd.f32 %v745, %v746
  %v748 = vrot.slane %v747, 4
  %v749 = vadd.f32 %v747, %v748
  %v750 = vrot.slane %v749, 2
  %v751 = vadd.f32 %v749, %v750
  %v752 = vrot.slane %v751, 1
  %v753 = vadd.f32 %v751, %v752
  %v755 = vsel %vm652, %v753, 0
  %757 = vmatprep.subr.mxu0 0.0
  %758 = vmatpush1.msra.mxu0 %v662
  %759 = vmatprep.subr.mxu0 0.0
  %760 = vmatpush1.msra.mxu0 %v663
  %761 = vmatprep.subr.mxu0 0.0
  %762 = vmatpush1.msra.mxu0 %v664
  %763 = vmatprep.subr.mxu0 0.0
  %764 = vmatpush1.msra.mxu0 %v665
  %765 = vmatprep.subr.mxu0 0.0
  %766 = vmatpush1.msra.mxu0 %v666
  %767 = vmatprep.subr.mxu0 0.0
  %768 = vmatpush1.msra.mxu0 %v667
  %769 = vmatprep.subr.mxu0 0.0
  %770 = vmatpush1.msra.mxu0 %v668
  %771 = vmatprep.subr.mxu0 0.0
  %772 = vmatpush1.msra.mxu0 %v669
  %773 = vmatprep.subr.mxu0 0.0
  %774 = vmatpush1.msra.mxu0 0.0
  %775 = vmatprep.subr.mxu0 0.0
  %776 = vmatpush1.msra.mxu0 0.0
  %777 = vmatprep.subr.mxu0 0.0
  %778 = vmatpush1.msra.mxu0 0.0
  %779 = vmatprep.subr.mxu0 0.0
  %780 = vmatpush1.msra.mxu0 0.0
  %781 = vmatprep.subr.mxu0 0.0
  %782 = vmatpush1.msra.mxu0 0.0
  %783 = vmatprep.subr.mxu0 0.0
  %784 = vmatpush1.msra.mxu0 0.0
  %785 = vmatprep.subr.mxu0 0.0
  %786 = vmatpush1.msra.mxu0 0.0
  %787 = vmatprep.subr.mxu0 0.0
  %788 = vmatpush1.msra.mxu0 0.0
  %789 = vmatprep.subr.mxu0 0.0
  %790 = vmatpush1.msra.mxu0 0.0
  %791 = vmatprep.subr.mxu0 0.0
  %792 = vmatpush1.msra.mxu0 0.0
  %793 = vmatprep.subr.mxu0 0.0
  %794 = vmatpush1.msra.mxu0 0.0
  %795 = vmatprep.subr.mxu0 0.0
  %796 = vmatpush1.msra.mxu0 0.0
  %797 = vmatprep.subr.mxu0 0.0
  %798 = vmatpush1.msra.mxu0 0.0
  %799 = vmatprep.subr.mxu0 0.0
  %800 = vmatpush1.msra.mxu0 0.0
  %801 = vmatprep.subr.mxu0 0.0
  %802 = vmatpush1.msra.mxu0 0.0
  %803 = vmatprep.subr.mxu0 0.0
  %804 = vmatpush1.msra.mxu0 0.0
  %805 = vmatprep.subr.mxu0 0.0
  %806 = vmatpush1.msra.mxu0 0.0
  %807 = vmatprep.subr.mxu0 0.0
  %808 = vmatpush1.msra.mxu0 0.0
  %809 = vmatprep.subr.mxu0 0.0
  %810 = vmatpush1.msra.mxu0 0.0
  %811 = vmatprep.subr.mxu0 0.0
  %812 = vmatpush1.msra.mxu0 0.0
  %813 = vmatprep.subr.mxu0 0.0
  %814 = vmatpush1.msra.mxu0 0.0
  %815 = vmatprep.subr.mxu0 0.0
  %816 = vmatpush1.msra.mxu0 0.0
  %817 = vmatprep.subr.mxu0 0.0
  %818 = vmatpush1.msra.mxu0 0.0
  %819 = vmatprep.subr.mxu0 0.0
  %820 = vmatpush1.msra.mxu0 0.0
  %821 = vmatprep.mubr.f32.mxu0 0.0
  %822 = vmatmul.mubr.f32.gmra.mrb[0].mxu0 %v755
  %v823 = vpop.f32.mrb[0].mxu0
  %v824 = vadd.f32 0.0, %v823
  %v825 = vpop.f32.mrb[0].mxu0
  %826 = vdwg.mxu0
  %v827 = vrcp.pop 128.0
  %v828 = vmul.f32 %v740, %v827
  %v829 = vmul.f32 %v824, %v827
  %v830 = vmul.f32 %v828, %v828
  %v831 = vsub.f32 %v829, %v830
  %v832 = vld [vmem:[%s3] sm:$0x1]
  %v833 = vadd.f32 %v831, 1e-05
  %v834 = vrsqrt.pop %v833
  %v835 = vmul.f32 %v832, %v834
  %v836 = vld [vmem:[%s4] sm:$0x1]
  %v837 = vmul.f32 %v828, %v835
  %v838 = vsub.f32 %v836, %v837
  %v839 = vld [vmem:[%s6] sm:$0xff]
  %vm840 = vcmask 64512
  %v842 = vsel %vm840, %v835, 0
  %844 = vmatprep.subr.mxu0 0.0
  %845 = vmatpush1.msra.mxu0 %v839
  %846 = vmatprep.subr.mxu0 0.0
  %847 = vmatpush1.msra.mxu0 0.0
  %848 = vmatprep.subr.mxu0 0.0
  %849 = vmatpush1.msra.mxu0 0.0
  %850 = vmatprep.subr.mxu0 0.0
  %851 = vmatpush1.msra.mxu0 0.0
  %852 = vmatprep.subr.mxu0 0.0
  %853 = vmatpush1.msra.mxu0 0.0
  %854 = vmatprep.subr.mxu0 0.0
  %855 = vmatpush1.msra.mxu0 0.0
  %856 = vmatprep.subr.mxu0 0.0
  %857 = vmatpush1.msra.mxu0 0.0
  %858 = vmatprep.subr.mxu0 0.0
  %859 = vmatpush1.msra.mxu0 0.0
  %860 = vmatprep.subr.mxu0 0.0
  %861 = vmatpush1.msra.mxu0 0.0
  %862 = vmatprep.subr.mxu0 0.0
  %863 = vmatpush1.msra.mxu0 0.0
  %864 = vmatprep.subr.mxu0 0.0
  %865 = vmatpush1.msra.mxu0 0.0
  %866 = vmatprep.subr.mxu0 0.0
  %867 = vmatpush1.msra.mxu0 0.0
  %868 = vmatprep.subr.mxu0 0.0
  %869 = vmatpush1.msra.mxu0 0.0
  %870 = vmatprep.subr.mxu0 0.0
  %871 = vmatpush1.msra.mxu0 0.0
  %872 = vmatprep.subr.mxu0 0.0
  %873 = vmatpush1.msra.mxu0 0.0
  %874 = vmatprep.subr.mxu0 0.0
  %875 = vmatpush1.msra.mxu0 0.0
  %876 = vmatprep.subr.mxu0 0.0
  %877 = vmatpush1.msra.mxu0 0.0
  %878 = vmatprep.subr.mxu0 0.0
  %879 = vmatpush1.msra.mxu0 0.0
  %880 = vmatprep.subr.mxu0 0.0
  %881 = vmatpush1.msra.mxu0 0.0
  %882 = vmatprep.subr.mxu0 0.0
  %883 = vmatpush1.msra.mxu0 0.0
  %884 = vmatprep.subr.mxu0 0.0
  %885 = vmatpush1.msra.mxu0 0.0
  %886 = vmatprep.subr.mxu0 0.0
  %887 = vmatpush1.msra.mxu0 0.0
  %888 = vmatprep.subr.mxu0 0.0
  %889 = vmatpush1.msra.mxu0 0.0
  %890 = vmatprep.subr.mxu0 0.0
  %891 = vmatpush1.msra.mxu0 0.0
  %892 = vmatprep.subr.mxu0 0.0
  %893 = vmatpush1.msra.mxu0 0.0
  %894 = vmatprep.subr.mxu0 0.0
  %895 = vmatpush1.msra.mxu0 0.0
  %896 = vmatprep.subr.mxu0 0.0
  %897 = vmatpush1.msra.mxu0 0.0
  %898 = vmatprep.subr.mxu0 0.0
  %899 = vmatpush1.msra.mxu0 0.0
  %900 = vmatprep.subr.mxu0 0.0
  %901 = vmatpush1.msra.mxu0 0.0
  %902 = vmatprep.subr.mxu0 0.0
  %903 = vmatpush1.msra.mxu0 0.0
  %904 = vmatprep.subr.mxu0 0.0
  %905 = vmatpush1.msra.mxu0 0.0
  %906 = vmatprep.subr.mxu0 0.0
  %907 = vmatpush1.msra.mxu0 0.0
  %908 = vmatprep.mubr.f32.mxu0 0.0
  %909 = vmatmul.mubr.f32.gmra.mrb[0].mxu0 %v842
  %v910 = vpop.f32.mrb[0].mxu0
  %v911 = vadd.f32 0.0, %v910
  %v912 = vpop.f32.mrb[0].mxu0
  %913 = vdwg.mxu0
  %v915 = vsel %vm840, %v838, 0
  %917 = vmatprep.subr.mxu0 0.0
  %918 = vmatpush1.msra.mxu0 %v839
  %919 = vmatprep.subr.mxu0 0.0
  %920 = vmatpush1.msra.mxu0 0.0
  %921 = vmatprep.subr.mxu0 0.0
  %922 = vmatpush1.msra.mxu0 0.0
  %923 = vmatprep.subr.mxu0 0.0
  %924 = vmatpush1.msra.mxu0 0.0
  %925 = vmatprep.subr.mxu0 0.0
  %926 = vmatpush1.msra.mxu0 0.0
  %927 = vmatprep.subr.mxu0 0.0
  %928 = vmatpush1.msra.mxu0 0.0
  %929 = vmatprep.subr.mxu0 0.0
  %930 = vmatpush1.msra.mxu0 0.0
  %931 = vmatprep.subr.mxu0 0.0
  %932 = vmatpush1.msra.mxu0 0.0
  %933 = vmatprep.subr.mxu0 0.0
  %934 = vmatpush1.msra.mxu0 0.0
  %935 = vmatprep.subr.mxu0 0.0
  %936 = vmatpush1.msra.mxu0 0.0
  %937 = vmatprep.subr.mxu0 0.0
  %938 = vmatpush1.msra.mxu0 0.0
  %939 = vmatprep.subr.mxu0 0.0
  %940 = vmatpush1.msra.mxu0 0.0
  %941 = vmatprep.subr.mxu0 0.0
  %942 = vmatpush1.msra.mxu0 0.0
  %943 = vmatprep.subr.mxu0 0.0
  %944 = vmatpush1.msra.mxu0 0.0
  %945 = vmatprep.subr.mxu0 0.0
  %946 = vmatpush1.msra.mxu0 0.0
  %947 = vmatprep.subr.mxu0 0.0
  %948 = vmatpush1.msra.mxu0 0.0
  %949 = vmatprep.subr.mxu0 0.0
  %950 = vmatpush1.msra.mxu0 0.0
  %951 = vmatprep.subr.mxu0 0.0
  %952 = vmatpush1.msra.mxu0 0.0
  %953 = vmatprep.subr.mxu0 0.0
  %954 = vmatpush1.msra.mxu0 0.0
  %955 = vmatprep.subr.mxu0 0.0
  %956 = vmatpush1.msra.mxu0 0.0
  %957 = vmatprep.subr.mxu0 0.0
  %958 = vmatpush1.msra.mxu0 0.0
  %959 = vmatprep.subr.mxu0 0.0
  %960 = vmatpush1.msra.mxu0 0.0
  %961 = vmatprep.subr.mxu0 0.0
  %962 = vmatpush1.msra.mxu0 0.0
  %963 = vmatprep.subr.mxu0 0.0
  %964 = vmatpush1.msra.mxu0 0.0
  %965 = vmatprep.subr.mxu0 0.0
  %966 = vmatpush1.msra.mxu0 0.0
  %967 = vmatprep.subr.mxu0 0.0
  %968 = vmatpush1.msra.mxu0 0.0
  %969 = vmatprep.subr.mxu0 0.0
  %970 = vmatpush1.msra.mxu0 0.0
  %971 = vmatprep.subr.mxu0 0.0
  %972 = vmatpush1.msra.mxu0 0.0
  %973 = vmatprep.subr.mxu0 0.0
  %974 = vmatpush1.msra.mxu0 0.0
  %975 = vmatprep.subr.mxu0 0.0
  %976 = vmatpush1.msra.mxu0 0.0
  %977 = vmatprep.subr.mxu0 0.0
  %978 = vmatpush1.msra.mxu0 0.0
  %979 = vmatprep.subr.mxu0 0.0
  %980 = vmatpush1.msra.mxu0 0.0
  %981 = vmatprep.mubr.f32.mxu0 0.0
  %982 = vmatmul.mubr.f32.gmra.mrb[0].mxu0 %v915
  %v983 = vpop.f32.mrb[0].mxu0
  %v984 = vadd.f32 0.0, %v983
  %v985 = vpop.f32.mrb[0].mxu0
  %986 = vdwg.mxu0
  %v987 = vlaneseq
  %v988 = vshrl.u32 %v987, 7
  %v989 = vsub.s32 0, %v988
  %v990 = vrot.slane %v911, %v989
  %v991 = vmul.f32 %v650, %v990
  %v992 = vmul.f32 %v651, %v990
  %v993 = vlaneseq
  %v994 = vshrl.u32 %v993, 7
  %v995 = vsub.s32 0, %v994
  %v996 = vrot.slane %v984, %v995
  %v997 = vadd.f32 %v991, %v996
  %v998 = vadd.f32 %v992, %v996
  %vm999 = vcmp.ge.f32.partialorder %v997, 0.0
  %vm1000 = vcmp.ge.f32.partialorder %v998, 0.0
  %v1001 = vmul.f32 %v997, 0.01
  %v1002 = vmul.f32 %v998, 0.01
  %v1003 = vsel %vm999, %v997, %v1001
  %v1004 = vsel %vm1000, %v998, %v1002
  %v1005 = vpack.c.bf16 %v1004, %v1003
  %v1007 = vunpack.c.l.b16 %v1005
  %v1008 = vunpack.c.h.b16 %v1005
  %v1009 = vpack.c.b16 %v1007, %v1007
  %v1010 = vpack.c.b16 %v1008, %v1008
  %vm1013 = vcmask 519168
  %1014 = vst.msk [vmem:[%s7] sm:$0xf] %vm1013, %v1009
  %1015 = vst.msk [vmem:[%s7 + $0x4] sm:$0xf] %vm1013, %v1010
  // Predicated region
  $region30: #{vae_forward.7} parent=0 // pred_check
    _
  $region31: #{vae_forward.7} parent=0 // pred_check_branch
    %1017 = sbr.rel (0) target = $region33
  $region32: #{vae_forward.7} parent=0 // pred_region
    _
  $region33: #{vae_forward.7} parent=0 // pred_fallthru
    _
  // Predicated region
  $region34: #{vae_forward.7} parent=0 // pred_check
    _
  $region35: #{vae_forward.7} parent=0 // pred_check_branch
    %1019 = sbr.rel (0) target = $region37
  $region36: #{vae_forward.7} parent=0 // pred_region
    _
  $region37: #{vae_forward.7} parent=0 // pred_fallthru
    _

// kernel: tile.83
$region0: #{tile.83}
  #allocation0 [shape = 's32[1]{0}', space=sflag, size = 0x4, scoped, tag = 'scoped memory for tile.83']
  %s0 = inlined_call_operand.vmem [shape: f32[32], index: 0, kind: input, shape index: {}]
  %s1 = inlined_call_operand.vmem [shape: f32[2,32], index: 1, kind: output, shape index: {}]
  // Predicated region
  $region2: #{tile.83} parent=0 // pred_check
    _
  $region3: #{tile.83} parent=0 // pred_check_branch
    %3 = sbr.rel (0) target = $region5
  $region4: #{tile.83} parent=0 // pred_region
    _
  $region5: #{tile.83} parent=0 // pred_fallthru
    _
  %v4 = vld [vmem:[%s0] ss:$0 sm:$0xff]
  %5 = vst [vmem:[%s1] sm:$0x3] %v4

// kernel: tile.84
$region0: #{tile.84}
  %s0 = inlined_call_operand.vmem [shape: f32[2,32], index: 0, kind: input, shape index: {}]
  %s1 = inlined_call_operand.vmem [shape: f32[1,64], index: 1, kind: output, shape index: {}]
  $region1: #{tile.84} parent=0
    #allocation0 [shape = 'u8[4096]{0}', space=vmem, size = 0x1000, scoped, tag = 'scoped mem for output reshape']
    #allocation1 [shape = 'u8[4096]{0}', space=vmem, size = 0x1000, scoped, tag = 'scoped mem for input reshape']
    %s3 = sshllo.u32 0, 2
    %v4 = vld [vmem:[%s0] sm:%s3]
    %5 = vst [vmem:[#allocation1] sm:%s3] %v4
    %v6 = vld [vmem:[#allocation1] sm:$0x1]
    %vm7 = vcmask 261120
    %8 = vst.msk [vmem:[#allocation0] sm:$0x1] %vm7, %v6
    %s9 = scalar_lea.vmem [#allocation1], 1
    %v10 = vld [vmem:[%s9] sm:$0x1]
    %11 = vrot.lane.b32.xlu0 %v10, 32
    %v12 = vpop.permute.xlu0 %11
    %vm13 = vcmask 523520
    %14 = vst.msk [vmem:[#allocation0] sm:$0x1] %vm13, %v12
    %s16 = sshllo.u32 0, 1
    %v18 = vld [vmem:[#allocation0] sm:%s16]
    %s19 = sshllo.u32 0, 1
    %20 = vst [vmem:[%s1] sm:%s19] %v18

// kernel: tile.89
$region0: #{tile.89}
  %s0 = inlined_call_operand.vmem [shape: f32[2,32,32], index: 0, kind: input, shape index: {}]
  %s1 = inlined_call_operand.vmem [shape: f32[64,32], index: 1, kind: output, shape index: {}]
  $region1: #{tile.89} parent=0
    #allocation0 [shape = 'u8[131072]{0}', space=vmem, size = 0x20000, scoped, tag = 'scoped mem for input reshape']
    %s3 = sshllo.u32 0, 2
    %s4 = smul.addr 2, 31
    %s5 = scalar_lea.vmem %s0, %s4
    %v6 = vld [vmem:[%s5] sm:%s3]
    %s7 = scalar_lea.vmem [#allocation0], 248
    %8 = vst [vmem:[%s7] sm:%s3] %v6
    %s9 = smul.addr 2, 30
    %s10 = scalar_lea.vmem %s0, %s9
    %v11 = vld [vmem:[%s10] sm:%s3]
    %s12 = scalar_lea.vmem [#allocation0], 240
    %13 = vst [vmem:[%s12] sm:%s3] %v11
    %s14 = smul.addr 2, 29
    %s15 = scalar_lea.vmem %s0, %s14
    %v16 = vld [vmem:[%s15] sm:%s3]
    %s17 = scalar_lea.vmem [#allocation0], 232
    %18 = vst [vmem:[%s17] sm:%s3] %v16
    %s19 = smul.addr 2, 28
    %s20 = scalar_lea.vmem %s0, %s19
    %v21 = vld [vmem:[%s20] sm:%s3]
    %s22 = scalar_lea.vmem [#allocation0], 224
    %23 = vst [vmem:[%s22] sm:%s3] %v21
    %s24 = smul.addr 2, 27
    %s25 = scalar_lea.vmem %s0, %s24
    %v26 = vld [vmem:[%s25] sm:%s3]
    %s27 = scalar_lea.vmem [#allocation0], 216
    %28 = vst [vmem:[%s27] sm:%s3] %v26
    %s29 = smul.addr 2, 26
    %s30 = scalar_lea.vmem %s0, %s29
    %v31 = vld [vmem:[%s30] sm:%s3]
    %s32 = scalar_lea.vmem [#allocation0], 208
    %33 = vst [vmem:[%s32] sm:%s3] %v31
    %s34 = smul.addr 2, 25
    %s35 = scalar_lea.vmem %s0, %s34
    %v36 = vld [vmem:[%s35] sm:%s3]
    %s37 = scalar_lea.vmem [#allocation0], 200
    %38 = vst [vmem:[%s37] sm:%s3] %v36
    %s39 = smul.addr 2, 24
    %s40 = scalar_lea.vmem %s0, %s39
    %v41 = vld [vmem:[%s40] sm:%s3]
    %s42 = scalar_lea.vmem [#allocation0], 192
    %43 = vst [vmem:[%s42] sm:%s3] %v41
    %s44 = smul.addr 2, 23
    %s45 = scalar_lea.vmem %s0, %s44
    %v46 = vld [vmem:[%s45] sm:%s3]
    %s47 = scalar_lea.vmem [#allocation0], 184
    %48 = vst [vmem:[%s47] sm:%s3] %v46
    %s49 = smul.addr 2, 22
    %s50 = scalar_lea.vmem %s0, %s49
    %v51 = vld [vmem:[%s50] sm:%s3]
    %s52 = scalar_lea.vmem [#allocation0], 176
    %53 = vst [vmem:[%s52] sm:%s3] %v51
    %s54 = smul.addr 2, 21
    %s55 = scalar_lea.vmem %s0, %s54
    %v56 = vld [vmem:[%s55] sm:%s3]
    %s57 = scalar_lea.vmem [#allocation0], 168
    %58 = vst [vmem:[%s57] sm:%s3] %v56
    %s59 = smul.addr 2, 20
    %s60 = scalar_lea.vmem %s0, %s59
    %v61 = vld [vmem:[%s60] sm:%s3]
    %s62 = scalar_lea.vmem [#allocation0], 160
    %63 = vst [vmem:[%s62] sm:%s3] %v61
    %s64 = smul.addr 2, 19
    %s65 = scalar_lea.vmem %s0, %s64
    %v66 = vld [vmem:[%s65] sm:%s3]
    %s67 = scalar_lea.vmem [#allocation0], 152
    %68 = vst [vmem:[%s67] sm:%s3] %v66
    %s69 = smul.addr 2, 18
    %s70 = scalar_lea.vmem %s0, %s69
    %v71 = vld [vmem:[%s70] sm:%s3]
    %s72 = scalar_lea.vmem [#allocation0], 144
    %73 = vst [vmem:[%s72] sm:%s3] %v71
    %s74 = smul.addr 2, 17
    %s75 = scalar_lea.vmem %s0, %s74
    %v76 = vld [vmem:[%s75] sm:%s3]
    %s77 = scalar_lea.vmem [#allocation0], 136
    %78 = vst [vmem:[%s77] sm:%s3] %v76
    %s79 = smul.addr 2, 16
    %s80 = scalar_lea.vmem %s0, %s79
    %v81 = vld [vmem:[%s80] sm:%s3]
    %s82 = scalar_lea.vmem [#allocation0], 128
    %83 = vst [vmem:[%s82] sm:%s3] %v81
    %s84 = smul.addr 2, 15
    %s85 = scalar_lea.vmem %s0, %s84
    %v86 = vld [vmem:[%s85] sm:%s3]
    %s87 = scalar_lea.vmem [#allocation0], 120
    %88 = vst [vmem:[%s87] sm:%s3] %v86
    %s89 = smul.addr 2, 14
    %s90 = scalar_lea.vmem %s0, %s89
    %v91 = vld [vmem:[%s90] sm:%s3]
    %s92 = scalar_lea.vmem [#allocation0], 112
    %93 = vst [vmem:[%s92] sm:%s3] %v91
    %s94 = smul.addr 2, 13
    %s95 = scalar_lea.vmem %s0, %s94
    %v96 = vld [vmem:[%s95] sm:%s3]
    %s97 = scalar_lea.vmem [#allocation0], 104
    %98 = vst [vmem:[%s97] sm:%s3] %v96
    %s99 = smul.addr 2, 12
    %s100 = scalar_lea.vmem %s0, %s99
    %v101 = vld [vmem:[%s100] sm:%s3]
    %s102 = scalar_lea.vmem [#allocation0], 96
    %103 = vst [vmem:[%s102] sm:%s3] %v101
    %s104 = smul.addr 2, 11
    %s105 = scalar_lea.vmem %s0, %s104
    %v106 = vld [vmem:[%s105] sm:%s3]
    %s107 = scalar_lea.vmem [#allocation0], 88
    %108 = vst [vmem:[%s107] sm:%s3] %v106
    %s109 = smul.addr 2, 10
    %s110 = scalar_lea.vmem %s0, %s109
    %v111 = vld [vmem:[%s110] sm:%s3]
    %s112 = scalar_lea.vmem [#allocation0], 80
    %113 = vst [vmem:[%s112] sm:%s3] %v111
    %s114 = smul.addr 2, 9
    %s115 = scalar_lea.vmem %s0, %s114
    %v116 = vld [vmem:[%s115] sm:%s3]
    %s117 = scalar_lea.vmem [#allocation0], 72
    %118 = vst [vmem:[%s117] sm:%s3] %v116
    %s119 = smul.addr 2, 8
    %s120 = scalar_lea.vmem %s0, %s119
    %v121 = vld [vmem:[%s120] sm:%s3]
    %s122 = scalar_lea.vmem [#allocation0], 64
    %123 = vst [vmem:[%s122] sm:%s3] %v121
    %s124 = smul.addr 2, 7
    %s125 = scalar_lea.vmem %s0, %s124
    %v126 = vld [vmem:[%s125] sm:%s3]
    %s127 = scalar_lea.vmem [#allocation0], 56
    %128 = vst [vmem:[%s127] sm:%s3] %v126
    %s129 = smul.addr 2, 6
    %s130 = scalar_lea.vmem %s0, %s129
    %v131 = vld [vmem:[%s130] sm:%s3]
    %s132 = scalar_lea.vmem [#allocation0], 48
    %133 = vst [vmem:[%s132] sm:%s3] %v131
    %s134 = smul.addr 2, 5
    %s135 = scalar_lea.vmem %s0, %s134
    %v136 = vld [vmem:[%s135] sm:%s3]
    %s137 = scalar_lea.vmem [#allocation0], 40
    %138 = vst [vmem:[%s137] sm:%s3] %v136
    %s139 = smul.addr 2, 4
    %s140 = scalar_lea.vmem %s0, %s139
    %v141 = vld [vmem:[%s140] sm:%s3]
    %s142 = scalar_lea.vmem [#allocation0], 32
    %143 = vst [vmem:[%s142] sm:%s3] %v141
    %s144 = smul.addr 2, 3
    %s145 = scalar_lea.vmem %s0, %s144
    %v146 = vld [vmem:[%s145] sm:%s3]
    %s147 = scalar_lea.vmem [#allocation0], 24
    %148 = vst [vmem:[%s147] sm:%s3] %v146
    %s149 = smul.addr 2, 2
    %s150 = scalar_lea.vmem %s0, %s149
    %v151 = vld [vmem:[%s150] sm:%s3]
    %s152 = scalar_lea.vmem [#allocation0], 16
    %153 = vst [vmem:[%s152] sm:%s3] %v151
    %s154 = scalar_lea.vmem %s0, 2
    %v155 = vld [vmem:[%s154] sm:%s3]
    %s156 = scalar_lea.vmem [#allocation0], 8
    %157 = vst [vmem:[%s156] sm:%s3] %v155
    %v158 = vld [vmem:[%s0] sm:%s3]
    %159 = vst [vmem:[#allocation0] sm:%s3] %v158
    %v160 = vld [vmem:[#allocation0] ss:$8 sm:$0xf]
    %v161 = vld [vmem:[#allocation0] ss:$8 sm:$0xf0]
    %vm162 = vcmask 1047556
    %v163 = vsel %vm162, %v161, %v160
    %vm164 = vcmask 261120
    %165 = vst.msk [vmem:[%s1] sm:$0xff] %vm164, %v163
    %s166 = scalar_lea.vmem [#allocation0], 64
    %v167 = vld [vmem:[%s166] ss:$8 sm:$0xf]
    %s168 = scalar_lea.vmem [#allocation0], 64
    %v169 = vld [vmem:[%s168] ss:$8 sm:$0xf0]
    %vm170 = vcmask 1047556
    %v171 = vsel %vm170, %v169, %v167
    %vm172 = vcmask 261120
    %s173 = scalar_lea.vmem %s1, 8
    %174 = vst.msk [vmem:[%s173] sm:$0xff] %vm172, %v171
    %s175 = scalar_lea.vmem [#allocation0], 128
    %v176 = vld [vmem:[%s175] ss:$8 sm:$0xf]
    %s177 = scalar_lea.vmem [#allocation0], 128
    %v178 = vld [vmem:[%s177] ss:$8 sm:$0xf0]
    %vm179 = vcmask 1047556
    %v180 = vsel %vm179, %v178, %v176
    %vm181 = vcmask 261120
    %s182 = scalar_lea.vmem %s1, 16
    %183 = vst.msk [vmem:[%s182] sm:$0xff] %vm181, %v180
    %s184 = scalar_lea.vmem [#allocation0], 192
    %v185 = vld [vmem:[%s184] ss:$8 sm:$0xf]
    %s186 = scalar_lea.vmem [#allocation0], 192
    %v187 = vld [vmem:[%s186] ss:$8 sm:$0xf0]
    %vm188 = vcmask 1047556
    %v189 = vsel %vm188, %v187, %v185
    %vm190 = vcmask 261120
    %s191 = scalar_lea.vmem %s1, 24
    %192 = vst.msk [vmem:[%s191] sm:$0xff] %vm190, %v189
    %s193 = scalar_lea.vmem [#allocation0], 1
    %v194 = vld [vmem:[%s193] ss:$8 sm:$0xf]
    %s195 = scalar_lea.vmem [#allocation0], 1
    %v196 = vld [vmem:[%s195] ss:$8 sm:$0xf0]
    %vm197 = vcmask 1047556
    %v198 = vsel %vm197, %v196, %v194
    %199 = vrot.lane.b32.xlu0 %v198, 32
    %v200 = vpop.permute.xlu0 %199
    %vm201 = vcmask 523520
    %202 = vst.msk [vmem:[%s1] sm:$0xff] %vm201, %v200
    %s203 = scalar_lea.vmem [#allocation0], 65
    %v204 = vld [vmem:[%s203] ss:$8 sm:$0xf]
    %s205 = scalar_lea.vmem [#allocation0], 65
    %v206 = vld [vmem:[%s205] ss:$8 sm:$0xf0]
    %vm207 = vcmask 1047556
    %v208 = vsel %vm207, %v206, %v204
    %209 = vrot.lane.b32.xlu0 %v208, 32
    %v210 = vpop.permute.xlu0 %209
    %vm211 = vcmask 523520
    %s212 = scalar_lea.vmem %s1, 8
    %213 = vst.msk [vmem:[%s212] sm:$0xff] %vm211, %v210
    %s214 = scalar_lea.vmem [#allocation0], 129
    %v215 = vld [vmem:[%s214] ss:$8 sm:$0xf]
    %s216 = scalar_lea.vmem [#allocation0], 129
    %v217 = vld [vmem:[%s216] ss:$8 sm:$0xf0]
    %vm218 = vcmask 1047556
    %v219 = vsel %vm218, %v217, %v215
    %220 = vrot.lane.b32.xlu0 %v219, 32
    %v221 = vpop.permute.xlu0 %220
    %vm222 = vcmask 523520
    %s223 = scalar_lea.vmem %s1, 16
    %224 = vst.msk [vmem:[%s223] sm:$0xff] %vm222, %v221
    %s225 = scalar_lea.vmem [#allocation0], 193
    %v226 = vld [vmem:[%s225] ss:$8 sm:$0xf]
    %s227 = scalar_lea.vmem [#allocation0], 193
    %v228 = vld [vmem:[%s227] ss:$8 sm:$0xf0]
    %vm229 = vcmask 1047556
    %v230 = vsel %vm229, %v228, %v226
    %231 = vrot.lane.b32.xlu0 %v230, 32
    %v232 = vpop.permute.xlu0 %231
    %vm233 = vcmask 523520
    %s234 = scalar_lea.vmem %s1, 24
    %235 = vst.msk [vmem:[%s234] sm:$0xff] %vm233, %v232

// kernel: vae_forward.8
$region0: #{vae_forward.8}
  #allocation0 [shape = 'u32[]', space=smem, size = 0x4, offset = 0x4, fixed_abs, tag = 'smem constant byte address 0x4 - core index']
  #allocation1 [shape = 'u32[144,128]{1,0:T(1,128)}', space=vmem, size = 0x12000, scoped, tag = 'internal scratch']
  %s0 = inlined_call_operand.vmem [shape: bf16[10,160], index: 0, kind: input, shape index: {}]
  %s1 = inlined_call_operand.vmem [shape: bf16[9,32,64], index: 1, kind: input, shape index: {}]
  %s2 = inlined_call_operand.vmem [shape: f32[1,64], index: 2, kind: input, shape index: {}]
  %s3 = inlined_call_operand.vmem [shape: f32[1,16], index: 3, kind: input, shape index: {}]
  %s4 = inlined_call_operand.vmem [shape: f32[1,16], index: 4, kind: input, shape index: {}]
  %s5 = inlined_call_operand.vmem [shape: f32[64,16], index: 5, kind: input, shape index: {}]
  %s6 = inlined_call_operand.vmem [shape: f32[16,64], index: 6, kind: input, shape index: {}]
  %s7 = inlined_call_operand.vmem [shape: bf16[8,64], index: 7, kind: output, shape index: {}]
  %s8 = sld [smem:[#allocation0]]
  $region38: #{vae_forward.8} parent=0
    _
  %s10 = ssub.s32 1, %s8
  %s11 = scalar_select 0, %s10, %s8
  // Predicated region
  $region2: #{vae_forward.8} parent=0 // pred_check
    _
  $region3: #{vae_forward.8} parent=0 // pred_check_branch
    %13 = sbr.rel (0) target = $region5
  $region4: #{vae_forward.8} parent=0 // pred_region
    _
  $region5: #{vae_forward.8} parent=0 // pred_fallthru
    _
  // Predicated region
  $region6: #{vae_forward.8} parent=0 // pred_check
    _
  $region7: #{vae_forward.8} parent=0 // pred_check_branch
    %15 = sbr.rel (0) target = $region9
  $region8: #{vae_forward.8} parent=0 // pred_region
    _
  $region9: #{vae_forward.8} parent=0 // pred_fallthru
    _
  // Predicated region
  $region10: #{vae_forward.8} parent=0 // pred_check
    _
  $region11: #{vae_forward.8} parent=0 // pred_check_branch
    %17 = sbr.rel (0) target = $region13
  $region12: #{vae_forward.8} parent=0 // pred_region
    _
  $region13: #{vae_forward.8} parent=0 // pred_fallthru
    _
  // Predicated region
  $region14: #{vae_forward.8} parent=0 // pred_check
    _
  $region15: #{vae_forward.8} parent=0 // pred_check_branch
    %19 = sbr.rel (0) target = $region17
  $region16: #{vae_forward.8} parent=0 // pred_region
    _
  $region17: #{vae_forward.8} parent=0 // pred_fallthru
    _
  // Predicated region
  $region18: #{vae_forward.8} parent=0 // pred_check
    _
  $region19: #{vae_forward.8} parent=0 // pred_check_branch
    %21 = sbr.rel (0) target = $region21
  $region20: #{vae_forward.8} parent=0 // pred_region
    _
  $region21: #{vae_forward.8} parent=0 // pred_fallthru
    _
  // Predicated region
  $region22: #{vae_forward.8} parent=0 // pred_check
    _
  $region23: #{vae_forward.8} parent=0 // pred_check_branch
    %23 = sbr.rel (0) target = $region25
  $region24: #{vae_forward.8} parent=0 // pred_region
    _
  $region25: #{vae_forward.8} parent=0 // pred_fallthru
    _
  // Predicated region
  $region26: #{vae_forward.8} parent=0 // pred_check
    _
  $region27: #{vae_forward.8} parent=0 // pred_check_branch
    %25 = sbr.rel (0) target = $region29
  $region28: #{vae_forward.8} parent=0 // pred_region
    _
  $region29: #{vae_forward.8} parent=0 // pred_fallthru
    _
  %v27 = vld [vmem:[%s0] sm:$0x33]
  %v28 = vld [vmem:[%s0] sm:$0xcc]
  %v29 = vld [vmem:[%s0 + $0x8] sm:$0x11]
  %v31 = vunpack.c.l.b16 %v27
  %v32 = vunpack.c.h.b16 %v27
  %v33 = vpack.c.b16 %v31, %v31
  %v34 = vpack.c.b16 %v32, %v32
  %v37 = vunpack.c.l.b16 %v28
  %v38 = vunpack.c.h.b16 %v28
  %v39 = vunpack.c.l.b16 %v29
  %v40 = vunpack.c.h.b16 %v29
  %v41 = vpack.c.b16 %v39, %v37
  %v42 = vpack.c.b16 %v40, %v38
  %v44 = vshrl.u32 %v41, 16
  %v46 = vshll.u32 %v41, 16
  %v48 = vrot.slane %v46, 1
  %v49 = vor.u32 %v44, %v48
  %v51 = vshrl.u32 %v42, 16
  %v53 = vshll.u32 %v42, 16
  %v55 = vrot.slane %v53, 1
  %v56 = vor.u32 %v51, %v55
  %vm57 = vcmask 1041408
  %v60 = vsel %vm57, %v33, %v49
  %v63 = vsel %vm57, %v34, %v56
  %v64 = vld [vmem:[%s1] sm:$0xf]
  %v65 = vld [vmem:[%s1 + $0x4] sm:$0xf]
  %v66 = vld [vmem:[%s1 + $0x8] sm:$0xf]
  %v67 = vld [vmem:[%s1 + $0xc] sm:$0xf]
  %v68 = vld [vmem:[%s0] sm:$0x3]
  %v69 = vld [vmem:[%s0] sm:$0xc]
  %v70 = vld [vmem:[%s0 + $0x8] sm:$0x1]
  %v73 = vunpack.c.l.b16 %v69
  %v74 = vunpack.c.l.b16 %v70
  %v75 = vpack.c.b16 %v74, %v73
  %v77 = vshrl.u32 %v75, 16
  %v79 = vshll.u32 %v75, 16
  %v81 = vrot.slane %v79, 1
  %v82 = vor.u32 %v77, %v81
  %v85 = vsel %vm57, %v68, %v82
  %s86 = scalar_lea.vmem %s1, 16
  %v87 = vld [vmem:[%s86] sm:$0xf]
  %v88 = vld [vmem:[%s86 + $0x4] sm:$0xf]
  %v89 = vld [vmem:[%s86 + $0x8] sm:$0xf]
  %v90 = vld [vmem:[%s86 + $0xc] sm:$0xf]
  %92 = vrot.lane.b32.xlu0 %v85, 40
  %v93 = vpop.permute.xlu0 %92
  %v98 = vunpack.c.l.b16 %v87
  %v99 = vunpack.c.l.b16 %v88
  %v100 = vunpack.c.l.b16 %v89
  %v101 = vunpack.c.l.b16 %v90
  %v102 = vpack.c.b16 %v99, %v98
  %v103 = vpack.c.b16 %v101, %v100
  %vm106 = vcmask 261120
  %v108 = vsel %vm106, %v93, 0
  %110 = vmatprep.subr.bf16.mxu0 0
  %111 = vmatpush1.bf16.msra.mxu0 %v102
  %112 = vmatprep.subr.bf16.mxu0 0
  %113 = vmatpush1.bf16.msra.mxu0 %v103
  %114 = vmatprep.subr.bf16.mxu0 0
  %115 = vmatpush1.bf16.msra.mxu0 0
  %116 = vmatprep.subr.bf16.mxu0 0
  %117 = vmatpush1.bf16.msra.mxu0 0
  %118 = vmatprep.subr.bf16.mxu0 0
  %119 = vmatpush1.bf16.msra.mxu0 0
  %120 = vmatprep.subr.bf16.mxu0 0
  %121 = vmatpush1.bf16.msra.mxu0 0
  %122 = vmatprep.subr.bf16.mxu0 0
  %123 = vmatpush1.bf16.msra.mxu0 0
  %124 = vmatprep.subr.bf16.mxu0 0
  %125 = vmatpush1.bf16.msra.mxu0 0
  %126 = vmatprep.subr.bf16.mxu0 0
  %127 = vmatpush1.bf16.msra.mxu0 0
  %128 = vmatprep.subr.bf16.mxu0 0
  %129 = vmatpush1.bf16.msra.mxu0 0
  %130 = vmatprep.subr.bf16.mxu0 0
  %131 = vmatpush1.bf16.msra.mxu0 0
  %132 = vmatprep.subr.bf16.mxu0 0
  %133 = vmatpush1.bf16.msra.mxu0 0
  %134 = vmatprep.subr.bf16.mxu0 0
  %135 = vmatpush1.bf16.msra.mxu0 0
  %136 = vmatprep.subr.bf16.mxu0 0
  %137 = vmatpush1.bf16.msra.mxu0 0
  %138 = vmatprep.subr.bf16.mxu0 0
  %139 = vmatpush1.bf16.msra.mxu0 0
  %140 = vmatprep.subr.bf16.mxu0 0
  %141 = vmatpush1.bf16.msra.mxu0 0
  %142 = vmatprep.mubr.bf16.mxu0 0
  %143 = vmatmul.mubr.bf16.gmra.mrb[0].mxu0 %v108
  %v144 = vpop.f32.mrb[0].mxu0
  %v145 = vadd.f32 0.0, %v144
  %v146 = vpop.f32.mrb[0].mxu0
  %v147 = vpop.f32.mrb[0].mxu0
  %v148 = vpop.f32.mrb[0].mxu0
  %149 = vdwg.mxu0
  %152 = vrot.lane.b32.xlu0 %v60, 8
  %v153 = vpop.permute.xlu0 %152
  %154 = vrot.lane.b32.xlu0 %v63, 8
  %v155 = vpop.permute.xlu0 %154
  %vm156 = vcmask 64512
  %v157 = vsel %vm156, %v153, %v155
  %v162 = vunpack.c.l.b16 %v64
  %v163 = vunpack.c.l.b16 %v65
  %v164 = vunpack.c.l.b16 %v66
  %v165 = vunpack.c.l.b16 %v67
  %v166 = vpack.c.b16 %v163, %v162
  %v167 = vpack.c.b16 %v165, %v164
  %v171 = vsel %vm106, %v157, 0
  %173 = vmatprep.subr.bf16.mxu0 0
  %174 = vmatpush1.bf16.msra.mxu0 %v166
  %175 = vmatprep.subr.bf16.mxu0 0
  %176 = vmatpush1.bf16.msra.mxu0 %v167
  %177 = vmatprep.subr.bf16.mxu0 0
  %178 = vmatpush1.bf16.msra.mxu0 0
  %179 = vmatprep.subr.bf16.mxu0 0
  %180 = vmatpush1.bf16.msra.mxu0 0
  %181 = vmatprep.subr.bf16.mxu0 0
  %182 = vmatpush1.bf16.msra.mxu0 0
  %183 = vmatprep.subr.bf16.mxu0 0
  %184 = vmatpush1.bf16.msra.mxu0 0
  %185 = vmatprep.subr.bf16.mxu0 0
  %186 = vmatpush1.bf16.msra.mxu0 0
  %187 = vmatprep.subr.bf16.mxu0 0
  %188 = vmatpush1.bf16.msra.mxu0 0
  %189 = vmatprep.subr.bf16.mxu0 0
  %190 = vmatpush1.bf16.msra.mxu0 0
  %191 = vmatprep.subr.bf16.mxu0 0
  %192 = vmatpush1.bf16.msra.mxu0 0
  %193 = vmatprep.subr.bf16.mxu0 0
  %194 = vmatpush1.bf16.msra.mxu0 0
  %195 = vmatprep.subr.bf16.mxu0 0
  %196 = vmatpush1.bf16.msra.mxu0 0
  %197 = vmatprep.subr.bf16.mxu0 0
  %198 = vmatpush1.bf16.msra.mxu0 0
  %199 = vmatprep.subr.bf16.mxu0 0
  %200 = vmatpush1.bf16.msra.mxu0 0
  %201 = vmatprep.subr.bf16.mxu0 0
  %202 = vmatpush1.bf16.msra.mxu0 0
  %203 = vmatprep.subr.bf16.mxu0 0
  %204 = vmatpush1.bf16.msra.mxu0 0
  %205 = vmatprep.mubr.bf16.mxu0 0
  %206 = vmatmul.mubr.bf16.gmra.mrb[0].mxu0 %v171
  %v207 = vpop.f32.mrb[0].mxu0
  %v208 = vadd.f32 %v145, %v207
  %v209 = vpop.f32.mrb[0].mxu0
  %v210 = vpop.f32.mrb[0].mxu0
  %v211 = vpop.f32.mrb[0].mxu0
  %212 = vdwg.mxu0
  %v213 = vld [vmem:[%s0 + $0x4] sm:$0x3]
  %v214 = vld [vmem:[%s0 + $0x4] sm:$0xc]
  %v215 = vld [vmem:[%s0 + $0xc] sm:$0x1]
  %v218 = vunpack.c.l.b16 %v214
  %v219 = vunpack.c.l.b16 %v215
  %v220 = vpack.c.b16 %v219, %v218
  %v222 = vshrl.u32 %v220, 16
  %v224 = vshll.u32 %v220, 16
  %v226 = vrot.slane %v224, 1
  %v227 = vor.u32 %v222, %v226
  %v230 = vsel %vm57, %v213, %v227
  %s231 = scalar_lea.vmem %s1, 32
  %v232 = vld [vmem:[%s231] sm:$0xf]
  %v233 = vld [vmem:[%s231 + $0x4] sm:$0xf]
  %v234 = vld [vmem:[%s231 + $0x8] sm:$0xf]
  %v235 = vld [vmem:[%s231 + $0xc] sm:$0xf]
  %v240 = vunpack.c.l.b16 %v232
  %v241 = vunpack.c.l.b16 %v233
  %v242 = vunpack.c.l.b16 %v234
  %v243 = vunpack.c.l.b16 %v235
  %v244 = vpack.c.b16 %v241, %v240
  %v245 = vpack.c.b16 %v243, %v242
  %v248 = vsel %vm106, %v230, 0
  %250 = vmatprep.subr.bf16.mxu0 0
  %251 = vmatpush1.bf16.msra.mxu0 %v244
  %252 = vmatprep.subr.bf16.mxu0 0
  %253 = vmatpush1.bf16.msra.mxu0 %v245
  %254 = vmatprep.subr.bf16.mxu0 0
  %255 = vmatpush1.bf16.msra.mxu0 0
  %256 = vmatprep.subr.bf16.mxu0 0
  %257 = vmatpush1.bf16.msra.mxu0 0
  %258 = vmatprep.subr.bf16.mxu0 0
  %259 = vmatpush1.bf16.msra.mxu0 0
  %260 = vmatprep.subr.bf16.mxu0 0
  %261 = vmatpush1.bf16.msra.mxu0 0
  %262 = vmatprep.subr.bf16.mxu0 0
  %263 = vmatpush1.bf16.msra.mxu0 0
  %264 = vmatprep.subr.bf16.mxu0 0
  %265 = vmatpush1.bf16.msra.mxu0 0
  %266 = vmatprep.subr.bf16.mxu0 0
  %267 = vmatpush1.bf16.msra.mxu0 0
  %268 = vmatprep.subr.bf16.mxu0 0
  %269 = vmatpush1.bf16.msra.mxu0 0
  %270 = vmatprep.subr.bf16.mxu0 0
  %271 = vmatpush1.bf16.msra.mxu0 0
  %272 = vmatprep.subr.bf16.mxu0 0
  %273 = vmatpush1.bf16.msra.mxu0 0
  %274 = vmatprep.subr.bf16.mxu0 0
  %275 = vmatpush1.bf16.msra.mxu0 0
  %276 = vmatprep.subr.bf16.mxu0 0
  %277 = vmatpush1.bf16.msra.mxu0 0
  %278 = vmatprep.subr.bf16.mxu0 0
  %279 = vmatpush1.bf16.msra.mxu0 0
  %280 = vmatprep.subr.bf16.mxu0 0
  %281 = vmatpush1.bf16.msra.mxu0 0
  %282 = vmatprep.mubr.bf16.mxu0 0
  %283 = vmatmul.mubr.bf16.gmra.mrb[0].mxu0 %v248
  %v284 = vpop.f32.mrb[0].mxu0
  %v285 = vadd.f32 0.0, %v284
  %v286 = vpop.f32.mrb[0].mxu0
  %v287 = vpop.f32.mrb[0].mxu0
  %v288 = vpop.f32.mrb[0].mxu0
  %289 = vdwg.mxu0
  %v290 = vadd.f32 %v208, %v285
  %v291 = vld [vmem:[%s0] sm:$0x7]
  %v292 = vld [vmem:[%s0] sm:$0x8]
  %v294 = vunpack.c.l.b16 %v291
  %v295 = vpack.c.b16 %v294, %v294
  %v297 = vshrl.u32 %v295, 16
  %v299 = vshll.u32 %v295, 16
  %v301 = vrot.slane %v299, 1
  %v302 = vor.u32 %v297, %v301
  %v304 = vunpack.c.l.b16 %v292
  %v305 = vpack.c.b16 %v74, %v304
  %v306 = vrot.slane %v305, 1
  %v309 = vsel %vm57, %v302, %v306
  %s310 = scalar_lea.vmem %s1, 48
  %v311 = vld [vmem:[%s310] sm:$0xf]
  %v312 = vld [vmem:[%s310 + $0x4] sm:$0xf]
  %v313 = vld [vmem:[%s310 + $0x8] sm:$0xf]
  %v314 = vld [vmem:[%s310 + $0xc] sm:$0xf]
  %316 = vrot.lane.b32.xlu0 %v309, 88
  %v317 = vpop.permute.xlu0 %316
  %v322 = vunpack.c.l.b16 %v311
  %v323 = vunpack.c.l.b16 %v312
  %v324 = vunpack.c.l.b16 %v313
  %v325 = vunpack.c.l.b16 %v314
  %v326 = vpack.c.b16 %v323, %v322
  %v327 = vpack.c.b16 %v325, %v324
  %v331 = vsel %vm106, %v317, 0
  %333 = vmatprep.subr.bf16.mxu0 0
  %334 = vmatpush1.bf16.msra.mxu0 %v326
  %335 = vmatprep.subr.bf16.mxu0 0
  %336 = vmatpush1.bf16.msra.mxu0 %v327
  %337 = vmatprep.subr.bf16.mxu0 0
  %338 = vmatpush1.bf16.msra.mxu0 0
  %339 = vmatprep.subr.bf16.mxu0 0
  %340 = vmatpush1.bf16.msra.mxu0 0
  %341 = vmatprep.subr.bf16.mxu0 0
  %342 = vmatpush1.bf16.msra.mxu0 0
  %343 = vmatprep.subr.bf16.mxu0 0
  %344 = vmatpush1.bf16.msra.mxu0 0
  %345 = vmatprep.subr.bf16.mxu0 0
  %346 = vmatpush1.bf16.msra.mxu0 0
  %347 = vmatprep.subr.bf16.mxu0 0
  %348 = vmatpush1.bf16.msra.mxu0 0
  %349 = vmatprep.subr.bf16.mxu0 0
  %350 = vmatpush1.bf16.msra.mxu0 0
  %351 = vmatprep.subr.bf16.mxu0 0
  %352 = vmatpush1.bf16.msra.mxu0 0
  %353 = vmatprep.subr.bf16.mxu0 0
  %354 = vmatpush1.bf16.msra.mxu0 0
  %355 = vmatprep.subr.bf16.mxu0 0
  %356 = vmatpush1.bf16.msra.mxu0 0
  %357 = vmatprep.subr.bf16.mxu0 0
  %358 = vmatpush1.bf16.msra.mxu0 0
  %359 = vmatprep.subr.bf16.mxu0 0
  %360 = vmatpush1.bf16.msra.mxu0 0
  %361 = vmatprep.subr.bf16.mxu0 0
  %362 = vmatpush1.bf16.msra.mxu0 0
  %363 = vmatprep.subr.bf16.mxu0 0
  %364 = vmatpush1.bf16.msra.mxu0 0
  %365 = vmatprep.mubr.bf16.mxu0 0
  %366 = vmatmul.mubr.bf16.gmra.mrb[0].mxu0 %v331
  %v367 = vpop.f32.mrb[0].mxu0
  %v368 = vadd.f32 0.0, %v367
  %v369 = vpop.f32.mrb[0].mxu0
  %v370 = vpop.f32.mrb[0].mxu0
  %v371 = vpop.f32.mrb[0].mxu0
  %372 = vdwg.mxu0
  %v373 = vadd.f32 %v290, %v368
  %s374 = scalar_lea.vmem %s1, 64
  %v375 = vld [vmem:[%s374] sm:$0xf]
  %v376 = vld [vmem:[%s374 + $0x4] sm:$0xf]
  %v377 = vld [vmem:[%s374 + $0x8] sm:$0xf]
  %v378 = vld [vmem:[%s374 + $0xc] sm:$0xf]
  %379 = vrot.lane.b32.xlu0 %v309, 120
  %v380 = vpop.permute.xlu0 %379
  %v385 = vunpack.c.l.b16 %v375
  %v386 = vunpack.c.l.b16 %v376
  %v387 = vunpack.c.l.b16 %v377
  %v388 = vunpack.c.l.b16 %v378
  %v389 = vpack.c.b16 %v386, %v385
  %v390 = vpack.c.b16 %v388, %v387
  %v394 = vsel %vm106, %v380, 0
  %396 = vmatprep.subr.bf16.mxu0 0
  %397 = vmatpush1.bf16.msra.mxu0 %v389
  %398 = vmatprep.subr.bf16.mxu0 0
  %399 = vmatpush1.bf16.msra.mxu0 %v390
  %400 = vmatprep.subr.bf16.mxu0 0
  %401 = vmatpush1.bf16.msra.mxu0 0
  %402 = vmatprep.subr.bf16.mxu0 0
  %403 = vmatpush1.bf16.msra.mxu0 0
  %404 = vmatprep.subr.bf16.mxu0 0
  %405 = vmatpush1.bf16.msra.mxu0 0
  %406 = vmatprep.subr.bf16.mxu0 0
  %407 = vmatpush1.bf16.msra.mxu0 0
  %408 = vmatprep.subr.bf16.mxu0 0
  %409 = vmatpush1.bf16.msra.mxu0 0
  %410 = vmatprep.subr.bf16.mxu0 0
  %411 = vmatpush1.bf16.msra.mxu0 0
  %412 = vmatprep.subr.bf16.mxu0 0
  %413 = vmatpush1.bf16.msra.mxu0 0
  %414 = vmatprep.subr.bf16.mxu0 0
  %415 = vmatpush1.bf16.msra.mxu0 0
  %416 = vmatprep.subr.bf16.mxu0 0
  %417 = vmatpush1.bf16.msra.mxu0 0
  %418 = vmatprep.subr.bf16.mxu0 0
  %419 = vmatpush1.bf16.msra.mxu0 0
  %420 = vmatprep.subr.bf16.mxu0 0
  %421 = vmatpush1.bf16.msra.mxu0 0
  %422 = vmatprep.subr.bf16.mxu0 0
  %423 = vmatpush1.bf16.msra.mxu0 0
  %424 = vmatprep.subr.bf16.mxu0 0
  %425 = vmatpush1.bf16.msra.mxu0 0
  %426 = vmatprep.subr.bf16.mxu0 0
  %427 = vmatpush1.bf16.msra.mxu0 0
  %428 = vmatprep.mubr.bf16.mxu0 0
  %429 = vmatmul.mubr.bf16.gmra.mrb[0].mxu0 %v394
  %v430 = vpop.f32.mrb[0].mxu0
  %v431 = vadd.f32 0.0, %v430
  %v432 = vpop.f32.mrb[0].mxu0
  %v433 = vpop.f32.mrb[0].mxu0
  %v434 = vpop.f32.mrb[0].mxu0
  %435 = vdwg.mxu0
  %v436 = vadd.f32 %v373, %v431
  %s437 = scalar_lea.vmem %s1, 80
  %v438 = vld [vmem:[%s437] sm:$0xf]
  %v439 = vld [vmem:[%s437 + $0x4] sm:$0xf]
  %v440 = vld [vmem:[%s437 + $0x8] sm:$0xf]
  %v441 = vld [vmem:[%s437 + $0xc] sm:$0xf]
  %442 = vrot.lane.b32.xlu0 %v309, 80
  %v443 = vpop.permute.xlu0 %442
  %v448 = vunpack.c.l.b16 %v438
  %v449 = vunpack.c.l.b16 %v439
  %v450 = vunpack.c.l.b16 %v440
  %v451 = vunpack.c.l.b16 %v441
  %v452 = vpack.c.b16 %v449, %v448
  %v453 = vpack.c.b16 %v451, %v450
  %v457 = vsel %vm106, %v443, 0
  %459 = vmatprep.subr.bf16.mxu0 0
  %460 = vmatpush1.bf16.msra.mxu0 %v452
  %461 = vmatprep.subr.bf16.mxu0 0
  %462 = vmatpush1.bf16.msra.mxu0 %v453
  %463 = vmatprep.subr.bf16.mxu0 0
  %464 = vmatpush1.bf16.msra.mxu0 0
  %465 = vmatprep.subr.bf16.mxu0 0
  %466 = vmatpush1.bf16.msra.mxu0 0
  %467 = vmatprep.subr.bf16.mxu0 0
  %468 = vmatpush1.bf16.msra.mxu0 0
  %469 = vmatprep.subr.bf16.mxu0 0
  %470 = vmatpush1.bf16.msra.mxu0 0
  %471 = vmatprep.subr.bf16.mxu0 0
  %472 = vmatpush1.bf16.msra.mxu0 0
  %473 = vmatprep.subr.bf16.mxu0 0
  %474 = vmatpush1.bf16.msra.mxu0 0
  %475 = vmatprep.subr.bf16.mxu0 0
  %476 = vmatpush1.bf16.msra.mxu0 0
  %477 = vmatprep.subr.bf16.mxu0 0
  %478 = vmatpush1.bf16.msra.mxu0 0
  %479 = vmatprep.subr.bf16.mxu0 0
  %480 = vmatpush1.bf16.msra.mxu0 0
  %481 = vmatprep.subr.bf16.mxu0 0
  %482 = vmatpush1.bf16.msra.mxu0 0
  %483 = vmatprep.subr.bf16.mxu0 0
  %484 = vmatpush1.bf16.msra.mxu0 0
  %485 = vmatprep.subr.bf16.mxu0 0
  %486 = vmatpush1.bf16.msra.mxu0 0
  %487 = vmatprep.subr.bf16.mxu0 0
  %488 = vmatpush1.bf16.msra.mxu0 0
  %489 = vmatprep.subr.bf16.mxu0 0
  %490 = vmatpush1.bf16.msra.mxu0 0
  %491 = vmatprep.mubr.bf16.mxu0 0
  %492 = vmatmul.mubr.bf16.gmra.mrb[0].mxu0 %v457
  %v493 = vpop.f32.mrb[0].mxu0
  %v494 = vadd.f32 0.0, %v493
  %v495 = vpop.f32.mrb[0].mxu0
  %v496 = vpop.f32.mrb[0].mxu0
  %v497 = vpop.f32.mrb[0].mxu0
  %498 = vdwg.mxu0
  %v499 = vadd.f32 %v436, %v494
  %v500 = vld [vmem:[%s0] sm:$0x77]
  %v501 = vld [vmem:[%s0] sm:$0x88]
  %v503 = vunpack.c.l.b16 %v500
  %v504 = vunpack.c.h.b16 %v500
  %v505 = vpack.c.b16 %v503, %v503
  %v506 = vpack.c.b16 %v504, %v504
  %v508 = vshrl.u32 %v505, 16
  %v510 = vshll.u32 %v505, 16
  %v512 = vrot.slane %v510, 1
  %v513 = vor.u32 %v508, %v512
  %v515 = vshrl.u32 %v506, 16
  %v517 = vshll.u32 %v506, 16
  %v519 = vrot.slane %v517, 1
  %v520 = vor.u32 %v515, %v519
  %v522 = vunpack.c.l.b16 %v501
  %v523 = vunpack.c.h.b16 %v501
  %v524 = vpack.c.b16 %v39, %v522
  %v525 = vpack.c.b16 %v40, %v523
  %v526 = vrot.slane %v524, 1
  %v527 = vrot.slane %v525, 1
  %v530 = vsel %vm57, %v513, %v526
  %v533 = vsel %vm57, %v520, %v527
  %s534 = scalar_lea.vmem %s1, 96
  %v535 = vld [vmem:[%s534] sm:$0xf]
  %v536 = vld [vmem:[%s534 + $0x4] sm:$0xf]
  %v537 = vld [vmem:[%s534 + $0x8] sm:$0xf]
  %v538 = vld [vmem:[%s534 + $0xc] sm:$0xf]
  %541 = vrot.lane.b32.xlu0 %v530, 8
  %v542 = vpop.permute.xlu0 %541
  %543 = vrot.lane.b32.xlu0 %v533, 8
  %v544 = vpop.permute.xlu0 %543
  %v545 = vsel %vm156, %v542, %v544
  %v550 = vunpack.c.l.b16 %v535
  %v551 = vunpack.c.l.b16 %v536
  %v552 = vunpack.c.l.b16 %v537
  %v553 = vunpack.c.l.b16 %v538
  %v554 = vpack.c.b16 %v551, %v550
  %v555 = vpack.c.b16 %v553, %v552
  %v559 = vsel %vm106, %v545, 0
  %561 = vmatprep.subr.bf16.mxu0 0
  %562 = vmatpush1.bf16.msra.mxu0 %v554
  %563 = vmatprep.subr.bf16.mxu0 0
  %564 = vmatpush1.bf16.msra.mxu0 %v555
  %565 = vmatprep.subr.bf16.mxu0 0
  %566 = vmatpush1.bf16.msra.mxu0 0
  %567 = vmatprep.subr.bf16.mxu0 0
  %568 = vmatpush1.bf16.msra.mxu0 0
  %569 = vmatprep.subr.bf16.mxu0 0
  %570 = vmatpush1.bf16.msra.mxu0 0
  %571 = vmatprep.subr.bf16.mxu0 0
  %572 = vmatpush1.bf16.msra.mxu0 0
  %573 = vmatprep.subr.bf16.mxu0 0
  %574 = vmatpush1.bf16.msra.mxu0 0
  %575 = vmatprep.subr.bf16.mxu0 0
  %576 = vmatpush1.bf16.msra.mxu0 0
  %577 = vmatprep.subr.bf16.mxu0 0
  %578 = vmatpush1.bf16.msra.mxu0 0
  %579 = vmatprep.subr.bf16.mxu0 0
  %580 = vmatpush1.bf16.msra.mxu0 0
  %581 = vmatprep.subr.bf16.mxu0 0
  %582 = vmatpush1.bf16.msra.mxu0 0
  %583 = vmatprep.subr.bf16.mxu0 0
  %584 = vmatpush1.bf16.msra.mxu0 0
  %585 = vmatprep.subr.bf16.mxu0 0
  %586 = vmatpush1.bf16.msra.mxu0 0
  %587 = vmatprep.subr.bf16.mxu0 0
  %588 = vmatpush1.bf16.msra.mxu0 0
  %589 = vmatprep.subr.bf16.mxu0 0
  %590 = vmatpush1.bf16.msra.mxu0 0
  %591 = vmatprep.subr.bf16.mxu0 0
  %592 = vmatpush1.bf16.msra.mxu0 0
  %593 = vmatprep.mubr.bf16.mxu0 0
  %594 = vmatmul.mubr.bf16.gmra.mrb[0].mxu0 %v559
  %v595 = vpop.f32.mrb[0].mxu0
  %v596 = vadd.f32 0.0, %v595
  %v597 = vpop.f32.mrb[0].mxu0
  %v598 = vpop.f32.mrb[0].mxu0
  %v599 = vpop.f32.mrb[0].mxu0
  %600 = vdwg.mxu0
  %v601 = vadd.f32 %v499, %v596
  %s602 = scalar_lea.vmem %s1, 112
  %v603 = vld [vmem:[%s602] sm:$0xf]
  %v604 = vld [vmem:[%s602 + $0x4] sm:$0xf]
  %v605 = vld [vmem:[%s602 + $0x8] sm:$0xf]
  %v606 = vld [vmem:[%s602 + $0xc] sm:$0xf]
  %607 = vrot.lane.b32.xlu0 %v309, 40
  %v608 = vpop.permute.xlu0 %607
  %v613 = vunpack.c.l.b16 %v603
  %v614 = vunpack.c.l.b16 %v604
  %v615 = vunpack.c.l.b16 %v605
  %v616 = vunpack.c.l.b16 %v606
  %v617 = vpack.c.b16 %v614, %v613
  %v618 = vpack.c.b16 %v616, %v615
  %v622 = vsel %vm106, %v608, 0
  %624 = vmatprep.subr.bf16.mxu0 0
  %625 = vmatpush1.bf16.msra.mxu0 %v617
  %626 = vmatprep.subr.bf16.mxu0 0
  %627 = vmatpush1.bf16.msra.mxu0 %v618
  %628 = vmatprep.subr.bf16.mxu0 0
  %629 = vmatpush1.bf16.msra.mxu0 0
  %630 = vmatprep.subr.bf16.mxu0 0
  %631 = vmatpush1.bf16.msra.mxu0 0
  %632 = vmatprep.subr.bf16.mxu0 0
  %633 = vmatpush1.bf16.msra.mxu0 0
  %634 = vmatprep.subr.bf16.mxu0 0
  %635 = vmatpush1.bf16.msra.mxu0 0
  %636 = vmatprep.subr.bf16.mxu0 0
  %637 = vmatpush1.bf16.msra.mxu0 0
  %638 = vmatprep.subr.bf16.mxu0 0
  %639 = vmatpush1.bf16.msra.mxu0 0
  %640 = vmatprep.subr.bf16.mxu0 0
  %641 = vmatpush1.bf16.msra.mxu0 0
  %642 = vmatprep.subr.bf16.mxu0 0
  %643 = vmatpush1.bf16.msra.mxu0 0
  %644 = vmatprep.subr.bf16.mxu0 0
  %645 = vmatpush1.bf16.msra.mxu0 0
  %646 = vmatprep.subr.bf16.mxu0 0
  %647 = vmatpush1.bf16.msra.mxu0 0
  %648 = vmatprep.subr.bf16.mxu0 0
  %649 = vmatpush1.bf16.msra.mxu0 0
  %650 = vmatprep.subr.bf16.mxu0 0
  %651 = vmatpush1.bf16.msra.mxu0 0
  %652 = vmatprep.subr.bf16.mxu0 0
  %653 = vmatpush1.bf16.msra.mxu0 0
  %654 = vmatprep.subr.bf16.mxu0 0
  %655 = vmatpush1.bf16.msra.mxu0 0
  %656 = vmatprep.mubr.bf16.mxu0 0
  %657 = vmatmul.mubr.bf16.gmra.mrb[0].mxu0 %v622
  %v658 = vpop.f32.mrb[0].mxu0
  %v659 = vadd.f32 0.0, %v658
  %v660 = vpop.f32.mrb[0].mxu0
  %v661 = vpop.f32.mrb[0].mxu0
  %v662 = vpop.f32.mrb[0].mxu0
  %663 = vdwg.mxu0
  %v664 = vadd.f32 %v601, %v659
  %v665 = vld [vmem:[%s0 + $0x4] sm:$0x7]
  %v666 = vld [vmem:[%s0 + $0x4] sm:$0x8]
  %v668 = vunpack.c.l.b16 %v665
  %v669 = vpack.c.b16 %v668, %v668
  %v671 = vshrl.u32 %v669, 16
  %v673 = vshll.u32 %v669, 16
  %v675 = vrot.slane %v673, 1
  %v676 = vor.u32 %v671, %v675
  %v678 = vunpack.c.l.b16 %v666
  %v679 = vpack.c.b16 %v219, %v678
  %v680 = vrot.slane %v679, 1
  %v683 = vsel %vm57, %v676, %v680
  %s684 = scalar_lea.vmem %s1, 128
  %v685 = vld [vmem:[%s684] sm:$0xf]
  %v686 = vld [vmem:[%s684 + $0x4] sm:$0xf]
  %v687 = vld [vmem:[%s684 + $0x8] sm:$0xf]
  %v688 = vld [vmem:[%s684 + $0xc] sm:$0xf]
  %v693 = vunpack.c.l.b16 %v685
  %v694 = vunpack.c.l.b16 %v686
  %v695 = vunpack.c.l.b16 %v687
  %v696 = vunpack.c.l.b16 %v688
  %v697 = vpack.c.b16 %v694, %v693
  %v698 = vpack.c.b16 %v696, %v695
  %v701 = vsel %vm106, %v683, 0
  %703 = vmatprep.subr.bf16.mxu0 0
  %704 = vmatpush1.bf16.msra.mxu0 %v697
  %705 = vmatprep.subr.bf16.mxu0 0
  %706 = vmatpush1.bf16.msra.mxu0 %v698
  %707 = vmatprep.subr.bf16.mxu0 0
  %708 = vmatpush1.bf16.msra.mxu0 0
  %709 = vmatprep.subr.bf16.mxu0 0
  %710 = vmatpush1.bf16.msra.mxu0 0
  %711 = vmatprep.subr.bf16.mxu0 0
  %712 = vmatpush1.bf16.msra.mxu0 0
  %713 = vmatprep.subr.bf16.mxu0 0
  %714 = vmatpush1.bf16.msra.mxu0 0
  %715 = vmatprep.subr.bf16.mxu0 0
  %716 = vmatpush1.bf16.msra.mxu0 0
  %717 = vmatprep.subr.bf16.mxu0 0
  %718 = vmatpush1.bf16.msra.mxu0 0
  %719 = vmatprep.subr.bf16.mxu0 0
  %720 = vmatpush1.bf16.msra.mxu0 0
  %721 = vmatprep.subr.bf16.mxu0 0
  %722 = vmatpush1.bf16.msra.mxu0 0
  %723 = vmatprep.subr.bf16.mxu0 0
  %724 = vmatpush1.bf16.msra.mxu0 0
  %725 = vmatprep.subr.bf16.mxu0 0
  %726 = vmatpush1.bf16.msra.mxu0 0
  %727 = vmatprep.subr.bf16.mxu0 0
  %728 = vmatpush1.bf16.msra.mxu0 0
  %729 = vmatprep.subr.bf16.mxu0 0
  %730 = vmatpush1.bf16.msra.mxu0 0
  %731 = vmatprep.subr.bf16.mxu0 0
  %732 = vmatpush1.bf16.msra.mxu0 0
  %733 = vmatprep.subr.bf16.mxu0 0
  %734 = vmatpush1.bf16.msra.mxu0 0
  %735 = vmatprep.mubr.bf16.mxu0 0
  %736 = vmatmul.mubr.bf16.gmra.mrb[0].mxu0 %v701
  %v737 = vpop.f32.mrb[0].mxu0
  %v738 = vadd.f32 0.0, %v737
  %v739 = vpop.f32.mrb[0].mxu0
  %v740 = vpop.f32.mrb[0].mxu0
  %v741 = vpop.f32.mrb[0].mxu0
  %742 = vdwg.mxu0
  %v743 = vadd.f32 %v664, %v738
  %v744 = vld [vmem:[%s2] sm:$0x1]
  %v746 = vlaneseq
  %v747 = vshrl.u32 %v746, 7
  %v748 = vsub.s32 0, %v747
  %v749 = vrot.slane %v744, %v748
  %v751 = vadd.f32 %v743, %v749
  %vm752 = vcmask 523264
  %v753 = vsel %vm752, %v751, 0.0
  %v754 = vrot.slane %v753, 4
  %v755 = vadd.f32 %v753, %v754
  %v756 = vrot.slane %v755, 2
  %v757 = vadd.f32 %v755, %v756
  %v758 = vrot.slane %v757, 1
  %v759 = vadd.f32 %v757, %v758
  %v760 = vld [vmem:[%s5] sm:$0xff]
  %v761 = vld [vmem:[%s5 + $0x8] sm:$0xff]
  %v762 = vld [vmem:[%s5 + $0x10] sm:$0xff]
  %v763 = vld [vmem:[%s5 + $0x18] sm:$0xff]
  %v764 = vld [vmem:[%s5 + $0x20] sm:$0xff]
  %v765 = vld [vmem:[%s5 + $0x28] sm:$0xff]
  %v766 = vld [vmem:[%s5 + $0x30] sm:$0xff]
  %v767 = vld [vmem:[%s5 + $0x38] sm:$0xff]
  %v769 = vsel %vm752, %v759, 0
  %771 = vmatprep.subr.mxu0 0.0
  %772 = vmatpush1.msra.mxu0 %v760
  %773 = vmatprep.subr.mxu0 0.0
  %774 = vmatpush1.msra.mxu0 %v761
  %775 = vmatprep.subr.mxu0 0.0
  %776 = vmatpush1.msra.mxu0 %v762
  %777 = vmatprep.subr.mxu0 0.0
  %778 = vmatpush1.msra.mxu0 %v763
  %779 = vmatprep.subr.mxu0 0.0
  %780 = vmatpush1.msra.mxu0 %v764
  %781 = vmatprep.subr.mxu0 0.0
  %782 = vmatpush1.msra.mxu0 %v765
  %783 = vmatprep.subr.mxu0 0.0
  %784 = vmatpush1.msra.mxu0 %v766
  %785 = vmatprep.subr.mxu0 0.0
  %786 = vmatpush1.msra.mxu0 %v767
  %787 = vmatprep.subr.mxu0 0.0
  %788 = vmatpush1.msra.mxu0 0.0
  %789 = vmatprep.subr.mxu0 0.0
  %790 = vmatpush1.msra.mxu0 0.0
  %791 = vmatprep.subr.mxu0 0.0
  %792 = vmatpush1.msra.mxu0 0.0
  %793 = vmatprep.subr.mxu0 0.0
  %794 = vmatpush1.msra.mxu0 0.0
  %795 = vmatprep.subr.mxu0 0.0
  %796 = vmatpush1.msra.mxu0 0.0
  %797 = vmatprep.subr.mxu0 0.0
  %798 = vmatpush1.msra.mxu0 0.0
  %799 = vmatprep.subr.mxu0 0.0
  %800 = vmatpush1.msra.mxu0 0.0
  %801 = vmatprep.subr.mxu0 0.0
  %802 = vmatpush1.msra.mxu0 0.0
  %803 = vmatprep.subr.mxu0 0.0
  %804 = vmatpush1.msra.mxu0 0.0
  %805 = vmatprep.subr.mxu0 0.0
  %806 = vmatpush1.msra.mxu0 0.0
  %807 = vmatprep.subr.mxu0 0.0
  %808 = vmatpush1.msra.mxu0 0.0
  %809 = vmatprep.subr.mxu0 0.0
  %810 = vmatpush1.msra.mxu0 0.0
  %811 = vmatprep.subr.mxu0 0.0
  %812 = vmatpush1.msra.mxu0 0.0
  %813 = vmatprep.subr.mxu0 0.0
  %814 = vmatpush1.msra.mxu0 0.0
  %815 = vmatprep.subr.mxu0 0.0
  %816 = vmatpush1.msra.mxu0 0.0
  %817 = vmatprep.subr.mxu0 0.0
  %818 = vmatpush1.msra.mxu0 0.0
  %819 = vmatprep.subr.mxu0 0.0
  %820 = vmatpush1.msra.mxu0 0.0
  %821 = vmatprep.subr.mxu0 0.0
  %822 = vmatpush1.msra.mxu0 0.0
  %823 = vmatprep.subr.mxu0 0.0
  %824 = vmatpush1.msra.mxu0 0.0
  %825 = vmatprep.subr.mxu0 0.0
  %826 = vmatpush1.msra.mxu0 0.0
  %827 = vmatprep.subr.mxu0 0.0
  %828 = vmatpush1.msra.mxu0 0.0
  %829 = vmatprep.subr.mxu0 0.0
  %830 = vmatpush1.msra.mxu0 0.0
  %831 = vmatprep.subr.mxu0 0.0
  %832 = vmatpush1.msra.mxu0 0.0
  %833 = vmatprep.subr.mxu0 0.0
  %834 = vmatpush1.msra.mxu0 0.0
  %835 = vmatprep.mubr.f32.mxu0 0.0
  %836 = vmatmul.mubr.f32.gmra.mrb[0].mxu0 %v769
  %v837 = vpop.f32.mrb[0].mxu0
  %v838 = vadd.f32 0.0, %v837
  %v839 = vpop.f32.mrb[0].mxu0
  %840 = vdwg.mxu0
  %v841 = vmul.f32 %v751, %v751
  %v842 = vsel %vm752, %v841, 0.0
  %v843 = vrot.slane %v842, 4
  %v844 = vadd.f32 %v842, %v843
  %v845 = vrot.slane %v844, 2
  %v846 = vadd.f32 %v844, %v845
  %v847 = vrot.slane %v846, 1
  %v848 = vadd.f32 %v846, %v847
  %v850 = vsel %vm752, %v848, 0
  %852 = vmatprep.subr.mxu0 0.0
  %853 = vmatpush1.msra.mxu0 %v760
  %854 = vmatprep.subr.mxu0 0.0
  %855 = vmatpush1.msra.mxu0 %v761
  %856 = vmatprep.subr.mxu0 0.0
  %857 = vmatpush1.msra.mxu0 %v762
  %858 = vmatprep.subr.mxu0 0.0
  %859 = vmatpush1.msra.mxu0 %v763
  %860 = vmatprep.subr.mxu0 0.0
  %861 = vmatpush1.msra.mxu0 %v764
  %862 = vmatprep.subr.mxu0 0.0
  %863 = vmatpush1.msra.mxu0 %v765
  %864 = vmatprep.subr.mxu0 0.0
  %865 = vmatpush1.msra.mxu0 %v766
  %866 = vmatprep.subr.mxu0 0.0
  %867 = vmatpush1.msra.mxu0 %v767
  %868 = vmatprep.subr.mxu0 0.0
  %869 = vmatpush1.msra.mxu0 0.0
  %870 = vmatprep.subr.mxu0 0.0
  %871 = vmatpush1.msra.mxu0 0.0
  %872 = vmatprep.subr.mxu0 0.0
  %873 = vmatpush1.msra.mxu0 0.0
  %874 = vmatprep.subr.mxu0 0.0
  %875 = vmatpush1.msra.mxu0 0.0
  %876 = vmatprep.subr.mxu0 0.0
  %877 = vmatpush1.msra.mxu0 0.0
  %878 = vmatprep.subr.mxu0 0.0
  %879 = vmatpush1.msra.mxu0 0.0
  %880 = vmatprep.subr.mxu0 0.0
  %881 = vmatpush1.msra.mxu0 0.0
  %882 = vmatprep.subr.mxu0 0.0
  %883 = vmatpush1.msra.mxu0 0.0
  %884 = vmatprep.subr.mxu0 0.0
  %885 = vmatpush1.msra.mxu0 0.0
  %886 = vmatprep.subr.mxu0 0.0
  %887 = vmatpush1.msra.mxu0 0.0
  %888 = vmatprep.subr.mxu0 0.0
  %889 = vmatpush1.msra.mxu0 0.0
  %890 = vmatprep.subr.mxu0 0.0
  %891 = vmatpush1.msra.mxu0 0.0
  %892 = vmatprep.subr.mxu0 0.0
  %893 = vmatpush1.msra.mxu0 0.0
  %894 = vmatprep.subr.mxu0 0.0
  %895 = vmatpush1.msra.mxu0 0.0
  %896 = vmatprep.subr.mxu0 0.0
  %897 = vmatpush1.msra.mxu0 0.0
  %898 = vmatprep.subr.mxu0 0.0
  %899 = vmatpush1.msra.mxu0 0.0
  %900 = vmatprep.subr.mxu0 0.0
  %901 = vmatpush1.msra.mxu0 0.0
  %902 = vmatprep.subr.mxu0 0.0
  %903 = vmatpush1.msra.mxu0 0.0
  %904 = vmatprep.subr.mxu0 0.0
  %905 = vmatpush1.msra.mxu0 0.0
  %906 = vmatprep.subr.mxu0 0.0
  %907 = vmatpush1.msra.mxu0 0.0
  %908 = vmatprep.subr.mxu0 0.0
  %909 = vmatpush1.msra.mxu0 0.0
  %910 = vmatprep.subr.mxu0 0.0
  %911 = vmatpush1.msra.mxu0 0.0
  %912 = vmatprep.subr.mxu0 0.0
  %913 = vmatpush1.msra.mxu0 0.0
  %914 = vmatprep.subr.mxu0 0.0
  %915 = vmatpush1.msra.mxu0 0.0
  %916 = vmatprep.mubr.f32.mxu0 0.0
  %917 = vmatmul.mubr.f32.gmra.mrb[0].mxu0 %v850
  %v918 = vpop.f32.mrb[0].mxu0
  %v919 = vadd.f32 0.0, %v918
  %v920 = vpop.f32.mrb[0].mxu0
  %921 = vdwg.mxu0
  %v922 = vrcp.pop 32.0
  %v923 = vmul.f32 %v838, %v922
  %v924 = vmul.f32 %v919, %v922
  %v925 = vmul.f32 %v923, %v923
  %v926 = vsub.f32 %v924, %v925
  %v927 = vld [vmem:[%s3] sm:$0x1]
  %v928 = vadd.f32 %v926, 1e-05
  %v929 = vrsqrt.pop %v928
  %v930 = vmul.f32 %v927, %v929
  %v931 = vld [vmem:[%s4] sm:$0x1]
  %v932 = vmul.f32 %v923, %v930
  %v933 = vsub.f32 %v931, %v932
  %v934 = vld [vmem:[%s6] sm:$0xff]
  %v935 = vld [vmem:[%s6 + $0x8] sm:$0xff]
  %vm936 = vcmask 130048
  %v938 = vsel %vm936, %v930, 0
  %940 = vmatprep.subr.mxu0 0.0
  %941 = vmatpush1.msra.mxu0 %v934
  %942 = vmatprep.subr.mxu0 0.0
  %943 = vmatpush1.msra.mxu0 %v935
  %944 = vmatprep.subr.mxu0 0.0
  %945 = vmatpush1.msra.mxu0 0.0
  %946 = vmatprep.subr.mxu0 0.0
  %947 = vmatpush1.msra.mxu0 0.0
  %948 = vmatprep.subr.mxu0 0.0
  %949 = vmatpush1.msra.mxu0 0.0
  %950 = vmatprep.subr.mxu0 0.0
  %951 = vmatpush1.msra.mxu0 0.0
  %952 = vmatprep.subr.mxu0 0.0
  %953 = vmatpush1.msra.mxu0 0.0
  %954 = vmatprep.subr.mxu0 0.0
  %955 = vmatpush1.msra.mxu0 0.0
  %956 = vmatprep.subr.mxu0 0.0
  %957 = vmatpush1.msra.mxu0 0.0
  %958 = vmatprep.subr.mxu0 0.0
  %959 = vmatpush1.msra.mxu0 0.0
  %960 = vmatprep.subr.mxu0 0.0
  %961 = vmatpush1.msra.mxu0 0.0
  %962 = vmatprep.subr.mxu0 0.0
  %963 = vmatpush1.msra.mxu0 0.0
  %964 = vmatprep.subr.mxu0 0.0
  %965 = vmatpush1.msra.mxu0 0.0
  %966 = vmatprep.subr.mxu0 0.0
  %967 = vmatpush1.msra.mxu0 0.0
  %968 = vmatprep.subr.mxu0 0.0
  %969 = vmatpush1.msra.mxu0 0.0
  %970 = vmatprep.subr.mxu0 0.0
  %971 = vmatpush1.msra.mxu0 0.0
  %972 = vmatprep.subr.mxu0 0.0
  %973 = vmatpush1.msra.mxu0 0.0
  %974 = vmatprep.subr.mxu0 0.0
  %975 = vmatpush1.msra.mxu0 0.0
  %976 = vmatprep.subr.mxu0 0.0
  %977 = vmatpush1.msra.mxu0 0.0
  %978 = vmatprep.subr.mxu0 0.0
  %979 = vmatpush1.msra.mxu0 0.0
  %980 = vmatprep.subr.mxu0 0.0
  %981 = vmatpush1.msra.mxu0 0.0
  %982 = vmatprep.subr.mxu0 0.0
  %983 = vmatpush1.msra.mxu0 0.0
  %984 = vmatprep.subr.mxu0 0.0
  %985 = vmatpush1.msra.mxu0 0.0
  %986 = vmatprep.subr.mxu0 0.0
  %987 = vmatpush1.msra.mxu0 0.0
  %988 = vmatprep.subr.mxu0 0.0
  %989 = vmatpush1.msra.mxu0 0.0
  %990 = vmatprep.subr.mxu0 0.0
  %991 = vmatpush1.msra.mxu0 0.0
  %992 = vmatprep.subr.mxu0 0.0
  %993 = vmatpush1.msra.mxu0 0.0
  %994 = vmatprep.subr.mxu0 0.0
  %995 = vmatpush1.msra.mxu0 0.0
  %996 = vmatprep.subr.mxu0 0.0
  %997 = vmatpush1.msra.mxu0 0.0
  %998 = vmatprep.subr.mxu0 0.0
  %999 = vmatpush1.msra.mxu0 0.0
  %1000 = vmatprep.subr.mxu0 0.0
  %1001 = vmatpush1.msra.mxu0 0.0
  %1002 = vmatprep.subr.mxu0 0.0
  %1003 = vmatpush1.msra.mxu0 0.0
  %1004 = vmatprep.mubr.f32.mxu0 0.0
  %1005 = vmatmul.mubr.f32.gmra.mrb[0].mxu0 %v938
  %v1006 = vpop.f32.mrb[0].mxu0
  %v1007 = vadd.f32 0.0, %v1006
  %v1008 = vpop.f32.mrb[0].mxu0
  %1009 = vdwg.mxu0
  %v1011 = vsel %vm936, %v933, 0
  %1013 = vmatprep.subr.mxu0 0.0
  %1014 = vmatpush1.msra.mxu0 %v934
  %1015 = vmatprep.subr.mxu0 0.0
  %1016 = vmatpush1.msra.mxu0 %v935
  %1017 = vmatprep.subr.mxu0 0.0
  %1018 = vmatpush1.msra.mxu0 0.0
  %1019 = vmatprep.subr.mxu0 0.0
  %1020 = vmatpush1.msra.mxu0 0.0
  %1021 = vmatprep.subr.mxu0 0.0
  %1022 = vmatpush1.msra.mxu0 0.0
  %1023 = vmatprep.subr.mxu0 0.0
  %1024 = vmatpush1.msra.mxu0 0.0
  %1025 = vmatprep.subr.mxu0 0.0
  %1026 = vmatpush1.msra.mxu0 0.0
  %1027 = vmatprep.subr.mxu0 0.0
  %1028 = vmatpush1.msra.mxu0 0.0
  %1029 = vmatprep.subr.mxu0 0.0
  %1030 = vmatpush1.msra.mxu0 0.0
  %1031 = vmatprep.subr.mxu0 0.0
  %1032 = vmatpush1.msra.mxu0 0.0
  %1033 = vmatprep.subr.mxu0 0.0
  %1034 = vmatpush1.msra.mxu0 0.0
  %1035 = vmatprep.subr.mxu0 0.0
  %1036 = vmatpush1.msra.mxu0 0.0
  %1037 = vmatprep.subr.mxu0 0.0
  %1038 = vmatpush1.msra.mxu0 0.0
  %1039 = vmatprep.subr.mxu0 0.0
  %1040 = vmatpush1.msra.mxu0 0.0
  %1041 = vmatprep.subr.mxu0 0.0
  %1042 = vmatpush1.msra.mxu0 0.0
  %1043 = vmatprep.subr.mxu0 0.0
  %1044 = vmatpush1.msra.mxu0 0.0
  %1045 = vmatprep.subr.mxu0 0.0
  %1046 = vmatpush1.msra.mxu0 0.0
  %1047 = vmatprep.subr.mxu0 0.0
  %1048 = vmatpush1.msra.mxu0 0.0
  %1049 = vmatprep.subr.mxu0 0.0
  %1050 = vmatpush1.msra.mxu0 0.0
  %1051 = vmatprep.subr.mxu0 0.0
  %1052 = vmatpush1.msra.mxu0 0.0
  %1053 = vmatprep.subr.mxu0 0.0
  %1054 = vmatpush1.msra.mxu0 0.0
  %1055 = vmatprep.subr.mxu0 0.0
  %1056 = vmatpush1.msra.mxu0 0.0
  %1057 = vmatprep.subr.mxu0 0.0
  %1058 = vmatpush1.msra.mxu0 0.0
  %1059 = vmatprep.subr.mxu0 0.0
  %1060 = vmatpush1.msra.mxu0 0.0
  %1061 = vmatprep.subr.mxu0 0.0
  %1062 = vmatpush1.msra.mxu0 0.0
  %1063 = vmatprep.subr.mxu0 0.0
  %1064 = vmatpush1.msra.mxu0 0.0
  %1065 = vmatprep.subr.mxu0 0.0
  %1066 = vmatpush1.msra.mxu0 0.0
  %1067 = vmatprep.subr.mxu0 0.0
  %1068 = vmatpush1.msra.mxu0 0.0
  %1069 = vmatprep.subr.mxu0 0.0
  %1070 = vmatpush1.msra.mxu0 0.0
  %1071 = vmatprep.subr.mxu0 0.0
  %1072 = vmatpush1.msra.mxu0 0.0
  %1073 = vmatprep.subr.mxu0 0.0
  %1074 = vmatpush1.msra.mxu0 0.0
  %1075 = vmatprep.subr.mxu0 0.0
  %1076 = vmatpush1.msra.mxu0 0.0
  %1077 = vmatprep.mubr.f32.mxu0 0.0
  %1078 = vmatmul.mubr.f32.gmra.mrb[0].mxu0 %v1011
  %v1079 = vpop.f32.mrb[0].mxu0
  %v1080 = vadd.f32 0.0, %v1079
  %v1081 = vpop.f32.mrb[0].mxu0
  %1082 = vdwg.mxu0
  %v1083 = vlaneseq
  %v1084 = vshrl.u32 %v1083, 7
  %v1085 = vsub.s32 0, %v1084
  %v1086 = vrot.slane %v1007, %v1085
  %v1087 = vmul.f32 %v751, %v1086
  %v1088 = vlaneseq
  %v1089 = vshrl.u32 %v1088, 7
  %v1090 = vsub.s32 0, %v1089
  %v1091 = vrot.slane %v1080, %v1090
  %v1092 = vadd.f32 %v1087, %v1091
  %vm1093 = vcmp.ge.f32.partialorder %v1092, 0.0
  %v1094 = vmul.f32 %v1092, 0.01
  %v1095 = vsel %vm1093, %v1092, %v1094
  %v1096 = vpack.c.bf16 %v1095, %v1095
  %vm1097 = vcmask 519168
  %1098 = vst.msk [vmem:[%s7] sm:$0xf] %vm1097, %v1096
  // Predicated region
  $region30: #{vae_forward.8} parent=0 // pred_check
    _
  $region31: #{vae_forward.8} parent=0 // pred_check_branch
    %1100 = sbr.rel (0) target = $region33
  $region32: #{vae_forward.8} parent=0 // pred_region
    _
  $region33: #{vae_forward.8} parent=0 // pred_fallthru
    _
  // Predicated region
  $region34: #{vae_forward.8} parent=0 // pred_check
    _
  $region35: #{vae_forward.8} parent=0 // pred_check_branch
    %1102 = sbr.rel (0) target = $region37
  $region36: #{vae_forward.8} parent=0 // pred_region
    _
  $region37: #{vae_forward.8} parent=0 // pred_fallthru
    _

// kernel: vae_forward.10
$region0: #{vae_forward.10}
  #allocation0 [shape = 'u32[]', space=smem, size = 0x4, offset = 0x4, fixed_abs, tag = 'smem constant byte address 0x4 - core index']
  #allocation1 [shape = 'u32[144,128]{1,0:T(1,128)}', space=vmem, size = 0x12000, scoped, tag = 'internal scratch']
  %s0 = inlined_call_operand.vmem [shape: f32[2,128], index: 0, kind: input, shape index: {}]
  %s1 = inlined_call_operand.vmem [shape: f32[128,16], index: 1, kind: input, shape index: {}]
  %s2 = inlined_call_operand.vmem [shape: f32[1,16], index: 2, kind: input, shape index: {}]
  %s3 = inlined_call_operand.vmem [shape: f32[2,8], index: 3, kind: input, shape index: {}]
  %s4 = inlined_call_operand.vmem [shape: f32[8,128], index: 4, kind: input, shape index: {}]
  %s5 = inlined_call_operand.vmem [shape: f32[1,128], index: 5, kind: input, shape index: {}]
  %s6 = inlined_call_operand.vmem [shape: f32[2,128], index: 6, kind: output, shape index: {0}]
  %s7 = inlined_call_operand.hbm [shape: f32[1,1], index: 7, kind: output, shape index: {1}]
  %8 = xla_tuple %s6, %s7
  %s9 = sld [smem:[#allocation0]]
  $region42: #{vae_forward.10} parent=0
    _
  %s11 = ssub.s32 1, %s9
  %s12 = scalar_select 0, %s11, %s9
  $region1: #{vae_forward.10} parent=0
    #allocation2 [shape = 'u8[512]{0}', space=smem, size = 0x200, scoped, tag = 'output window, operand 1, single buffered']
    #allocation3 [shape = 's32[1]{0}', space=sflag, size = 0x4, scoped, tag = 'scoped memory for vae_forward.10']
    %13 = vsyncpa [#allocation3], 0
    // Predicated region
    $region2: #{vae_forward.10} parent=1 // pred_check
      _
    $region3: #{vae_forward.10} parent=1 // pred_check_branch
      %15 = sbr.rel (0) target = $region5
    $region4: #{vae_forward.10} parent=1 // pred_region
      _
    $region5: #{vae_forward.10} parent=1 // pred_fallthru
      _
    // Predicated region
    $region6: #{vae_forward.10} parent=1 // pred_check
      _
    $region7: #{vae_forward.10} parent=1 // pred_check_branch
      %17 = sbr.rel (0) target = $region9
    $region8: #{vae_forward.10} parent=1 // pred_region
      _
    $region9: #{vae_forward.10} parent=1 // pred_fallthru
      _
    // Predicated region
    $region10: #{vae_forward.10} parent=1 // pred_check
      _
    $region11: #{vae_forward.10} parent=1 // pred_check_branch
      %19 = sbr.rel (0) target = $region13
    $region12: #{vae_forward.10} parent=1 // pred_region
      _
    $region13: #{vae_forward.10} parent=1 // pred_fallthru
      _
    // Predicated region
    $region14: #{vae_forward.10} parent=1 // pred_check
      _
    $region15: #{vae_forward.10} parent=1 // pred_check_branch
      %21 = sbr.rel (0) target = $region17
    $region16: #{vae_forward.10} parent=1 // pred_region
      _
    $region17: #{vae_forward.10} parent=1 // pred_fallthru
      _
    // Predicated region
    $region18: #{vae_forward.10} parent=1 // pred_check
      _
    $region19: #{vae_forward.10} parent=1 // pred_check_branch
      %23 = sbr.rel (0) target = $region21
    $region20: #{vae_forward.10} parent=1 // pred_region
      _
    $region21: #{vae_forward.10} parent=1 // pred_fallthru
      _
    // Predicated region
    $region22: #{vae_forward.10} parent=1 // pred_check
      _
    $region23: #{vae_forward.10} parent=1 // pred_check_branch
      %25 = sbr.rel (0) target = $region25
    $region24: #{vae_forward.10} parent=1 // pred_region
      _
    $region25: #{vae_forward.10} parent=1 // pred_fallthru
      _
    %v26 = vld [vmem:[%s0] sm:$0x3]
    %v27 = vld [vmem:[%s1] sm:$0xff]
    %v28 = vld [vmem:[%s1 + $0x8] sm:$0xff]
    %v29 = vld [vmem:[%s1 + $0x10] sm:$0xff]
    %v30 = vld [vmem:[%s1 + $0x18] sm:$0xff]
    %v31 = vld [vmem:[%s1 + $0x20] sm:$0xff]
    %v32 = vld [vmem:[%s1 + $0x28] sm:$0xff]
    %v33 = vld [vmem:[%s1 + $0x30] sm:$0xff]
    %v34 = vld [vmem:[%s1 + $0x38] sm:$0xff]
    %v35 = vld [vmem:[%s1 + $0x40] sm:$0xff]
    %v36 = vld [vmem:[%s1 + $0x48] sm:$0xff]
    %v37 = vld [vmem:[%s1 + $0x50] sm:$0xff]
    %v38 = vld [vmem:[%s1 + $0x58] sm:$0xff]
    %v39 = vld [vmem:[%s1 + $0x60] sm:$0xff]
    %v40 = vld [vmem:[%s1 + $0x68] sm:$0xff]
    %v41 = vld [vmem:[%s1 + $0x70] sm:$0xff]
    %v42 = vld [vmem:[%s1 + $0x78] sm:$0xff]
    %v43 = vld [vmem:[%s2] sm:$0x1]
    %v45 = vlaneseq
    %v46 = vshrl.u32 %v45, 7
    %v47 = vsub.s32 0, %v46
    %v48 = vrot.slane %v43, %v47
    %50 = vmatprep.subr.mxu0 0.0
    %51 = vmatpush1.msra.mxu0 %v27
    %52 = vmatprep.subr.mxu0 0.0
    %53 = vmatpush1.msra.mxu0 %v28
    %54 = vmatprep.subr.mxu0 0.0
    %55 = vmatpush1.msra.mxu0 %v29
    %56 = vmatprep.subr.mxu0 0.0
    %57 = vmatpush1.msra.mxu0 %v30
    %58 = vmatprep.subr.mxu0 0.0
    %59 = vmatpush1.msra.mxu0 %v31
    %60 = vmatprep.subr.mxu0 0.0
    %61 = vmatpush1.msra.mxu0 %v32
    %62 = vmatprep.subr.mxu0 0.0
    %63 = vmatpush1.msra.mxu0 %v33
    %64 = vmatprep.subr.mxu0 0.0
    %65 = vmatpush1.msra.mxu0 %v34
    %66 = vmatprep.subr.mxu0 0.0
    %67 = vmatpush1.msra.mxu0 %v35
    %68 = vmatprep.subr.mxu0 0.0
    %69 = vmatpush1.msra.mxu0 %v36
    %70 = vmatprep.subr.mxu0 0.0
    %71 = vmatpush1.msra.mxu0 %v37
    %72 = vmatprep.subr.mxu0 0.0
    %73 = vmatpush1.msra.mxu0 %v38
    %74 = vmatprep.subr.mxu0 0.0
    %75 = vmatpush1.msra.mxu0 %v39
    %76 = vmatprep.subr.mxu0 0.0
    %77 = vmatpush1.msra.mxu0 %v40
    %78 = vmatprep.subr.mxu0 0.0
    %79 = vmatpush1.msra.mxu0 %v41
    %80 = vmatprep.subr.mxu0 0.0
    %81 = vmatpush1.msra.mxu0 %v42
    %82 = vmatprep.subr.mxu0 0.0
    %83 = vmatpush1.msra.mxu0 0.0
    %84 = vmatprep.subr.mxu0 0.0
    %85 = vmatpush1.msra.mxu0 0.0
    %86 = vmatprep.subr.mxu0 0.0
    %87 = vmatpush1.msra.mxu0 0.0
    %88 = vmatprep.subr.mxu0 0.0
    %89 = vmatpush1.msra.mxu0 0.0
    %90 = vmatprep.subr.mxu0 0.0
    %91 = vmatpush1.msra.mxu0 0.0
    %92 = vmatprep.subr.mxu0 0.0
    %93 = vmatpush1.msra.mxu0 0.0
    %94 = vmatprep.subr.mxu0 0.0
    %95 = vmatpush1.msra.mxu0 0.0
    %96 = vmatprep.subr.mxu0 0.0
    %97 = vmatpush1.msra.mxu0 0.0
    %98 = vmatprep.subr.mxu0 0.0
    %99 = vmatpush1.msra.mxu0 0.0
    %100 = vmatprep.subr.mxu0 0.0
    %101 = vmatpush1.msra.mxu0 0.0
    %102 = vmatprep.subr.mxu0 0.0
    %103 = vmatpush1.msra.mxu0 0.0
    %104 = vmatprep.subr.mxu0 0.0
    %105 = vmatpush1.msra.mxu0 0.0
    %106 = vmatprep.subr.mxu0 0.0
    %107 = vmatpush1.msra.mxu0 0.0
    %108 = vmatprep.subr.mxu0 0.0
    %109 = vmatpush1.msra.mxu0 0.0
    %110 = vmatprep.subr.mxu0 0.0
    %111 = vmatpush1.msra.mxu0 0.0
    %112 = vmatprep.subr.mxu0 0.0
    %113 = vmatpush1.msra.mxu0 0.0
    %114 = vmatprep.mubr.f32.mxu0 0.0
    %115 = vmatmul.mubr.f32.gmra.mrb[0].mxu0 %v26
    %v116 = vpop.f32.mrb[0].mxu0
    %v117 = vadd.f32 %v48, %v116
    %v118 = vpop.f32.mrb[0].mxu0
    %119 = vdwg.mxu0
    %v120 = vmul.f32 %v117, 0.5
    %v121 = vmul.f32 %v120, 1.442695
    %v122 = vpow.pop %v121
    %v123 = vld [vmem:[%s3] sm:$0x3]
    %125 = vrot.lane.b32.xlu0 %v122, 120
    %v126 = vpop.permute.xlu0 %125
    %v128 = vmul.f32 %v123, %v126
    %v129 = vadd.f32 %v117, %v128
    %v130 = vmul.f32 %v122, %v122
    %v131 = vadd.f32 %v117, 1.0
    %v132 = vmul.f32 %v117, %v117
    %134 = vrot.lane.b32.xlu0 %v132, 8
    %v135 = vpop.permute.xlu0 %134
    %v137 = vsub.f32 %v131, %v135
    %v138 = vsub.f32 %v137, %v130
    %140 = vrot.lane.b32.xlu0 %v138, 120
    %v141 = vpop.permute.xlu0 %140
    %vm143 = vcmask 58368
    %v144 = vsel %vm143, %v141, 0.0
    %145 = vadd.xlane.f32.xlu0 %v144
    %v146 = vpop.xlane.xlu0 %145
    %v147 = vrot.slane %v146, 4
    %v148 = vadd.f32 %v146, %v147
    %v149 = vrot.slane %v148, 2
    %v150 = vadd.f32 %v148, %v149
    %v151 = vrot.slane %v150, 1
    %v152 = vadd.f32 %v150, %v151
    %s153 = vtos %v152
    %s154 = smul.f32 %s153, -0.5
    %s155 = scalar_lea.smem [#allocation2], 0
    %156 = sst [smem:[%s155]] %s154
    %v157 = vld [vmem:[%s4] sm:$0xff]
    %v158 = vld [vmem:[%s5] sm:$0x1]
    %v160 = vlaneseq
    %v161 = vshrl.u32 %v160, 7
    %v162 = vsub.s32 0, %v161
    %v163 = vrot.slane %v158, %v162
    %vm165 = vcmask 64512
    %v167 = vsel %vm165, %v129, 0
    %169 = vmatprep.subr.mxu0 0.0
    %170 = vmatpush1.msra.mxu0 %v157
    %171 = vmatprep.subr.mxu0 0.0
    %172 = vmatpush1.msra.mxu0 0.0
    %173 = vmatprep.subr.mxu0 0.0
    %174 = vmatpush1.msra.mxu0 0.0
    %175 = vmatprep.subr.mxu0 0.0
    %176 = vmatpush1.msra.mxu0 0.0
    %177 = vmatprep.subr.mxu0 0.0
    %178 = vmatpush1.msra.mxu0 0.0
    %179 = vmatprep.subr.mxu0 0.0
    %180 = vmatpush1.msra.mxu0 0.0
    %181 = vmatprep.subr.mxu0 0.0
    %182 = vmatpush1.msra.mxu0 0.0
    %183 = vmatprep.subr.mxu0 0.0
    %184 = vmatpush1.msra.mxu0 0.0
    %185 = vmatprep.subr.mxu0 0.0
    %186 = vmatpush1.msra.mxu0 0.0
    %187 = vmatprep.subr.mxu0 0.0
    %188 = vmatpush1.msra.mxu0 0.0
    %189 = vmatprep.subr.mxu0 0.0
    %190 = vmatpush1.msra.mxu0 0.0
    %191 = vmatprep.subr.mxu0 0.0
    %192 = vmatpush1.msra.mxu0 0.0
    %193 = vmatprep.subr.mxu0 0.0
    %194 = vmatpush1.msra.mxu0 0.0
    %195 = vmatprep.subr.mxu0 0.0
    %196 = vmatpush1.msra.mxu0 0.0
    %197 = vmatprep.subr.mxu0 0.0
    %198 = vmatpush1.msra.mxu0 0.0
    %199 = vmatprep.subr.mxu0 0.0
    %200 = vmatpush1.msra.mxu0 0.0
    %201 = vmatprep.subr.mxu0 0.0
    %202 = vmatpush1.msra.mxu0 0.0
    %203 = vmatprep.subr.mxu0 0.0
    %204 = vmatpush1.msra.mxu0 0.0
    %205 = vmatprep.subr.mxu0 0.0
    %206 = vmatpush1.msra.mxu0 0.0
    %207 = vmatprep.subr.mxu0 0.0
    %208 = vmatpush1.msra.mxu0 0.0
    %209 = vmatprep.subr.mxu0 0.0
    %210 = vmatpush1.msra.mxu0 0.0
    %211 = vmatprep.subr.mxu0 0.0
    %212 = vmatpush1.msra.mxu0 0.0
    %213 = vmatprep.subr.mxu0 0.0
    %214 = vmatpush1.msra.mxu0 0.0
    %215 = vmatprep.subr.mxu0 0.0
    %216 = vmatpush1.msra.mxu0 0.0
    %217 = vmatprep.subr.mxu0 0.0
    %218 = vmatpush1.msra.mxu0 0.0
    %219 = vmatprep.subr.mxu0 0.0
    %220 = vmatpush1.msra.mxu0 0.0
    %221 = vmatprep.subr.mxu0 0.0
    %222 = vmatpush1.msra.mxu0 0.0
    %223 = vmatprep.subr.mxu0 0.0
    %224 = vmatpush1.msra.mxu0 0.0
    %225 = vmatprep.subr.mxu0 0.0
    %226 = vmatpush1.msra.mxu0 0.0
    %227 = vmatprep.subr.mxu0 0.0
    %228 = vmatpush1.msra.mxu0 0.0
    %229 = vmatprep.subr.mxu0 0.0
    %230 = vmatpush1.msra.mxu0 0.0
    %231 = vmatprep.subr.mxu0 0.0
    %232 = vmatpush1.msra.mxu0 0.0
    %233 = vmatprep.mubr.f32.mxu0 0.0
    %234 = vmatmul.mubr.f32.gmra.mrb[0].mxu0 %v167
    %v235 = vpop.f32.mrb[0].mxu0
    %v236 = vadd.f32 %v163, %v235
    %v237 = vpop.f32.mrb[0].mxu0
    %238 = vdwg.mxu0
    %239 = vst [vmem:[%s6] sm:$0x3] %v236
    // Predicated region
    $region26: #{vae_forward.10} parent=1 // pred_check
      _
    $region27: #{vae_forward.10} parent=1 // pred_check_branch
      %241 = sbr.rel (0) target = $region29
    $region28: #{vae_forward.10} parent=1 // pred_region
      _
    $region29: #{vae_forward.10} parent=1 // pred_fallthru
      _
    // Predicated region
    $region30: #{vae_forward.10} parent=1 // pred_check
      _
    $region31: #{vae_forward.10} parent=1 // pred_check_branch
      %243 = sbr.rel (0) target = $region33
    $region32: #{vae_forward.10} parent=1 // pred_region
      %s245 = ssub.s32 16, 16
      %246 = vsyncadd [#allocation3], %s245
      %249 = dma.smem_to_hbm [#allocation2], 16, %s7, [#allocation3]
    $region33: #{vae_forward.10} parent=1 // pred_fallthru
      _
    // Predicated region
    $region34: #{vae_forward.10} parent=1 // pred_check
      _
    $region35: #{vae_forward.10} parent=1 // pred_check_branch
      %251 = sbr.rel (0) target = $region37
    $region36: #{vae_forward.10} parent=1 // pred_region
      _
    $region37: #{vae_forward.10} parent=1 // pred_fallthru
      _
    // Predicated region
    $region38: #{vae_forward.10} parent=1 // pred_check
      _
    $region39: #{vae_forward.10} parent=1 // pred_check_branch
      %253 = sbr.rel (0) target = $region41
    $region40: #{vae_forward.10} parent=1 // pred_region
      %254 = dma.done [#allocation3], 16
    $region41: #{vae_forward.10} parent=1 // pred_fallthru
      _
    %255 = sfence
    %256 = vsyncpa [#allocation3], 1

// kernel: vae_forward.9
$region0: #{vae_forward.9}
  #allocation0 [shape = 'u32[]', space=smem, size = 0x4, offset = 0x4, fixed_abs, tag = 'smem constant byte address 0x4 - core index']
  #allocation1 [shape = 'u32[144,128]{1,0:T(1,128)}', space=vmem, size = 0x12000, scoped, tag = 'internal scratch']
  %s0 = inlined_call_operand.vmem [shape: bf16[6,192], index: 0, kind: input, shape index: {}]
  %s1 = inlined_call_operand.vmem [shape: bf16[9,32,64], index: 1, kind: input, shape index: {}]
  %s2 = inlined_call_operand.vmem [shape: f32[1,64], index: 2, kind: input, shape index: {}]
  %s3 = inlined_call_operand.vmem [shape: f32[1,32], index: 3, kind: input, shape index: {}]
  %s4 = inlined_call_operand.vmem [shape: f32[1,32], index: 4, kind: input, shape index: {}]
  %s5 = inlined_call_operand.vmem [shape: f32[64,32], index: 5, kind: input, shape index: {}]
  %s6 = inlined_call_operand.vmem [shape: f32[32,64], index: 6, kind: input, shape index: {}]
  %s7 = inlined_call_operand.vmem [shape: bf16[4,64], index: 7, kind: output, shape index: {}]
  %s8 = sld [smem:[#allocation0]]
  $region38: #{vae_forward.9} parent=0
    _
  %s10 = ssub.s32 1, %s8
  %s11 = scalar_select 0, %s10, %s8
  // Predicated region
  $region2: #{vae_forward.9} parent=0 // pred_check
    _
  $region3: #{vae_forward.9} parent=0 // pred_check_branch
    %13 = sbr.rel (0) target = $region5
  $region4: #{vae_forward.9} parent=0 // pred_region
    _
  $region5: #{vae_forward.9} parent=0 // pred_fallthru
    _
  // Predicated region
  $region6: #{vae_forward.9} parent=0 // pred_check
    _
  $region7: #{vae_forward.9} parent=0 // pred_check_branch
    %15 = sbr.rel (0) target = $region9
  $region8: #{vae_forward.9} parent=0 // pred_region
    _
  $region9: #{vae_forward.9} parent=0 // pred_fallthru
    _
  // Predicated region
  $region10: #{vae_forward.9} parent=0 // pred_check
    _
  $region11: #{vae_forward.9} parent=0 // pred_check_branch
    %17 = sbr.rel (0) target = $region13
  $region12: #{vae_forward.9} parent=0 // pred_region
    _
  $region13: #{vae_forward.9} parent=0 // pred_fallthru
    _
  // Predicated region
  $region14: #{vae_forward.9} parent=0 // pred_check
    _
  $region15: #{vae_forward.9} parent=0 // pred_check_branch
    %19 = sbr.rel (0) target = $region17
  $region16: #{vae_forward.9} parent=0 // pred_region
    _
  $region17: #{vae_forward.9} parent=0 // pred_fallthru
    _
  // Predicated region
  $region18: #{vae_forward.9} parent=0 // pred_check
    _
  $region19: #{vae_forward.9} parent=0 // pred_check_branch
    %21 = sbr.rel (0) target = $region21
  $region20: #{vae_forward.9} parent=0 // pred_region
    _
  $region21: #{vae_forward.9} parent=0 // pred_fallthru
    _
  // Predicated region
  $region22: #{vae_forward.9} parent=0 // pred_check
    _
  $region23: #{vae_forward.9} parent=0 // pred_check_branch
    %23 = sbr.rel (0) target = $region25
  $region24: #{vae_forward.9} parent=0 // pred_region
    _
  $region25: #{vae_forward.9} parent=0 // pred_fallthru
    _
  // Predicated region
  $region26: #{vae_forward.9} parent=0 // pred_check
    _
  $region27: #{vae_forward.9} parent=0 // pred_check_branch
    %25 = sbr.rel (0) target = $region29
  $region28: #{vae_forward.9} parent=0 // pred_region
    _
  $region29: #{vae_forward.9} parent=0 // pred_fallthru
    _
  %v27 = vld [vmem:[%s0 + $0x4] sm:$0x1]
  %v28 = vld [vmem:[%s0 + $0x4] sm:$0x6]
  %v30 = vunpack.c.l.b16 %v28
  %v31 = vpack.c.b16 %v30, %v30
  %v33 = vshrl.u32 %v31, 16
  %v35 = vshll.u32 %v31, 16
  %v37 = vrot.slane %v35, 1
  %v38 = vor.u32 %v33, %v37
  %vm39 = vcmask 1040384
  %v42 = vsel %vm39, %v27, %v38
  %v43 = vld [vmem:[%s1] sm:$0xf]
  %v44 = vld [vmem:[%s1 + $0x4] sm:$0xf]
  %v45 = vld [vmem:[%s1 + $0x8] sm:$0xf]
  %v46 = vld [vmem:[%s1 + $0xc] sm:$0xf]
  %v47 = vld [vmem:[%s0] sm:$0x11]
  %v48 = vld [vmem:[%s0] sm:$0x66]
  %v50 = vunpack.c.l.b16 %v47
  %v51 = vunpack.c.h.b16 %v47
  %v52 = vpack.c.b16 %v50, %v50
  %v53 = vpack.c.b16 %v51, %v51
  %v55 = vunpack.c.l.b16 %v48
  %v56 = vunpack.c.h.b16 %v48
  %v57 = vpack.c.b16 %v55, %v55
  %v58 = vpack.c.b16 %v56, %v56
  %v60 = vshrl.u32 %v57, 16
  %v62 = vshll.u32 %v57, 16
  %v64 = vrot.slane %v62, 1
  %v65 = vor.u32 %v60, %v64
  %v67 = vshrl.u32 %v58, 16
  %v69 = vshll.u32 %v58, 16
  %v71 = vrot.slane %v69, 1
  %v72 = vor.u32 %v67, %v71
  %v75 = vsel %vm39, %v52, %v65
  %v78 = vsel %vm39, %v53, %v72
  %s79 = scalar_lea.vmem %s1, 16
  %v80 = vld [vmem:[%s79] sm:$0xf]
  %v81 = vld [vmem:[%s79 + $0x4] sm:$0xf]
  %v82 = vld [vmem:[%s79 + $0x8] sm:$0xf]
  %v83 = vld [vmem:[%s79 + $0xc] sm:$0xf]
  %86 = vrot.lane.b32.xlu0 %v75, 16
  %v87 = vpop.permute.xlu0 %86
  %88 = vrot.lane.b32.xlu0 %v78, 16
  %v89 = vpop.permute.xlu0 %88
  %vm90 = vcmask 130048
  %v91 = vsel %vm90, %v87, %v89
  %v96 = vunpack.c.l.b16 %v80
  %v97 = vunpack.c.l.b16 %v81
  %v98 = vunpack.c.l.b16 %v82
  %v99 = vunpack.c.l.b16 %v83
  %v100 = vpack.c.b16 %v97, %v96
  %v101 = vpack.c.b16 %v99, %v98
  %vm104 = vcmask 261120
  %v106 = vsel %vm104, %v91, 0
  %108 = vmatprep.subr.bf16.mxu0 0
  %109 = vmatpush1.bf16.msra.mxu0 %v100
  %110 = vmatprep.subr.bf16.mxu0 0
  %111 = vmatpush1.bf16.msra.mxu0 %v101
  %112 = vmatprep.subr.bf16.mxu0 0
  %113 = vmatpush1.bf16.msra.mxu0 0
  %114 = vmatprep.subr.bf16.mxu0 0
  %115 = vmatpush1.bf16.msra.mxu0 0
  %116 = vmatprep.subr.bf16.mxu0 0
  %117 = vmatpush1.bf16.msra.mxu0 0
  %118 = vmatprep.subr.bf16.mxu0 0
  %119 = vmatpush1.bf16.msra.mxu0 0
  %120 = vmatprep.subr.bf16.mxu0 0
  %121 = vmatpush1.bf16.msra.mxu0 0
  %122 = vmatprep.subr.bf16.mxu0 0
  %123 = vmatpush1.bf16.msra.mxu0 0
  %124 = vmatprep.subr.bf16.mxu0 0
  %125 = vmatpush1.bf16.msra.mxu0 0
  %126 = vmatprep.subr.bf16.mxu0 0
  %127 = vmatpush1.bf16.msra.mxu0 0
  %128 = vmatprep.subr.bf16.mxu0 0
  %129 = vmatpush1.bf16.msra.mxu0 0
  %130 = vmatprep.subr.bf16.mxu0 0
  %131 = vmatpush1.bf16.msra.mxu0 0
  %132 = vmatprep.subr.bf16.mxu0 0
  %133 = vmatpush1.bf16.msra.mxu0 0
  %134 = vmatprep.subr.bf16.mxu0 0
  %135 = vmatpush1.bf16.msra.mxu0 0
  %136 = vmatprep.subr.bf16.mxu0 0
  %137 = vmatpush1.bf16.msra.mxu0 0
  %138 = vmatprep.subr.bf16.mxu0 0
  %139 = vmatpush1.bf16.msra.mxu0 0
  %140 = vmatprep.mubr.bf16.mxu0 0
  %141 = vmatmul.mubr.bf16.gmra.mrb[0].mxu0 %v106
  %v142 = vpop.f32.mrb[0].mxu0
  %v143 = vadd.f32 0.0, %v142
  %v144 = vpop.f32.mrb[0].mxu0
  %v145 = vpop.f32.mrb[0].mxu0
  %v146 = vpop.f32.mrb[0].mxu0
  %147 = vdwg.mxu0
  %149 = vrot.lane.b32.xlu0 %v42, 112
  %v150 = vpop.permute.xlu0 %149
  %v155 = vunpack.c.l.b16 %v43
  %v156 = vunpack.c.l.b16 %v44
  %v157 = vunpack.c.l.b16 %v45
  %v158 = vunpack.c.l.b16 %v46
  %v159 = vpack.c.b16 %v156, %v155
  %v160 = vpack.c.b16 %v158, %v157
  %v164 = vsel %vm104, %v150, 0
  %166 = vmatprep.subr.bf16.mxu0 0
  %167 = vmatpush1.bf16.msra.mxu0 %v159
  %168 = vmatprep.subr.bf16.mxu0 0
  %169 = vmatpush1.bf16.msra.mxu0 %v160
  %170 = vmatprep.subr.bf16.mxu0 0
  %171 = vmatpush1.bf16.msra.mxu0 0
  %172 = vmatprep.subr.bf16.mxu0 0
  %173 = vmatpush1.bf16.msra.mxu0 0
  %174 = vmatprep.subr.bf16.mxu0 0
  %175 = vmatpush1.bf16.msra.mxu0 0
  %176 = vmatprep.subr.bf16.mxu0 0
  %177 = vmatpush1.bf16.msra.mxu0 0
  %178 = vmatprep.subr.bf16.mxu0 0
  %179 = vmatpush1.bf16.msra.mxu0 0
  %180 = vmatprep.subr.bf16.mxu0 0
  %181 = vmatpush1.bf16.msra.mxu0 0
  %182 = vmatprep.subr.bf16.mxu0 0
  %183 = vmatpush1.bf16.msra.mxu0 0
  %184 = vmatprep.subr.bf16.mxu0 0
  %185 = vmatpush1.bf16.msra.mxu0 0
  %186 = vmatprep.subr.bf16.mxu0 0
  %187 = vmatpush1.bf16.msra.mxu0 0
  %188 = vmatprep.subr.bf16.mxu0 0
  %189 = vmatpush1.bf16.msra.mxu0 0
  %190 = vmatprep.subr.bf16.mxu0 0
  %191 = vmatpush1.bf16.msra.mxu0 0
  %192 = vmatprep.subr.bf16.mxu0 0
  %193 = vmatpush1.bf16.msra.mxu0 0
  %194 = vmatprep.subr.bf16.mxu0 0
  %195 = vmatpush1.bf16.msra.mxu0 0
  %196 = vmatprep.subr.bf16.mxu0 0
  %197 = vmatpush1.bf16.msra.mxu0 0
  %198 = vmatprep.mubr.bf16.mxu0 0
  %199 = vmatmul.mubr.bf16.gmra.mrb[0].mxu0 %v164
  %v200 = vpop.f32.mrb[0].mxu0
  %v201 = vadd.f32 %v143, %v200
  %v202 = vpop.f32.mrb[0].mxu0
  %v203 = vpop.f32.mrb[0].mxu0
  %v204 = vpop.f32.mrb[0].mxu0
  %205 = vdwg.mxu0
  %s206 = scalar_lea.vmem %s1, 32
  %v207 = vld [vmem:[%s206] sm:$0xf]
  %v208 = vld [vmem:[%s206 + $0x4] sm:$0xf]
  %v209 = vld [vmem:[%s206 + $0x8] sm:$0xf]
  %v210 = vld [vmem:[%s206 + $0xc] sm:$0xf]
  %211 = vrot.lane.b32.xlu0 %v42, 96
  %v212 = vpop.permute.xlu0 %211
  %v217 = vunpack.c.l.b16 %v207
  %v218 = vunpack.c.l.b16 %v208
  %v219 = vunpack.c.l.b16 %v209
  %v220 = vunpack.c.l.b16 %v210
  %v221 = vpack.c.b16 %v218, %v217
  %v222 = vpack.c.b16 %v220, %v219
  %v226 = vsel %vm104, %v212, 0
  %228 = vmatprep.subr.bf16.mxu0 0
  %229 = vmatpush1.bf16.msra.mxu0 %v221
  %230 = vmatprep.subr.bf16.mxu0 0
  %231 = vmatpush1.bf16.msra.mxu0 %v222
  %232 = vmatprep.subr.bf16.mxu0 0
  %233 = vmatpush1.bf16.msra.mxu0 0
  %234 = vmatprep.subr.bf16.mxu0 0
  %235 = vmatpush1.bf16.msra.mxu0 0
  %236 = vmatprep.subr.bf16.mxu0 0
  %237 = vmatpush1.bf16.msra.mxu0 0
  %238 = vmatprep.subr.bf16.mxu0 0
  %239 = vmatpush1.bf16.msra.mxu0 0
  %240 = vmatprep.subr.bf16.mxu0 0
  %241 = vmatpush1.bf16.msra.mxu0 0
  %242 = vmatprep.subr.bf16.mxu0 0
  %243 = vmatpush1.bf16.msra.mxu0 0
  %244 = vmatprep.subr.bf16.mxu0 0
  %245 = vmatpush1.bf16.msra.mxu0 0
  %246 = vmatprep.subr.bf16.mxu0 0
  %247 = vmatpush1.bf16.msra.mxu0 0
  %248 = vmatprep.subr.bf16.mxu0 0
  %249 = vmatpush1.bf16.msra.mxu0 0
  %250 = vmatprep.subr.bf16.mxu0 0
  %251 = vmatpush1.bf16.msra.mxu0 0
  %252 = vmatprep.subr.bf16.mxu0 0
  %253 = vmatpush1.bf16.msra.mxu0 0
  %254 = vmatprep.subr.bf16.mxu0 0
  %255 = vmatpush1.bf16.msra.mxu0 0
  %256 = vmatprep.subr.bf16.mxu0 0
  %257 = vmatpush1.bf16.msra.mxu0 0
  %258 = vmatprep.subr.bf16.mxu0 0
  %259 = vmatpush1.bf16.msra.mxu0 0
  %260 = vmatprep.mubr.bf16.mxu0 0
  %261 = vmatmul.mubr.bf16.gmra.mrb[0].mxu0 %v226
  %v262 = vpop.f32.mrb[0].mxu0
  %v263 = vadd.f32 0.0, %v262
  %v264 = vpop.f32.mrb[0].mxu0
  %v265 = vpop.f32.mrb[0].mxu0
  %v266 = vpop.f32.mrb[0].mxu0
  %267 = vdwg.mxu0
  %v268 = vadd.f32 %v201, %v263
  %v269 = vld [vmem:[%s0] sm:$0x3]
  %v270 = vld [vmem:[%s0] sm:$0x4]
  %v272 = vunpack.c.l.b16 %v269
  %v273 = vpack.c.b16 %v272, %v272
  %v275 = vshrl.u32 %v273, 16
  %v277 = vshll.u32 %v273, 16
  %v279 = vrot.slane %v277, 1
  %v280 = vor.u32 %v275, %v279
  %v282 = vunpack.c.l.b16 %v270
  %v283 = vpack.c.b16 %v282, %v282
  %v284 = vrot.slane %v283, 1
  %v287 = vsel %vm39, %v280, %v284
  %s288 = scalar_lea.vmem %s1, 48
  %v289 = vld [vmem:[%s288] sm:$0xf]
  %v290 = vld [vmem:[%s288 + $0x4] sm:$0xf]
  %v291 = vld [vmem:[%s288 + $0x8] sm:$0xf]
  %v292 = vld [vmem:[%s288 + $0xc] sm:$0xf]
  %294 = vrot.lane.b32.xlu0 %v287, 80
  %v295 = vpop.permute.xlu0 %294
  %v300 = vunpack.c.l.b16 %v289
  %v301 = vunpack.c.l.b16 %v290
  %v302 = vunpack.c.l.b16 %v291
  %v303 = vunpack.c.l.b16 %v292
  %v304 = vpack.c.b16 %v301, %v300
  %v305 = vpack.c.b16 %v303, %v302
  %v309 = vsel %vm104, %v295, 0
  %311 = vmatprep.subr.bf16.mxu0 0
  %312 = vmatpush1.bf16.msra.mxu0 %v304
  %313 = vmatprep.subr.bf16.mxu0 0
  %314 = vmatpush1.bf16.msra.mxu0 %v305
  %315 = vmatprep.subr.bf16.mxu0 0
  %316 = vmatpush1.bf16.msra.mxu0 0
  %317 = vmatprep.subr.bf16.mxu0 0
  %318 = vmatpush1.bf16.msra.mxu0 0
  %319 = vmatprep.subr.bf16.mxu0 0
  %320 = vmatpush1.bf16.msra.mxu0 0
  %321 = vmatprep.subr.bf16.mxu0 0
  %322 = vmatpush1.bf16.msra.mxu0 0
  %323 = vmatprep.subr.bf16.mxu0 0
  %324 = vmatpush1.bf16.msra.mxu0 0
  %325 = vmatprep.subr.bf16.mxu0 0
  %326 = vmatpush1.bf16.msra.mxu0 0
  %327 = vmatprep.subr.bf16.mxu0 0
  %328 = vmatpush1.bf16.msra.mxu0 0
  %329 = vmatprep.subr.bf16.mxu0 0
  %330 = vmatpush1.bf16.msra.mxu0 0
  %331 = vmatprep.subr.bf16.mxu0 0
  %332 = vmatpush1.bf16.msra.mxu0 0
  %333 = vmatprep.subr.bf16.mxu0 0
  %334 = vmatpush1.bf16.msra.mxu0 0
  %335 = vmatprep.subr.bf16.mxu0 0
  %336 = vmatpush1.bf16.msra.mxu0 0
  %337 = vmatprep.subr.bf16.mxu0 0
  %338 = vmatpush1.bf16.msra.mxu0 0
  %339 = vmatprep.subr.bf16.mxu0 0
  %340 = vmatpush1.bf16.msra.mxu0 0
  %341 = vmatprep.subr.bf16.mxu0 0
  %342 = vmatpush1.bf16.msra.mxu0 0
  %343 = vmatprep.mubr.bf16.mxu0 0
  %344 = vmatmul.mubr.bf16.gmra.mrb[0].mxu0 %v309
  %v345 = vpop.f32.mrb[0].mxu0
  %v346 = vadd.f32 0.0, %v345
  %v347 = vpop.f32.mrb[0].mxu0
  %v348 = vpop.f32.mrb[0].mxu0
  %v349 = vpop.f32.mrb[0].mxu0
  %350 = vdwg.mxu0
  %v351 = vadd.f32 %v268, %v346
  %s352 = scalar_lea.vmem %s1, 64
  %v353 = vld [vmem:[%s352] sm:$0xf]
  %v354 = vld [vmem:[%s352 + $0x4] sm:$0xf]
  %v355 = vld [vmem:[%s352 + $0x8] sm:$0xf]
  %v356 = vld [vmem:[%s352 + $0xc] sm:$0xf]
  %357 = vrot.lane.b32.xlu0 %v287, 112
  %v358 = vpop.permute.xlu0 %357
  %v363 = vunpack.c.l.b16 %v353
  %v364 = vunpack.c.l.b16 %v354
  %v365 = vunpack.c.l.b16 %v355
  %v366 = vunpack.c.l.b16 %v356
  %v367 = vpack.c.b16 %v364, %v363
  %v368 = vpack.c.b16 %v366, %v365
  %v372 = vsel %vm104, %v358, 0
  %374 = vmatprep.subr.bf16.mxu0 0
  %375 = vmatpush1.bf16.msra.mxu0 %v367
  %376 = vmatprep.subr.bf16.mxu0 0
  %377 = vmatpush1.bf16.msra.mxu0 %v368
  %378 = vmatprep.subr.bf16.mxu0 0
  %379 = vmatpush1.bf16.msra.mxu0 0
  %380 = vmatprep.subr.bf16.mxu0 0
  %381 = vmatpush1.bf16.msra.mxu0 0
  %382 = vmatprep.subr.bf16.mxu0 0
  %383 = vmatpush1.bf16.msra.mxu0 0
  %384 = vmatprep.subr.bf16.mxu0 0
  %385 = vmatpush1.bf16.msra.mxu0 0
  %386 = vmatprep.subr.bf16.mxu0 0
  %387 = vmatpush1.bf16.msra.mxu0 0
  %388 = vmatprep.subr.bf16.mxu0 0
  %389 = vmatpush1.bf16.msra.mxu0 0
  %390 = vmatprep.subr.bf16.mxu0 0
  %391 = vmatpush1.bf16.msra.mxu0 0
  %392 = vmatprep.subr.bf16.mxu0 0
  %393 = vmatpush1.bf16.msra.mxu0 0
  %394 = vmatprep.subr.bf16.mxu0 0
  %395 = vmatpush1.bf16.msra.mxu0 0
  %396 = vmatprep.subr.bf16.mxu0 0
  %397 = vmatpush1.bf16.msra.mxu0 0
  %398 = vmatprep.subr.bf16.mxu0 0
  %399 = vmatpush1.bf16.msra.mxu0 0
  %400 = vmatprep.subr.bf16.mxu0 0
  %401 = vmatpush1.bf16.msra.mxu0 0
  %402 = vmatprep.subr.bf16.mxu0 0
  %403 = vmatpush1.bf16.msra.mxu0 0
  %404 = vmatprep.subr.bf16.mxu0 0
  %405 = vmatpush1.bf16.msra.mxu0 0
  %406 = vmatprep.mubr.bf16.mxu0 0
  %407 = vmatmul.mubr.bf16.gmra.mrb[0].mxu0 %v372
  %v408 = vpop.f32.mrb[0].mxu0
  %v409 = vadd.f32 0.0, %v408
  %v410 = vpop.f32.mrb[0].mxu0
  %v411 = vpop.f32.mrb[0].mxu0
  %v412 = vpop.f32.mrb[0].mxu0
  %413 = vdwg.mxu0
  %v414 = vadd.f32 %v351, %v409
  %s415 = scalar_lea.vmem %s1, 80
  %v416 = vld [vmem:[%s415] sm:$0xf]
  %v417 = vld [vmem:[%s415 + $0x4] sm:$0xf]
  %v418 = vld [vmem:[%s415 + $0x8] sm:$0xf]
  %v419 = vld [vmem:[%s415 + $0xc] sm:$0xf]
  %420 = vrot.lane.b32.xlu0 %v287, 64
  %v421 = vpop.permute.xlu0 %420
  %v426 = vunpack.c.l.b16 %v416
  %v427 = vunpack.c.l.b16 %v417
  %v428 = vunpack.c.l.b16 %v418
  %v429 = vunpack.c.l.b16 %v419
  %v430 = vpack.c.b16 %v427, %v426
  %v431 = vpack.c.b16 %v429, %v428
  %v435 = vsel %vm104, %v421, 0
  %437 = vmatprep.subr.bf16.mxu0 0
  %438 = vmatpush1.bf16.msra.mxu0 %v430
  %439 = vmatprep.subr.bf16.mxu0 0
  %440 = vmatpush1.bf16.msra.mxu0 %v431
  %441 = vmatprep.subr.bf16.mxu0 0
  %442 = vmatpush1.bf16.msra.mxu0 0
  %443 = vmatprep.subr.bf16.mxu0 0
  %444 = vmatpush1.bf16.msra.mxu0 0
  %445 = vmatprep.subr.bf16.mxu0 0
  %446 = vmatpush1.bf16.msra.mxu0 0
  %447 = vmatprep.subr.bf16.mxu0 0
  %448 = vmatpush1.bf16.msra.mxu0 0
  %449 = vmatprep.subr.bf16.mxu0 0
  %450 = vmatpush1.bf16.msra.mxu0 0
  %451 = vmatprep.subr.bf16.mxu0 0
  %452 = vmatpush1.bf16.msra.mxu0 0
  %453 = vmatprep.subr.bf16.mxu0 0
  %454 = vmatpush1.bf16.msra.mxu0 0
  %455 = vmatprep.subr.bf16.mxu0 0
  %456 = vmatpush1.bf16.msra.mxu0 0
  %457 = vmatprep.subr.bf16.mxu0 0
  %458 = vmatpush1.bf16.msra.mxu0 0
  %459 = vmatprep.subr.bf16.mxu0 0
  %460 = vmatpush1.bf16.msra.mxu0 0
  %461 = vmatprep.subr.bf16.mxu0 0
  %462 = vmatpush1.bf16.msra.mxu0 0
  %463 = vmatprep.subr.bf16.mxu0 0
  %464 = vmatpush1.bf16.msra.mxu0 0
  %465 = vmatprep.subr.bf16.mxu0 0
  %466 = vmatpush1.bf16.msra.mxu0 0
  %467 = vmatprep.subr.bf16.mxu0 0
  %468 = vmatpush1.bf16.msra.mxu0 0
  %469 = vmatprep.mubr.bf16.mxu0 0
  %470 = vmatmul.mubr.bf16.gmra.mrb[0].mxu0 %v435
  %v471 = vpop.f32.mrb[0].mxu0
  %v472 = vadd.f32 0.0, %v471
  %v473 = vpop.f32.mrb[0].mxu0
  %v474 = vpop.f32.mrb[0].mxu0
  %v475 = vpop.f32.mrb[0].mxu0
  %476 = vdwg.mxu0
  %v477 = vadd.f32 %v414, %v472
  %v478 = vld [vmem:[%s0 + $0x4] sm:$0x3]
  %v479 = vld [vmem:[%s0 + $0x4] sm:$0x4]
  %v481 = vunpack.c.l.b16 %v478
  %v482 = vpack.c.b16 %v481, %v481
  %v484 = vshrl.u32 %v482, 16
  %v486 = vshll.u32 %v482, 16
  %v488 = vrot.slane %v486, 1
  %v489 = vor.u32 %v484, %v488
  %v491 = vunpack.c.l.b16 %v479
  %v492 = vpack.c.b16 %v491, %v491
  %v493 = vrot.slane %v492, 1
  %v496 = vsel %vm39, %v489, %v493
  %s497 = scalar_lea.vmem %s1, 96
  %v498 = vld [vmem:[%s497] sm:$0xf]
  %v499 = vld [vmem:[%s497 + $0x4] sm:$0xf]
  %v500 = vld [vmem:[%s497 + $0x8] sm:$0xf]
  %v501 = vld [vmem:[%s497 + $0xc] sm:$0xf]
  %503 = vrot.lane.b32.xlu0 %v496, 112
  %v504 = vpop.permute.xlu0 %503
  %v509 = vunpack.c.l.b16 %v498
  %v510 = vunpack.c.l.b16 %v499
  %v511 = vunpack.c.l.b16 %v500
  %v512 = vunpack.c.l.b16 %v501
  %v513 = vpack.c.b16 %v510, %v509
  %v514 = vpack.c.b16 %v512, %v511
  %v518 = vsel %vm104, %v504, 0
  %520 = vmatprep.subr.bf16.mxu0 0
  %521 = vmatpush1.bf16.msra.mxu0 %v513
  %522 = vmatprep.subr.bf16.mxu0 0
  %523 = vmatpush1.bf16.msra.mxu0 %v514
  %524 = vmatprep.subr.bf16.mxu0 0
  %525 = vmatpush1.bf16.msra.mxu0 0
  %526 = vmatprep.subr.bf16.mxu0 0
  %527 = vmatpush1.bf16.msra.mxu0 0
  %528 = vmatprep.subr.bf16.mxu0 0
  %529 = vmatpush1.bf16.msra.mxu0 0
  %530 = vmatprep.subr.bf16.mxu0 0
  %531 = vmatpush1.bf16.msra.mxu0 0
  %532 = vmatprep.subr.bf16.mxu0 0
  %533 = vmatpush1.bf16.msra.mxu0 0
  %534 = vmatprep.subr.bf16.mxu0 0
  %535 = vmatpush1.bf16.msra.mxu0 0
  %536 = vmatprep.subr.bf16.mxu0 0
  %537 = vmatpush1.bf16.msra.mxu0 0
  %538 = vmatprep.subr.bf16.mxu0 0
  %539 = vmatpush1.bf16.msra.mxu0 0
  %540 = vmatprep.subr.bf16.mxu0 0
  %541 = vmatpush1.bf16.msra.mxu0 0
  %542 = vmatprep.subr.bf16.mxu0 0
  %543 = vmatpush1.bf16.msra.mxu0 0
  %544 = vmatprep.subr.bf16.mxu0 0
  %545 = vmatpush1.bf16.msra.mxu0 0
  %546 = vmatprep.subr.bf16.mxu0 0
  %547 = vmatpush1.bf16.msra.mxu0 0
  %548 = vmatprep.subr.bf16.mxu0 0
  %549 = vmatpush1.bf16.msra.mxu0 0
  %550 = vmatprep.subr.bf16.mxu0 0
  %551 = vmatpush1.bf16.msra.mxu0 0
  %552 = vmatprep.mubr.bf16.mxu0 0
  %553 = vmatmul.mubr.bf16.gmra.mrb[0].mxu0 %v518
  %v554 = vpop.f32.mrb[0].mxu0
  %v555 = vadd.f32 0.0, %v554
  %v556 = vpop.f32.mrb[0].mxu0
  %v557 = vpop.f32.mrb[0].mxu0
  %v558 = vpop.f32.mrb[0].mxu0
  %559 = vdwg.mxu0
  %v560 = vadd.f32 %v477, %v555
  %v561 = vld [vmem:[%s0] sm:$0x33]
  %v562 = vld [vmem:[%s0] sm:$0x44]
  %v564 = vunpack.c.l.b16 %v561
  %v565 = vunpack.c.h.b16 %v561
  %v566 = vpack.c.b16 %v564, %v564
  %v567 = vpack.c.b16 %v565, %v565
  %v569 = vshrl.u32 %v566, 16
  %v571 = vshll.u32 %v566, 16
  %v573 = vrot.slane %v571, 1
  %v574 = vor.u32 %v569, %v573
  %v576 = vshrl.u32 %v567, 16
  %v578 = vshll.u32 %v567, 16
  %v580 = vrot.slane %v578, 1
  %v581 = vor.u32 %v576, %v580
  %v583 = vunpack.c.l.b16 %v562
  %v584 = vunpack.c.h.b16 %v562
  %v585 = vpack.c.b16 %v583, %v583
  %v586 = vpack.c.b16 %v584, %v584
  %v587 = vrot.slane %v585, 1
  %v588 = vrot.slane %v586, 1
  %v591 = vsel %vm39, %v574, %v587
  %v594 = vsel %vm39, %v581, %v588
  %s595 = scalar_lea.vmem %s1, 112
  %v596 = vld [vmem:[%s595] sm:$0xf]
  %v597 = vld [vmem:[%s595 + $0x4] sm:$0xf]
  %v598 = vld [vmem:[%s595 + $0x8] sm:$0xf]
  %v599 = vld [vmem:[%s595 + $0xc] sm:$0xf]
  %602 = vrot.lane.b32.xlu0 %v591, 16
  %v603 = vpop.permute.xlu0 %602
  %604 = vrot.lane.b32.xlu0 %v594, 16
  %v605 = vpop.permute.xlu0 %604
  %v606 = vsel %vm90, %v603, %v605
  %v611 = vunpack.c.l.b16 %v596
  %v612 = vunpack.c.l.b16 %v597
  %v613 = vunpack.c.l.b16 %v598
  %v614 = vunpack.c.l.b16 %v599
  %v615 = vpack.c.b16 %v612, %v611
  %v616 = vpack.c.b16 %v614, %v613
  %v620 = vsel %vm104, %v606, 0
  %622 = vmatprep.subr.bf16.mxu0 0
  %623 = vmatpush1.bf16.msra.mxu0 %v615
  %624 = vmatprep.subr.bf16.mxu0 0
  %625 = vmatpush1.bf16.msra.mxu0 %v616
  %626 = vmatprep.subr.bf16.mxu0 0
  %627 = vmatpush1.bf16.msra.mxu0 0
  %628 = vmatprep.subr.bf16.mxu0 0
  %629 = vmatpush1.bf16.msra.mxu0 0
  %630 = vmatprep.subr.bf16.mxu0 0
  %631 = vmatpush1.bf16.msra.mxu0 0
  %632 = vmatprep.subr.bf16.mxu0 0
  %633 = vmatpush1.bf16.msra.mxu0 0
  %634 = vmatprep.subr.bf16.mxu0 0
  %635 = vmatpush1.bf16.msra.mxu0 0
  %636 = vmatprep.subr.bf16.mxu0 0
  %637 = vmatpush1.bf16.msra.mxu0 0
  %638 = vmatprep.subr.bf16.mxu0 0
  %639 = vmatpush1.bf16.msra.mxu0 0
  %640 = vmatprep.subr.bf16.mxu0 0
  %641 = vmatpush1.bf16.msra.mxu0 0
  %642 = vmatprep.subr.bf16.mxu0 0
  %643 = vmatpush1.bf16.msra.mxu0 0
  %644 = vmatprep.subr.bf16.mxu0 0
  %645 = vmatpush1.bf16.msra.mxu0 0
  %646 = vmatprep.subr.bf16.mxu0 0
  %647 = vmatpush1.bf16.msra.mxu0 0
  %648 = vmatprep.subr.bf16.mxu0 0
  %649 = vmatpush1.bf16.msra.mxu0 0
  %650 = vmatprep.subr.bf16.mxu0 0
  %651 = vmatpush1.bf16.msra.mxu0 0
  %652 = vmatprep.subr.bf16.mxu0 0
  %653 = vmatpush1.bf16.msra.mxu0 0
  %654 = vmatprep.mubr.bf16.mxu0 0
  %655 = vmatmul.mubr.bf16.gmra.mrb[0].mxu0 %v620
  %v656 = vpop.f32.mrb[0].mxu0
  %v657 = vadd.f32 0.0, %v656
  %v658 = vpop.f32.mrb[0].mxu0
  %v659 = vpop.f32.mrb[0].mxu0
  %v660 = vpop.f32.mrb[0].mxu0
  %661 = vdwg.mxu0
  %v662 = vadd.f32 %v560, %v657
  %s663 = scalar_lea.vmem %s1, 128
  %v664 = vld [vmem:[%s663] sm:$0xf]
  %v665 = vld [vmem:[%s663 + $0x4] sm:$0xf]
  %v666 = vld [vmem:[%s663 + $0x8] sm:$0xf]
  %v667 = vld [vmem:[%s663 + $0xc] sm:$0xf]
  %668 = vrot.lane.b32.xlu0 %v496, 96
  %v669 = vpop.permute.xlu0 %668
  %v674 = vunpack.c.l.b16 %v664
  %v675 = vunpack.c.l.b16 %v665
  %v676 = vunpack.c.l.b16 %v666
  %v677 = vunpack.c.l.b16 %v667
  %v678 = vpack.c.b16 %v675, %v674
  %v679 = vpack.c.b16 %v677, %v676
  %v683 = vsel %vm104, %v669, 0
  %685 = vmatprep.subr.bf16.mxu0 0
  %686 = vmatpush1.bf16.msra.mxu0 %v678
  %687 = vmatprep.subr.bf16.mxu0 0
  %688 = vmatpush1.bf16.msra.mxu0 %v679
  %689 = vmatprep.subr.bf16.mxu0 0
  %690 = vmatpush1.bf16.msra.mxu0 0
  %691 = vmatprep.subr.bf16.mxu0 0
  %692 = vmatpush1.bf16.msra.mxu0 0
  %693 = vmatprep.subr.bf16.mxu0 0
  %694 = vmatpush1.bf16.msra.mxu0 0
  %695 = vmatprep.subr.bf16.mxu0 0
  %696 = vmatpush1.bf16.msra.mxu0 0
  %697 = vmatprep.subr.bf16.mxu0 0
  %698 = vmatpush1.bf16.msra.mxu0 0
  %699 = vmatprep.subr.bf16.mxu0 0
  %700 = vmatpush1.bf16.msra.mxu0 0
  %701 = vmatprep.subr.bf16.mxu0 0
  %702 = vmatpush1.bf16.msra.mxu0 0
  %703 = vmatprep.subr.bf16.mxu0 0
  %704 = vmatpush1.bf16.msra.mxu0 0
  %705 = vmatprep.subr.bf16.mxu0 0
  %706 = vmatpush1.bf16.msra.mxu0 0
  %707 = vmatprep.subr.bf16.mxu0 0
  %708 = vmatpush1.bf16.msra.mxu0 0
  %709 = vmatprep.subr.bf16.mxu0 0
  %710 = vmatpush1.bf16.msra.mxu0 0
  %711 = vmatprep.subr.bf16.mxu0 0
  %712 = vmatpush1.bf16.msra.mxu0 0
  %713 = vmatprep.subr.bf16.mxu0 0
  %714 = vmatpush1.bf16.msra.mxu0 0
  %715 = vmatprep.subr.bf16.mxu0 0
  %716 = vmatpush1.bf16.msra.mxu0 0
  %717 = vmatprep.mubr.bf16.mxu0 0
  %718 = vmatmul.mubr.bf16.gmra.mrb[0].mxu0 %v683
  %v719 = vpop.f32.mrb[0].mxu0
  %v720 = vadd.f32 0.0, %v719
  %v721 = vpop.f32.mrb[0].mxu0
  %v722 = vpop.f32.mrb[0].mxu0
  %v723 = vpop.f32.mrb[0].mxu0
  %724 = vdwg.mxu0
  %v725 = vadd.f32 %v662, %v720
  %v726 = vld [vmem:[%s2] sm:$0x1]
  %v728 = vlaneseq
  %v729 = vshrl.u32 %v728, 7
  %v730 = vsub.s32 0, %v729
  %v731 = vrot.slane %v726, %v730
  %v733 = vadd.f32 %v725, %v731
  %vm734 = vcmask 519168
  %v735 = vsel %vm734, %v733, 0.0
  %v736 = vrot.slane %v735, 4
  %v737 = vadd.f32 %v735, %v736
  %v738 = vrot.slane %v737, 2
  %v739 = vadd.f32 %v737, %v738
  %v740 = vrot.slane %v739, 1
  %v741 = vadd.f32 %v739, %v740
  %v742 = vld [vmem:[%s5] sm:$0xff]
  %v743 = vld [vmem:[%s5 + $0x8] sm:$0xff]
  %v744 = vld [vmem:[%s5 + $0x10] sm:$0xff]
  %v745 = vld [vmem:[%s5 + $0x18] sm:$0xff]
  %v746 = vld [vmem:[%s5 + $0x20] sm:$0xff]
  %v747 = vld [vmem:[%s5 + $0x28] sm:$0xff]
  %v748 = vld [vmem:[%s5 + $0x30] sm:$0xff]
  %v749 = vld [vmem:[%s5 + $0x38] sm:$0xff]
  %vm750 = vcmask 523264
  %v752 = vsel %vm750, %v741, 0
  %754 = vmatprep.subr.mxu0 0.0
  %755 = vmatpush1.msra.mxu0 %v742
  %756 = vmatprep.subr.mxu0 0.0
  %757 = vmatpush1.msra.mxu0 %v743
  %758 = vmatprep.subr.mxu0 0.0
  %759 = vmatpush1.msra.mxu0 %v744
  %760 = vmatprep.subr.mxu0 0.0
  %761 = vmatpush1.msra.mxu0 %v745
  %762 = vmatprep.subr.mxu0 0.0
  %763 = vmatpush1.msra.mxu0 %v746
  %764 = vmatprep.subr.mxu0 0.0
  %765 = vmatpush1.msra.mxu0 %v747
  %766 = vmatprep.subr.mxu0 0.0
  %767 = vmatpush1.msra.mxu0 %v748
  %768 = vmatprep.subr.mxu0 0.0
  %769 = vmatpush1.msra.mxu0 %v749
  %770 = vmatprep.subr.mxu0 0.0
  %771 = vmatpush1.msra.mxu0 0.0
  %772 = vmatprep.subr.mxu0 0.0
  %773 = vmatpush1.msra.mxu0 0.0
  %774 = vmatprep.subr.mxu0 0.0
  %775 = vmatpush1.msra.mxu0 0.0
  %776 = vmatprep.subr.mxu0 0.0
  %777 = vmatpush1.msra.mxu0 0.0
  %778 = vmatprep.subr.mxu0 0.0
  %779 = vmatpush1.msra.mxu0 0.0
  %780 = vmatprep.subr.mxu0 0.0
  %781 = vmatpush1.msra.mxu0 0.0
  %782 = vmatprep.subr.mxu0 0.0
  %783 = vmatpush1.msra.mxu0 0.0
  %784 = vmatprep.subr.mxu0 0.0
  %785 = vmatpush1.msra.mxu0 0.0
  %786 = vmatprep.subr.mxu0 0.0
  %787 = vmatpush1.msra.mxu0 0.0
  %788 = vmatprep.subr.mxu0 0.0
  %789 = vmatpush1.msra.mxu0 0.0
  %790 = vmatprep.subr.mxu0 0.0
  %791 = vmatpush1.msra.mxu0 0.0
  %792 = vmatprep.subr.mxu0 0.0
  %793 = vmatpush1.msra.mxu0 0.0
  %794 = vmatprep.subr.mxu0 0.0
  %795 = vmatpush1.msra.mxu0 0.0
  %796 = vmatprep.subr.mxu0 0.0
  %797 = vmatpush1.msra.mxu0 0.0
  %798 = vmatprep.subr.mxu0 0.0
  %799 = vmatpush1.msra.mxu0 0.0
  %800 = vmatprep.subr.mxu0 0.0
  %801 = vmatpush1.msra.mxu0 0.0
  %802 = vmatprep.subr.mxu0 0.0
  %803 = vmatpush1.msra.mxu0 0.0
  %804 = vmatprep.subr.mxu0 0.0
  %805 = vmatpush1.msra.mxu0 0.0
  %806 = vmatprep.subr.mxu0 0.0
  %807 = vmatpush1.msra.mxu0 0.0
  %808 = vmatprep.subr.mxu0 0.0
  %809 = vmatpush1.msra.mxu0 0.0
  %810 = vmatprep.subr.mxu0 0.0
  %811 = vmatpush1.msra.mxu0 0.0
  %812 = vmatprep.subr.mxu0 0.0
  %813 = vmatpush1.msra.mxu0 0.0
  %814 = vmatprep.subr.mxu0 0.0
  %815 = vmatpush1.msra.mxu0 0.0
  %816 = vmatprep.subr.mxu0 0.0
  %817 = vmatpush1.msra.mxu0 0.0
  %818 = vmatprep.mubr.f32.mxu0 0.0
  %819 = vmatmul.mubr.f32.gmra.mrb[0].mxu0 %v752
  %v820 = vpop.f32.mrb[0].mxu0
  %v821 = vadd.f32 0.0, %v820
  %v822 = vpop.f32.mrb[0].mxu0
  %823 = vdwg.mxu0
  %v824 = vmul.f32 %v733, %v733
  %v825 = vsel %vm734, %v824, 0.0
  %v826 = vrot.slane %v825, 4
  %v827 = vadd.f32 %v825, %v826
  %v828 = vrot.slane %v827, 2
  %v829 = vadd.f32 %v827, %v828
  %v830 = vrot.slane %v829, 1
  %v831 = vadd.f32 %v829, %v830
  %v833 = vsel %vm750, %v831, 0
  %835 = vmatprep.subr.mxu0 0.0
  %836 = vmatpush1.msra.mxu0 %v742
  %837 = vmatprep.subr.mxu0 0.0
  %838 = vmatpush1.msra.mxu0 %v743
  %839 = vmatprep.subr.mxu0 0.0
  %840 = vmatpush1.msra.mxu0 %v744
  %841 = vmatprep.subr.mxu0 0.0
  %842 = vmatpush1.msra.mxu0 %v745
  %843 = vmatprep.subr.mxu0 0.0
  %844 = vmatpush1.msra.mxu0 %v746
  %845 = vmatprep.subr.mxu0 0.0
  %846 = vmatpush1.msra.mxu0 %v747
  %847 = vmatprep.subr.mxu0 0.0
  %848 = vmatpush1.msra.mxu0 %v748
  %849 = vmatprep.subr.mxu0 0.0
  %850 = vmatpush1.msra.mxu0 %v749
  %851 = vmatprep.subr.mxu0 0.0
  %852 = vmatpush1.msra.mxu0 0.0
  %853 = vmatprep.subr.mxu0 0.0
  %854 = vmatpush1.msra.mxu0 0.0
  %855 = vmatprep.subr.mxu0 0.0
  %856 = vmatpush1.msra.mxu0 0.0
  %857 = vmatprep.subr.mxu0 0.0
  %858 = vmatpush1.msra.mxu0 0.0
  %859 = vmatprep.subr.mxu0 0.0
  %860 = vmatpush1.msra.mxu0 0.0
  %861 = vmatprep.subr.mxu0 0.0
  %862 = vmatpush1.msra.mxu0 0.0
  %863 = vmatprep.subr.mxu0 0.0
  %864 = vmatpush1.msra.mxu0 0.0
  %865 = vmatprep.subr.mxu0 0.0
  %866 = vmatpush1.msra.mxu0 0.0
  %867 = vmatprep.subr.mxu0 0.0
  %868 = vmatpush1.msra.mxu0 0.0
  %869 = vmatprep.subr.mxu0 0.0
  %870 = vmatpush1.msra.mxu0 0.0
  %871 = vmatprep.subr.mxu0 0.0
  %872 = vmatpush1.msra.mxu0 0.0
  %873 = vmatprep.subr.mxu0 0.0
  %874 = vmatpush1.msra.mxu0 0.0
  %875 = vmatprep.subr.mxu0 0.0
  %876 = vmatpush1.msra.mxu0 0.0
  %877 = vmatprep.subr.mxu0 0.0
  %878 = vmatpush1.msra.mxu0 0.0
  %879 = vmatprep.subr.mxu0 0.0
  %880 = vmatpush1.msra.mxu0 0.0
  %881 = vmatprep.subr.mxu0 0.0
  %882 = vmatpush1.msra.mxu0 0.0
  %883 = vmatprep.subr.mxu0 0.0
  %884 = vmatpush1.msra.mxu0 0.0
  %885 = vmatprep.subr.mxu0 0.0
  %886 = vmatpush1.msra.mxu0 0.0
  %887 = vmatprep.subr.mxu0 0.0
  %888 = vmatpush1.msra.mxu0 0.0
  %889 = vmatprep.subr.mxu0 0.0
  %890 = vmatpush1.msra.mxu0 0.0
  %891 = vmatprep.subr.mxu0 0.0
  %892 = vmatpush1.msra.mxu0 0.0
  %893 = vmatprep.subr.mxu0 0.0
  %894 = vmatpush1.msra.mxu0 0.0
  %895 = vmatprep.subr.mxu0 0.0
  %896 = vmatpush1.msra.mxu0 0.0
  %897 = vmatprep.subr.mxu0 0.0
  %898 = vmatpush1.msra.mxu0 0.0
  %899 = vmatprep.mubr.f32.mxu0 0.0
  %900 = vmatmul.mubr.f32.gmra.mrb[0].mxu0 %v833
  %v901 = vpop.f32.mrb[0].mxu0
  %v902 = vadd.f32 0.0, %v901
  %v903 = vpop.f32.mrb[0].mxu0
  %904 = vdwg.mxu0
  %v905 = vrcp.pop 8.0
  %v906 = vmul.f32 %v821, %v905
  %v907 = vmul.f32 %v902, %v905
  %v908 = vmul.f32 %v906, %v906
  %v909 = vsub.f32 %v907, %v908
  %v910 = vld [vmem:[%s3] sm:$0x1]
  %v911 = vadd.f32 %v909, 1e-05
  %v912 = vrsqrt.pop %v911
  %v913 = vmul.f32 %v910, %v912
  %v914 = vld [vmem:[%s4] sm:$0x1]
  %v915 = vmul.f32 %v906, %v913
  %v916 = vsub.f32 %v914, %v915
  %v917 = vld [vmem:[%s6] sm:$0xff]
  %v918 = vld [vmem:[%s6 + $0x8] sm:$0xff]
  %v919 = vld [vmem:[%s6 + $0x10] sm:$0xff]
  %v920 = vld [vmem:[%s6 + $0x18] sm:$0xff]
  %v922 = vsel %vm104, %v913, 0
  %924 = vmatprep.subr.mxu0 0.0
  %925 = vmatpush1.msra.mxu0 %v917
  %926 = vmatprep.subr.mxu0 0.0
  %927 = vmatpush1.msra.mxu0 %v918
  %928 = vmatprep.subr.mxu0 0.0
  %929 = vmatpush1.msra.mxu0 %v919
  %930 = vmatprep.subr.mxu0 0.0
  %931 = vmatpush1.msra.mxu0 %v920
  %932 = vmatprep.subr.mxu0 0.0
  %933 = vmatpush1.msra.mxu0 0.0
  %934 = vmatprep.subr.mxu0 0.0
  %935 = vmatpush1.msra.mxu0 0.0
  %936 = vmatprep.subr.mxu0 0.0
  %937 = vmatpush1.msra.mxu0 0.0
  %938 = vmatprep.subr.mxu0 0.0
  %939 = vmatpush1.msra.mxu0 0.0
  %940 = vmatprep.subr.mxu0 0.0
  %941 = vmatpush1.msra.mxu0 0.0
  %942 = vmatprep.subr.mxu0 0.0
  %943 = vmatpush1.msra.mxu0 0.0
  %944 = vmatprep.subr.mxu0 0.0
  %945 = vmatpush1.msra.mxu0 0.0
  %946 = vmatprep.subr.mxu0 0.0
  %947 = vmatpush1.msra.mxu0 0.0
  %948 = vmatprep.subr.mxu0 0.0
  %949 = vmatpush1.msra.mxu0 0.0
  %950 = vmatprep.subr.mxu0 0.0
  %951 = vmatpush1.msra.mxu0 0.0
  %952 = vmatprep.subr.mxu0 0.0
  %953 = vmatpush1.msra.mxu0 0.0
  %954 = vmatprep.subr.mxu0 0.0
  %955 = vmatpush1.msra.mxu0 0.0
  %956 = vmatprep.subr.mxu0 0.0
  %957 = vmatpush1.msra.mxu0 0.0
  %958 = vmatprep.subr.mxu0 0.0
  %959 = vmatpush1.msra.mxu0 0.0
  %960 = vmatprep.subr.mxu0 0.0
  %961 = vmatpush1.msra.mxu0 0.0
  %962 = vmatprep.subr.mxu0 0.0
  %963 = vmatpush1.msra.mxu0 0.0
  %964 = vmatprep.subr.mxu0 0.0
  %965 = vmatpush1.msra.mxu0 0.0
  %966 = vmatprep.subr.mxu0 0.0
  %967 = vmatpush1.msra.mxu0 0.0
  %968 = vmatprep.subr.mxu0 0.0
  %969 = vmatpush1.msra.mxu0 0.0
  %970 = vmatprep.subr.mxu0 0.0
  %971 = vmatpush1.msra.mxu0 0.0
  %972 = vmatprep.subr.mxu0 0.0
  %973 = vmatpush1.msra.mxu0 0.0
  %974 = vmatprep.subr.mxu0 0.0
  %975 = vmatpush1.msra.mxu0 0.0
  %976 = vmatprep.subr.mxu0 0.0
  %977 = vmatpush1.msra.mxu0 0.0
  %978 = vmatprep.subr.mxu0 0.0
  %979 = vmatpush1.msra.mxu0 0.0
  %980 = vmatprep.subr.mxu0 0.0
  %981 = vmatpush1.msra.mxu0 0.0
  %982 = vmatprep.subr.mxu0 0.0
  %983 = vmatpush1.msra.mxu0 0.0
  %984 = vmatprep.subr.mxu0 0.0
  %985 = vmatpush1.msra.mxu0 0.0
  %986 = vmatprep.subr.mxu0 0.0
  %987 = vmatpush1.msra.mxu0 0.0
  %988 = vmatprep.mubr.f32.mxu0 0.0
  %989 = vmatmul.mubr.f32.gmra.mrb[0].mxu0 %v922
  %v990 = vpop.f32.mrb[0].mxu0
  %v991 = vadd.f32 0.0, %v990
  %v992 = vpop.f32.mrb[0].mxu0
  %993 = vdwg.mxu0
  %v995 = vsel %vm104, %v916, 0
  %997 = vmatprep.subr.mxu0 0.0
  %998 = vmatpush1.msra.mxu0 %v917
  %999 = vmatprep.subr.mxu0 0.0
  %1000 = vmatpush1.msra.mxu0 %v918
  %1001 = vmatprep.subr.mxu0 0.0
  %1002 = vmatpush1.msra.mxu0 %v919
  %1003 = vmatprep.subr.mxu0 0.0
  %1004 = vmatpush1.msra.mxu0 %v920
  %1005 = vmatprep.subr.mxu0 0.0
  %1006 = vmatpush1.msra.mxu0 0.0
  %1007 = vmatprep.subr.mxu0 0.0
  %1008 = vmatpush1.msra.mxu0 0.0
  %1009 = vmatprep.subr.mxu0 0.0
  %1010 = vmatpush1.msra.mxu0 0.0
  %1011 = vmatprep.subr.mxu0 0.0
  %1012 = vmatpush1.msra.mxu0 0.0
  %1013 = vmatprep.subr.mxu0 0.0
  %1014 = vmatpush1.msra.mxu0 0.0
  %1015 = vmatprep.subr.mxu0 0.0
  %1016 = vmatpush1.msra.mxu0 0.0
  %1017 = vmatprep.subr.mxu0 0.0
  %1018 = vmatpush1.msra.mxu0 0.0
  %1019 = vmatprep.subr.mxu0 0.0
  %1020 = vmatpush1.msra.mxu0 0.0
  %1021 = vmatprep.subr.mxu0 0.0
  %1022 = vmatpush1.msra.mxu0 0.0
  %1023 = vmatprep.subr.mxu0 0.0
  %1024 = vmatpush1.msra.mxu0 0.0
  %1025 = vmatprep.subr.mxu0 0.0
  %1026 = vmatpush1.msra.mxu0 0.0
  %1027 = vmatprep.subr.mxu0 0.0
  %1028 = vmatpush1.msra.mxu0 0.0
  %1029 = vmatprep.subr.mxu0 0.0
  %1030 = vmatpush1.msra.mxu0 0.0
  %1031 = vmatprep.subr.mxu0 0.0
  %1032 = vmatpush1.msra.mxu0 0.0
  %1033 = vmatprep.subr.mxu0 0.0
  %1034 = vmatpush1.msra.mxu0 0.0
  %1035 = vmatprep.subr.mxu0 0.0
  %1036 = vmatpush1.msra.mxu0 0.0
  %1037 = vmatprep.subr.mxu0 0.0
  %1038 = vmatpush1.msra.mxu0 0.0
  %1039 = vmatprep.subr.mxu0 0.0
  %1040 = vmatpush1.msra.mxu0 0.0
  %1041 = vmatprep.subr.mxu0 0.0
  %1042 = vmatpush1.msra.mxu0 0.0
  %1043 = vmatprep.subr.mxu0 0.0
  %1044 = vmatpush1.msra.mxu0 0.0
  %1045 = vmatprep.subr.mxu0 0.0
  %1046 = vmatpush1.msra.mxu0 0.0
  %1047 = vmatprep.subr.mxu0 0.0
  %1048 = vmatpush1.msra.mxu0 0.0
  %1049 = vmatprep.subr.mxu0 0.0
  %1050 = vmatpush1.msra.mxu0 0.0
  %1051 = vmatprep.subr.mxu0 0.0
  %1052 = vmatpush1.msra.mxu0 0.0
  %1053 = vmatprep.subr.mxu0 0.0
  %1054 = vmatpush1.msra.mxu0 0.0
  %1055 = vmatprep.subr.mxu0 0.0
  %1056 = vmatpush1.msra.mxu0 0.0
  %1057 = vmatprep.subr.mxu0 0.0
  %1058 = vmatpush1.msra.mxu0 0.0
  %1059 = vmatprep.subr.mxu0 0.0
  %1060 = vmatpush1.msra.mxu0 0.0
  %1061 = vmatprep.mubr.f32.mxu0 0.0
  %1062 = vmatmul.mubr.f32.gmra.mrb[0].mxu0 %v995
  %v1063 = vpop.f32.mrb[0].mxu0
  %v1064 = vadd.f32 0.0, %v1063
  %v1065 = vpop.f32.mrb[0].mxu0
  %1066 = vdwg.mxu0
  %v1067 = vlaneseq
  %v1068 = vshrl.u32 %v1067, 7
  %v1069 = vsub.s32 0, %v1068
  %v1070 = vrot.slane %v991, %v1069
  %v1071 = vmul.f32 %v733, %v1070
  %v1072 = vlaneseq
  %v1073 = vshrl.u32 %v1072, 7
  %v1074 = vsub.s32 0, %v1073
  %v1075 = vrot.slane %v1064, %v1074
  %v1076 = vadd.f32 %v1071, %v1075
  %vm1077 = vcmp.ge.f32.partialorder %v1076, 0.0
  %v1078 = vmul.f32 %v1076, 0.01
  %v1079 = vsel %vm1077, %v1076, %v1078
  %v1080 = vpack.c.bf16 %v1079, %v1079
  %vm1081 = vcmask 517120
  %1082 = vst.msk [vmem:[%s7] sm:$0x3] %vm1081, %v1080
  // Predicated region
  $region30: #{vae_forward.9} parent=0 // pred_check
    _
  $region31: #{vae_forward.9} parent=0 // pred_check_branch
    %1084 = sbr.rel (0) target = $region33
  $region32: #{vae_forward.9} parent=0 // pred_region
    _
  $region33: #{vae_forward.9} parent=0 // pred_fallthru
    _
  // Predicated region
  $region34: #{vae_forward.9} parent=0 // pred_check
    _
  $region35: #{vae_forward.9} parent=0 // pred_check_branch
    %1086 = sbr.rel (0) target = $region37
  $region36: #{vae_forward.9} parent=0 // pred_region
    _
  $region37: #{vae_forward.9} parent=0 // pred_fallthru
    _

// kernel: tile.93
$region0: #{tile.93}
  #allocation0 [shape = 's32[1]{0}', space=sflag, size = 0x4, scoped, tag = 'scoped memory for tile.93']
  %s0 = inlined_call_operand.vmem [shape: f32[16], index: 0, kind: input, shape index: {}]
  %s1 = inlined_call_operand.vmem [shape: f32[2,16], index: 1, kind: output, shape index: {}]
  // Predicated region
  $region2: #{tile.93} parent=0 // pred_check
    _
  $region3: #{tile.93} parent=0 // pred_check_branch
    %3 = sbr.rel (0) target = $region5
  $region4: #{tile.93} parent=0 // pred_region
    _
  $region5: #{tile.93} parent=0 // pred_fallthru
    _
  %v4 = vld [vmem:[%s0] ss:$0 sm:$0xff]
  %5 = vst [vmem:[%s1] sm:$0x3] %v4

// kernel: tile.94
$region0: #{tile.94}
  %s0 = inlined_call_operand.vmem [shape: f32[2,16], index: 0, kind: input, shape index: {}]
  %s1 = inlined_call_operand.vmem [shape: f32[1,32], index: 1, kind: output, shape index: {}]
  $region1: #{tile.94} parent=0
    #allocation0 [shape = 'u8[4096]{0}', space=vmem, size = 0x1000, scoped, tag = 'scoped mem for output reshape']
    #allocation1 [shape = 'u8[4096]{0}', space=vmem, size = 0x1000, scoped, tag = 'scoped mem for input reshape']
    %s3 = sshllo.u32 0, 2
    %v4 = vld [vmem:[%s0] sm:%s3]
    %5 = vst [vmem:[#allocation1] sm:%s3] %v4
    %v6 = vld [vmem:[#allocation1] sm:$0x1]
    %vm7 = vcmask 130048
    %8 = vst.msk [vmem:[#allocation0] sm:$0x1] %vm7, %v6
    %s9 = scalar_lea.vmem [#allocation1], 1
    %v10 = vld [vmem:[%s9] sm:$0x1]
    %11 = vrot.lane.b32.xlu0 %v10, 16
    %v12 = vpop.permute.xlu0 %11
    %vm13 = vcmask 261248
    %14 = vst.msk [vmem:[#allocation0] sm:$0x1] %vm13, %v12
    %s16 = sshllo.u32 0, 1
    %v18 = vld [vmem:[#allocation0] sm:%s16]
    %s19 = sshllo.u32 0, 1
    %20 = vst [vmem:[%s1] sm:%s19] %v18

// kernel: tile.99
$region0: #{tile.99}
  %s0 = inlined_call_operand.vmem [shape: f32[2,16,16], index: 0, kind: input, shape index: {}]
  %s1 = inlined_call_operand.vmem [shape: f32[32,16], index: 1, kind: output, shape index: {}]
  $region1: #{tile.99} parent=0
    #allocation0 [shape = 'u8[65536]{0}', space=vmem, size = 0x10000, scoped, tag = 'scoped mem for input reshape']
    %s3 = sshllo.u32 0, 2
    %s4 = smul.addr 2, 15
    %s5 = scalar_lea.vmem %s0, %s4
    %v6 = vld [vmem:[%s5] sm:%s3]
    %s7 = scalar_lea.vmem [#allocation0], 120
    %8 = vst [vmem:[%s7] sm:%s3] %v6
    %s9 = smul.addr 2, 14
    %s10 = scalar_lea.vmem %s0, %s9
    %v11 = vld [vmem:[%s10] sm:%s3]
    %s12 = scalar_lea.vmem [#allocation0], 112
    %13 = vst [vmem:[%s12] sm:%s3] %v11
    %s14 = smul.addr 2, 13
    %s15 = scalar_lea.vmem %s0, %s14
    %v16 = vld [vmem:[%s15] sm:%s3]
    %s17 = scalar_lea.vmem [#allocation0], 104
    %18 = vst [vmem:[%s17] sm:%s3] %v16
    %s19 = smul.addr 2, 12
    %s20 = scalar_lea.vmem %s0, %s19
    %v21 = vld [vmem:[%s20] sm:%s3]
    %s22 = scalar_lea.vmem [#allocation0], 96
    %23 = vst [vmem:[%s22] sm:%s3] %v21
    %s24 = smul.addr 2, 11
    %s25 = scalar_lea.vmem %s0, %s24
    %v26 = vld [vmem:[%s25] sm:%s3]
    %s27 = scalar_lea.vmem [#allocation0], 88
    %28 = vst [vmem:[%s27] sm:%s3] %v26
    %s29 = smul.addr 2, 10
    %s30 = scalar_lea.vmem %s0, %s29
    %v31 = vld [vmem:[%s30] sm:%s3]
    %s32 = scalar_lea.vmem [#allocation0], 80
    %33 = vst [vmem:[%s32] sm:%s3] %v31
    %s34 = smul.addr 2, 9
    %s35 = scalar_lea.vmem %s0, %s34
    %v36 = vld [vmem:[%s35] sm:%s3]
    %s37 = scalar_lea.vmem [#allocation0], 72
    %38 = vst [vmem:[%s37] sm:%s3] %v36
    %s39 = smul.addr 2, 8
    %s40 = scalar_lea.vmem %s0, %s39
    %v41 = vld [vmem:[%s40] sm:%s3]
    %s42 = scalar_lea.vmem [#allocation0], 64
    %43 = vst [vmem:[%s42] sm:%s3] %v41
    %s44 = smul.addr 2, 7
    %s45 = scalar_lea.vmem %s0, %s44
    %v46 = vld [vmem:[%s45] sm:%s3]
    %s47 = scalar_lea.vmem [#allocation0], 56
    %48 = vst [vmem:[%s47] sm:%s3] %v46
    %s49 = smul.addr 2, 6
    %s50 = scalar_lea.vmem %s0, %s49
    %v51 = vld [vmem:[%s50] sm:%s3]
    %s52 = scalar_lea.vmem [#allocation0], 48
    %53 = vst [vmem:[%s52] sm:%s3] %v51
    %s54 = smul.addr 2, 5
    %s55 = scalar_lea.vmem %s0, %s54
    %v56 = vld [vmem:[%s55] sm:%s3]
    %s57 = scalar_lea.vmem [#allocation0], 40
    %58 = vst [vmem:[%s57] sm:%s3] %v56
    %s59 = smul.addr 2, 4
    %s60 = scalar_lea.vmem %s0, %s59
    %v61 = vld [vmem:[%s60] sm:%s3]
    %s62 = scalar_lea.vmem [#allocation0], 32
    %63 = vst [vmem:[%s62] sm:%s3] %v61
    %s64 = smul.addr 2, 3
    %s65 = scalar_lea.vmem %s0, %s64
    %v66 = vld [vmem:[%s65] sm:%s3]
    %s67 = scalar_lea.vmem [#allocation0], 24
    %68 = vst [vmem:[%s67] sm:%s3] %v66
    %s69 = smul.addr 2, 2
    %s70 = scalar_lea.vmem %s0, %s69
    %v71 = vld [vmem:[%s70] sm:%s3]
    %s72 = scalar_lea.vmem [#allocation0], 16
    %73 = vst [vmem:[%s72] sm:%s3] %v71
    %s74 = scalar_lea.vmem %s0, 2
    %v75 = vld [vmem:[%s74] sm:%s3]
    %s76 = scalar_lea.vmem [#allocation0], 8
    %77 = vst [vmem:[%s76] sm:%s3] %v75
    %v78 = vld [vmem:[%s0] sm:%s3]
    %79 = vst [vmem:[#allocation0] sm:%s3] %v78
    %v80 = vld [vmem:[#allocation0] ss:$8 sm:$0xf]
    %v81 = vld [vmem:[#allocation0] ss:$8 sm:$0xf0]
    %vm82 = vcmask 1047556
    %v83 = vsel %vm82, %v81, %v80
    %vm84 = vcmask 130048
    %85 = vst.msk [vmem:[%s1] sm:$0xff] %vm84, %v83
    %s86 = scalar_lea.vmem [#allocation0], 64
    %v87 = vld [vmem:[%s86] ss:$8 sm:$0xf]
    %s88 = scalar_lea.vmem [#allocation0], 64
    %v89 = vld [vmem:[%s88] ss:$8 sm:$0xf0]
    %vm90 = vcmask 1047556
    %v91 = vsel %vm90, %v89, %v87
    %vm92 = vcmask 130048
    %s93 = scalar_lea.vmem %s1, 8
    %94 = vst.msk [vmem:[%s93] sm:$0xff] %vm92, %v91
    %s95 = scalar_lea.vmem [#allocation0], 1
    %v96 = vld [vmem:[%s95] ss:$8 sm:$0xf]
    %s97 = scalar_lea.vmem [#allocation0], 1
    %v98 = vld [vmem:[%s97] ss:$8 sm:$0xf0]
    %vm99 = vcmask 1047556
    %v100 = vsel %vm99, %v98, %v96
    %101 = vrot.lane.b32.xlu0 %v100, 16
    %v102 = vpop.permute.xlu0 %101
    %vm103 = vcmask 261248
    %104 = vst.msk [vmem:[%s1] sm:$0xff] %vm103, %v102
    %s105 = scalar_lea.vmem [#allocation0], 65
    %v106 = vld [vmem:[%s105] ss:$8 sm:$0xf]
    %s107 = scalar_lea.vmem [#allocation0], 65
    %v108 = vld [vmem:[%s107] ss:$8 sm:$0xf0]
    %vm109 = vcmask 1047556
    %v110 = vsel %vm109, %v108, %v106
    %111 = vrot.lane.b32.xlu0 %v110, 16
    %v112 = vpop.permute.xlu0 %111
    %vm113 = vcmask 261248
    %s114 = scalar_lea.vmem %s1, 8
    %115 = vst.msk [vmem:[%s114] sm:$0xff] %vm113, %v112

// kernel: tile.103
$region0: #{tile.103}
  #allocation0 [shape = 's32[1]{0}', space=sflag, size = 0x4, scoped, tag = 'scoped memory for tile.103']
  %s0 = inlined_call_operand.vmem [shape: f32[8], index: 0, kind: input, shape index: {}]
  %s1 = inlined_call_operand.vmem [shape: f32[4,8], index: 1, kind: output, shape index: {}]
  // Predicated region
  $region2: #{tile.103} parent=0 // pred_check
    _
  $region3: #{tile.103} parent=0 // pred_check_branch
    %3 = sbr.rel (0) target = $region5
  $region4: #{tile.103} parent=0 // pred_region
    _
  $region5: #{tile.103} parent=0 // pred_fallthru
    _
  %v4 = vld [vmem:[%s0] ss:$0 sm:$0xff]
  %5 = vst [vmem:[%s1] sm:$0xf] %v4

// kernel: tile.104
$region0: #{tile.104}
  %s0 = inlined_call_operand.vmem [shape: f32[4,8], index: 0, kind: input, shape index: {}]
  %s1 = inlined_call_operand.vmem [shape: f32[1,32], index: 1, kind: output, shape index: {}]
  $region1: #{tile.104} parent=0
    #allocation0 [shape = 'u8[4096]{0}', space=vmem, size = 0x1000, scoped, tag = 'scoped mem for output reshape']
    #allocation1 [shape = 'u8[4096]{0}', space=vmem, size = 0x1000, scoped, tag = 'scoped mem for input reshape']
    %s3 = sshllo.u32 0, 4
    %v4 = vld [vmem:[%s0] sm:%s3]
    %5 = vst [vmem:[#allocation1] sm:%s3] %v4
    %v6 = vld [vmem:[#allocation1] sm:$0x1]
    %vm7 = vcmask 64512
    %8 = vst.msk [vmem:[#allocation0] sm:$0x1] %vm7, %v6
    %s9 = scalar_lea.vmem [#allocation1], 3
    %v10 = vld [vmem:[%s9] sm:$0x1]
    %11 = vrot.lane.b32.xlu0 %v10, 24
    %v12 = vpop.permute.xlu0 %11
    %vm13 = vcmask 261312
    %14 = vst.msk [vmem:[#allocation0] sm:$0x1] %vm13, %v12
    %s15 = scalar_lea.vmem [#allocation1], 2
    %v16 = vld [vmem:[%s15] sm:$0x1]
    %17 = vrot.lane.b32.xlu0 %v16, 16
    %v18 = vpop.permute.xlu0 %17
    %vm19 = vcmask 195712
    %20 = vst.msk [vmem:[#allocation0] sm:$0x1] %vm19, %v18
    %s21 = scalar_lea.vmem [#allocation1], 1
    %v22 = vld [vmem:[%s21] sm:$0x1]
    %23 = vrot.lane.b32.xlu0 %v22, 8
    %v24 = vpop.permute.xlu0 %23
    %vm25 = vcmask 130112
    %26 = vst.msk [vmem:[#allocation0] sm:$0x1] %vm25, %v24
    %s28 = sshllo.u32 0, 1
    %v30 = vld [vmem:[#allocation0] sm:%s28]
    %s31 = sshllo.u32 0, 1
    %32 = vst [vmem:[%s1] sm:%s31] %v30

// kernel: tile.109
$region0: #{tile.109}
  %s0 = inlined_call_operand.vmem [shape: f32[4,8,8], index: 0, kind: input, shape index: {}]
  %s1 = inlined_call_operand.vmem [shape: f32[32,8], index: 1, kind: output, shape index: {}]
  $region1: #{tile.109} parent=0
    #allocation0 [shape = 'u8[32768]{0}', space=vmem, size = 0x8000, scoped, tag = 'scoped mem for input reshape']
    %s3 = sshllo.u32 0, 4
    %s4 = smul.addr 4, 7
    %s5 = scalar_lea.vmem %s0, %s4
    %v6 = vld [vmem:[%s5] sm:%s3]
    %s7 = scalar_lea.vmem [#allocation0], 56
    %8 = vst [vmem:[%s7] sm:%s3] %v6
    %s9 = smul.addr 4, 6
    %s10 = scalar_lea.vmem %s0, %s9
    %v11 = vld [vmem:[%s10] sm:%s3]
    %s12 = scalar_lea.vmem [#allocation0], 48
    %13 = vst [vmem:[%s12] sm:%s3] %v11
    %s14 = smul.addr 4, 5
    %s15 = scalar_lea.vmem %s0, %s14
    %v16 = vld [vmem:[%s15] sm:%s3]
    %s17 = scalar_lea.vmem [#allocation0], 40
    %18 = vst [vmem:[%s17] sm:%s3] %v16
    %s19 = smul.addr 4, 4
    %s20 = scalar_lea.vmem %s0, %s19
    %v21 = vld [vmem:[%s20] sm:%s3]
    %s22 = scalar_lea.vmem [#allocation0], 32
    %23 = vst [vmem:[%s22] sm:%s3] %v21
    %s24 = smul.addr 4, 3
    %s25 = scalar_lea.vmem %s0, %s24
    %v26 = vld [vmem:[%s25] sm:%s3]
    %s27 = scalar_lea.vmem [#allocation0], 24
    %28 = vst [vmem:[%s27] sm:%s3] %v26
    %s29 = smul.addr 4, 2
    %s30 = scalar_lea.vmem %s0, %s29
    %v31 = vld [vmem:[%s30] sm:%s3]
    %s32 = scalar_lea.vmem [#allocation0], 16
    %33 = vst [vmem:[%s32] sm:%s3] %v31
    %s34 = scalar_lea.vmem %s0, 4
    %v35 = vld [vmem:[%s34] sm:%s3]
    %s36 = scalar_lea.vmem [#allocation0], 8
    %37 = vst [vmem:[%s36] sm:%s3] %v35
    %v38 = vld [vmem:[%s0] sm:%s3]
    %39 = vst [vmem:[#allocation0] sm:%s3] %v38
    %v40 = vld [vmem:[#allocation0] ss:$8 sm:$0xf]
    %v41 = vld [vmem:[#allocation0] ss:$8 sm:$0xf0]
    %vm42 = vcmask 1047556
    %v43 = vsel %vm42, %v41, %v40
    %vm44 = vcmask 64512
    %45 = vst.msk [vmem:[%s1] sm:$0xff] %vm44, %v43
    %s46 = scalar_lea.vmem [#allocation0], 3
    %v47 = vld [vmem:[%s46] ss:$8 sm:$0xf]
    %s48 = scalar_lea.vmem [#allocation0], 3
    %v49 = vld [vmem:[%s48] ss:$8 sm:$0xf0]
    %vm50 = vcmask 1047556
    %v51 = vsel %vm50, %v49, %v47
    %52 = vrot.lane.b32.xlu0 %v51, 24
    %v53 = vpop.permute.xlu0 %52
    %vm54 = vcmask 261312
    %55 = vst.msk [vmem:[%s1] sm:$0xff] %vm54, %v53
    %s56 = scalar_lea.vmem [#allocation0], 2
    %v57 = vld [vmem:[%s56] ss:$8 sm:$0xf]
    %s58 = scalar_lea.vmem [#allocation0], 2
    %v59 = vld [vmem:[%s58] ss:$8 sm:$0xf0]
    %vm60 = vcmask 1047556
    %v61 = vsel %vm60, %v59, %v57
    %62 = vrot.lane.b32.xlu0 %v61, 16
    %v63 = vpop.permute.xlu0 %62
    %vm64 = vcmask 195712
    %65 = vst.msk [vmem:[%s1] sm:$0xff] %vm64, %v63
    %s66 = scalar_lea.vmem [#allocation0], 1
    %v67 = vld [vmem:[%s66] ss:$8 sm:$0xf]
    %s68 = scalar_lea.vmem [#allocation0], 1
    %v69 = vld [vmem:[%s68] ss:$8 sm:$0xf0]
    %vm70 = vcmask 1047556
    %v71 = vsel %vm70, %v69, %v67
    %72 = vrot.lane.b32.xlu0 %v71, 8
    %v73 = vpop.permute.xlu0 %72
    %vm74 = vcmask 130112
    %75 = vst.msk [vmem:[%s1] sm:$0xff] %vm74, %v73

// kernel: vae_forward.11
$region0: #{vae_forward.11}
  #allocation0 [shape = 'u32[]', space=smem, size = 0x4, offset = 0x4, fixed_abs, tag = 'smem constant byte address 0x4 - core index']
  #allocation1 [shape = 'u32[144,128]{1,0:T(1,128)}', space=vmem, size = 0x12000, scoped, tag = 'internal scratch']
  %s0 = inlined_call_operand.vmem [shape: bf16[6,96], index: 0, kind: input, shape index: {}]
  %s1 = inlined_call_operand.vmem [shape: bf16[9,64,32], index: 1, kind: input, shape index: {}]
  %s2 = inlined_call_operand.vmem [shape: f32[1,32], index: 2, kind: input, shape index: {}]
  %s3 = inlined_call_operand.vmem [shape: f32[1,16], index: 3, kind: input, shape index: {}]
  %s4 = inlined_call_operand.vmem [shape: f32[1,16], index: 4, kind: input, shape index: {}]
  %s5 = inlined_call_operand.vmem [shape: f32[32,16], index: 5, kind: input, shape index: {}]
  %s6 = inlined_call_operand.vmem [shape: f32[16,32], index: 6, kind: input, shape index: {}]
  %s7 = inlined_call_operand.vmem [shape: bf16[16,32], index: 7, kind: output, shape index: {}]
  %s8 = sld [smem:[#allocation0]]
  $region38: #{vae_forward.11} parent=0
    _
  %s10 = ssub.s32 1, %s8
  %s11 = scalar_select 0, %s10, %s8
  // Predicated region
  $region2: #{vae_forward.11} parent=0 // pred_check
    _
  $region3: #{vae_forward.11} parent=0 // pred_check_branch
    %13 = sbr.rel (0) target = $region5
  $region4: #{vae_forward.11} parent=0 // pred_region
    _
  $region5: #{vae_forward.11} parent=0 // pred_fallthru
    _
  // Predicated region
  $region6: #{vae_forward.11} parent=0 // pred_check
    _
  $region7: #{vae_forward.11} parent=0 // pred_check_branch
    %15 = sbr.rel (0) target = $region9
  $region8: #{vae_forward.11} parent=0 // pred_region
    _
  $region9: #{vae_forward.11} parent=0 // pred_fallthru
    _
  // Predicated region
  $region10: #{vae_forward.11} parent=0 // pred_check
    _
  $region11: #{vae_forward.11} parent=0 // pred_check_branch
    %17 = sbr.rel (0) target = $region13
  $region12: #{vae_forward.11} parent=0 // pred_region
    _
  $region13: #{vae_forward.11} parent=0 // pred_fallthru
    _
  // Predicated region
  $region14: #{vae_forward.11} parent=0 // pred_check
    _
  $region15: #{vae_forward.11} parent=0 // pred_check_branch
    %19 = sbr.rel (0) target = $region17
  $region16: #{vae_forward.11} parent=0 // pred_region
    _
  $region17: #{vae_forward.11} parent=0 // pred_fallthru
    _
  // Predicated region
  $region18: #{vae_forward.11} parent=0 // pred_check
    _
  $region19: #{vae_forward.11} parent=0 // pred_check_branch
    %21 = sbr.rel (0) target = $region21
  $region20: #{vae_forward.11} parent=0 // pred_region
    _
  $region21: #{vae_forward.11} parent=0 // pred_fallthru
    _
  // Predicated region
  $region22: #{vae_forward.11} parent=0 // pred_check
    _
  $region23: #{vae_forward.11} parent=0 // pred_check_branch
    %23 = sbr.rel (0) target = $region25
  $region24: #{vae_forward.11} parent=0 // pred_region
    _
  $region25: #{vae_forward.11} parent=0 // pred_fallthru
    _
  // Predicated region
  $region26: #{vae_forward.11} parent=0 // pred_check
    _
  $region27: #{vae_forward.11} parent=0 // pred_check_branch
    %25 = sbr.rel (0) target = $region29
  $region28: #{vae_forward.11} parent=0 // pred_region
    _
  $region29: #{vae_forward.11} parent=0 // pred_fallthru
    _
  %v27 = vld [vmem:[%s0] sm:$0x1]
  %v28 = vld [vmem:[%s0] sm:$0x6]
  %v30 = vunpack.c.l.b16 %v28
  %v31 = vpack.c.b16 %v30, %v30
  %v33 = vshrl.u32 %v31, 16
  %v35 = vshll.u32 %v31, 16
  %v37 = vrot.slane %v35, 1
  %v38 = vor.u32 %v33, %v37
  %vm39 = vcmask 1040384
  %v42 = vsel %vm39, %v27, %v38
  %v43 = vld [vmem:[%s1] sm:$0xf]
  %v44 = vld [vmem:[%s1 + $0x4] sm:$0xf]
  %v45 = vld [vmem:[%s1 + $0x8] sm:$0xf]
  %v46 = vld [vmem:[%s1 + $0xc] sm:$0xf]
  %v47 = vld [vmem:[%s1 + $0x10] sm:$0xf]
  %v48 = vld [vmem:[%s1 + $0x14] sm:$0xf]
  %v49 = vld [vmem:[%s1 + $0x18] sm:$0xf]
  %v50 = vld [vmem:[%s1 + $0x1c] sm:$0xf]
  %s51 = scalar_lea.vmem %s1, 32
  %v52 = vld [vmem:[%s51] sm:$0xf]
  %v53 = vld [vmem:[%s51 + $0x4] sm:$0xf]
  %v54 = vld [vmem:[%s51 + $0x8] sm:$0xf]
  %v55 = vld [vmem:[%s51 + $0xc] sm:$0xf]
  %v56 = vld [vmem:[%s51 + $0x10] sm:$0xf]
  %v57 = vld [vmem:[%s51 + $0x14] sm:$0xf]
  %v58 = vld [vmem:[%s51 + $0x18] sm:$0xf]
  %v59 = vld [vmem:[%s51 + $0x1c] sm:$0xf]
  %s60 = scalar_lea.vmem %s1, 64
  %v61 = vld [vmem:[%s60] sm:$0xf]
  %v62 = vld [vmem:[%s60 + $0x4] sm:$0xf]
  %v63 = vld [vmem:[%s60 + $0x8] sm:$0xf]
  %v64 = vld [vmem:[%s60 + $0xc] sm:$0xf]
  %v65 = vld [vmem:[%s60 + $0x10] sm:$0xf]
  %v66 = vld [vmem:[%s60 + $0x14] sm:$0xf]
  %v67 = vld [vmem:[%s60 + $0x18] sm:$0xf]
  %v68 = vld [vmem:[%s60 + $0x1c] sm:$0xf]
  %70 = vrot.lane.b32.xlu0 %v42, 96
  %v71 = vpop.permute.xlu0 %70
  %v80 = vunpack.c.l.b16 %v61
  %v81 = vunpack.c.l.b16 %v62
  %v82 = vunpack.c.l.b16 %v63
  %v83 = vunpack.c.l.b16 %v64
  %v84 = vunpack.c.l.b16 %v65
  %v85 = vunpack.c.l.b16 %v66
  %v86 = vunpack.c.l.b16 %v67
  %v87 = vunpack.c.l.b16 %v68
  %v88 = vpack.c.b16 %v81, %v80
  %v89 = vpack.c.b16 %v83, %v82
  %v90 = vpack.c.b16 %v85, %v84
  %v91 = vpack.c.b16 %v87, %v86
  %vm96 = vcmask 523264
  %v98 = vsel %vm96, %v71, 0
  %100 = vmatprep.subr.bf16.mxu0 0
  %101 = vmatpush1.bf16.msra.mxu0 %v88
  %102 = vmatprep.subr.bf16.mxu0 0
  %103 = vmatpush1.bf16.msra.mxu0 %v89
  %104 = vmatprep.subr.bf16.mxu0 0
  %105 = vmatpush1.bf16.msra.mxu0 %v90
  %106 = vmatprep.subr.bf16.mxu0 0
  %107 = vmatpush1.bf16.msra.mxu0 %v91
  %108 = vmatprep.subr.bf16.mxu0 0
  %109 = vmatpush1.bf16.msra.mxu0 0
  %110 = vmatprep.subr.bf16.mxu0 0
  %111 = vmatpush1.bf16.msra.mxu0 0
  %112 = vmatprep.subr.bf16.mxu0 0
  %113 = vmatpush1.bf16.msra.mxu0 0
  %114 = vmatprep.subr.bf16.mxu0 0
  %115 = vmatpush1.bf16.msra.mxu0 0
  %116 = vmatprep.subr.bf16.mxu0 0
  %117 = vmatpush1.bf16.msra.mxu0 0
  %118 = vmatprep.subr.bf16.mxu0 0
  %119 = vmatpush1.bf16.msra.mxu0 0
  %120 = vmatprep.subr.bf16.mxu0 0
  %121 = vmatpush1.bf16.msra.mxu0 0
  %122 = vmatprep.subr.bf16.mxu0 0
  %123 = vmatpush1.bf16.msra.mxu0 0
  %124 = vmatprep.subr.bf16.mxu0 0
  %125 = vmatpush1.bf16.msra.mxu0 0
  %126 = vmatprep.subr.bf16.mxu0 0
  %127 = vmatpush1.bf16.msra.mxu0 0
  %128 = vmatprep.subr.bf16.mxu0 0
  %129 = vmatpush1.bf16.msra.mxu0 0
  %130 = vmatprep.subr.bf16.mxu0 0
  %131 = vmatpush1.bf16.msra.mxu0 0
  %132 = vmatprep.mubr.bf16.mxu0 0
  %133 = vmatmul.mubr.bf16.gmra.mrb[0].mxu0 %v98
  %v134 = vpop.f32.mrb[0].mxu0
  %v135 = vadd.f32 0.0, %v134
  %v136 = vpop.f32.mrb[0].mxu0
  %v137 = vpop.f32.mrb[0].mxu0
  %v138 = vpop.f32.mrb[0].mxu0
  %139 = vdwg.mxu0
  %v148 = vunpack.c.l.b16 %v52
  %v149 = vunpack.c.l.b16 %v53
  %v150 = vunpack.c.l.b16 %v54
  %v151 = vunpack.c.l.b16 %v55
  %v152 = vunpack.c.l.b16 %v56
  %v153 = vunpack.c.l.b16 %v57
  %v154 = vunpack.c.l.b16 %v58
  %v155 = vunpack.c.l.b16 %v59
  %v156 = vpack.c.b16 %v149, %v148
  %v157 = vpack.c.b16 %v151, %v150
  %v158 = vpack.c.b16 %v153, %v152
  %v159 = vpack.c.b16 %v155, %v154
  %v164 = vsel %vm96, %v42, 0
  %166 = vmatprep.subr.bf16.mxu0 0
  %167 = vmatpush1.bf16.msra.mxu0 %v156
  %168 = vmatprep.subr.bf16.mxu0 0
  %169 = vmatpush1.bf16.msra.mxu0 %v157
  %170 = vmatprep.subr.bf16.mxu0 0
  %171 = vmatpush1.bf16.msra.mxu0 %v158
  %172 = vmatprep.subr.bf16.mxu0 0
  %173 = vmatpush1.bf16.msra.mxu0 %v159
  %174 = vmatprep.subr.bf16.mxu0 0
  %175 = vmatpush1.bf16.msra.mxu0 0
  %176 = vmatprep.subr.bf16.mxu0 0
  %177 = vmatpush1.bf16.msra.mxu0 0
  %178 = vmatprep.subr.bf16.mxu0 0
  %179 = vmatpush1.bf16.msra.mxu0 0
  %180 = vmatprep.subr.bf16.mxu0 0
  %181 = vmatpush1.bf16.msra.mxu0 0
  %182 = vmatprep.subr.bf16.mxu0 0
  %183 = vmatpush1.bf16.msra.mxu0 0
  %184 = vmatprep.subr.bf16.mxu0 0
  %185 = vmatpush1.bf16.msra.mxu0 0
  %186 = vmatprep.subr.bf16.mxu0 0
  %187 = vmatpush1.bf16.msra.mxu0 0
  %188 = vmatprep.subr.bf16.mxu0 0
  %189 = vmatpush1.bf16.msra.mxu0 0
  %190 = vmatprep.subr.bf16.mxu0 0
  %191 = vmatpush1.bf16.msra.mxu0 0
  %192 = vmatprep.subr.bf16.mxu0 0
  %193 = vmatpush1.bf16.msra.mxu0 0
  %194 = vmatprep.subr.bf16.mxu0 0
  %195 = vmatpush1.bf16.msra.mxu0 0
  %196 = vmatprep.subr.bf16.mxu0 0
  %197 = vmatpush1.bf16.msra.mxu0 0
  %198 = vmatprep.mubr.bf16.mxu0 0
  %199 = vmatmul.mubr.bf16.gmra.mrb[0].mxu0 %v164
  %v200 = vpop.f32.mrb[0].mxu0
  %v201 = vadd.f32 %v135, %v200
  %v202 = vpop.f32.mrb[0].mxu0
  %v203 = vpop.f32.mrb[0].mxu0
  %v204 = vpop.f32.mrb[0].mxu0
  %205 = vdwg.mxu0
  %s206 = scalar_lea.vmem %s1, 96
  %v207 = vld [vmem:[%s206] sm:$0xf]
  %v208 = vld [vmem:[%s206 + $0x4] sm:$0xf]
  %v209 = vld [vmem:[%s206 + $0x8] sm:$0xf]
  %v210 = vld [vmem:[%s206 + $0xc] sm:$0xf]
  %v211 = vld [vmem:[%s206 + $0x10] sm:$0xf]
  %v212 = vld [vmem:[%s206 + $0x14] sm:$0xf]
  %v213 = vld [vmem:[%s206 + $0x18] sm:$0xf]
  %v214 = vld [vmem:[%s206 + $0x1c] sm:$0xf]
  %v215 = vld [vmem:[%s0] sm:$0x3]
  %v216 = vld [vmem:[%s0] sm:$0x4]
  %v218 = vunpack.c.l.b16 %v215
  %v219 = vpack.c.b16 %v218, %v218
  %v221 = vshrl.u32 %v219, 16
  %v223 = vshll.u32 %v219, 16
  %v225 = vrot.slane %v223, 1
  %v226 = vor.u32 %v221, %v225
  %v228 = vunpack.c.l.b16 %v216
  %v229 = vpack.c.b16 %v228, %v228
  %v230 = vrot.slane %v229, 1
  %v233 = vsel %vm39, %v226, %v230
  %s234 = scalar_lea.vmem %s1, 128
  %v235 = vld [vmem:[%s234] sm:$0xf]
  %v236 = vld [vmem:[%s234 + $0x4] sm:$0xf]
  %v237 = vld [vmem:[%s234 + $0x8] sm:$0xf]
  %v238 = vld [vmem:[%s234 + $0xc] sm:$0xf]
  %v239 = vld [vmem:[%s234 + $0x10] sm:$0xf]
  %v240 = vld [vmem:[%s234 + $0x14] sm:$0xf]
  %v241 = vld [vmem:[%s234 + $0x18] sm:$0xf]
  %v242 = vld [vmem:[%s234 + $0x1c] sm:$0xf]
  %v251 = vunpack.c.l.b16 %v235
  %v252 = vunpack.c.l.b16 %v236
  %v253 = vunpack.c.l.b16 %v237
  %v254 = vunpack.c.l.b16 %v238
  %v255 = vunpack.c.l.b16 %v239
  %v256 = vunpack.c.l.b16 %v240
  %v257 = vunpack.c.l.b16 %v241
  %v258 = vunpack.c.l.b16 %v242
  %v259 = vpack.c.b16 %v252, %v251
  %v260 = vpack.c.b16 %v254, %v253
  %v261 = vpack.c.b16 %v256, %v255
  %v262 = vpack.c.b16 %v258, %v257
  %v267 = vsel %vm96, %v233, 0
  %269 = vmatprep.subr.bf16.mxu0 0
  %270 = vmatpush1.bf16.msra.mxu0 %v259
  %271 = vmatprep.subr.bf16.mxu0 0
  %272 = vmatpush1.bf16.msra.mxu0 %v260
  %273 = vmatprep.subr.bf16.mxu0 0
  %274 = vmatpush1.bf16.msra.mxu0 %v261
  %275 = vmatprep.subr.bf16.mxu0 0
  %276 = vmatpush1.bf16.msra.mxu0 %v262
  %277 = vmatprep.subr.bf16.mxu0 0
  %278 = vmatpush1.bf16.msra.mxu0 0
  %279 = vmatprep.subr.bf16.mxu0 0
  %280 = vmatpush1.bf16.msra.mxu0 0
  %281 = vmatprep.subr.bf16.mxu0 0
  %282 = vmatpush1.bf16.msra.mxu0 0
  %283 = vmatprep.subr.bf16.mxu0 0
  %284 = vmatpush1.bf16.msra.mxu0 0
  %285 = vmatprep.subr.bf16.mxu0 0
  %286 = vmatpush1.bf16.msra.mxu0 0
  %287 = vmatprep.subr.bf16.mxu0 0
  %288 = vmatpush1.bf16.msra.mxu0 0
  %289 = vmatprep.subr.bf16.mxu0 0
  %290 = vmatpush1.bf16.msra.mxu0 0
  %291 = vmatprep.subr.bf16.mxu0 0
  %292 = vmatpush1.bf16.msra.mxu0 0
  %293 = vmatprep.subr.bf16.mxu0 0
  %294 = vmatpush1.bf16.msra.mxu0 0
  %295 = vmatprep.subr.bf16.mxu0 0
  %296 = vmatpush1.bf16.msra.mxu0 0
  %297 = vmatprep.subr.bf16.mxu0 0
  %298 = vmatpush1.bf16.msra.mxu0 0
  %299 = vmatprep.subr.bf16.mxu0 0
  %300 = vmatpush1.bf16.msra.mxu0 0
  %301 = vmatprep.mubr.bf16.mxu0 0
  %302 = vmatmul.mubr.bf16.gmra.mrb[0].mxu0 %v267
  %v303 = vpop.f32.mrb[0].mxu0
  %v304 = vadd.f32 0.0, %v303
  %v305 = vpop.f32.mrb[0].mxu0
  %v306 = vpop.f32.mrb[0].mxu0
  %v307 = vpop.f32.mrb[0].mxu0
  %308 = vdwg.mxu0
  %v317 = vunpack.c.l.b16 %v207
  %v318 = vunpack.c.l.b16 %v208
  %v319 = vunpack.c.l.b16 %v209
  %v320 = vunpack.c.l.b16 %v210
  %v321 = vunpack.c.l.b16 %v211
  %v322 = vunpack.c.l.b16 %v212
  %v323 = vunpack.c.l.b16 %v213
  %v324 = vunpack.c.l.b16 %v214
  %v325 = vpack.c.b16 %v318, %v317
  %v326 = vpack.c.b16 %v320, %v319
  %v327 = vpack.c.b16 %v322, %v321
  %v328 = vpack.c.b16 %v324, %v323
  %333 = vmatprep.subr.bf16.mxu0 0
  %334 = vmatpush1.bf16.msra.mxu0 %v325
  %335 = vmatprep.subr.bf16.mxu0 0
  %336 = vmatpush1.bf16.msra.mxu0 %v326
  %337 = vmatprep.subr.bf16.mxu0 0
  %338 = vmatpush1.bf16.msra.mxu0 %v327
  %339 = vmatprep.subr.bf16.mxu0 0
  %340 = vmatpush1.bf16.msra.mxu0 %v328
  %341 = vmatprep.subr.bf16.mxu0 0
  %342 = vmatpush1.bf16.msra.mxu0 0
  %343 = vmatprep.subr.bf16.mxu0 0
  %344 = vmatpush1.bf16.msra.mxu0 0
  %345 = vmatprep.subr.bf16.mxu0 0
  %346 = vmatpush1.bf16.msra.mxu0 0
  %347 = vmatprep.subr.bf16.mxu0 0
  %348 = vmatpush1.bf16.msra.mxu0 0
  %349 = vmatprep.subr.bf16.mxu0 0
  %350 = vmatpush1.bf16.msra.mxu0 0
  %351 = vmatprep.subr.bf16.mxu0 0
  %352 = vmatpush1.bf16.msra.mxu0 0
  %353 = vmatprep.subr.bf16.mxu0 0
  %354 = vmatpush1.bf16.msra.mxu0 0
  %355 = vmatprep.subr.bf16.mxu0 0
  %356 = vmatpush1.bf16.msra.mxu0 0
  %357 = vmatprep.subr.bf16.mxu0 0
  %358 = vmatpush1.bf16.msra.mxu0 0
  %359 = vmatprep.subr.bf16.mxu0 0
  %360 = vmatpush1.bf16.msra.mxu0 0
  %361 = vmatprep.subr.bf16.mxu0 0
  %362 = vmatpush1.bf16.msra.mxu0 0
  %363 = vmatprep.subr.bf16.mxu0 0
  %364 = vmatpush1.bf16.msra.mxu0 0
  %365 = vmatprep.mubr.bf16.mxu0 0
  %366 = vmatmul.mubr.bf16.gmra.mrb[0].mxu0 %v164
  %v367 = vpop.f32.mrb[0].mxu0
  %v368 = vadd.f32 %v304, %v367
  %v369 = vpop.f32.mrb[0].mxu0
  %v370 = vpop.f32.mrb[0].mxu0
  %v371 = vpop.f32.mrb[0].mxu0
  %372 = vdwg.mxu0
  %s373 = scalar_lea.vmem %s1, 160
  %v374 = vld [vmem:[%s373] sm:$0xf]
  %v375 = vld [vmem:[%s373 + $0x4] sm:$0xf]
  %v376 = vld [vmem:[%s373 + $0x8] sm:$0xf]
  %v377 = vld [vmem:[%s373 + $0xc] sm:$0xf]
  %v378 = vld [vmem:[%s373 + $0x10] sm:$0xf]
  %v379 = vld [vmem:[%s373 + $0x14] sm:$0xf]
  %v380 = vld [vmem:[%s373 + $0x18] sm:$0xf]
  %v381 = vld [vmem:[%s373 + $0x1c] sm:$0xf]
  %s382 = scalar_lea.vmem %s1, 192
  %v383 = vld [vmem:[%s382] sm:$0xf]
  %v384 = vld [vmem:[%s382 + $0x4] sm:$0xf]
  %v385 = vld [vmem:[%s382 + $0x8] sm:$0xf]
  %v386 = vld [vmem:[%s382 + $0xc] sm:$0xf]
  %v387 = vld [vmem:[%s382 + $0x10] sm:$0xf]
  %v388 = vld [vmem:[%s382 + $0x14] sm:$0xf]
  %v389 = vld [vmem:[%s382 + $0x18] sm:$0xf]
  %v390 = vld [vmem:[%s382 + $0x1c] sm:$0xf]
  %v399 = vunpack.c.l.b16 %v383
  %v400 = vunpack.c.l.b16 %v384
  %v401 = vunpack.c.l.b16 %v385
  %v402 = vunpack.c.l.b16 %v386
  %v403 = vunpack.c.l.b16 %v387
  %v404 = vunpack.c.l.b16 %v388
  %v405 = vunpack.c.l.b16 %v389
  %v406 = vunpack.c.l.b16 %v390
  %v407 = vpack.c.b16 %v400, %v399
  %v408 = vpack.c.b16 %v402, %v401
  %v409 = vpack.c.b16 %v404, %v403
  %v410 = vpack.c.b16 %v406, %v405
  %415 = vmatprep.subr.bf16.mxu0 0
  %416 = vmatpush1.bf16.msra.mxu0 %v407
  %417 = vmatprep.subr.bf16.mxu0 0
  %418 = vmatpush1.bf16.msra.mxu0 %v408
  %419 = vmatprep.subr.bf16.mxu0 0
  %420 = vmatpush1.bf16.msra.mxu0 %v409
  %421 = vmatprep.subr.bf16.mxu0 0
  %422 = vmatpush1.bf16.msra.mxu0 %v410
  %423 = vmatprep.subr.bf16.mxu0 0
  %424 = vmatpush1.bf16.msra.mxu0 0
  %425 = vmatprep.subr.bf16.mxu0 0
  %426 = vmatpush1.bf16.msra.mxu0 0
  %427 = vmatprep.subr.bf16.mxu0 0
  %428 = vmatpush1.bf16.msra.mxu0 0
  %429 = vmatprep.subr.bf16.mxu0 0
  %430 = vmatpush1.bf16.msra.mxu0 0
  %431 = vmatprep.subr.bf16.mxu0 0
  %432 = vmatpush1.bf16.msra.mxu0 0
  %433 = vmatprep.subr.bf16.mxu0 0
  %434 = vmatpush1.bf16.msra.mxu0 0
  %435 = vmatprep.subr.bf16.mxu0 0
  %436 = vmatpush1.bf16.msra.mxu0 0
  %437 = vmatprep.subr.bf16.mxu0 0
  %438 = vmatpush1.bf16.msra.mxu0 0
  %439 = vmatprep.subr.bf16.mxu0 0
  %440 = vmatpush1.bf16.msra.mxu0 0
  %441 = vmatprep.subr.bf16.mxu0 0
  %442 = vmatpush1.bf16.msra.mxu0 0
  %443 = vmatprep.subr.bf16.mxu0 0
  %444 = vmatpush1.bf16.msra.mxu0 0
  %445 = vmatprep.subr.bf16.mxu0 0
  %446 = vmatpush1.bf16.msra.mxu0 0
  %447 = vmatprep.mubr.bf16.mxu0 0
  %448 = vmatmul.mubr.bf16.gmra.mrb[0].mxu0 %v98
  %v449 = vpop.f32.mrb[0].mxu0
  %v450 = vadd.f32 0.0, %v449
  %v451 = vpop.f32.mrb[0].mxu0
  %v452 = vpop.f32.mrb[0].mxu0
  %v453 = vpop.f32.mrb[0].mxu0
  %454 = vdwg.mxu0
  %v463 = vunpack.c.l.b16 %v374
  %v464 = vunpack.c.l.b16 %v375
  %v465 = vunpack.c.l.b16 %v376
  %v466 = vunpack.c.l.b16 %v377
  %v467 = vunpack.c.l.b16 %v378
  %v468 = vunpack.c.l.b16 %v379
  %v469 = vunpack.c.l.b16 %v380
  %v470 = vunpack.c.l.b16 %v381
  %v471 = vpack.c.b16 %v464, %v463
  %v472 = vpack.c.b16 %v466, %v465
  %v473 = vpack.c.b16 %v468, %v467
  %v474 = vpack.c.b16 %v470, %v469
  %479 = vmatprep.subr.bf16.mxu0 0
  %480 = vmatpush1.bf16.msra.mxu0 %v471
  %481 = vmatprep.subr.bf16.mxu0 0
  %482 = vmatpush1.bf16.msra.mxu0 %v472
  %483 = vmatprep.subr.bf16.mxu0 0
  %484 = vmatpush1.bf16.msra.mxu0 %v473
  %485 = vmatprep.subr.bf16.mxu0 0
  %486 = vmatpush1.bf16.msra.mxu0 %v474
  %487 = vmatprep.subr.bf16.mxu0 0
  %488 = vmatpush1.bf16.msra.mxu0 0
  %489 = vmatprep.subr.bf16.mxu0 0
  %490 = vmatpush1.bf16.msra.mxu0 0
  %491 = vmatprep.subr.bf16.mxu0 0
  %492 = vmatpush1.bf16.msra.mxu0 0
  %493 = vmatprep.subr.bf16.mxu0 0
  %494 = vmatpush1.bf16.msra.mxu0 0
  %495 = vmatprep.subr.bf16.mxu0 0
  %496 = vmatpush1.bf16.msra.mxu0 0
  %497 = vmatprep.subr.bf16.mxu0 0
  %498 = vmatpush1.bf16.msra.mxu0 0
  %499 = vmatprep.subr.bf16.mxu0 0
  %500 = vmatpush1.bf16.msra.mxu0 0
  %501 = vmatprep.subr.bf16.mxu0 0
  %502 = vmatpush1.bf16.msra.mxu0 0
  %503 = vmatprep.subr.bf16.mxu0 0
  %504 = vmatpush1.bf16.msra.mxu0 0
  %505 = vmatprep.subr.bf16.mxu0 0
  %506 = vmatpush1.bf16.msra.mxu0 0
  %507 = vmatprep.subr.bf16.mxu0 0
  %508 = vmatpush1.bf16.msra.mxu0 0
  %509 = vmatprep.subr.bf16.mxu0 0
  %510 = vmatpush1.bf16.msra.mxu0 0
  %511 = vmatprep.mubr.bf16.mxu0 0
  %512 = vmatmul.mubr.bf16.gmra.mrb[0].mxu0 %v164
  %v513 = vpop.f32.mrb[0].mxu0
  %v514 = vadd.f32 %v450, %v513
  %v515 = vpop.f32.mrb[0].mxu0
  %v516 = vpop.f32.mrb[0].mxu0
  %v517 = vpop.f32.mrb[0].mxu0
  %518 = vdwg.mxu0
  %s519 = scalar_lea.vmem %s1, 224
  %v520 = vld [vmem:[%s519] sm:$0xf]
  %v521 = vld [vmem:[%s519 + $0x4] sm:$0xf]
  %v522 = vld [vmem:[%s519 + $0x8] sm:$0xf]
  %v523 = vld [vmem:[%s519 + $0xc] sm:$0xf]
  %v524 = vld [vmem:[%s519 + $0x10] sm:$0xf]
  %v525 = vld [vmem:[%s519 + $0x14] sm:$0xf]
  %v526 = vld [vmem:[%s519 + $0x18] sm:$0xf]
  %v527 = vld [vmem:[%s519 + $0x1c] sm:$0xf]
  %v536 = vunpack.c.l.b16 %v520
  %v537 = vunpack.c.l.b16 %v521
  %v538 = vunpack.c.l.b16 %v522
  %v539 = vunpack.c.l.b16 %v523
  %v540 = vunpack.c.l.b16 %v524
  %v541 = vunpack.c.l.b16 %v525
  %v542 = vunpack.c.l.b16 %v526
  %v543 = vunpack.c.l.b16 %v527
  %v544 = vpack.c.b16 %v537, %v536
  %v545 = vpack.c.b16 %v539, %v538
  %v546 = vpack.c.b16 %v541, %v540
  %v547 = vpack.c.b16 %v543, %v542
  %552 = vmatprep.subr.bf16.mxu0 0
  %553 = vmatpush1.bf16.msra.mxu0 %v544
  %554 = vmatprep.subr.bf16.mxu0 0
  %555 = vmatpush1.bf16.msra.mxu0 %v545
  %556 = vmatprep.subr.bf16.mxu0 0
  %557 = vmatpush1.bf16.msra.mxu0 %v546
  %558 = vmatprep.subr.bf16.mxu0 0
  %559 = vmatpush1.bf16.msra.mxu0 %v547
  %560 = vmatprep.subr.bf16.mxu0 0
  %561 = vmatpush1.bf16.msra.mxu0 0
  %562 = vmatprep.subr.bf16.mxu0 0
  %563 = vmatpush1.bf16.msra.mxu0 0
  %564 = vmatprep.subr.bf16.mxu0 0
  %565 = vmatpush1.bf16.msra.mxu0 0
  %566 = vmatprep.subr.bf16.mxu0 0
  %567 = vmatpush1.bf16.msra.mxu0 0
  %568 = vmatprep.subr.bf16.mxu0 0
  %569 = vmatpush1.bf16.msra.mxu0 0
  %570 = vmatprep.subr.bf16.mxu0 0
  %571 = vmatpush1.bf16.msra.mxu0 0
  %572 = vmatprep.subr.bf16.mxu0 0
  %573 = vmatpush1.bf16.msra.mxu0 0
  %574 = vmatprep.subr.bf16.mxu0 0
  %575 = vmatpush1.bf16.msra.mxu0 0
  %576 = vmatprep.subr.bf16.mxu0 0
  %577 = vmatpush1.bf16.msra.mxu0 0
  %578 = vmatprep.subr.bf16.mxu0 0
  %579 = vmatpush1.bf16.msra.mxu0 0
  %580 = vmatprep.subr.bf16.mxu0 0
  %581 = vmatpush1.bf16.msra.mxu0 0
  %582 = vmatprep.subr.bf16.mxu0 0
  %583 = vmatpush1.bf16.msra.mxu0 0
  %584 = vmatprep.mubr.bf16.mxu0 0
  %585 = vmatmul.mubr.bf16.gmra.mrb[0].mxu0 %v267
  %v586 = vpop.f32.mrb[0].mxu0
  %v587 = vadd.f32 0.0, %v586
  %v588 = vpop.f32.mrb[0].mxu0
  %v589 = vpop.f32.mrb[0].mxu0
  %v590 = vpop.f32.mrb[0].mxu0
  %591 = vdwg.mxu0
  %v592 = vadd.f32 %v514, %v587
  %s593 = scalar_lea.vmem %s1, 256
  %v594 = vld [vmem:[%s593] sm:$0xf]
  %v595 = vld [vmem:[%s593 + $0x4] sm:$0xf]
  %v596 = vld [vmem:[%s593 + $0x8] sm:$0xf]
  %v597 = vld [vmem:[%s593 + $0xc] sm:$0xf]
  %v598 = vld [vmem:[%s593 + $0x10] sm:$0xf]
  %v599 = vld [vmem:[%s593 + $0x14] sm:$0xf]
  %v600 = vld [vmem:[%s593 + $0x18] sm:$0xf]
  %v601 = vld [vmem:[%s593 + $0x1c] sm:$0xf]
  %603 = vrot.lane.b32.xlu0 %v233, 96
  %v604 = vpop.permute.xlu0 %603
  %v613 = vunpack.c.l.b16 %v594
  %v614 = vunpack.c.l.b16 %v595
  %v615 = vunpack.c.l.b16 %v596
  %v616 = vunpack.c.l.b16 %v597
  %v617 = vunpack.c.l.b16 %v598
  %v618 = vunpack.c.l.b16 %v599
  %v619 = vunpack.c.l.b16 %v600
  %v620 = vunpack.c.l.b16 %v601
  %v621 = vpack.c.b16 %v614, %v613
  %v622 = vpack.c.b16 %v616, %v615
  %v623 = vpack.c.b16 %v618, %v617
  %v624 = vpack.c.b16 %v620, %v619
  %v630 = vsel %vm96, %v604, 0
  %632 = vmatprep.subr.bf16.mxu0 0
  %633 = vmatpush1.bf16.msra.mxu0 %v621
  %634 = vmatprep.subr.bf16.mxu0 0
  %635 = vmatpush1.bf16.msra.mxu0 %v622
  %636 = vmatprep.subr.bf16.mxu0 0
  %637 = vmatpush1.bf16.msra.mxu0 %v623
  %638 = vmatprep.subr.bf16.mxu0 0
  %639 = vmatpush1.bf16.msra.mxu0 %v624
  %640 = vmatprep.subr.bf16.mxu0 0
  %641 = vmatpush1.bf16.msra.mxu0 0
  %642 = vmatprep.subr.bf16.mxu0 0
  %643 = vmatpush1.bf16.msra.mxu0 0
  %644 = vmatprep.subr.bf16.mxu0 0
  %645 = vmatpush1.bf16.msra.mxu0 0
  %646 = vmatprep.subr.bf16.mxu0 0
  %647 = vmatpush1.bf16.msra.mxu0 0
  %648 = vmatprep.subr.bf16.mxu0 0
  %649 = vmatpush1.bf16.msra.mxu0 0
  %650 = vmatprep.subr.bf16.mxu0 0
  %651 = vmatpush1.bf16.msra.mxu0 0
  %652 = vmatprep.subr.bf16.mxu0 0
  %653 = vmatpush1.bf16.msra.mxu0 0
  %654 = vmatprep.subr.bf16.mxu0 0
  %655 = vmatpush1.bf16.msra.mxu0 0
  %656 = vmatprep.subr.bf16.mxu0 0
  %657 = vmatpush1.bf16.msra.mxu0 0
  %658 = vmatprep.subr.bf16.mxu0 0
  %659 = vmatpush1.bf16.msra.mxu0 0
  %660 = vmatprep.subr.bf16.mxu0 0
  %661 = vmatpush1.bf16.msra.mxu0 0
  %662 = vmatprep.subr.bf16.mxu0 0
  %663 = vmatpush1.bf16.msra.mxu0 0
  %664 = vmatprep.mubr.bf16.mxu0 0
  %665 = vmatmul.mubr.bf16.gmra.mrb[0].mxu0 %v630
  %v666 = vpop.f32.mrb[0].mxu0
  %v667 = vadd.f32 0.0, %v666
  %v668 = vpop.f32.mrb[0].mxu0
  %v669 = vpop.f32.mrb[0].mxu0
  %v670 = vpop.f32.mrb[0].mxu0
  %671 = vdwg.mxu0
  %v672 = vadd.f32 %v592, %v667
  %v673 = vld [vmem:[%s2] sm:$0x1]
  %v675 = vlaneseq
  %v676 = vshrl.u32 %v675, 7
  %v677 = vsub.s32 0, %v676
  %v678 = vrot.slane %v673, %v677
  %v688 = vunpack.c.l.b16 %v43
  %v689 = vunpack.c.l.b16 %v44
  %v690 = vunpack.c.l.b16 %v45
  %v691 = vunpack.c.l.b16 %v46
  %v692 = vunpack.c.l.b16 %v47
  %v693 = vunpack.c.l.b16 %v48
  %v694 = vunpack.c.l.b16 %v49
  %v695 = vunpack.c.l.b16 %v50
  %v696 = vpack.c.b16 %v689, %v688
  %v697 = vpack.c.b16 %v691, %v690
  %v698 = vpack.c.b16 %v693, %v692
  %v699 = vpack.c.b16 %v695, %v694
  %704 = vmatprep.subr.bf16.mxu0 0
  %705 = vmatpush1.bf16.msra.mxu0 %v696
  %706 = vmatprep.subr.bf16.mxu0 0
  %707 = vmatpush1.bf16.msra.mxu0 %v697
  %708 = vmatprep.subr.bf16.mxu0 0
  %709 = vmatpush1.bf16.msra.mxu0 %v698
  %710 = vmatprep.subr.bf16.mxu0 0
  %711 = vmatpush1.bf16.msra.mxu0 %v699
  %712 = vmatprep.subr.bf16.mxu0 0
  %713 = vmatpush1.bf16.msra.mxu0 0
  %714 = vmatprep.subr.bf16.mxu0 0
  %715 = vmatpush1.bf16.msra.mxu0 0
  %716 = vmatprep.subr.bf16.mxu0 0
  %717 = vmatpush1.bf16.msra.mxu0 0
  %718 = vmatprep.subr.bf16.mxu0 0
  %719 = vmatpush1.bf16.msra.mxu0 0
  %720 = vmatprep.subr.bf16.mxu0 0
  %721 = vmatpush1.bf16.msra.mxu0 0
  %722 = vmatprep.subr.bf16.mxu0 0
  %723 = vmatpush1.bf16.msra.mxu0 0
  %724 = vmatprep.subr.bf16.mxu0 0
  %725 = vmatpush1.bf16.msra.mxu0 0
  %726 = vmatprep.subr.bf16.mxu0 0
  %727 = vmatpush1.bf16.msra.mxu0 0
  %728 = vmatprep.subr.bf16.mxu0 0
  %729 = vmatpush1.bf16.msra.mxu0 0
  %730 = vmatprep.subr.bf16.mxu0 0
  %731 = vmatpush1.bf16.msra.mxu0 0
  %732 = vmatprep.subr.bf16.mxu0 0
  %733 = vmatpush1.bf16.msra.mxu0 0
  %734 = vmatprep.subr.bf16.mxu0 0
  %735 = vmatpush1.bf16.msra.mxu0 0
  %736 = vmatprep.mubr.bf16.mxu0 0
  %737 = vmatmul.mubr.bf16.gmra.mrb[0].mxu0 %v164
  %v738 = vpop.f32.mrb[0].mxu0
  %v739 = vadd.f32 %v678, %v738
  %v740 = vpop.f32.mrb[0].mxu0
  %v741 = vpop.f32.mrb[0].mxu0
  %v742 = vpop.f32.mrb[0].mxu0
  %743 = vdwg.mxu0
  %v744 = vadd.f32 %v201, %v678
  %v745 = vadd.f32 %v368, %v678
  %v746 = vadd.f32 %v672, %v678
  %vm747 = vcmask 257024
  %v748 = vsel %vm747, %v739, 0.0
  %v749 = vrot.slane %v748, 4
  %v750 = vadd.f32 %v748, %v749
  %v751 = vrot.slane %v750, 2
  %v752 = vadd.f32 %v750, %v751
  %v753 = vrot.slane %v752, 1
  %v754 = vadd.f32 %v752, %v753
  %v755 = vld [vmem:[%s5] sm:$0xff]
  %v756 = vld [vmem:[%s5 + $0x8] sm:$0xff]
  %v757 = vld [vmem:[%s5 + $0x10] sm:$0xff]
  %v758 = vld [vmem:[%s5 + $0x18] sm:$0xff]
  %v759 = vmul.f32 %v739, %v739
  %v760 = vsel %vm747, %v759, 0.0
  %v761 = vrot.slane %v760, 4
  %v762 = vadd.f32 %v760, %v761
  %v763 = vrot.slane %v762, 2
  %v764 = vadd.f32 %v762, %v763
  %v765 = vrot.slane %v764, 1
  %v766 = vadd.f32 %v764, %v765
  %v767 = vsel %vm747, %v744, 0.0
  %v768 = vrot.slane %v767, 4
  %v769 = vadd.f32 %v767, %v768
  %v770 = vrot.slane %v769, 2
  %v771 = vadd.f32 %v769, %v770
  %v772 = vrot.slane %v771, 1
  %v773 = vadd.f32 %v771, %v772
  %vm774 = vcmask 261120
  %v776 = vsel %vm774, %v773, 0
  %778 = vmatprep.subr.mxu0 0.0
  %779 = vmatpush1.msra.mxu0 %v755
  %780 = vmatprep.subr.mxu0 0.0
  %781 = vmatpush1.msra.mxu0 %v756
  %782 = vmatprep.subr.mxu0 0.0
  %783 = vmatpush1.msra.mxu0 %v757
  %784 = vmatprep.subr.mxu0 0.0
  %785 = vmatpush1.msra.mxu0 %v758
  %786 = vmatprep.subr.mxu0 0.0
  %787 = vmatpush1.msra.mxu0 0.0
  %788 = vmatprep.subr.mxu0 0.0
  %789 = vmatpush1.msra.mxu0 0.0
  %790 = vmatprep.subr.mxu0 0.0
  %791 = vmatpush1.msra.mxu0 0.0
  %792 = vmatprep.subr.mxu0 0.0
  %793 = vmatpush1.msra.mxu0 0.0
  %794 = vmatprep.subr.mxu0 0.0
  %795 = vmatpush1.msra.mxu0 0.0
  %796 = vmatprep.subr.mxu0 0.0
  %797 = vmatpush1.msra.mxu0 0.0
  %798 = vmatprep.subr.mxu0 0.0
  %799 = vmatpush1.msra.mxu0 0.0
  %800 = vmatprep.subr.mxu0 0.0
  %801 = vmatpush1.msra.mxu0 0.0
  %802 = vmatprep.subr.mxu0 0.0
  %803 = vmatpush1.msra.mxu0 0.0
  %804 = vmatprep.subr.mxu0 0.0
  %805 = vmatpush1.msra.mxu0 0.0
  %806 = vmatprep.subr.mxu0 0.0
  %807 = vmatpush1.msra.mxu0 0.0
  %808 = vmatprep.subr.mxu0 0.0
  %809 = vmatpush1.msra.mxu0 0.0
  %810 = vmatprep.subr.mxu0 0.0
  %811 = vmatpush1.msra.mxu0 0.0
  %812 = vmatprep.subr.mxu0 0.0
  %813 = vmatpush1.msra.mxu0 0.0
  %814 = vmatprep.subr.mxu0 0.0
  %815 = vmatpush1.msra.mxu0 0.0
  %816 = vmatprep.subr.mxu0 0.0
  %817 = vmatpush1.msra.mxu0 0.0
  %818 = vmatprep.subr.mxu0 0.0
  %819 = vmatpush1.msra.mxu0 0.0
  %820 = vmatprep.subr.mxu0 0.0
  %821 = vmatpush1.msra.mxu0 0.0
  %822 = vmatprep.subr.mxu0 0.0
  %823 = vmatpush1.msra.mxu0 0.0
  %824 = vmatprep.subr.mxu0 0.0
  %825 = vmatpush1.msra.mxu0 0.0
  %826 = vmatprep.subr.mxu0 0.0
  %827 = vmatpush1.msra.mxu0 0.0
  %828 = vmatprep.subr.mxu0 0.0
  %829 = vmatpush1.msra.mxu0 0.0
  %830 = vmatprep.subr.mxu0 0.0
  %831 = vmatpush1.msra.mxu0 0.0
  %832 = vmatprep.subr.mxu0 0.0
  %833 = vmatpush1.msra.mxu0 0.0
  %834 = vmatprep.subr.mxu0 0.0
  %835 = vmatpush1.msra.mxu0 0.0
  %836 = vmatprep.subr.mxu0 0.0
  %837 = vmatpush1.msra.mxu0 0.0
  %838 = vmatprep.subr.mxu0 0.0
  %839 = vmatpush1.msra.mxu0 0.0
  %840 = vmatprep.subr.mxu0 0.0
  %841 = vmatpush1.msra.mxu0 0.0
  %842 = vmatprep.mubr.f32.mxu0 0.0
  %843 = vmatmul.mubr.f32.gmra.mrb[0].mxu0 %v776
  %v844 = vpop.f32.mrb[0].mxu0
  %v845 = vadd.f32 0.0, %v844
  %v846 = vpop.f32.mrb[0].mxu0
  %847 = vdwg.mxu0
  %v849 = vsel %vm774, %v754, 0
  %851 = vmatprep.subr.mxu0 0.0
  %852 = vmatpush1.msra.mxu0 %v755
  %853 = vmatprep.subr.mxu0 0.0
  %854 = vmatpush1.msra.mxu0 %v756
  %855 = vmatprep.subr.mxu0 0.0
  %856 = vmatpush1.msra.mxu0 %v757
  %857 = vmatprep.subr.mxu0 0.0
  %858 = vmatpush1.msra.mxu0 %v758
  %859 = vmatprep.subr.mxu0 0.0
  %860 = vmatpush1.msra.mxu0 0.0
  %861 = vmatprep.subr.mxu0 0.0
  %862 = vmatpush1.msra.mxu0 0.0
  %863 = vmatprep.subr.mxu0 0.0
  %864 = vmatpush1.msra.mxu0 0.0
  %865 = vmatprep.subr.mxu0 0.0
  %866 = vmatpush1.msra.mxu0 0.0
  %867 = vmatprep.subr.mxu0 0.0
  %868 = vmatpush1.msra.mxu0 0.0
  %869 = vmatprep.subr.mxu0 0.0
  %870 = vmatpush1.msra.mxu0 0.0
  %871 = vmatprep.subr.mxu0 0.0
  %872 = vmatpush1.msra.mxu0 0.0
  %873 = vmatprep.subr.mxu0 0.0
  %874 = vmatpush1.msra.mxu0 0.0
  %875 = vmatprep.subr.mxu0 0.0
  %876 = vmatpush1.msra.mxu0 0.0
  %877 = vmatprep.subr.mxu0 0.0
  %878 = vmatpush1.msra.mxu0 0.0
  %879 = vmatprep.subr.mxu0 0.0
  %880 = vmatpush1.msra.mxu0 0.0
  %881 = vmatprep.subr.mxu0 0.0
  %882 = vmatpush1.msra.mxu0 0.0
  %883 = vmatprep.subr.mxu0 0.0
  %884 = vmatpush1.msra.mxu0 0.0
  %885 = vmatprep.subr.mxu0 0.0
  %886 = vmatpush1.msra.mxu0 0.0
  %887 = vmatprep.subr.mxu0 0.0
  %888 = vmatpush1.msra.mxu0 0.0
  %889 = vmatprep.subr.mxu0 0.0
  %890 = vmatpush1.msra.mxu0 0.0
  %891 = vmatprep.subr.mxu0 0.0
  %892 = vmatpush1.msra.mxu0 0.0
  %893 = vmatprep.subr.mxu0 0.0
  %894 = vmatpush1.msra.mxu0 0.0
  %895 = vmatprep.subr.mxu0 0.0
  %896 = vmatpush1.msra.mxu0 0.0
  %897 = vmatprep.subr.mxu0 0.0
  %898 = vmatpush1.msra.mxu0 0.0
  %899 = vmatprep.subr.mxu0 0.0
  %900 = vmatpush1.msra.mxu0 0.0
  %901 = vmatprep.subr.mxu0 0.0
  %902 = vmatpush1.msra.mxu0 0.0
  %903 = vmatprep.subr.mxu0 0.0
  %904 = vmatpush1.msra.mxu0 0.0
  %905 = vmatprep.subr.mxu0 0.0
  %906 = vmatpush1.msra.mxu0 0.0
  %907 = vmatprep.subr.mxu0 0.0
  %908 = vmatpush1.msra.mxu0 0.0
  %909 = vmatprep.subr.mxu0 0.0
  %910 = vmatpush1.msra.mxu0 0.0
  %911 = vmatprep.subr.mxu0 0.0
  %912 = vmatpush1.msra.mxu0 0.0
  %913 = vmatprep.subr.mxu0 0.0
  %914 = vmatpush1.msra.mxu0 0.0
  %915 = vmatprep.mubr.f32.mxu0 0.0
  %916 = vmatmul.mubr.f32.gmra.mrb[0].mxu0 %v849
  %v917 = vpop.f32.mrb[0].mxu0
  %v918 = vadd.f32 %v845, %v917
  %v919 = vpop.f32.mrb[0].mxu0
  %920 = vdwg.mxu0
  %v921 = vmul.f32 %v744, %v744
  %v922 = vsel %vm747, %v921, 0.0
  %v923 = vrot.slane %v922, 4
  %v924 = vadd.f32 %v922, %v923
  %v925 = vrot.slane %v924, 2
  %v926 = vadd.f32 %v924, %v925
  %v927 = vrot.slane %v926, 1
  %v928 = vadd.f32 %v926, %v927
  %v930 = vsel %vm774, %v928, 0
  %932 = vmatprep.subr.mxu0 0.0
  %933 = vmatpush1.msra.mxu0 %v755
  %934 = vmatprep.subr.mxu0 0.0
  %935 = vmatpush1.msra.mxu0 %v756
  %936 = vmatprep.subr.mxu0 0.0
  %937 = vmatpush1.msra.mxu0 %v757
  %938 = vmatprep.subr.mxu0 0.0
  %939 = vmatpush1.msra.mxu0 %v758
  %940 = vmatprep.subr.mxu0 0.0
  %941 = vmatpush1.msra.mxu0 0.0
  %942 = vmatprep.subr.mxu0 0.0
  %943 = vmatpush1.msra.mxu0 0.0
  %944 = vmatprep.subr.mxu0 0.0
  %945 = vmatpush1.msra.mxu0 0.0
  %946 = vmatprep.subr.mxu0 0.0
  %947 = vmatpush1.msra.mxu0 0.0
  %948 = vmatprep.subr.mxu0 0.0
  %949 = vmatpush1.msra.mxu0 0.0
  %950 = vmatprep.subr.mxu0 0.0
  %951 = vmatpush1.msra.mxu0 0.0
  %952 = vmatprep.subr.mxu0 0.0
  %953 = vmatpush1.msra.mxu0 0.0
  %954 = vmatprep.subr.mxu0 0.0
  %955 = vmatpush1.msra.mxu0 0.0
  %956 = vmatprep.subr.mxu0 0.0
  %957 = vmatpush1.msra.mxu0 0.0
  %958 = vmatprep.subr.mxu0 0.0
  %959 = vmatpush1.msra.mxu0 0.0
  %960 = vmatprep.subr.mxu0 0.0
  %961 = vmatpush1.msra.mxu0 0.0
  %962 = vmatprep.subr.mxu0 0.0
  %963 = vmatpush1.msra.mxu0 0.0
  %964 = vmatprep.subr.mxu0 0.0
  %965 = vmatpush1.msra.mxu0 0.0
  %966 = vmatprep.subr.mxu0 0.0
  %967 = vmatpush1.msra.mxu0 0.0
  %968 = vmatprep.subr.mxu0 0.0
  %969 = vmatpush1.msra.mxu0 0.0
  %970 = vmatprep.subr.mxu0 0.0
  %971 = vmatpush1.msra.mxu0 0.0
  %972 = vmatprep.subr.mxu0 0.0
  %973 = vmatpush1.msra.mxu0 0.0
  %974 = vmatprep.subr.mxu0 0.0
  %975 = vmatpush1.msra.mxu0 0.0
  %976 = vmatprep.subr.mxu0 0.0
  %977 = vmatpush1.msra.mxu0 0.0
  %978 = vmatprep.subr.mxu0 0.0
  %979 = vmatpush1.msra.mxu0 0.0
  %980 = vmatprep.subr.mxu0 0.0
  %981 = vmatpush1.msra.mxu0 0.0
  %982 = vmatprep.subr.mxu0 0.0
  %983 = vmatpush1.msra.mxu0 0.0
  %984 = vmatprep.subr.mxu0 0.0
  %985 = vmatpush1.msra.mxu0 0.0
  %986 = vmatprep.subr.mxu0 0.0
  %987 = vmatpush1.msra.mxu0 0.0
  %988 = vmatprep.subr.mxu0 0.0
  %989 = vmatpush1.msra.mxu0 0.0
  %990 = vmatprep.subr.mxu0 0.0
  %991 = vmatpush1.msra.mxu0 0.0
  %992 = vmatprep.subr.mxu0 0.0
  %993 = vmatpush1.msra.mxu0 0.0
  %994 = vmatprep.subr.mxu0 0.0
  %995 = vmatpush1.msra.mxu0 0.0
  %996 = vmatprep.mubr.f32.mxu0 0.0
  %997 = vmatmul.mubr.f32.gmra.mrb[0].mxu0 %v930
  %v998 = vpop.f32.mrb[0].mxu0
  %v999 = vadd.f32 0.0, %v998
  %v1000 = vpop.f32.mrb[0].mxu0
  %1001 = vdwg.mxu0
  %v1003 = vsel %vm774, %v766, 0
  %1005 = vmatprep.subr.mxu0 0.0
  %1006 = vmatpush1.msra.mxu0 %v755
  %1007 = vmatprep.subr.mxu0 0.0
  %1008 = vmatpush1.msra.mxu0 %v756
  %1009 = vmatprep.subr.mxu0 0.0
  %1010 = vmatpush1.msra.mxu0 %v757
  %1011 = vmatprep.subr.mxu0 0.0
  %1012 = vmatpush1.msra.mxu0 %v758
  %1013 = vmatprep.subr.mxu0 0.0
  %1014 = vmatpush1.msra.mxu0 0.0
  %1015 = vmatprep.subr.mxu0 0.0
  %1016 = vmatpush1.msra.mxu0 0.0
  %1017 = vmatprep.subr.mxu0 0.0
  %1018 = vmatpush1.msra.mxu0 0.0
  %1019 = vmatprep.subr.mxu0 0.0
  %1020 = vmatpush1.msra.mxu0 0.0
  %1021 = vmatprep.subr.mxu0 0.0
  %1022 = vmatpush1.msra.mxu0 0.0
  %1023 = vmatprep.subr.mxu0 0.0
  %1024 = vmatpush1.msra.mxu0 0.0
  %1025 = vmatprep.subr.mxu0 0.0
  %1026 = vmatpush1.msra.mxu0 0.0
  %1027 = vmatprep.subr.mxu0 0.0
  %1028 = vmatpush1.msra.mxu0 0.0
  %1029 = vmatprep.subr.mxu0 0.0
  %1030 = vmatpush1.msra.mxu0 0.0
  %1031 = vmatprep.subr.mxu0 0.0
  %1032 = vmatpush1.msra.mxu0 0.0
  %1033 = vmatprep.subr.mxu0 0.0
  %1034 = vmatpush1.msra.mxu0 0.0
  %1035 = vmatprep.subr.mxu0 0.0
  %1036 = vmatpush1.msra.mxu0 0.0
  %1037 = vmatprep.subr.mxu0 0.0
  %1038 = vmatpush1.msra.mxu0 0.0
  %1039 = vmatprep.subr.mxu0 0.0
  %1040 = vmatpush1.msra.mxu0 0.0
  %1041 = vmatprep.subr.mxu0 0.0
  %1042 = vmatpush1.msra.mxu0 0.0
  %1043 = vmatprep.subr.mxu0 0.0
  %1044 = vmatpush1.msra.mxu0 0.0
  %1045 = vmatprep.subr.mxu0 0.0
  %1046 = vmatpush1.msra.mxu0 0.0
  %1047 = vmatprep.subr.mxu0 0.0
  %1048 = vmatpush1.msra.mxu0 0.0
  %1049 = vmatprep.subr.mxu0 0.0
  %1050 = vmatpush1.msra.mxu0 0.0
  %1051 = vmatprep.subr.mxu0 0.0
  %1052 = vmatpush1.msra.mxu0 0.0
  %1053 = vmatprep.subr.mxu0 0.0
  %1054 = vmatpush1.msra.mxu0 0.0
  %1055 = vmatprep.subr.mxu0 0.0
  %1056 = vmatpush1.msra.mxu0 0.0
  %1057 = vmatprep.subr.mxu0 0.0
  %1058 = vmatpush1.msra.mxu0 0.0
  %1059 = vmatprep.subr.mxu0 0.0
  %1060 = vmatpush1.msra.mxu0 0.0
  %1061 = vmatprep.subr.mxu0 0.0
  %1062 = vmatpush1.msra.mxu0 0.0
  %1063 = vmatprep.subr.mxu0 0.0
  %1064 = vmatpush1.msra.mxu0 0.0
  %1065 = vmatprep.subr.mxu0 0.0
  %1066 = vmatpush1.msra.mxu0 0.0
  %1067 = vmatprep.subr.mxu0 0.0
  %1068 = vmatpush1.msra.mxu0 0.0
  %1069 = vmatprep.mubr.f32.mxu0 0.0
  %1070 = vmatmul.mubr.f32.gmra.mrb[0].mxu0 %v1003
  %v1071 = vpop.f32.mrb[0].mxu0
  %v1072 = vadd.f32 %v999, %v1071
  %v1073 = vpop.f32.mrb[0].mxu0
  %1074 = vdwg.mxu0
  %v1075 = vsel %vm747, %v745, 0.0
  %v1076 = vrot.slane %v1075, 4
  %v1077 = vadd.f32 %v1075, %v1076
  %v1078 = vrot.slane %v1077, 2
  %v1079 = vadd.f32 %v1077, %v1078
  %v1080 = vrot.slane %v1079, 1
  %v1081 = vadd.f32 %v1079, %v1080
  %v1083 = vsel %vm774, %v1081, 0
  %1085 = vmatprep.subr.mxu0 0.0
  %1086 = vmatpush1.msra.mxu0 %v755
  %1087 = vmatprep.subr.mxu0 0.0
  %1088 = vmatpush1.msra.mxu0 %v756
  %1089 = vmatprep.subr.mxu0 0.0
  %1090 = vmatpush1.msra.mxu0 %v757
  %1091 = vmatprep.subr.mxu0 0.0
  %1092 = vmatpush1.msra.mxu0 %v758
  %1093 = vmatprep.subr.mxu0 0.0
  %1094 = vmatpush1.msra.mxu0 0.0
  %1095 = vmatprep.subr.mxu0 0.0
  %1096 = vmatpush1.msra.mxu0 0.0
  %1097 = vmatprep.subr.mxu0 0.0
  %1098 = vmatpush1.msra.mxu0 0.0
  %1099 = vmatprep.subr.mxu0 0.0
  %1100 = vmatpush1.msra.mxu0 0.0
  %1101 = vmatprep.subr.mxu0 0.0
  %1102 = vmatpush1.msra.mxu0 0.0
  %1103 = vmatprep.subr.mxu0 0.0
  %1104 = vmatpush1.msra.mxu0 0.0
  %1105 = vmatprep.subr.mxu0 0.0
  %1106 = vmatpush1.msra.mxu0 0.0
  %1107 = vmatprep.subr.mxu0 0.0
  %1108 = vmatpush1.msra.mxu0 0.0
  %1109 = vmatprep.subr.mxu0 0.0
  %1110 = vmatpush1.msra.mxu0 0.0
  %1111 = vmatprep.subr.mxu0 0.0
  %1112 = vmatpush1.msra.mxu0 0.0
  %1113 = vmatprep.subr.mxu0 0.0
  %1114 = vmatpush1.msra.mxu0 0.0
  %1115 = vmatprep.subr.mxu0 0.0
  %1116 = vmatpush1.msra.mxu0 0.0
  %1117 = vmatprep.subr.mxu0 0.0
  %1118 = vmatpush1.msra.mxu0 0.0
  %1119 = vmatprep.subr.mxu0 0.0
  %1120 = vmatpush1.msra.mxu0 0.0
  %1121 = vmatprep.subr.mxu0 0.0
  %1122 = vmatpush1.msra.mxu0 0.0
  %1123 = vmatprep.subr.mxu0 0.0
  %1124 = vmatpush1.msra.mxu0 0.0
  %1125 = vmatprep.subr.mxu0 0.0
  %1126 = vmatpush1.msra.mxu0 0.0
  %1127 = vmatprep.subr.mxu0 0.0
  %1128 = vmatpush1.msra.mxu0 0.0
  %1129 = vmatprep.subr.mxu0 0.0
  %1130 = vmatpush1.msra.mxu0 0.0
  %1131 = vmatprep.subr.mxu0 0.0
  %1132 = vmatpush1.msra.mxu0 0.0
  %1133 = vmatprep.subr.mxu0 0.0
  %1134 = vmatpush1.msra.mxu0 0.0
  %1135 = vmatprep.subr.mxu0 0.0
  %1136 = vmatpush1.msra.mxu0 0.0
  %1137 = vmatprep.subr.mxu0 0.0
  %1138 = vmatpush1.msra.mxu0 0.0
  %1139 = vmatprep.subr.mxu0 0.0
  %1140 = vmatpush1.msra.mxu0 0.0
  %1141 = vmatprep.subr.mxu0 0.0
  %1142 = vmatpush1.msra.mxu0 0.0
  %1143 = vmatprep.subr.mxu0 0.0
  %1144 = vmatpush1.msra.mxu0 0.0
  %1145 = vmatprep.subr.mxu0 0.0
  %1146 = vmatpush1.msra.mxu0 0.0
  %1147 = vmatprep.subr.mxu0 0.0
  %1148 = vmatpush1.msra.mxu0 0.0
  %1149 = vmatprep.mubr.f32.mxu0 0.0
  %1150 = vmatmul.mubr.f32.gmra.mrb[0].mxu0 %v1083
  %v1151 = vpop.f32.mrb[0].mxu0
  %v1152 = vadd.f32 0.0, %v1151
  %v1153 = vpop.f32.mrb[0].mxu0
  %1154 = vdwg.mxu0
  %v1155 = vadd.f32 %v918, %v1152
  %v1156 = vmul.f32 %v745, %v745
  %v1157 = vsel %vm747, %v1156, 0.0
  %v1158 = vrot.slane %v1157, 4
  %v1159 = vadd.f32 %v1157, %v1158
  %v1160 = vrot.slane %v1159, 2
  %v1161 = vadd.f32 %v1159, %v1160
  %v1162 = vrot.slane %v1161, 1
  %v1163 = vadd.f32 %v1161, %v1162
  %v1165 = vsel %vm774, %v1163, 0
  %1167 = vmatprep.subr.mxu0 0.0
  %1168 = vmatpush1.msra.mxu0 %v755
  %1169 = vmatprep.subr.mxu0 0.0
  %1170 = vmatpush1.msra.mxu0 %v756
  %1171 = vmatprep.subr.mxu0 0.0
  %1172 = vmatpush1.msra.mxu0 %v757
  %1173 = vmatprep.subr.mxu0 0.0
  %1174 = vmatpush1.msra.mxu0 %v758
  %1175 = vmatprep.subr.mxu0 0.0
  %1176 = vmatpush1.msra.mxu0 0.0
  %1177 = vmatprep.subr.mxu0 0.0
  %1178 = vmatpush1.msra.mxu0 0.0
  %1179 = vmatprep.subr.mxu0 0.0
  %1180 = vmatpush1.msra.mxu0 0.0
  %1181 = vmatprep.subr.mxu0 0.0
  %1182 = vmatpush1.msra.mxu0 0.0
  %1183 = vmatprep.subr.mxu0 0.0
  %1184 = vmatpush1.msra.mxu0 0.0
  %1185 = vmatprep.subr.mxu0 0.0
  %1186 = vmatpush1.msra.mxu0 0.0
  %1187 = vmatprep.subr.mxu0 0.0
  %1188 = vmatpush1.msra.mxu0 0.0
  %1189 = vmatprep.subr.mxu0 0.0
  %1190 = vmatpush1.msra.mxu0 0.0
  %1191 = vmatprep.subr.mxu0 0.0
  %1192 = vmatpush1.msra.mxu0 0.0
  %1193 = vmatprep.subr.mxu0 0.0
  %1194 = vmatpush1.msra.mxu0 0.0
  %1195 = vmatprep.subr.mxu0 0.0
  %1196 = vmatpush1.msra.mxu0 0.0
  %1197 = vmatprep.subr.mxu0 0.0
  %1198 = vmatpush1.msra.mxu0 0.0
  %1199 = vmatprep.subr.mxu0 0.0
  %1200 = vmatpush1.msra.mxu0 0.0
  %1201 = vmatprep.subr.mxu0 0.0
  %1202 = vmatpush1.msra.mxu0 0.0
  %1203 = vmatprep.subr.mxu0 0.0
  %1204 = vmatpush1.msra.mxu0 0.0
  %1205 = vmatprep.subr.mxu0 0.0
  %1206 = vmatpush1.msra.mxu0 0.0
  %1207 = vmatprep.subr.mxu0 0.0
  %1208 = vmatpush1.msra.mxu0 0.0
  %1209 = vmatprep.subr.mxu0 0.0
  %1210 = vmatpush1.msra.mxu0 0.0
  %1211 = vmatprep.subr.mxu0 0.0
  %1212 = vmatpush1.msra.mxu0 0.0
  %1213 = vmatprep.subr.mxu0 0.0
  %1214 = vmatpush1.msra.mxu0 0.0
  %1215 = vmatprep.subr.mxu0 0.0
  %1216 = vmatpush1.msra.mxu0 0.0
  %1217 = vmatprep.subr.mxu0 0.0
  %1218 = vmatpush1.msra.mxu0 0.0
  %1219 = vmatprep.subr.mxu0 0.0
  %1220 = vmatpush1.msra.mxu0 0.0
  %1221 = vmatprep.subr.mxu0 0.0
  %1222 = vmatpush1.msra.mxu0 0.0
  %1223 = vmatprep.subr.mxu0 0.0
  %1224 = vmatpush1.msra.mxu0 0.0
  %1225 = vmatprep.subr.mxu0 0.0
  %1226 = vmatpush1.msra.mxu0 0.0
  %1227 = vmatprep.subr.mxu0 0.0
  %1228 = vmatpush1.msra.mxu0 0.0
  %1229 = vmatprep.subr.mxu0 0.0
  %1230 = vmatpush1.msra.mxu0 0.0
  %1231 = vmatprep.mubr.f32.mxu0 0.0
  %1232 = vmatmul.mubr.f32.gmra.mrb[0].mxu0 %v1165
  %v1233 = vpop.f32.mrb[0].mxu0
  %v1234 = vadd.f32 0.0, %v1233
  %v1235 = vpop.f32.mrb[0].mxu0
  %1236 = vdwg.mxu0
  %v1237 = vadd.f32 %v1072, %v1234
  %v1238 = vsel %vm747, %v746, 0.0
  %v1239 = vrot.slane %v1238, 4
  %v1240 = vadd.f32 %v1238, %v1239
  %v1241 = vrot.slane %v1240, 2
  %v1242 = vadd.f32 %v1240, %v1241
  %v1243 = vrot.slane %v1242, 1
  %v1244 = vadd.f32 %v1242, %v1243
  %v1246 = vsel %vm774, %v1244, 0
  %1248 = vmatprep.subr.mxu0 0.0
  %1249 = vmatpush1.msra.mxu0 %v755
  %1250 = vmatprep.subr.mxu0 0.0
  %1251 = vmatpush1.msra.mxu0 %v756
  %1252 = vmatprep.subr.mxu0 0.0
  %1253 = vmatpush1.msra.mxu0 %v757
  %1254 = vmatprep.subr.mxu0 0.0
  %1255 = vmatpush1.msra.mxu0 %v758
  %1256 = vmatprep.subr.mxu0 0.0
  %1257 = vmatpush1.msra.mxu0 0.0
  %1258 = vmatprep.subr.mxu0 0.0
  %1259 = vmatpush1.msra.mxu0 0.0
  %1260 = vmatprep.subr.mxu0 0.0
  %1261 = vmatpush1.msra.mxu0 0.0
  %1262 = vmatprep.subr.mxu0 0.0
  %1263 = vmatpush1.msra.mxu0 0.0
  %1264 = vmatprep.subr.mxu0 0.0
  %1265 = vmatpush1.msra.mxu0 0.0
  %1266 = vmatprep.subr.mxu0 0.0
  %1267 = vmatpush1.msra.mxu0 0.0
  %1268 = vmatprep.subr.mxu0 0.0
  %1269 = vmatpush1.msra.mxu0 0.0
  %1270 = vmatprep.subr.mxu0 0.0
  %1271 = vmatpush1.msra.mxu0 0.0
  %1272 = vmatprep.subr.mxu0 0.0
  %1273 = vmatpush1.msra.mxu0 0.0
  %1274 = vmatprep.subr.mxu0 0.0
  %1275 = vmatpush1.msra.mxu0 0.0
  %1276 = vmatprep.subr.mxu0 0.0
  %1277 = vmatpush1.msra.mxu0 0.0
  %1278 = vmatprep.subr.mxu0 0.0
  %1279 = vmatpush1.msra.mxu0 0.0
  %1280 = vmatprep.subr.mxu0 0.0
  %1281 = vmatpush1.msra.mxu0 0.0
  %1282 = vmatprep.subr.mxu0 0.0
  %1283 = vmatpush1.msra.mxu0 0.0
  %1284 = vmatprep.subr.mxu0 0.0
  %1285 = vmatpush1.msra.mxu0 0.0
  %1286 = vmatprep.subr.mxu0 0.0
  %1287 = vmatpush1.msra.mxu0 0.0
  %1288 = vmatprep.subr.mxu0 0.0
  %1289 = vmatpush1.msra.mxu0 0.0
  %1290 = vmatprep.subr.mxu0 0.0
  %1291 = vmatpush1.msra.mxu0 0.0
  %1292 = vmatprep.subr.mxu0 0.0
  %1293 = vmatpush1.msra.mxu0 0.0
  %1294 = vmatprep.subr.mxu0 0.0
  %1295 = vmatpush1.msra.mxu0 0.0
  %1296 = vmatprep.subr.mxu0 0.0
  %1297 = vmatpush1.msra.mxu0 0.0
  %1298 = vmatprep.subr.mxu0 0.0
  %1299 = vmatpush1.msra.mxu0 0.0
  %1300 = vmatprep.subr.mxu0 0.0
  %1301 = vmatpush1.msra.mxu0 0.0
  %1302 = vmatprep.subr.mxu0 0.0
  %1303 = vmatpush1.msra.mxu0 0.0
  %1304 = vmatprep.subr.mxu0 0.0
  %1305 = vmatpush1.msra.mxu0 0.0
  %1306 = vmatprep.subr.mxu0 0.0
  %1307 = vmatpush1.msra.mxu0 0.0
  %1308 = vmatprep.subr.mxu0 0.0
  %1309 = vmatpush1.msra.mxu0 0.0
  %1310 = vmatprep.subr.mxu0 0.0
  %1311 = vmatpush1.msra.mxu0 0.0
  %1312 = vmatprep.mubr.f32.mxu0 0.0
  %1313 = vmatmul.mubr.f32.gmra.mrb[0].mxu0 %v1246
  %v1314 = vpop.f32.mrb[0].mxu0
  %v1315 = vadd.f32 0.0, %v1314
  %v1316 = vpop.f32.mrb[0].mxu0
  %1317 = vdwg.mxu0
  %v1318 = vadd.f32 %v1155, %v1315
  %v1319 = vmul.f32 %v746, %v746
  %v1320 = vsel %vm747, %v1319, 0.0
  %v1321 = vrot.slane %v1320, 4
  %v1322 = vadd.f32 %v1320, %v1321
  %v1323 = vrot.slane %v1322, 2
  %v1324 = vadd.f32 %v1322, %v1323
  %v1325 = vrot.slane %v1324, 1
  %v1326 = vadd.f32 %v1324, %v1325
  %v1328 = vsel %vm774, %v1326, 0
  %1330 = vmatprep.subr.mxu0 0.0
  %1331 = vmatpush1.msra.mxu0 %v755
  %1332 = vmatprep.subr.mxu0 0.0
  %1333 = vmatpush1.msra.mxu0 %v756
  %1334 = vmatprep.subr.mxu0 0.0
  %1335 = vmatpush1.msra.mxu0 %v757
  %1336 = vmatprep.subr.mxu0 0.0
  %1337 = vmatpush1.msra.mxu0 %v758
  %1338 = vmatprep.subr.mxu0 0.0
  %1339 = vmatpush1.msra.mxu0 0.0
  %1340 = vmatprep.subr.mxu0 0.0
  %1341 = vmatpush1.msra.mxu0 0.0
  %1342 = vmatprep.subr.mxu0 0.0
  %1343 = vmatpush1.msra.mxu0 0.0
  %1344 = vmatprep.subr.mxu0 0.0
  %1345 = vmatpush1.msra.mxu0 0.0
  %1346 = vmatprep.subr.mxu0 0.0
  %1347 = vmatpush1.msra.mxu0 0.0
  %1348 = vmatprep.subr.mxu0 0.0
  %1349 = vmatpush1.msra.mxu0 0.0
  %1350 = vmatprep.subr.mxu0 0.0
  %1351 = vmatpush1.msra.mxu0 0.0
  %1352 = vmatprep.subr.mxu0 0.0
  %1353 = vmatpush1.msra.mxu0 0.0
  %1354 = vmatprep.subr.mxu0 0.0
  %1355 = vmatpush1.msra.mxu0 0.0
  %1356 = vmatprep.subr.mxu0 0.0
  %1357 = vmatpush1.msra.mxu0 0.0
  %1358 = vmatprep.subr.mxu0 0.0
  %1359 = vmatpush1.msra.mxu0 0.0
  %1360 = vmatprep.subr.mxu0 0.0
  %1361 = vmatpush1.msra.mxu0 0.0
  %1362 = vmatprep.subr.mxu0 0.0
  %1363 = vmatpush1.msra.mxu0 0.0
  %1364 = vmatprep.subr.mxu0 0.0
  %1365 = vmatpush1.msra.mxu0 0.0
  %1366 = vmatprep.subr.mxu0 0.0
  %1367 = vmatpush1.msra.mxu0 0.0
  %1368 = vmatprep.subr.mxu0 0.0
  %1369 = vmatpush1.msra.mxu0 0.0
  %1370 = vmatprep.subr.mxu0 0.0
  %1371 = vmatpush1.msra.mxu0 0.0
  %1372 = vmatprep.subr.mxu0 0.0
  %1373 = vmatpush1.msra.mxu0 0.0
  %1374 = vmatprep.subr.mxu0 0.0
  %1375 = vmatpush1.msra.mxu0 0.0
  %1376 = vmatprep.subr.mxu0 0.0
  %1377 = vmatpush1.msra.mxu0 0.0
  %1378 = vmatprep.subr.mxu0 0.0
  %1379 = vmatpush1.msra.mxu0 0.0
  %1380 = vmatprep.subr.mxu0 0.0
  %1381 = vmatpush1.msra.mxu0 0.0
  %1382 = vmatprep.subr.mxu0 0.0
  %1383 = vmatpush1.msra.mxu0 0.0
  %1384 = vmatprep.subr.mxu0 0.0
  %1385 = vmatpush1.msra.mxu0 0.0
  %1386 = vmatprep.subr.mxu0 0.0
  %1387 = vmatpush1.msra.mxu0 0.0
  %1388 = vmatprep.subr.mxu0 0.0
  %1389 = vmatpush1.msra.mxu0 0.0
  %1390 = vmatprep.subr.mxu0 0.0
  %1391 = vmatpush1.msra.mxu0 0.0
  %1392 = vmatprep.subr.mxu0 0.0
  %1393 = vmatpush1.msra.mxu0 0.0
  %1394 = vmatprep.mubr.f32.mxu0 0.0
  %1395 = vmatmul.mubr.f32.gmra.mrb[0].mxu0 %v1328
  %v1396 = vpop.f32.mrb[0].mxu0
  %v1397 = vadd.f32 0.0, %v1396
  %v1398 = vpop.f32.mrb[0].mxu0
  %1399 = vdwg.mxu0
  %v1400 = vadd.f32 %v1237, %v1397
  %v1401 = vrcp.pop 32.0
  %v1402 = vmul.f32 %v1318, %v1401
  %v1403 = vmul.f32 %v1400, %v1401
  %v1404 = vmul.f32 %v1402, %v1402
  %v1405 = vsub.f32 %v1403, %v1404
  %v1406 = vld [vmem:[%s3] sm:$0x1]
  %v1407 = vadd.f32 %v1405, 1e-05
  %v1408 = vrsqrt.pop %v1407
  %v1409 = vmul.f32 %v1406, %v1408
  %v1410 = vld [vmem:[%s4] sm:$0x1]
  %v1411 = vmul.f32 %v1402, %v1409
  %v1412 = vsub.f32 %v1410, %v1411
  %v1413 = vld [vmem:[%s6] sm:$0xff]
  %v1414 = vld [vmem:[%s6 + $0x8] sm:$0xff]
  %vm1415 = vcmask 130048
  %v1417 = vsel %vm1415, %v1409, 0
  %1419 = vmatprep.subr.mxu0 0.0
  %1420 = vmatpush1.msra.mxu0 %v1413
  %1421 = vmatprep.subr.mxu0 0.0
  %1422 = vmatpush1.msra.mxu0 %v1414
  %1423 = vmatprep.subr.mxu0 0.0
  %1424 = vmatpush1.msra.mxu0 0.0
  %1425 = vmatprep.subr.mxu0 0.0
  %1426 = vmatpush1.msra.mxu0 0.0
  %1427 = vmatprep.subr.mxu0 0.0
  %1428 = vmatpush1.msra.mxu0 0.0
  %1429 = vmatprep.subr.mxu0 0.0
  %1430 = vmatpush1.msra.mxu0 0.0
  %1431 = vmatprep.subr.mxu0 0.0
  %1432 = vmatpush1.msra.mxu0 0.0
  %1433 = vmatprep.subr.mxu0 0.0
  %1434 = vmatpush1.msra.mxu0 0.0
  %1435 = vmatprep.subr.mxu0 0.0
  %1436 = vmatpush1.msra.mxu0 0.0
  %1437 = vmatprep.subr.mxu0 0.0
  %1438 = vmatpush1.msra.mxu0 0.0
  %1439 = vmatprep.subr.mxu0 0.0
  %1440 = vmatpush1.msra.mxu0 0.0
  %1441 = vmatprep.subr.mxu0 0.0
  %1442 = vmatpush1.msra.mxu0 0.0
  %1443 = vmatprep.subr.mxu0 0.0
  %1444 = vmatpush1.msra.mxu0 0.0
  %1445 = vmatprep.subr.mxu0 0.0
  %1446 = vmatpush1.msra.mxu0 0.0
  %1447 = vmatprep.subr.mxu0 0.0
  %1448 = vmatpush1.msra.mxu0 0.0
  %1449 = vmatprep.subr.mxu0 0.0
  %1450 = vmatpush1.msra.mxu0 0.0
  %1451 = vmatprep.subr.mxu0 0.0
  %1452 = vmatpush1.msra.mxu0 0.0
  %1453 = vmatprep.subr.mxu0 0.0
  %1454 = vmatpush1.msra.mxu0 0.0
  %1455 = vmatprep.subr.mxu0 0.0
  %1456 = vmatpush1.msra.mxu0 0.0
  %1457 = vmatprep.subr.mxu0 0.0
  %1458 = vmatpush1.msra.mxu0 0.0
  %1459 = vmatprep.subr.mxu0 0.0
  %1460 = vmatpush1.msra.mxu0 0.0
  %1461 = vmatprep.subr.mxu0 0.0
  %1462 = vmatpush1.msra.mxu0 0.0
  %1463 = vmatprep.subr.mxu0 0.0
  %1464 = vmatpush1.msra.mxu0 0.0
  %1465 = vmatprep.subr.mxu0 0.0
  %1466 = vmatpush1.msra.mxu0 0.0
  %1467 = vmatprep.subr.mxu0 0.0
  %1468 = vmatpush1.msra.mxu0 0.0
  %1469 = vmatprep.subr.mxu0 0.0
  %1470 = vmatpush1.msra.mxu0 0.0
  %1471 = vmatprep.subr.mxu0 0.0
  %1472 = vmatpush1.msra.mxu0 0.0
  %1473 = vmatprep.subr.mxu0 0.0
  %1474 = vmatpush1.msra.mxu0 0.0
  %1475 = vmatprep.subr.mxu0 0.0
  %1476 = vmatpush1.msra.mxu0 0.0
  %1477 = vmatprep.subr.mxu0 0.0
  %1478 = vmatpush1.msra.mxu0 0.0
  %1479 = vmatprep.subr.mxu0 0.0
  %1480 = vmatpush1.msra.mxu0 0.0
  %1481 = vmatprep.subr.mxu0 0.0
  %1482 = vmatpush1.msra.mxu0 0.0
  %1483 = vmatprep.mubr.f32.mxu0 0.0
  %1484 = vmatmul.mubr.f32.gmra.mrb[0].mxu0 %v1417
  %v1485 = vpop.f32.mrb[0].mxu0
  %v1486 = vadd.f32 0.0, %v1485
  %v1487 = vpop.f32.mrb[0].mxu0
  %1488 = vdwg.mxu0
  %v1490 = vsel %vm1415, %v1412, 0
  %1492 = vmatprep.subr.mxu0 0.0
  %1493 = vmatpush1.msra.mxu0 %v1413
  %1494 = vmatprep.subr.mxu0 0.0
  %1495 = vmatpush1.msra.mxu0 %v1414
  %1496 = vmatprep.subr.mxu0 0.0
  %1497 = vmatpush1.msra.mxu0 0.0
  %1498 = vmatprep.subr.mxu0 0.0
  %1499 = vmatpush1.msra.mxu0 0.0
  %1500 = vmatprep.subr.mxu0 0.0
  %1501 = vmatpush1.msra.mxu0 0.0
  %1502 = vmatprep.subr.mxu0 0.0
  %1503 = vmatpush1.msra.mxu0 0.0
  %1504 = vmatprep.subr.mxu0 0.0
  %1505 = vmatpush1.msra.mxu0 0.0
  %1506 = vmatprep.subr.mxu0 0.0
  %1507 = vmatpush1.msra.mxu0 0.0
  %1508 = vmatprep.subr.mxu0 0.0
  %1509 = vmatpush1.msra.mxu0 0.0
  %1510 = vmatprep.subr.mxu0 0.0
  %1511 = vmatpush1.msra.mxu0 0.0
  %1512 = vmatprep.subr.mxu0 0.0
  %1513 = vmatpush1.msra.mxu0 0.0
  %1514 = vmatprep.subr.mxu0 0.0
  %1515 = vmatpush1.msra.mxu0 0.0
  %1516 = vmatprep.subr.mxu0 0.0
  %1517 = vmatpush1.msra.mxu0 0.0
  %1518 = vmatprep.subr.mxu0 0.0
  %1519 = vmatpush1.msra.mxu0 0.0
  %1520 = vmatprep.subr.mxu0 0.0
  %1521 = vmatpush1.msra.mxu0 0.0
  %1522 = vmatprep.subr.mxu0 0.0
  %1523 = vmatpush1.msra.mxu0 0.0
  %1524 = vmatprep.subr.mxu0 0.0
  %1525 = vmatpush1.msra.mxu0 0.0
  %1526 = vmatprep.subr.mxu0 0.0
  %1527 = vmatpush1.msra.mxu0 0.0
  %1528 = vmatprep.subr.mxu0 0.0
  %1529 = vmatpush1.msra.mxu0 0.0
  %1530 = vmatprep.subr.mxu0 0.0
  %1531 = vmatpush1.msra.mxu0 0.0
  %1532 = vmatprep.subr.mxu0 0.0
  %1533 = vmatpush1.msra.mxu0 0.0
  %1534 = vmatprep.subr.mxu0 0.0
  %1535 = vmatpush1.msra.mxu0 0.0
  %1536 = vmatprep.subr.mxu0 0.0
  %1537 = vmatpush1.msra.mxu0 0.0
  %1538 = vmatprep.subr.mxu0 0.0
  %1539 = vmatpush1.msra.mxu0 0.0
  %1540 = vmatprep.subr.mxu0 0.0
  %1541 = vmatpush1.msra.mxu0 0.0
  %1542 = vmatprep.subr.mxu0 0.0
  %1543 = vmatpush1.msra.mxu0 0.0
  %1544 = vmatprep.subr.mxu0 0.0
  %1545 = vmatpush1.msra.mxu0 0.0
  %1546 = vmatprep.subr.mxu0 0.0
  %1547 = vmatpush1.msra.mxu0 0.0
  %1548 = vmatprep.subr.mxu0 0.0
  %1549 = vmatpush1.msra.mxu0 0.0
  %1550 = vmatprep.subr.mxu0 0.0
  %1551 = vmatpush1.msra.mxu0 0.0
  %1552 = vmatprep.subr.mxu0 0.0
  %1553 = vmatpush1.msra.mxu0 0.0
  %1554 = vmatprep.subr.mxu0 0.0
  %1555 = vmatpush1.msra.mxu0 0.0
  %1556 = vmatprep.mubr.f32.mxu0 0.0
  %1557 = vmatmul.mubr.f32.gmra.mrb[0].mxu0 %v1490
  %v1558 = vpop.f32.mrb[0].mxu0
  %v1559 = vadd.f32 0.0, %v1558
  %v1560 = vpop.f32.mrb[0].mxu0
  %1561 = vdwg.mxu0
  %v1562 = vlaneseq
  %v1563 = vshrl.u32 %v1562, 7
  %v1564 = vsub.s32 0, %v1563
  %v1565 = vrot.slane %v1486, %v1564
  %v1566 = vmul.f32 %v739, %v1565
  %v1567 = vlaneseq
  %v1568 = vshrl.u32 %v1567, 7
  %v1569 = vsub.s32 0, %v1568
  %v1570 = vrot.slane %v1559, %v1569
  %v1571 = vadd.f32 %v1566, %v1570
  %v1572 = vmul.f32 %v744, %v1565
  %v1573 = vadd.f32 %v1572, %v1570
  %v1574 = vmul.f32 %v745, %v1565
  %v1575 = vadd.f32 %v1574, %v1570
  %v1576 = vmul.f32 %v746, %v1565
  %v1577 = vadd.f32 %v1576, %v1570
  %vm1578 = vcmp.ge.f32.partialorder %v1571, 0.0
  %v1579 = vmul.f32 %v1571, 0.01
  %v1580 = vsel %vm1578, %v1571, %v1579
  %vm1581 = vcmp.ge.f32.partialorder %v1573, 0.0
  %v1582 = vmul.f32 %v1573, 0.01
  %v1583 = vsel %vm1581, %v1573, %v1582
  %vm1584 = vcmp.ge.f32.partialorder %v1575, 0.0
  %v1585 = vmul.f32 %v1575, 0.01
  %v1586 = vsel %vm1584, %v1575, %v1585
  %vm1587 = vcmp.ge.f32.partialorder %v1577, 0.0
  %v1588 = vmul.f32 %v1577, 0.01
  %v1589 = vsel %vm1587, %v1577, %v1588
  %v1591 = vrot.slane %v1583, 4
  %v1594 = vrot.slane %v1589, 4
  %vm1596 = vcmask 1043456
  %v1597 = vsel %vm1596, %v1580, %v1591
  %v1598 = vsel %vm1596, %v1586, %v1594
  %v1599 = vpack.c.bf16 %v1598, %v1597
  %v1601 = vunpack.c.l.b16 %v1599
  %v1602 = vunpack.c.h.b16 %v1599
  %v1603 = vpack.c.b16 %v1601, %v1601
  %v1604 = vpack.c.b16 %v1602, %v1602
  %1607 = vst.msk [vmem:[%s7] sm:$0xf] %vm747, %v1603
  %1608 = vst.msk [vmem:[%s7 + $0x4] sm:$0xf] %vm747, %v1604
  // Predicated region
  $region30: #{vae_forward.11} parent=0 // pred_check
    _
  $region31: #{vae_forward.11} parent=0 // pred_check_branch
    %1610 = sbr.rel (0) target = $region33
  $region32: #{vae_forward.11} parent=0 // pred_region
    _
  $region33: #{vae_forward.11} parent=0 // pred_fallthru
    _
  // Predicated region
  $region34: #{vae_forward.11} parent=0 // pred_check
    _
  $region35: #{vae_forward.11} parent=0 // pred_check_branch
    %1612 = sbr.rel (0) target = $region37
  $region36: #{vae_forward.11} parent=0 // pred_region
    _
  $region37: #{vae_forward.11} parent=0 // pred_fallthru
    _

// kernel: tile.113
$region0: #{tile.113}
  #allocation0 [shape = 's32[1]{0}', space=sflag, size = 0x4, scoped, tag = 'scoped memory for tile.113']
  %s0 = inlined_call_operand.vmem [shape: f32[3], index: 0, kind: input, shape index: {}]
  %s1 = inlined_call_operand.vmem [shape: f32[8,3], index: 1, kind: output, shape index: {}]
  // Predicated region
  $region2: #{tile.113} parent=0 // pred_check
    _
  $region3: #{tile.113} parent=0 // pred_check_branch
    %3 = sbr.rel (0) target = $region5
  $region4: #{tile.113} parent=0 // pred_region
    _
  $region5: #{tile.113} parent=0 // pred_fallthru
    _
  %v4 = vld [vmem:[%s0] ss:$0 sm:$0xff]
  %5 = vst [vmem:[%s1] sm:$0xff] %v4

// kernel: tile.114
$region0: #{tile.114}
  %s0 = inlined_call_operand.vmem [shape: f32[8,3], index: 0, kind: input, shape index: {}]
  %s1 = inlined_call_operand.vmem [shape: f32[1,24], index: 1, kind: output, shape index: {}]
  $region1: #{tile.114} parent=0
    #allocation0 [shape = 'u8[4096]{0}', space=vmem, size = 0x1000, scoped, tag = 'scoped mem for output reshape']
    %v2 = vld [vmem:[%s0] sm:$0x1]
    %vm3 = vcmask 23552
    %4 = vst.msk [vmem:[#allocation0] sm:$0x1] %vm3, %v2
    %s5 = scalar_lea.vmem %s0, 7
    %v6 = vld [vmem:[%s5] sm:$0x1]
    %7 = vrot.lane.b32.xlu0 %v6, 21
    %v8 = vpop.permute.xlu0 %7
    %vm9 = vcmask 195752
    %10 = vst.msk [vmem:[#allocation0] sm:$0x1] %vm9, %v8
    %s11 = scalar_lea.vmem %s0, 6
    %v12 = vld [vmem:[%s11] sm:$0x1]
    %13 = vrot.lane.b32.xlu0 %v12, 18
    %v14 = vpop.permute.xlu0 %13
    %vm15 = vcmask 171152
    %16 = vst.msk [vmem:[#allocation0] sm:$0x1] %vm15, %v14
    %s17 = scalar_lea.vmem %s0, 5
    %v18 = vld [vmem:[%s17] sm:$0x1]
    %19 = vrot.lane.b32.xlu0 %v18, 15
    %v20 = vpop.permute.xlu0 %19
    %vm21 = vcmask 146552
    %22 = vst.msk [vmem:[#allocation0] sm:$0x1] %vm21, %v20
    %s23 = scalar_lea.vmem %s0, 4
    %v24 = vld [vmem:[%s23] sm:$0x1]
    %25 = vrot.lane.b32.xlu0 %v24, 12
    %v26 = vpop.permute.xlu0 %25
    %vm27 = vcmask 121952
    %28 = vst.msk [vmem:[#allocation0] sm:$0x1] %vm27, %v26
    %s29 = scalar_lea.vmem %s0, 3
    %v30 = vld [vmem:[%s29] sm:$0x1]
    %31 = vrot.lane.b32.xlu0 %v30, 9
    %v32 = vpop.permute.xlu0 %31
    %vm33 = vcmask 97352
    %34 = vst.msk [vmem:[#allocation0] sm:$0x1] %vm33, %v32
    %s35 = scalar_lea.vmem %s0, 2
    %v36 = vld [vmem:[%s35] sm:$0x1]
    %37 = vrot.lane.b32.xlu0 %v36, 6
    %v38 = vpop.permute.xlu0 %37
    %vm39 = vcmask 72752
    %40 = vst.msk [vmem:[#allocation0] sm:$0x1] %vm39, %v38
    %s41 = scalar_lea.vmem %s0, 1
    %v42 = vld [vmem:[%s41] sm:$0x1]
    %43 = vrot.lane.b32.xlu0 %v42, 3
    %v44 = vpop.permute.xlu0 %43
    %vm45 = vcmask 48152
    %46 = vst.msk [vmem:[#allocation0] sm:$0x1] %vm45, %v44
    %s48 = sshllo.u32 0, 1
    %v50 = vld [vmem:[#allocation0] sm:%s48]
    %s51 = sshllo.u32 0, 1
    %52 = vst [vmem:[%s1] sm:%s51] %v50

// kernel: vae_forward.12
$region0: #{vae_forward.12}
  #allocation0 [shape = 'u32[]', space=smem, size = 0x4, offset = 0x4, fixed_abs, tag = 'smem constant byte address 0x4 - core index']
  #allocation1 [shape = 'u32[144,128]{1,0:T(1,128)}', space=vmem, size = 0x12000, scoped, tag = 'internal scratch']
  %s0 = inlined_call_operand.vmem [shape: bf16[10,80], index: 0, kind: input, shape index: {}]
  %s1 = inlined_call_operand.vmem [shape: bf16[9,64,32], index: 1, kind: input, shape index: {}]
  %s2 = inlined_call_operand.vmem [shape: f32[1,32], index: 2, kind: input, shape index: {}]
  %s3 = inlined_call_operand.vmem [shape: f32[1,8], index: 3, kind: input, shape index: {}]
  %s4 = inlined_call_operand.vmem [shape: f32[1,8], index: 4, kind: input, shape index: {}]
  %s5 = inlined_call_operand.vmem [shape: f32[32,8], index: 5, kind: input, shape index: {}]
  %s6 = inlined_call_operand.vmem [shape: f32[8,32], index: 6, kind: input, shape index: {}]
  %s7 = inlined_call_operand.vmem [shape: bf16[32,32], index: 7, kind: output, shape index: {}]
  %s8 = sld [smem:[#allocation0]]
  $region38: #{vae_forward.12} parent=0
    _
  %s10 = ssub.s32 1, %s8
  %s11 = scalar_select 0, %s10, %s8
  // Predicated region
  $region2: #{vae_forward.12} parent=0 // pred_check
    _
  $region3: #{vae_forward.12} parent=0 // pred_check_branch
    %13 = sbr.rel (0) target = $region5
  $region4: #{vae_forward.12} parent=0 // pred_region
    _
  $region5: #{vae_forward.12} parent=0 // pred_fallthru
    _
  // Predicated region
  $region6: #{vae_forward.12} parent=0 // pred_check
    _
  $region7: #{vae_forward.12} parent=0 // pred_check_branch
    %15 = sbr.rel (0) target = $region9
  $region8: #{vae_forward.12} parent=0 // pred_region
    _
  $region9: #{vae_forward.12} parent=0 // pred_fallthru
    _
  // Predicated region
  $region10: #{vae_forward.12} parent=0 // pred_check
    _
  $region11: #{vae_forward.12} parent=0 // pred_check_branch
    %17 = sbr.rel (0) target = $region13
  $region12: #{vae_forward.12} parent=0 // pred_region
    _
  $region13: #{vae_forward.12} parent=0 // pred_fallthru
    _
  // Predicated region
  $region14: #{vae_forward.12} parent=0 // pred_check
    _
  $region15: #{vae_forward.12} parent=0 // pred_check_branch
    %19 = sbr.rel (0) target = $region17
  $region16: #{vae_forward.12} parent=0 // pred_region
    _
  $region17: #{vae_forward.12} parent=0 // pred_fallthru
    _
  // Predicated region
  $region18: #{vae_forward.12} parent=0 // pred_check
    _
  $region19: #{vae_forward.12} parent=0 // pred_check_branch
    %21 = sbr.rel (0) target = $region21
  $region20: #{vae_forward.12} parent=0 // pred_region
    _
  $region21: #{vae_forward.12} parent=0 // pred_fallthru
    _
  // Predicated region
  $region22: #{vae_forward.12} parent=0 // pred_check
    _
  $region23: #{vae_forward.12} parent=0 // pred_check_branch
    %23 = sbr.rel (0) target = $region25
  $region24: #{vae_forward.12} parent=0 // pred_region
    _
  $region25: #{vae_forward.12} parent=0 // pred_fallthru
    _
  // Predicated region
  $region26: #{vae_forward.12} parent=0 // pred_check
    _
  $region27: #{vae_forward.12} parent=0 // pred_check_branch
    %25 = sbr.rel (0) target = $region29
  $region28: #{vae_forward.12} parent=0 // pred_region
    _
  $region29: #{vae_forward.12} parent=0 // pred_fallthru
    _
  %v27 = vld [vmem:[%s0] sm:$0x3]
  %v28 = vld [vmem:[%s0] sm:$0xc]
  %v29 = vld [vmem:[%s0 + $0x4] sm:$0x1]
  %v32 = vunpack.c.l.b16 %v28
  %v33 = vunpack.c.l.b16 %v29
  %v34 = vpack.c.b16 %v33, %v32
  %v36 = vshrl.u32 %v34, 16
  %v38 = vshll.u32 %v34, 16
  %v40 = vrot.slane %v38, 1
  %v41 = vor.u32 %v36, %v40
  %vm42 = vcmask 1041408
  %v45 = vsel %vm42, %v27, %v41
  %v46 = vld [vmem:[%s1] sm:$0xf]
  %v47 = vld [vmem:[%s1 + $0x4] sm:$0xf]
  %v48 = vld [vmem:[%s1 + $0x8] sm:$0xf]
  %v49 = vld [vmem:[%s1 + $0xc] sm:$0xf]
  %v50 = vld [vmem:[%s1 + $0x10] sm:$0xf]
  %v51 = vld [vmem:[%s1 + $0x14] sm:$0xf]
  %v52 = vld [vmem:[%s1 + $0x18] sm:$0xf]
  %v53 = vld [vmem:[%s1 + $0x1c] sm:$0xf]
  %s54 = scalar_lea.vmem %s1, 32
  %v55 = vld [vmem:[%s54] sm:$0xf]
  %v56 = vld [vmem:[%s54 + $0x4] sm:$0xf]
  %v57 = vld [vmem:[%s54 + $0x8] sm:$0xf]
  %v58 = vld [vmem:[%s54 + $0xc] sm:$0xf]
  %v59 = vld [vmem:[%s54 + $0x10] sm:$0xf]
  %v60 = vld [vmem:[%s54 + $0x14] sm:$0xf]
  %v61 = vld [vmem:[%s54 + $0x18] sm:$0xf]
  %v62 = vld [vmem:[%s54 + $0x1c] sm:$0xf]
  %s63 = scalar_lea.vmem %s1, 64
  %v64 = vld [vmem:[%s63] sm:$0xf]
  %v65 = vld [vmem:[%s63 + $0x4] sm:$0xf]
  %v66 = vld [vmem:[%s63 + $0x8] sm:$0xf]
  %v67 = vld [vmem:[%s63 + $0xc] sm:$0xf]
  %v68 = vld [vmem:[%s63 + $0x10] sm:$0xf]
  %v69 = vld [vmem:[%s63 + $0x14] sm:$0xf]
  %v70 = vld [vmem:[%s63 + $0x18] sm:$0xf]
  %v71 = vld [vmem:[%s63 + $0x1c] sm:$0xf]
  %73 = vrot.lane.b32.xlu0 %v45, 112
  %v74 = vpop.permute.xlu0 %73
  %v83 = vunpack.c.l.b16 %v64
  %v84 = vunpack.c.l.b16 %v65
  %v85 = vunpack.c.l.b16 %v66
  %v86 = vunpack.c.l.b16 %v67
  %v87 = vunpack.c.l.b16 %v68
  %v88 = vunpack.c.l.b16 %v69
  %v89 = vunpack.c.l.b16 %v70
  %v90 = vunpack.c.l.b16 %v71
  %v91 = vpack.c.b16 %v84, %v83
  %v92 = vpack.c.b16 %v86, %v85
  %v93 = vpack.c.b16 %v88, %v87
  %v94 = vpack.c.b16 %v90, %v89
  %vm99 = vcmask 523264
  %v101 = vsel %vm99, %v74, 0
  %103 = vmatprep.subr.bf16.mxu0 0
  %104 = vmatpush1.bf16.msra.mxu0 %v91
  %105 = vmatprep.subr.bf16.mxu0 0
  %106 = vmatpush1.bf16.msra.mxu0 %v92
  %107 = vmatprep.subr.bf16.mxu0 0
  %108 = vmatpush1.bf16.msra.mxu0 %v93
  %109 = vmatprep.subr.bf16.mxu0 0
  %110 = vmatpush1.bf16.msra.mxu0 %v94
  %111 = vmatprep.subr.bf16.mxu0 0
  %112 = vmatpush1.bf16.msra.mxu0 0
  %113 = vmatprep.subr.bf16.mxu0 0
  %114 = vmatpush1.bf16.msra.mxu0 0
  %115 = vmatprep.subr.bf16.mxu0 0
  %116 = vmatpush1.bf16.msra.mxu0 0
  %117 = vmatprep.subr.bf16.mxu0 0
  %118 = vmatpush1.bf16.msra.mxu0 0
  %119 = vmatprep.subr.bf16.mxu0 0
  %120 = vmatpush1.bf16.msra.mxu0 0
  %121 = vmatprep.subr.bf16.mxu0 0
  %122 = vmatpush1.bf16.msra.mxu0 0
  %123 = vmatprep.subr.bf16.mxu0 0
  %124 = vmatpush1.bf16.msra.mxu0 0
  %125 = vmatprep.subr.bf16.mxu0 0
  %126 = vmatpush1.bf16.msra.mxu0 0
  %127 = vmatprep.subr.bf16.mxu0 0
  %128 = vmatpush1.bf16.msra.mxu0 0
  %129 = vmatprep.subr.bf16.mxu0 0
  %130 = vmatpush1.bf16.msra.mxu0 0
  %131 = vmatprep.subr.bf16.mxu0 0
  %132 = vmatpush1.bf16.msra.mxu0 0
  %133 = vmatprep.subr.bf16.mxu0 0
  %134 = vmatpush1.bf16.msra.mxu0 0
  %135 = vmatprep.mubr.bf16.mxu0 0
  %136 = vmatmul.mubr.bf16.gmra.mrb[0].mxu0 %v101
  %v137 = vpop.f32.mrb[0].mxu0
  %v138 = vadd.f32 0.0, %v137
  %v139 = vpop.f32.mrb[0].mxu0
  %v140 = vpop.f32.mrb[0].mxu0
  %v141 = vpop.f32.mrb[0].mxu0
  %142 = vdwg.mxu0
  %v151 = vunpack.c.l.b16 %v55
  %v152 = vunpack.c.l.b16 %v56
  %v153 = vunpack.c.l.b16 %v57
  %v154 = vunpack.c.l.b16 %v58
  %v155 = vunpack.c.l.b16 %v59
  %v156 = vunpack.c.l.b16 %v60
  %v157 = vunpack.c.l.b16 %v61
  %v158 = vunpack.c.l.b16 %v62
  %v159 = vpack.c.b16 %v152, %v151
  %v160 = vpack.c.b16 %v154, %v153
  %v161 = vpack.c.b16 %v156, %v155
  %v162 = vpack.c.b16 %v158, %v157
  %v167 = vsel %vm99, %v45, 0
  %169 = vmatprep.subr.bf16.mxu0 0
  %170 = vmatpush1.bf16.msra.mxu0 %v159
  %171 = vmatprep.subr.bf16.mxu0 0
  %172 = vmatpush1.bf16.msra.mxu0 %v160
  %173 = vmatprep.subr.bf16.mxu0 0
  %174 = vmatpush1.bf16.msra.mxu0 %v161
  %175 = vmatprep.subr.bf16.mxu0 0
  %176 = vmatpush1.bf16.msra.mxu0 %v162
  %177 = vmatprep.subr.bf16.mxu0 0
  %178 = vmatpush1.bf16.msra.mxu0 0
  %179 = vmatprep.subr.bf16.mxu0 0
  %180 = vmatpush1.bf16.msra.mxu0 0
  %181 = vmatprep.subr.bf16.mxu0 0
  %182 = vmatpush1.bf16.msra.mxu0 0
  %183 = vmatprep.subr.bf16.mxu0 0
  %184 = vmatpush1.bf16.msra.mxu0 0
  %185 = vmatprep.subr.bf16.mxu0 0
  %186 = vmatpush1.bf16.msra.mxu0 0
  %187 = vmatprep.subr.bf16.mxu0 0
  %188 = vmatpush1.bf16.msra.mxu0 0
  %189 = vmatprep.subr.bf16.mxu0 0
  %190 = vmatpush1.bf16.msra.mxu0 0
  %191 = vmatprep.subr.bf16.mxu0 0
  %192 = vmatpush1.bf16.msra.mxu0 0
  %193 = vmatprep.subr.bf16.mxu0 0
  %194 = vmatpush1.bf16.msra.mxu0 0
  %195 = vmatprep.subr.bf16.mxu0 0
  %196 = vmatpush1.bf16.msra.mxu0 0
  %197 = vmatprep.subr.bf16.mxu0 0
  %198 = vmatpush1.bf16.msra.mxu0 0
  %199 = vmatprep.subr.bf16.mxu0 0
  %200 = vmatpush1.bf16.msra.mxu0 0
  %201 = vmatprep.mubr.bf16.mxu0 0
  %202 = vmatmul.mubr.bf16.gmra.mrb[0].mxu0 %v167
  %v203 = vpop.f32.mrb[0].mxu0
  %v204 = vadd.f32 %v138, %v203
  %v205 = vpop.f32.mrb[0].mxu0
  %v206 = vpop.f32.mrb[0].mxu0
  %v207 = vpop.f32.mrb[0].mxu0
  %208 = vdwg.mxu0
  %s209 = scalar_lea.vmem %s1, 96
  %v210 = vld [vmem:[%s209] sm:$0xf]
  %v211 = vld [vmem:[%s209 + $0x4] sm:$0xf]
  %v212 = vld [vmem:[%s209 + $0x8] sm:$0xf]
  %v213 = vld [vmem:[%s209 + $0xc] sm:$0xf]
  %v214 = vld [vmem:[%s209 + $0x10] sm:$0xf]
  %v215 = vld [vmem:[%s209 + $0x14] sm:$0xf]
  %v216 = vld [vmem:[%s209 + $0x18] sm:$0xf]
  %v217 = vld [vmem:[%s209 + $0x1c] sm:$0xf]
  %v218 = vld [vmem:[%s0] sm:$0x7]
  %v219 = vld [vmem:[%s0] sm:$0x8]
  %v221 = vunpack.c.l.b16 %v218
  %v222 = vpack.c.b16 %v221, %v221
  %v224 = vshrl.u32 %v222, 16
  %v226 = vshll.u32 %v222, 16
  %v228 = vrot.slane %v226, 1
  %v229 = vor.u32 %v224, %v228
  %v231 = vunpack.c.l.b16 %v219
  %v232 = vpack.c.b16 %v33, %v231
  %v233 = vrot.slane %v232, 1
  %v236 = vsel %vm42, %v229, %v233
  %s237 = scalar_lea.vmem %s1, 128
  %v238 = vld [vmem:[%s237] sm:$0xf]
  %v239 = vld [vmem:[%s237 + $0x4] sm:$0xf]
  %v240 = vld [vmem:[%s237 + $0x8] sm:$0xf]
  %v241 = vld [vmem:[%s237 + $0xc] sm:$0xf]
  %v242 = vld [vmem:[%s237 + $0x10] sm:$0xf]
  %v243 = vld [vmem:[%s237 + $0x14] sm:$0xf]
  %v244 = vld [vmem:[%s237 + $0x18] sm:$0xf]
  %v245 = vld [vmem:[%s237 + $0x1c] sm:$0xf]
  %v254 = vunpack.c.l.b16 %v238
  %v255 = vunpack.c.l.b16 %v239
  %v256 = vunpack.c.l.b16 %v240
  %v257 = vunpack.c.l.b16 %v241
  %v258 = vunpack.c.l.b16 %v242
  %v259 = vunpack.c.l.b16 %v243
  %v260 = vunpack.c.l.b16 %v244
  %v261 = vunpack.c.l.b16 %v245
  %v262 = vpack.c.b16 %v255, %v254
  %v263 = vpack.c.b16 %v257, %v256
  %v264 = vpack.c.b16 %v259, %v258
  %v265 = vpack.c.b16 %v261, %v260
  %v270 = vsel %vm99, %v236, 0
  %272 = vmatprep.subr.bf16.mxu0 0
  %273 = vmatpush1.bf16.msra.mxu0 %v262
  %274 = vmatprep.subr.bf16.mxu0 0
  %275 = vmatpush1.bf16.msra.mxu0 %v263
  %276 = vmatprep.subr.bf16.mxu0 0
  %277 = vmatpush1.bf16.msra.mxu0 %v264
  %278 = vmatprep.subr.bf16.mxu0 0
  %279 = vmatpush1.bf16.msra.mxu0 %v265
  %280 = vmatprep.subr.bf16.mxu0 0
  %281 = vmatpush1.bf16.msra.mxu0 0
  %282 = vmatprep.subr.bf16.mxu0 0
  %283 = vmatpush1.bf16.msra.mxu0 0
  %284 = vmatprep.subr.bf16.mxu0 0
  %285 = vmatpush1.bf16.msra.mxu0 0
  %286 = vmatprep.subr.bf16.mxu0 0
  %287 = vmatpush1.bf16.msra.mxu0 0
  %288 = vmatprep.subr.bf16.mxu0 0
  %289 = vmatpush1.bf16.msra.mxu0 0
  %290 = vmatprep.subr.bf16.mxu0 0
  %291 = vmatpush1.bf16.msra.mxu0 0
  %292 = vmatprep.subr.bf16.mxu0 0
  %293 = vmatpush1.bf16.msra.mxu0 0
  %294 = vmatprep.subr.bf16.mxu0 0
  %295 = vmatpush1.bf16.msra.mxu0 0
  %296 = vmatprep.subr.bf16.mxu0 0
  %297 = vmatpush1.bf16.msra.mxu0 0
  %298 = vmatprep.subr.bf16.mxu0 0
  %299 = vmatpush1.bf16.msra.mxu0 0
  %300 = vmatprep.subr.bf16.mxu0 0
  %301 = vmatpush1.bf16.msra.mxu0 0
  %302 = vmatprep.subr.bf16.mxu0 0
  %303 = vmatpush1.bf16.msra.mxu0 0
  %304 = vmatprep.mubr.bf16.mxu0 0
  %305 = vmatmul.mubr.bf16.gmra.mrb[0].mxu0 %v270
  %v306 = vpop.f32.mrb[0].mxu0
  %v307 = vadd.f32 0.0, %v306
  %v308 = vpop.f32.mrb[0].mxu0
  %v309 = vpop.f32.mrb[0].mxu0
  %v310 = vpop.f32.mrb[0].mxu0
  %311 = vdwg.mxu0
  %v320 = vunpack.c.l.b16 %v210
  %v321 = vunpack.c.l.b16 %v211
  %v322 = vunpack.c.l.b16 %v212
  %v323 = vunpack.c.l.b16 %v213
  %v324 = vunpack.c.l.b16 %v214
  %v325 = vunpack.c.l.b16 %v215
  %v326 = vunpack.c.l.b16 %v216
  %v327 = vunpack.c.l.b16 %v217
  %v328 = vpack.c.b16 %v321, %v320
  %v329 = vpack.c.b16 %v323, %v322
  %v330 = vpack.c.b16 %v325, %v324
  %v331 = vpack.c.b16 %v327, %v326
  %336 = vmatprep.subr.bf16.mxu0 0
  %337 = vmatpush1.bf16.msra.mxu0 %v328
  %338 = vmatprep.subr.bf16.mxu0 0
  %339 = vmatpush1.bf16.msra.mxu0 %v329
  %340 = vmatprep.subr.bf16.mxu0 0
  %341 = vmatpush1.bf16.msra.mxu0 %v330
  %342 = vmatprep.subr.bf16.mxu0 0
  %343 = vmatpush1.bf16.msra.mxu0 %v331
  %344 = vmatprep.subr.bf16.mxu0 0
  %345 = vmatpush1.bf16.msra.mxu0 0
  %346 = vmatprep.subr.bf16.mxu0 0
  %347 = vmatpush1.bf16.msra.mxu0 0
  %348 = vmatprep.subr.bf16.mxu0 0
  %349 = vmatpush1.bf16.msra.mxu0 0
  %350 = vmatprep.subr.bf16.mxu0 0
  %351 = vmatpush1.bf16.msra.mxu0 0
  %352 = vmatprep.subr.bf16.mxu0 0
  %353 = vmatpush1.bf16.msra.mxu0 0
  %354 = vmatprep.subr.bf16.mxu0 0
  %355 = vmatpush1.bf16.msra.mxu0 0
  %356 = vmatprep.subr.bf16.mxu0 0
  %357 = vmatpush1.bf16.msra.mxu0 0
  %358 = vmatprep.subr.bf16.mxu0 0
  %359 = vmatpush1.bf16.msra.mxu0 0
  %360 = vmatprep.subr.bf16.mxu0 0
  %361 = vmatpush1.bf16.msra.mxu0 0
  %362 = vmatprep.subr.bf16.mxu0 0
  %363 = vmatpush1.bf16.msra.mxu0 0
  %364 = vmatprep.subr.bf16.mxu0 0
  %365 = vmatpush1.bf16.msra.mxu0 0
  %366 = vmatprep.subr.bf16.mxu0 0
  %367 = vmatpush1.bf16.msra.mxu0 0
  %368 = vmatprep.mubr.bf16.mxu0 0
  %369 = vmatmul.mubr.bf16.gmra.mrb[0].mxu0 %v167
  %v370 = vpop.f32.mrb[0].mxu0
  %v371 = vadd.f32 %v307, %v370
  %v372 = vpop.f32.mrb[0].mxu0
  %v373 = vpop.f32.mrb[0].mxu0
  %v374 = vpop.f32.mrb[0].mxu0
  %375 = vdwg.mxu0
  %s376 = scalar_lea.vmem %s1, 160
  %v377 = vld [vmem:[%s376] sm:$0xf]
  %v378 = vld [vmem:[%s376 + $0x4] sm:$0xf]
  %v379 = vld [vmem:[%s376 + $0x8] sm:$0xf]
  %v380 = vld [vmem:[%s376 + $0xc] sm:$0xf]
  %v381 = vld [vmem:[%s376 + $0x10] sm:$0xf]
  %v382 = vld [vmem:[%s376 + $0x14] sm:$0xf]
  %v383 = vld [vmem:[%s376 + $0x18] sm:$0xf]
  %v384 = vld [vmem:[%s376 + $0x1c] sm:$0xf]
  %s385 = scalar_lea.vmem %s1, 192
  %v386 = vld [vmem:[%s385] sm:$0xf]
  %v387 = vld [vmem:[%s385 + $0x4] sm:$0xf]
  %v388 = vld [vmem:[%s385 + $0x8] sm:$0xf]
  %v389 = vld [vmem:[%s385 + $0xc] sm:$0xf]
  %v390 = vld [vmem:[%s385 + $0x10] sm:$0xf]
  %v391 = vld [vmem:[%s385 + $0x14] sm:$0xf]
  %v392 = vld [vmem:[%s385 + $0x18] sm:$0xf]
  %v393 = vld [vmem:[%s385 + $0x1c] sm:$0xf]
  %v402 = vunpack.c.l.b16 %v386
  %v403 = vunpack.c.l.b16 %v387
  %v404 = vunpack.c.l.b16 %v388
  %v405 = vunpack.c.l.b16 %v389
  %v406 = vunpack.c.l.b16 %v390
  %v407 = vunpack.c.l.b16 %v391
  %v408 = vunpack.c.l.b16 %v392
  %v409 = vunpack.c.l.b16 %v393
  %v410 = vpack.c.b16 %v403, %v402
  %v411 = vpack.c.b16 %v405, %v404
  %v412 = vpack.c.b16 %v407, %v406
  %v413 = vpack.c.b16 %v409, %v408
  %418 = vmatprep.subr.bf16.mxu0 0
  %419 = vmatpush1.bf16.msra.mxu0 %v410
  %420 = vmatprep.subr.bf16.mxu0 0
  %421 = vmatpush1.bf16.msra.mxu0 %v411
  %422 = vmatprep.subr.bf16.mxu0 0
  %423 = vmatpush1.bf16.msra.mxu0 %v412
  %424 = vmatprep.subr.bf16.mxu0 0
  %425 = vmatpush1.bf16.msra.mxu0 %v413
  %426 = vmatprep.subr.bf16.mxu0 0
  %427 = vmatpush1.bf16.msra.mxu0 0
  %428 = vmatprep.subr.bf16.mxu0 0
  %429 = vmatpush1.bf16.msra.mxu0 0
  %430 = vmatprep.subr.bf16.mxu0 0
  %431 = vmatpush1.bf16.msra.mxu0 0
  %432 = vmatprep.subr.bf16.mxu0 0
  %433 = vmatpush1.bf16.msra.mxu0 0
  %434 = vmatprep.subr.bf16.mxu0 0
  %435 = vmatpush1.bf16.msra.mxu0 0
  %436 = vmatprep.subr.bf16.mxu0 0
  %437 = vmatpush1.bf16.msra.mxu0 0
  %438 = vmatprep.subr.bf16.mxu0 0
  %439 = vmatpush1.bf16.msra.mxu0 0
  %440 = vmatprep.subr.bf16.mxu0 0
  %441 = vmatpush1.bf16.msra.mxu0 0
  %442 = vmatprep.subr.bf16.mxu0 0
  %443 = vmatpush1.bf16.msra.mxu0 0
  %444 = vmatprep.subr.bf16.mxu0 0
  %445 = vmatpush1.bf16.msra.mxu0 0
  %446 = vmatprep.subr.bf16.mxu0 0
  %447 = vmatpush1.bf16.msra.mxu0 0
  %448 = vmatprep.subr.bf16.mxu0 0
  %449 = vmatpush1.bf16.msra.mxu0 0
  %450 = vmatprep.mubr.bf16.mxu0 0
  %451 = vmatmul.mubr.bf16.gmra.mrb[0].mxu0 %v101
  %v452 = vpop.f32.mrb[0].mxu0
  %v453 = vadd.f32 0.0, %v452
  %v454 = vpop.f32.mrb[0].mxu0
  %v455 = vpop.f32.mrb[0].mxu0
  %v456 = vpop.f32.mrb[0].mxu0
  %457 = vdwg.mxu0
  %v466 = vunpack.c.l.b16 %v377
  %v467 = vunpack.c.l.b16 %v378
  %v468 = vunpack.c.l.b16 %v379
  %v469 = vunpack.c.l.b16 %v380
  %v470 = vunpack.c.l.b16 %v381
  %v471 = vunpack.c.l.b16 %v382
  %v472 = vunpack.c.l.b16 %v383
  %v473 = vunpack.c.l.b16 %v384
  %v474 = vpack.c.b16 %v467, %v466
  %v475 = vpack.c.b16 %v469, %v468
  %v476 = vpack.c.b16 %v471, %v470
  %v477 = vpack.c.b16 %v473, %v472
  %482 = vmatprep.subr.bf16.mxu0 0
  %483 = vmatpush1.bf16.msra.mxu0 %v474
  %484 = vmatprep.subr.bf16.mxu0 0
  %485 = vmatpush1.bf16.msra.mxu0 %v475
  %486 = vmatprep.subr.bf16.mxu0 0
  %487 = vmatpush1.bf16.msra.mxu0 %v476
  %488 = vmatprep.subr.bf16.mxu0 0
  %489 = vmatpush1.bf16.msra.mxu0 %v477
  %490 = vmatprep.subr.bf16.mxu0 0
  %491 = vmatpush1.bf16.msra.mxu0 0
  %492 = vmatprep.subr.bf16.mxu0 0
  %493 = vmatpush1.bf16.msra.mxu0 0
  %494 = vmatprep.subr.bf16.mxu0 0
  %495 = vmatpush1.bf16.msra.mxu0 0
  %496 = vmatprep.subr.bf16.mxu0 0
  %497 = vmatpush1.bf16.msra.mxu0 0
  %498 = vmatprep.subr.bf16.mxu0 0
  %499 = vmatpush1.bf16.msra.mxu0 0
  %500 = vmatprep.subr.bf16.mxu0 0
  %501 = vmatpush1.bf16.msra.mxu0 0
  %502 = vmatprep.subr.bf16.mxu0 0
  %503 = vmatpush1.bf16.msra.mxu0 0
  %504 = vmatprep.subr.bf16.mxu0 0
  %505 = vmatpush1.bf16.msra.mxu0 0
  %506 = vmatprep.subr.bf16.mxu0 0
  %507 = vmatpush1.bf16.msra.mxu0 0
  %508 = vmatprep.subr.bf16.mxu0 0
  %509 = vmatpush1.bf16.msra.mxu0 0
  %510 = vmatprep.subr.bf16.mxu0 0
  %511 = vmatpush1.bf16.msra.mxu0 0
  %512 = vmatprep.subr.bf16.mxu0 0
  %513 = vmatpush1.bf16.msra.mxu0 0
  %514 = vmatprep.mubr.bf16.mxu0 0
  %515 = vmatmul.mubr.bf16.gmra.mrb[0].mxu0 %v167
  %v516 = vpop.f32.mrb[0].mxu0
  %v517 = vadd.f32 %v453, %v516
  %v518 = vpop.f32.mrb[0].mxu0
  %v519 = vpop.f32.mrb[0].mxu0
  %v520 = vpop.f32.mrb[0].mxu0
  %521 = vdwg.mxu0
  %s522 = scalar_lea.vmem %s1, 224
  %v523 = vld [vmem:[%s522] sm:$0xf]
  %v524 = vld [vmem:[%s522 + $0x4] sm:$0xf]
  %v525 = vld [vmem:[%s522 + $0x8] sm:$0xf]
  %v526 = vld [vmem:[%s522 + $0xc] sm:$0xf]
  %v527 = vld [vmem:[%s522 + $0x10] sm:$0xf]
  %v528 = vld [vmem:[%s522 + $0x14] sm:$0xf]
  %v529 = vld [vmem:[%s522 + $0x18] sm:$0xf]
  %v530 = vld [vmem:[%s522 + $0x1c] sm:$0xf]
  %v539 = vunpack.c.l.b16 %v523
  %v540 = vunpack.c.l.b16 %v524
  %v541 = vunpack.c.l.b16 %v525
  %v542 = vunpack.c.l.b16 %v526
  %v543 = vunpack.c.l.b16 %v527
  %v544 = vunpack.c.l.b16 %v528
  %v545 = vunpack.c.l.b16 %v529
  %v546 = vunpack.c.l.b16 %v530
  %v547 = vpack.c.b16 %v540, %v539
  %v548 = vpack.c.b16 %v542, %v541
  %v549 = vpack.c.b16 %v544, %v543
  %v550 = vpack.c.b16 %v546, %v545
  %555 = vmatprep.subr.bf16.mxu0 0
  %556 = vmatpush1.bf16.msra.mxu0 %v547
  %557 = vmatprep.subr.bf16.mxu0 0
  %558 = vmatpush1.bf16.msra.mxu0 %v548
  %559 = vmatprep.subr.bf16.mxu0 0
  %560 = vmatpush1.bf16.msra.mxu0 %v549
  %561 = vmatprep.subr.bf16.mxu0 0
  %562 = vmatpush1.bf16.msra.mxu0 %v550
  %563 = vmatprep.subr.bf16.mxu0 0
  %564 = vmatpush1.bf16.msra.mxu0 0
  %565 = vmatprep.subr.bf16.mxu0 0
  %566 = vmatpush1.bf16.msra.mxu0 0
  %567 = vmatprep.subr.bf16.mxu0 0
  %568 = vmatpush1.bf16.msra.mxu0 0
  %569 = vmatprep.subr.bf16.mxu0 0
  %570 = vmatpush1.bf16.msra.mxu0 0
  %571 = vmatprep.subr.bf16.mxu0 0
  %572 = vmatpush1.bf16.msra.mxu0 0
  %573 = vmatprep.subr.bf16.mxu0 0
  %574 = vmatpush1.bf16.msra.mxu0 0
  %575 = vmatprep.subr.bf16.mxu0 0
  %576 = vmatpush1.bf16.msra.mxu0 0
  %577 = vmatprep.subr.bf16.mxu0 0
  %578 = vmatpush1.bf16.msra.mxu0 0
  %579 = vmatprep.subr.bf16.mxu0 0
  %580 = vmatpush1.bf16.msra.mxu0 0
  %581 = vmatprep.subr.bf16.mxu0 0
  %582 = vmatpush1.bf16.msra.mxu0 0
  %583 = vmatprep.subr.bf16.mxu0 0
  %584 = vmatpush1.bf16.msra.mxu0 0
  %585 = vmatprep.subr.bf16.mxu0 0
  %586 = vmatpush1.bf16.msra.mxu0 0
  %587 = vmatprep.mubr.bf16.mxu0 0
  %588 = vmatmul.mubr.bf16.gmra.mrb[0].mxu0 %v270
  %v589 = vpop.f32.mrb[0].mxu0
  %v590 = vadd.f32 0.0, %v589
  %v591 = vpop.f32.mrb[0].mxu0
  %v592 = vpop.f32.mrb[0].mxu0
  %v593 = vpop.f32.mrb[0].mxu0
  %594 = vdwg.mxu0
  %v595 = vadd.f32 %v517, %v590
  %s596 = scalar_lea.vmem %s1, 256
  %v597 = vld [vmem:[%s596] sm:$0xf]
  %v598 = vld [vmem:[%s596 + $0x4] sm:$0xf]
  %v599 = vld [vmem:[%s596 + $0x8] sm:$0xf]
  %v600 = vld [vmem:[%s596 + $0xc] sm:$0xf]
  %v601 = vld [vmem:[%s596 + $0x10] sm:$0xf]
  %v602 = vld [vmem:[%s596 + $0x14] sm:$0xf]
  %v603 = vld [vmem:[%s596 + $0x18] sm:$0xf]
  %v604 = vld [vmem:[%s596 + $0x1c] sm:$0xf]
  %606 = vrot.lane.b32.xlu0 %v236, 112
  %v607 = vpop.permute.xlu0 %606
  %v616 = vunpack.c.l.b16 %v597
  %v617 = vunpack.c.l.b16 %v598
  %v618 = vunpack.c.l.b16 %v599
  %v619 = vunpack.c.l.b16 %v600
  %v620 = vunpack.c.l.b16 %v601
  %v621 = vunpack.c.l.b16 %v602
  %v622 = vunpack.c.l.b16 %v603
  %v623 = vunpack.c.l.b16 %v604
  %v624 = vpack.c.b16 %v617, %v616
  %v625 = vpack.c.b16 %v619, %v618
  %v626 = vpack.c.b16 %v621, %v620
  %v627 = vpack.c.b16 %v623, %v622
  %v633 = vsel %vm99, %v607, 0
  %635 = vmatprep.subr.bf16.mxu0 0
  %636 = vmatpush1.bf16.msra.mxu0 %v624
  %637 = vmatprep.subr.bf16.mxu0 0
  %638 = vmatpush1.bf16.msra.mxu0 %v625
  %639 = vmatprep.subr.bf16.mxu0 0
  %640 = vmatpush1.bf16.msra.mxu0 %v626
  %641 = vmatprep.subr.bf16.mxu0 0
  %642 = vmatpush1.bf16.msra.mxu0 %v627
  %643 = vmatprep.subr.bf16.mxu0 0
  %644 = vmatpush1.bf16.msra.mxu0 0
  %645 = vmatprep.subr.bf16.mxu0 0
  %646 = vmatpush1.bf16.msra.mxu0 0
  %647 = vmatprep.subr.bf16.mxu0 0
  %648 = vmatpush1.bf16.msra.mxu0 0
  %649 = vmatprep.subr.bf16.mxu0 0
  %650 = vmatpush1.bf16.msra.mxu0 0
  %651 = vmatprep.subr.bf16.mxu0 0
  %652 = vmatpush1.bf16.msra.mxu0 0
  %653 = vmatprep.subr.bf16.mxu0 0
  %654 = vmatpush1.bf16.msra.mxu0 0
  %655 = vmatprep.subr.bf16.mxu0 0
  %656 = vmatpush1.bf16.msra.mxu0 0
  %657 = vmatprep.subr.bf16.mxu0 0
  %658 = vmatpush1.bf16.msra.mxu0 0
  %659 = vmatprep.subr.bf16.mxu0 0
  %660 = vmatpush1.bf16.msra.mxu0 0
  %661 = vmatprep.subr.bf16.mxu0 0
  %662 = vmatpush1.bf16.msra.mxu0 0
  %663 = vmatprep.subr.bf16.mxu0 0
  %664 = vmatpush1.bf16.msra.mxu0 0
  %665 = vmatprep.subr.bf16.mxu0 0
  %666 = vmatpush1.bf16.msra.mxu0 0
  %667 = vmatprep.mubr.bf16.mxu0 0
  %668 = vmatmul.mubr.bf16.gmra.mrb[0].mxu0 %v633
  %v669 = vpop.f32.mrb[0].mxu0
  %v670 = vadd.f32 0.0, %v669
  %v671 = vpop.f32.mrb[0].mxu0
  %v672 = vpop.f32.mrb[0].mxu0
  %v673 = vpop.f32.mrb[0].mxu0
  %674 = vdwg.mxu0
  %v675 = vadd.f32 %v595, %v670
  %v676 = vld [vmem:[%s2] sm:$0x1]
  %v678 = vlaneseq
  %v679 = vshrl.u32 %v678, 7
  %v680 = vsub.s32 0, %v679
  %v681 = vrot.slane %v676, %v680
  %v691 = vunpack.c.l.b16 %v46
  %v692 = vunpack.c.l.b16 %v47
  %v693 = vunpack.c.l.b16 %v48
  %v694 = vunpack.c.l.b16 %v49
  %v695 = vunpack.c.l.b16 %v50
  %v696 = vunpack.c.l.b16 %v51
  %v697 = vunpack.c.l.b16 %v52
  %v698 = vunpack.c.l.b16 %v53
  %v699 = vpack.c.b16 %v692, %v691
  %v700 = vpack.c.b16 %v694, %v693
  %v701 = vpack.c.b16 %v696, %v695
  %v702 = vpack.c.b16 %v698, %v697
  %707 = vmatprep.subr.bf16.mxu0 0
  %708 = vmatpush1.bf16.msra.mxu0 %v699
  %709 = vmatprep.subr.bf16.mxu0 0
  %710 = vmatpush1.bf16.msra.mxu0 %v700
  %711 = vmatprep.subr.bf16.mxu0 0
  %712 = vmatpush1.bf16.msra.mxu0 %v701
  %713 = vmatprep.subr.bf16.mxu0 0
  %714 = vmatpush1.bf16.msra.mxu0 %v702
  %715 = vmatprep.subr.bf16.mxu0 0
  %716 = vmatpush1.bf16.msra.mxu0 0
  %717 = vmatprep.subr.bf16.mxu0 0
  %718 = vmatpush1.bf16.msra.mxu0 0
  %719 = vmatprep.subr.bf16.mxu0 0
  %720 = vmatpush1.bf16.msra.mxu0 0
  %721 = vmatprep.subr.bf16.mxu0 0
  %722 = vmatpush1.bf16.msra.mxu0 0
  %723 = vmatprep.subr.bf16.mxu0 0
  %724 = vmatpush1.bf16.msra.mxu0 0
  %725 = vmatprep.subr.bf16.mxu0 0
  %726 = vmatpush1.bf16.msra.mxu0 0
  %727 = vmatprep.subr.bf16.mxu0 0
  %728 = vmatpush1.bf16.msra.mxu0 0
  %729 = vmatprep.subr.bf16.mxu0 0
  %730 = vmatpush1.bf16.msra.mxu0 0
  %731 = vmatprep.subr.bf16.mxu0 0
  %732 = vmatpush1.bf16.msra.mxu0 0
  %733 = vmatprep.subr.bf16.mxu0 0
  %734 = vmatpush1.bf16.msra.mxu0 0
  %735 = vmatprep.subr.bf16.mxu0 0
  %736 = vmatpush1.bf16.msra.mxu0 0
  %737 = vmatprep.subr.bf16.mxu0 0
  %738 = vmatpush1.bf16.msra.mxu0 0
  %739 = vmatprep.mubr.bf16.mxu0 0
  %740 = vmatmul.mubr.bf16.gmra.mrb[0].mxu0 %v167
  %v741 = vpop.f32.mrb[0].mxu0
  %v742 = vadd.f32 %v681, %v741
  %v743 = vpop.f32.mrb[0].mxu0
  %v744 = vpop.f32.mrb[0].mxu0
  %v745 = vpop.f32.mrb[0].mxu0
  %746 = vdwg.mxu0
  %v747 = vadd.f32 %v204, %v681
  %v748 = vadd.f32 %v371, %v681
  %v749 = vadd.f32 %v675, %v681
  %vm750 = vcmask 261120
  %v751 = vsel %vm750, %v742, 0.0
  %v752 = vrot.slane %v751, 4
  %v753 = vadd.f32 %v751, %v752
  %v754 = vrot.slane %v753, 2
  %v755 = vadd.f32 %v753, %v754
  %v756 = vrot.slane %v755, 1
  %v757 = vadd.f32 %v755, %v756
  %v758 = vld [vmem:[%s5] sm:$0xff]
  %v759 = vld [vmem:[%s5 + $0x8] sm:$0xff]
  %v760 = vld [vmem:[%s5 + $0x10] sm:$0xff]
  %v761 = vld [vmem:[%s5 + $0x18] sm:$0xff]
  %v762 = vmul.f32 %v742, %v742
  %v763 = vsel %vm750, %v762, 0.0
  %v764 = vrot.slane %v763, 4
  %v765 = vadd.f32 %v763, %v764
  %v766 = vrot.slane %v765, 2
  %v767 = vadd.f32 %v765, %v766
  %v768 = vrot.slane %v767, 1
  %v769 = vadd.f32 %v767, %v768
  %v770 = vsel %vm750, %v747, 0.0
  %v771 = vrot.slane %v770, 4
  %v772 = vadd.f32 %v770, %v771
  %v773 = vrot.slane %v772, 2
  %v774 = vadd.f32 %v772, %v773
  %v775 = vrot.slane %v774, 1
  %v776 = vadd.f32 %v774, %v775
  %v778 = vsel %vm750, %v776, 0
  %780 = vmatprep.subr.mxu0 0.0
  %781 = vmatpush1.msra.mxu0 %v758
  %782 = vmatprep.subr.mxu0 0.0
  %783 = vmatpush1.msra.mxu0 %v759
  %784 = vmatprep.subr.mxu0 0.0
  %785 = vmatpush1.msra.mxu0 %v760
  %786 = vmatprep.subr.mxu0 0.0
  %787 = vmatpush1.msra.mxu0 %v761
  %788 = vmatprep.subr.mxu0 0.0
  %789 = vmatpush1.msra.mxu0 0.0
  %790 = vmatprep.subr.mxu0 0.0
  %791 = vmatpush1.msra.mxu0 0.0
  %792 = vmatprep.subr.mxu0 0.0
  %793 = vmatpush1.msra.mxu0 0.0
  %794 = vmatprep.subr.mxu0 0.0
  %795 = vmatpush1.msra.mxu0 0.0
  %796 = vmatprep.subr.mxu0 0.0
  %797 = vmatpush1.msra.mxu0 0.0
  %798 = vmatprep.subr.mxu0 0.0
  %799 = vmatpush1.msra.mxu0 0.0
  %800 = vmatprep.subr.mxu0 0.0
  %801 = vmatpush1.msra.mxu0 0.0
  %802 = vmatprep.subr.mxu0 0.0
  %803 = vmatpush1.msra.mxu0 0.0
  %804 = vmatprep.subr.mxu0 0.0
  %805 = vmatpush1.msra.mxu0 0.0
  %806 = vmatprep.subr.mxu0 0.0
  %807 = vmatpush1.msra.mxu0 0.0
  %808 = vmatprep.subr.mxu0 0.0
  %809 = vmatpush1.msra.mxu0 0.0
  %810 = vmatprep.subr.mxu0 0.0
  %811 = vmatpush1.msra.mxu0 0.0
  %812 = vmatprep.subr.mxu0 0.0
  %813 = vmatpush1.msra.mxu0 0.0
  %814 = vmatprep.subr.mxu0 0.0
  %815 = vmatpush1.msra.mxu0 0.0
  %816 = vmatprep.subr.mxu0 0.0
  %817 = vmatpush1.msra.mxu0 0.0
  %818 = vmatprep.subr.mxu0 0.0
  %819 = vmatpush1.msra.mxu0 0.0
  %820 = vmatprep.subr.mxu0 0.0
  %821 = vmatpush1.msra.mxu0 0.0
  %822 = vmatprep.subr.mxu0 0.0
  %823 = vmatpush1.msra.mxu0 0.0
  %824 = vmatprep.subr.mxu0 0.0
  %825 = vmatpush1.msra.mxu0 0.0
  %826 = vmatprep.subr.mxu0 0.0
  %827 = vmatpush1.msra.mxu0 0.0
  %828 = vmatprep.subr.mxu0 0.0
  %829 = vmatpush1.msra.mxu0 0.0
  %830 = vmatprep.subr.mxu0 0.0
  %831 = vmatpush1.msra.mxu0 0.0
  %832 = vmatprep.subr.mxu0 0.0
  %833 = vmatpush1.msra.mxu0 0.0
  %834 = vmatprep.subr.mxu0 0.0
  %835 = vmatpush1.msra.mxu0 0.0
  %836 = vmatprep.subr.mxu0 0.0
  %837 = vmatpush1.msra.mxu0 0.0
  %838 = vmatprep.subr.mxu0 0.0
  %839 = vmatpush1.msra.mxu0 0.0
  %840 = vmatprep.subr.mxu0 0.0
  %841 = vmatpush1.msra.mxu0 0.0
  %842 = vmatprep.subr.mxu0 0.0
  %843 = vmatpush1.msra.mxu0 0.0
  %844 = vmatprep.mubr.f32.mxu0 0.0
  %845 = vmatmul.mubr.f32.gmra.mrb[0].mxu0 %v778
  %v846 = vpop.f32.mrb[0].mxu0
  %v847 = vadd.f32 0.0, %v846
  %v848 = vpop.f32.mrb[0].mxu0
  %849 = vdwg.mxu0
  %v851 = vsel %vm750, %v757, 0
  %853 = vmatprep.subr.mxu0 0.0
  %854 = vmatpush1.msra.mxu0 %v758
  %855 = vmatprep.subr.mxu0 0.0
  %856 = vmatpush1.msra.mxu0 %v759
  %857 = vmatprep.subr.mxu0 0.0
  %858 = vmatpush1.msra.mxu0 %v760
  %859 = vmatprep.subr.mxu0 0.0
  %860 = vmatpush1.msra.mxu0 %v761
  %861 = vmatprep.subr.mxu0 0.0
  %862 = vmatpush1.msra.mxu0 0.0
  %863 = vmatprep.subr.mxu0 0.0
  %864 = vmatpush1.msra.mxu0 0.0
  %865 = vmatprep.subr.mxu0 0.0
  %866 = vmatpush1.msra.mxu0 0.0
  %867 = vmatprep.subr.mxu0 0.0
  %868 = vmatpush1.msra.mxu0 0.0
  %869 = vmatprep.subr.mxu0 0.0
  %870 = vmatpush1.msra.mxu0 0.0
  %871 = vmatprep.subr.mxu0 0.0
  %872 = vmatpush1.msra.mxu0 0.0
  %873 = vmatprep.subr.mxu0 0.0
  %874 = vmatpush1.msra.mxu0 0.0
  %875 = vmatprep.subr.mxu0 0.0
  %876 = vmatpush1.msra.mxu0 0.0
  %877 = vmatprep.subr.mxu0 0.0
  %878 = vmatpush1.msra.mxu0 0.0
  %879 = vmatprep.subr.mxu0 0.0
  %880 = vmatpush1.msra.mxu0 0.0
  %881 = vmatprep.subr.mxu0 0.0
  %882 = vmatpush1.msra.mxu0 0.0
  %883 = vmatprep.subr.mxu0 0.0
  %884 = vmatpush1.msra.mxu0 0.0
  %885 = vmatprep.subr.mxu0 0.0
  %886 = vmatpush1.msra.mxu0 0.0
  %887 = vmatprep.subr.mxu0 0.0
  %888 = vmatpush1.msra.mxu0 0.0
  %889 = vmatprep.subr.mxu0 0.0
  %890 = vmatpush1.msra.mxu0 0.0
  %891 = vmatprep.subr.mxu0 0.0
  %892 = vmatpush1.msra.mxu0 0.0
  %893 = vmatprep.subr.mxu0 0.0
  %894 = vmatpush1.msra.mxu0 0.0
  %895 = vmatprep.subr.mxu0 0.0
  %896 = vmatpush1.msra.mxu0 0.0
  %897 = vmatprep.subr.mxu0 0.0
  %898 = vmatpush1.msra.mxu0 0.0
  %899 = vmatprep.subr.mxu0 0.0
  %900 = vmatpush1.msra.mxu0 0.0
  %901 = vmatprep.subr.mxu0 0.0
  %902 = vmatpush1.msra.mxu0 0.0
  %903 = vmatprep.subr.mxu0 0.0
  %904 = vmatpush1.msra.mxu0 0.0
  %905 = vmatprep.subr.mxu0 0.0
  %906 = vmatpush1.msra.mxu0 0.0
  %907 = vmatprep.subr.mxu0 0.0
  %908 = vmatpush1.msra.mxu0 0.0
  %909 = vmatprep.subr.mxu0 0.0
  %910 = vmatpush1.msra.mxu0 0.0
  %911 = vmatprep.subr.mxu0 0.0
  %912 = vmatpush1.msra.mxu0 0.0
  %913 = vmatprep.subr.mxu0 0.0
  %914 = vmatpush1.msra.mxu0 0.0
  %915 = vmatprep.subr.mxu0 0.0
  %916 = vmatpush1.msra.mxu0 0.0
  %917 = vmatprep.mubr.f32.mxu0 0.0
  %918 = vmatmul.mubr.f32.gmra.mrb[0].mxu0 %v851
  %v919 = vpop.f32.mrb[0].mxu0
  %v920 = vadd.f32 %v847, %v919
  %v921 = vpop.f32.mrb[0].mxu0
  %922 = vdwg.mxu0
  %v923 = vmul.f32 %v747, %v747
  %v924 = vsel %vm750, %v923, 0.0
  %v925 = vrot.slane %v924, 4
  %v926 = vadd.f32 %v924, %v925
  %v927 = vrot.slane %v926, 2
  %v928 = vadd.f32 %v926, %v927
  %v929 = vrot.slane %v928, 1
  %v930 = vadd.f32 %v928, %v929
  %v932 = vsel %vm750, %v930, 0
  %934 = vmatprep.subr.mxu0 0.0
  %935 = vmatpush1.msra.mxu0 %v758
  %936 = vmatprep.subr.mxu0 0.0
  %937 = vmatpush1.msra.mxu0 %v759
  %938 = vmatprep.subr.mxu0 0.0
  %939 = vmatpush1.msra.mxu0 %v760
  %940 = vmatprep.subr.mxu0 0.0
  %941 = vmatpush1.msra.mxu0 %v761
  %942 = vmatprep.subr.mxu0 0.0
  %943 = vmatpush1.msra.mxu0 0.0
  %944 = vmatprep.subr.mxu0 0.0
  %945 = vmatpush1.msra.mxu0 0.0
  %946 = vmatprep.subr.mxu0 0.0
  %947 = vmatpush1.msra.mxu0 0.0
  %948 = vmatprep.subr.mxu0 0.0
  %949 = vmatpush1.msra.mxu0 0.0
  %950 = vmatprep.subr.mxu0 0.0
  %951 = vmatpush1.msra.mxu0 0.0
  %952 = vmatprep.subr.mxu0 0.0
  %953 = vmatpush1.msra.mxu0 0.0
  %954 = vmatprep.subr.mxu0 0.0
  %955 = vmatpush1.msra.mxu0 0.0
  %956 = vmatprep.subr.mxu0 0.0
  %957 = vmatpush1.msra.mxu0 0.0
  %958 = vmatprep.subr.mxu0 0.0
  %959 = vmatpush1.msra.mxu0 0.0
  %960 = vmatprep.subr.mxu0 0.0
  %961 = vmatpush1.msra.mxu0 0.0
  %962 = vmatprep.subr.mxu0 0.0
  %963 = vmatpush1.msra.mxu0 0.0
  %964 = vmatprep.subr.mxu0 0.0
  %965 = vmatpush1.msra.mxu0 0.0
  %966 = vmatprep.subr.mxu0 0.0
  %967 = vmatpush1.msra.mxu0 0.0
  %968 = vmatprep.subr.mxu0 0.0
  %969 = vmatpush1.msra.mxu0 0.0
  %970 = vmatprep.subr.mxu0 0.0
  %971 = vmatpush1.msra.mxu0 0.0
  %972 = vmatprep.subr.mxu0 0.0
  %973 = vmatpush1.msra.mxu0 0.0
  %974 = vmatprep.subr.mxu0 0.0
  %975 = vmatpush1.msra.mxu0 0.0
  %976 = vmatprep.subr.mxu0 0.0
  %977 = vmatpush1.msra.mxu0 0.0
  %978 = vmatprep.subr.mxu0 0.0
  %979 = vmatpush1.msra.mxu0 0.0
  %980 = vmatprep.subr.mxu0 0.0
  %981 = vmatpush1.msra.mxu0 0.0
  %982 = vmatprep.subr.mxu0 0.0
  %983 = vmatpush1.msra.mxu0 0.0
  %984 = vmatprep.subr.mxu0 0.0
  %985 = vmatpush1.msra.mxu0 0.0
  %986 = vmatprep.subr.mxu0 0.0
  %987 = vmatpush1.msra.mxu0 0.0
  %988 = vmatprep.subr.mxu0 0.0
  %989 = vmatpush1.msra.mxu0 0.0
  %990 = vmatprep.subr.mxu0 0.0
  %991 = vmatpush1.msra.mxu0 0.0
  %992 = vmatprep.subr.mxu0 0.0
  %993 = vmatpush1.msra.mxu0 0.0
  %994 = vmatprep.subr.mxu0 0.0
  %995 = vmatpush1.msra.mxu0 0.0
  %996 = vmatprep.subr.mxu0 0.0
  %997 = vmatpush1.msra.mxu0 0.0
  %998 = vmatprep.mubr.f32.mxu0 0.0
  %999 = vmatmul.mubr.f32.gmra.mrb[0].mxu0 %v932
  %v1000 = vpop.f32.mrb[0].mxu0
  %v1001 = vadd.f32 0.0, %v1000
  %v1002 = vpop.f32.mrb[0].mxu0
  %1003 = vdwg.mxu0
  %v1005 = vsel %vm750, %v769, 0
  %1007 = vmatprep.subr.mxu0 0.0
  %1008 = vmatpush1.msra.mxu0 %v758
  %1009 = vmatprep.subr.mxu0 0.0
  %1010 = vmatpush1.msra.mxu0 %v759
  %1011 = vmatprep.subr.mxu0 0.0
  %1012 = vmatpush1.msra.mxu0 %v760
  %1013 = vmatprep.subr.mxu0 0.0
  %1014 = vmatpush1.msra.mxu0 %v761
  %1015 = vmatprep.subr.mxu0 0.0
  %1016 = vmatpush1.msra.mxu0 0.0
  %1017 = vmatprep.subr.mxu0 0.0
  %1018 = vmatpush1.msra.mxu0 0.0
  %1019 = vmatprep.subr.mxu0 0.0
  %1020 = vmatpush1.msra.mxu0 0.0
  %1021 = vmatprep.subr.mxu0 0.0
  %1022 = vmatpush1.msra.mxu0 0.0
  %1023 = vmatprep.subr.mxu0 0.0
  %1024 = vmatpush1.msra.mxu0 0.0
  %1025 = vmatprep.subr.mxu0 0.0
  %1026 = vmatpush1.msra.mxu0 0.0
  %1027 = vmatprep.subr.mxu0 0.0
  %1028 = vmatpush1.msra.mxu0 0.0
  %1029 = vmatprep.subr.mxu0 0.0
  %1030 = vmatpush1.msra.mxu0 0.0
  %1031 = vmatprep.subr.mxu0 0.0
  %1032 = vmatpush1.msra.mxu0 0.0
  %1033 = vmatprep.subr.mxu0 0.0
  %1034 = vmatpush1.msra.mxu0 0.0
  %1035 = vmatprep.subr.mxu0 0.0
  %1036 = vmatpush1.msra.mxu0 0.0
  %1037 = vmatprep.subr.mxu0 0.0
  %1038 = vmatpush1.msra.mxu0 0.0
  %1039 = vmatprep.subr.mxu0 0.0
  %1040 = vmatpush1.msra.mxu0 0.0
  %1041 = vmatprep.subr.mxu0 0.0
  %1042 = vmatpush1.msra.mxu0 0.0
  %1043 = vmatprep.subr.mxu0 0.0
  %1044 = vmatpush1.msra.mxu0 0.0
  %1045 = vmatprep.subr.mxu0 0.0
  %1046 = vmatpush1.msra.mxu0 0.0
  %1047 = vmatprep.subr.mxu0 0.0
  %1048 = vmatpush1.msra.mxu0 0.0
  %1049 = vmatprep.subr.mxu0 0.0
  %1050 = vmatpush1.msra.mxu0 0.0
  %1051 = vmatprep.subr.mxu0 0.0
  %1052 = vmatpush1.msra.mxu0 0.0
  %1053 = vmatprep.subr.mxu0 0.0
  %1054 = vmatpush1.msra.mxu0 0.0
  %1055 = vmatprep.subr.mxu0 0.0
  %1056 = vmatpush1.msra.mxu0 0.0
  %1057 = vmatprep.subr.mxu0 0.0
  %1058 = vmatpush1.msra.mxu0 0.0
  %1059 = vmatprep.subr.mxu0 0.0
  %1060 = vmatpush1.msra.mxu0 0.0
  %1061 = vmatprep.subr.mxu0 0.0
  %1062 = vmatpush1.msra.mxu0 0.0
  %1063 = vmatprep.subr.mxu0 0.0
  %1064 = vmatpush1.msra.mxu0 0.0
  %1065 = vmatprep.subr.mxu0 0.0
  %1066 = vmatpush1.msra.mxu0 0.0
  %1067 = vmatprep.subr.mxu0 0.0
  %1068 = vmatpush1.msra.mxu0 0.0
  %1069 = vmatprep.subr.mxu0 0.0
  %1070 = vmatpush1.msra.mxu0 0.0
  %1071 = vmatprep.mubr.f32.mxu0 0.0
  %1072 = vmatmul.mubr.f32.gmra.mrb[0].mxu0 %v1005
  %v1073 = vpop.f32.mrb[0].mxu0
  %v1074 = vadd.f32 %v1001, %v1073
  %v1075 = vpop.f32.mrb[0].mxu0
  %1076 = vdwg.mxu0
  %v1077 = vsel %vm750, %v748, 0.0
  %v1078 = vrot.slane %v1077, 4
  %v1079 = vadd.f32 %v1077, %v1078
  %v1080 = vrot.slane %v1079, 2
  %v1081 = vadd.f32 %v1079, %v1080
  %v1082 = vrot.slane %v1081, 1
  %v1083 = vadd.f32 %v1081, %v1082
  %v1085 = vsel %vm750, %v1083, 0
  %1087 = vmatprep.subr.mxu0 0.0
  %1088 = vmatpush1.msra.mxu0 %v758
  %1089 = vmatprep.subr.mxu0 0.0
  %1090 = vmatpush1.msra.mxu0 %v759
  %1091 = vmatprep.subr.mxu0 0.0
  %1092 = vmatpush1.msra.mxu0 %v760
  %1093 = vmatprep.subr.mxu0 0.0
  %1094 = vmatpush1.msra.mxu0 %v761
  %1095 = vmatprep.subr.mxu0 0.0
  %1096 = vmatpush1.msra.mxu0 0.0
  %1097 = vmatprep.subr.mxu0 0.0
  %1098 = vmatpush1.msra.mxu0 0.0
  %1099 = vmatprep.subr.mxu0 0.0
  %1100 = vmatpush1.msra.mxu0 0.0
  %1101 = vmatprep.subr.mxu0 0.0
  %1102 = vmatpush1.msra.mxu0 0.0
  %1103 = vmatprep.subr.mxu0 0.0
  %1104 = vmatpush1.msra.mxu0 0.0
  %1105 = vmatprep.subr.mxu0 0.0
  %1106 = vmatpush1.msra.mxu0 0.0
  %1107 = vmatprep.subr.mxu0 0.0
  %1108 = vmatpush1.msra.mxu0 0.0
  %1109 = vmatprep.subr.mxu0 0.0
  %1110 = vmatpush1.msra.mxu0 0.0
  %1111 = vmatprep.subr.mxu0 0.0
  %1112 = vmatpush1.msra.mxu0 0.0
  %1113 = vmatprep.subr.mxu0 0.0
  %1114 = vmatpush1.msra.mxu0 0.0
  %1115 = vmatprep.subr.mxu0 0.0
  %1116 = vmatpush1.msra.mxu0 0.0
  %1117 = vmatprep.subr.mxu0 0.0
  %1118 = vmatpush1.msra.mxu0 0.0
  %1119 = vmatprep.subr.mxu0 0.0
  %1120 = vmatpush1.msra.mxu0 0.0
  %1121 = vmatprep.subr.mxu0 0.0
  %1122 = vmatpush1.msra.mxu0 0.0
  %1123 = vmatprep.subr.mxu0 0.0
  %1124 = vmatpush1.msra.mxu0 0.0
  %1125 = vmatprep.subr.mxu0 0.0
  %1126 = vmatpush1.msra.mxu0 0.0
  %1127 = vmatprep.subr.mxu0 0.0
  %1128 = vmatpush1.msra.mxu0 0.0
  %1129 = vmatprep.subr.mxu0 0.0
  %1130 = vmatpush1.msra.mxu0 0.0
  %1131 = vmatprep.subr.mxu0 0.0
  %1132 = vmatpush1.msra.mxu0 0.0
  %1133 = vmatprep.subr.mxu0 0.0
  %1134 = vmatpush1.msra.mxu0 0.0
  %1135 = vmatprep.subr.mxu0 0.0
  %1136 = vmatpush1.msra.mxu0 0.0
  %1137 = vmatprep.subr.mxu0 0.0
  %1138 = vmatpush1.msra.mxu0 0.0
  %1139 = vmatprep.subr.mxu0 0.0
  %1140 = vmatpush1.msra.mxu0 0.0
  %1141 = vmatprep.subr.mxu0 0.0
  %1142 = vmatpush1.msra.mxu0 0.0
  %1143 = vmatprep.subr.mxu0 0.0
  %1144 = vmatpush1.msra.mxu0 0.0
  %1145 = vmatprep.subr.mxu0 0.0
  %1146 = vmatpush1.msra.mxu0 0.0
  %1147 = vmatprep.subr.mxu0 0.0
  %1148 = vmatpush1.msra.mxu0 0.0
  %1149 = vmatprep.subr.mxu0 0.0
  %1150 = vmatpush1.msra.mxu0 0.0
  %1151 = vmatprep.mubr.f32.mxu0 0.0
  %1152 = vmatmul.mubr.f32.gmra.mrb[0].mxu0 %v1085
  %v1153 = vpop.f32.mrb[0].mxu0
  %v1154 = vadd.f32 0.0, %v1153
  %v1155 = vpop.f32.mrb[0].mxu0
  %1156 = vdwg.mxu0
  %v1157 = vadd.f32 %v920, %v1154
  %v1158 = vmul.f32 %v748, %v748
  %v1159 = vsel %vm750, %v1158, 0.0
  %v1160 = vrot.slane %v1159, 4
  %v1161 = vadd.f32 %v1159, %v1160
  %v1162 = vrot.slane %v1161, 2
  %v1163 = vadd.f32 %v1161, %v1162
  %v1164 = vrot.slane %v1163, 1
  %v1165 = vadd.f32 %v1163, %v1164
  %v1167 = vsel %vm750, %v1165, 0
  %1169 = vmatprep.subr.mxu0 0.0
  %1170 = vmatpush1.msra.mxu0 %v758
  %1171 = vmatprep.subr.mxu0 0.0
  %1172 = vmatpush1.msra.mxu0 %v759
  %1173 = vmatprep.subr.mxu0 0.0
  %1174 = vmatpush1.msra.mxu0 %v760
  %1175 = vmatprep.subr.mxu0 0.0
  %1176 = vmatpush1.msra.mxu0 %v761
  %1177 = vmatprep.subr.mxu0 0.0
  %1178 = vmatpush1.msra.mxu0 0.0
  %1179 = vmatprep.subr.mxu0 0.0
  %1180 = vmatpush1.msra.mxu0 0.0
  %1181 = vmatprep.subr.mxu0 0.0
  %1182 = vmatpush1.msra.mxu0 0.0
  %1183 = vmatprep.subr.mxu0 0.0
  %1184 = vmatpush1.msra.mxu0 0.0
  %1185 = vmatprep.subr.mxu0 0.0
  %1186 = vmatpush1.msra.mxu0 0.0
  %1187 = vmatprep.subr.mxu0 0.0
  %1188 = vmatpush1.msra.mxu0 0.0
  %1189 = vmatprep.subr.mxu0 0.0
  %1190 = vmatpush1.msra.mxu0 0.0
  %1191 = vmatprep.subr.mxu0 0.0
  %1192 = vmatpush1.msra.mxu0 0.0
  %1193 = vmatprep.subr.mxu0 0.0
  %1194 = vmatpush1.msra.mxu0 0.0
  %1195 = vmatprep.subr.mxu0 0.0
  %1196 = vmatpush1.msra.mxu0 0.0
  %1197 = vmatprep.subr.mxu0 0.0
  %1198 = vmatpush1.msra.mxu0 0.0
  %1199 = vmatprep.subr.mxu0 0.0
  %1200 = vmatpush1.msra.mxu0 0.0
  %1201 = vmatprep.subr.mxu0 0.0
  %1202 = vmatpush1.msra.mxu0 0.0
  %1203 = vmatprep.subr.mxu0 0.0
  %1204 = vmatpush1.msra.mxu0 0.0
  %1205 = vmatprep.subr.mxu0 0.0
  %1206 = vmatpush1.msra.mxu0 0.0
  %1207 = vmatprep.subr.mxu0 0.0
  %1208 = vmatpush1.msra.mxu0 0.0
  %1209 = vmatprep.subr.mxu0 0.0
  %1210 = vmatpush1.msra.mxu0 0.0
  %1211 = vmatprep.subr.mxu0 0.0
  %1212 = vmatpush1.msra.mxu0 0.0
  %1213 = vmatprep.subr.mxu0 0.0
  %1214 = vmatpush1.msra.mxu0 0.0
  %1215 = vmatprep.subr.mxu0 0.0
  %1216 = vmatpush1.msra.mxu0 0.0
  %1217 = vmatprep.subr.mxu0 0.0
  %1218 = vmatpush1.msra.mxu0 0.0
  %1219 = vmatprep.subr.mxu0 0.0
  %1220 = vmatpush1.msra.mxu0 0.0
  %1221 = vmatprep.subr.mxu0 0.0
  %1222 = vmatpush1.msra.mxu0 0.0
  %1223 = vmatprep.subr.mxu0 0.0
  %1224 = vmatpush1.msra.mxu0 0.0
  %1225 = vmatprep.subr.mxu0 0.0
  %1226 = vmatpush1.msra.mxu0 0.0
  %1227 = vmatprep.subr.mxu0 0.0
  %1228 = vmatpush1.msra.mxu0 0.0
  %1229 = vmatprep.subr.mxu0 0.0
  %1230 = vmatpush1.msra.mxu0 0.0
  %1231 = vmatprep.subr.mxu0 0.0
  %1232 = vmatpush1.msra.mxu0 0.0
  %1233 = vmatprep.mubr.f32.mxu0 0.0
  %1234 = vmatmul.mubr.f32.gmra.mrb[0].mxu0 %v1167
  %v1235 = vpop.f32.mrb[0].mxu0
  %v1236 = vadd.f32 0.0, %v1235
  %v1237 = vpop.f32.mrb[0].mxu0
  %1238 = vdwg.mxu0
  %v1239 = vadd.f32 %v1074, %v1236
  %v1240 = vsel %vm750, %v749, 0.0
  %v1241 = vrot.slane %v1240, 4
  %v1242 = vadd.f32 %v1240, %v1241
  %v1243 = vrot.slane %v1242, 2
  %v1244 = vadd.f32 %v1242, %v1243
  %v1245 = vrot.slane %v1244, 1
  %v1246 = vadd.f32 %v1244, %v1245
  %v1248 = vsel %vm750, %v1246, 0
  %1250 = vmatprep.subr.mxu0 0.0
  %1251 = vmatpush1.msra.mxu0 %v758
  %1252 = vmatprep.subr.mxu0 0.0
  %1253 = vmatpush1.msra.mxu0 %v759
  %1254 = vmatprep.subr.mxu0 0.0
  %1255 = vmatpush1.msra.mxu0 %v760
  %1256 = vmatprep.subr.mxu0 0.0
  %1257 = vmatpush1.msra.mxu0 %v761
  %1258 = vmatprep.subr.mxu0 0.0
  %1259 = vmatpush1.msra.mxu0 0.0
  %1260 = vmatprep.subr.mxu0 0.0
  %1261 = vmatpush1.msra.mxu0 0.0
  %1262 = vmatprep.subr.mxu0 0.0
  %1263 = vmatpush1.msra.mxu0 0.0
  %1264 = vmatprep.subr.mxu0 0.0
  %1265 = vmatpush1.msra.mxu0 0.0
  %1266 = vmatprep.subr.mxu0 0.0
  %1267 = vmatpush1.msra.mxu0 0.0
  %1268 = vmatprep.subr.mxu0 0.0
  %1269 = vmatpush1.msra.mxu0 0.0
  %1270 = vmatprep.subr.mxu0 0.0
  %1271 = vmatpush1.msra.mxu0 0.0
  %1272 = vmatprep.subr.mxu0 0.0
  %1273 = vmatpush1.msra.mxu0 0.0
  %1274 = vmatprep.subr.mxu0 0.0
  %1275 = vmatpush1.msra.mxu0 0.0
  %1276 = vmatprep.subr.mxu0 0.0
  %1277 = vmatpush1.msra.mxu0 0.0
  %1278 = vmatprep.subr.mxu0 0.0
  %1279 = vmatpush1.msra.mxu0 0.0
  %1280 = vmatprep.subr.mxu0 0.0
  %1281 = vmatpush1.msra.mxu0 0.0
  %1282 = vmatprep.subr.mxu0 0.0
  %1283 = vmatpush1.msra.mxu0 0.0
  %1284 = vmatprep.subr.mxu0 0.0
  %1285 = vmatpush1.msra.mxu0 0.0
  %1286 = vmatprep.subr.mxu0 0.0
  %1287 = vmatpush1.msra.mxu0 0.0
  %1288 = vmatprep.subr.mxu0 0.0
  %1289 = vmatpush1.msra.mxu0 0.0
  %1290 = vmatprep.subr.mxu0 0.0
  %1291 = vmatpush1.msra.mxu0 0.0
  %1292 = vmatprep.subr.mxu0 0.0
  %1293 = vmatpush1.msra.mxu0 0.0
  %1294 = vmatprep.subr.mxu0 0.0
  %1295 = vmatpush1.msra.mxu0 0.0
  %1296 = vmatprep.subr.mxu0 0.0
  %1297 = vmatpush1.msra.mxu0 0.0
  %1298 = vmatprep.subr.mxu0 0.0
  %1299 = vmatpush1.msra.mxu0 0.0
  %1300 = vmatprep.subr.mxu0 0.0
  %1301 = vmatpush1.msra.mxu0 0.0
  %1302 = vmatprep.subr.mxu0 0.0
  %1303 = vmatpush1.msra.mxu0 0.0
  %1304 = vmatprep.subr.mxu0 0.0
  %1305 = vmatpush1.msra.mxu0 0.0
  %1306 = vmatprep.subr.mxu0 0.0
  %1307 = vmatpush1.msra.mxu0 0.0
  %1308 = vmatprep.subr.mxu0 0.0
  %1309 = vmatpush1.msra.mxu0 0.0
  %1310 = vmatprep.subr.mxu0 0.0
  %1311 = vmatpush1.msra.mxu0 0.0
  %1312 = vmatprep.subr.mxu0 0.0
  %1313 = vmatpush1.msra.mxu0 0.0
  %1314 = vmatprep.mubr.f32.mxu0 0.0
  %1315 = vmatmul.mubr.f32.gmra.mrb[0].mxu0 %v1248
  %v1316 = vpop.f32.mrb[0].mxu0
  %v1317 = vadd.f32 0.0, %v1316
  %v1318 = vpop.f32.mrb[0].mxu0
  %1319 = vdwg.mxu0
  %v1320 = vadd.f32 %v1157, %v1317
  %v1321 = vmul.f32 %v749, %v749
  %v1322 = vsel %vm750, %v1321, 0.0
  %v1323 = vrot.slane %v1322, 4
  %v1324 = vadd.f32 %v1322, %v1323
  %v1325 = vrot.slane %v1324, 2
  %v1326 = vadd.f32 %v1324, %v1325
  %v1327 = vrot.slane %v1326, 1
  %v1328 = vadd.f32 %v1326, %v1327
  %v1330 = vsel %vm750, %v1328, 0
  %1332 = vmatprep.subr.mxu0 0.0
  %1333 = vmatpush1.msra.mxu0 %v758
  %1334 = vmatprep.subr.mxu0 0.0
  %1335 = vmatpush1.msra.mxu0 %v759
  %1336 = vmatprep.subr.mxu0 0.0
  %1337 = vmatpush1.msra.mxu0 %v760
  %1338 = vmatprep.subr.mxu0 0.0
  %1339 = vmatpush1.msra.mxu0 %v761
  %1340 = vmatprep.subr.mxu0 0.0
  %1341 = vmatpush1.msra.mxu0 0.0
  %1342 = vmatprep.subr.mxu0 0.0
  %1343 = vmatpush1.msra.mxu0 0.0
  %1344 = vmatprep.subr.mxu0 0.0
  %1345 = vmatpush1.msra.mxu0 0.0
  %1346 = vmatprep.subr.mxu0 0.0
  %1347 = vmatpush1.msra.mxu0 0.0
  %1348 = vmatprep.subr.mxu0 0.0
  %1349 = vmatpush1.msra.mxu0 0.0
  %1350 = vmatprep.subr.mxu0 0.0
  %1351 = vmatpush1.msra.mxu0 0.0
  %1352 = vmatprep.subr.mxu0 0.0
  %1353 = vmatpush1.msra.mxu0 0.0
  %1354 = vmatprep.subr.mxu0 0.0
  %1355 = vmatpush1.msra.mxu0 0.0
  %1356 = vmatprep.subr.mxu0 0.0
  %1357 = vmatpush1.msra.mxu0 0.0
  %1358 = vmatprep.subr.mxu0 0.0
  %1359 = vmatpush1.msra.mxu0 0.0
  %1360 = vmatprep.subr.mxu0 0.0
  %1361 = vmatpush1.msra.mxu0 0.0
  %1362 = vmatprep.subr.mxu0 0.0
  %1363 = vmatpush1.msra.mxu0 0.0
  %1364 = vmatprep.subr.mxu0 0.0
  %1365 = vmatpush1.msra.mxu0 0.0
  %1366 = vmatprep.subr.mxu0 0.0
  %1367 = vmatpush1.msra.mxu0 0.0
  %1368 = vmatprep.subr.mxu0 0.0
  %1369 = vmatpush1.msra.mxu0 0.0
  %1370 = vmatprep.subr.mxu0 0.0
  %1371 = vmatpush1.msra.mxu0 0.0
  %1372 = vmatprep.subr.mxu0 0.0
  %1373 = vmatpush1.msra.mxu0 0.0
  %1374 = vmatprep.subr.mxu0 0.0
  %1375 = vmatpush1.msra.mxu0 0.0
  %1376 = vmatprep.subr.mxu0 0.0
  %1377 = vmatpush1.msra.mxu0 0.0
  %1378 = vmatprep.subr.mxu0 0.0
  %1379 = vmatpush1.msra.mxu0 0.0
  %1380 = vmatprep.subr.mxu0 0.0
  %1381 = vmatpush1.msra.mxu0 0.0
  %1382 = vmatprep.subr.mxu0 0.0
  %1383 = vmatpush1.msra.mxu0 0.0
  %1384 = vmatprep.subr.mxu0 0.0
  %1385 = vmatpush1.msra.mxu0 0.0
  %1386 = vmatprep.subr.mxu0 0.0
  %1387 = vmatpush1.msra.mxu0 0.0
  %1388 = vmatprep.subr.mxu0 0.0
  %1389 = vmatpush1.msra.mxu0 0.0
  %1390 = vmatprep.subr.mxu0 0.0
  %1391 = vmatpush1.msra.mxu0 0.0
  %1392 = vmatprep.subr.mxu0 0.0
  %1393 = vmatpush1.msra.mxu0 0.0
  %1394 = vmatprep.subr.mxu0 0.0
  %1395 = vmatpush1.msra.mxu0 0.0
  %1396 = vmatprep.mubr.f32.mxu0 0.0
  %1397 = vmatmul.mubr.f32.gmra.mrb[0].mxu0 %v1330
  %v1398 = vpop.f32.mrb[0].mxu0
  %v1399 = vadd.f32 0.0, %v1398
  %v1400 = vpop.f32.mrb[0].mxu0
  %1401 = vdwg.mxu0
  %v1402 = vadd.f32 %v1239, %v1399
  %v1403 = vrcp.pop 128.0
  %v1404 = vmul.f32 %v1320, %v1403
  %v1405 = vmul.f32 %v1402, %v1403
  %v1406 = vmul.f32 %v1404, %v1404
  %v1407 = vsub.f32 %v1405, %v1406
  %v1408 = vld [vmem:[%s3] sm:$0x1]
  %v1409 = vadd.f32 %v1407, 1e-05
  %v1410 = vrsqrt.pop %v1409
  %v1411 = vmul.f32 %v1408, %v1410
  %v1412 = vld [vmem:[%s4] sm:$0x1]
  %v1413 = vmul.f32 %v1404, %v1411
  %v1414 = vsub.f32 %v1412, %v1413
  %v1415 = vld [vmem:[%s6] sm:$0xff]
  %vm1416 = vcmask 64512
  %v1418 = vsel %vm1416, %v1411, 0
  %1420 = vmatprep.subr.mxu0 0.0
  %1421 = vmatpush1.msra.mxu0 %v1415
  %1422 = vmatprep.subr.mxu0 0.0
  %1423 = vmatpush1.msra.mxu0 0.0
  %1424 = vmatprep.subr.mxu0 0.0
  %1425 = vmatpush1.msra.mxu0 0.0
  %1426 = vmatprep.subr.mxu0 0.0
  %1427 = vmatpush1.msra.mxu0 0.0
  %1428 = vmatprep.subr.mxu0 0.0
  %1429 = vmatpush1.msra.mxu0 0.0
  %1430 = vmatprep.subr.mxu0 0.0
  %1431 = vmatpush1.msra.mxu0 0.0
  %1432 = vmatprep.subr.mxu0 0.0
  %1433 = vmatpush1.msra.mxu0 0.0
  %1434 = vmatprep.subr.mxu0 0.0
  %1435 = vmatpush1.msra.mxu0 0.0
  %1436 = vmatprep.subr.mxu0 0.0
  %1437 = vmatpush1.msra.mxu0 0.0
  %1438 = vmatprep.subr.mxu0 0.0
  %1439 = vmatpush1.msra.mxu0 0.0
  %1440 = vmatprep.subr.mxu0 0.0
  %1441 = vmatpush1.msra.mxu0 0.0
  %1442 = vmatprep.subr.mxu0 0.0
  %1443 = vmatpush1.msra.mxu0 0.0
  %1444 = vmatprep.subr.mxu0 0.0
  %1445 = vmatpush1.msra.mxu0 0.0
  %1446 = vmatprep.subr.mxu0 0.0
  %1447 = vmatpush1.msra.mxu0 0.0
  %1448 = vmatprep.subr.mxu0 0.0
  %1449 = vmatpush1.msra.mxu0 0.0
  %1450 = vmatprep.subr.mxu0 0.0
  %1451 = vmatpush1.msra.mxu0 0.0
  %1452 = vmatprep.subr.mxu0 0.0
  %1453 = vmatpush1.msra.mxu0 0.0
  %1454 = vmatprep.subr.mxu0 0.0
  %1455 = vmatpush1.msra.mxu0 0.0
  %1456 = vmatprep.subr.mxu0 0.0
  %1457 = vmatpush1.msra.mxu0 0.0
  %1458 = vmatprep.subr.mxu0 0.0
  %1459 = vmatpush1.msra.mxu0 0.0
  %1460 = vmatprep.subr.mxu0 0.0
  %1461 = vmatpush1.msra.mxu0 0.0
  %1462 = vmatprep.subr.mxu0 0.0
  %1463 = vmatpush1.msra.mxu0 0.0
  %1464 = vmatprep.subr.mxu0 0.0
  %1465 = vmatpush1.msra.mxu0 0.0
  %1466 = vmatprep.subr.mxu0 0.0
  %1467 = vmatpush1.msra.mxu0 0.0
  %1468 = vmatprep.subr.mxu0 0.0
  %1469 = vmatpush1.msra.mxu0 0.0
  %1470 = vmatprep.subr.mxu0 0.0
  %1471 = vmatpush1.msra.mxu0 0.0
  %1472 = vmatprep.subr.mxu0 0.0
  %1473 = vmatpush1.msra.mxu0 0.0
  %1474 = vmatprep.subr.mxu0 0.0
  %1475 = vmatpush1.msra.mxu0 0.0
  %1476 = vmatprep.subr.mxu0 0.0
  %1477 = vmatpush1.msra.mxu0 0.0
  %1478 = vmatprep.subr.mxu0 0.0
  %1479 = vmatpush1.msra.mxu0 0.0
  %1480 = vmatprep.subr.mxu0 0.0
  %1481 = vmatpush1.msra.mxu0 0.0
  %1482 = vmatprep.subr.mxu0 0.0
  %1483 = vmatpush1.msra.mxu0 0.0
  %1484 = vmatprep.mubr.f32.mxu0 0.0
  %1485 = vmatmul.mubr.f32.gmra.mrb[0].mxu0 %v1418
  %v1486 = vpop.f32.mrb[0].mxu0
  %v1487 = vadd.f32 0.0, %v1486
  %v1488 = vpop.f32.mrb[0].mxu0
  %1489 = vdwg.mxu0
  %v1491 = vsel %vm1416, %v1414, 0
  %1493 = vmatprep.subr.mxu0 0.0
  %1494 = vmatpush1.msra.mxu0 %v1415
  %1495 = vmatprep.subr.mxu0 0.0
  %1496 = vmatpush1.msra.mxu0 0.0
  %1497 = vmatprep.subr.mxu0 0.0
  %1498 = vmatpush1.msra.mxu0 0.0
  %1499 = vmatprep.subr.mxu0 0.0
  %1500 = vmatpush1.msra.mxu0 0.0
  %1501 = vmatprep.subr.mxu0 0.0
  %1502 = vmatpush1.msra.mxu0 0.0
  %1503 = vmatprep.subr.mxu0 0.0
  %1504 = vmatpush1.msra.mxu0 0.0
  %1505 = vmatprep.subr.mxu0 0.0
  %1506 = vmatpush1.msra.mxu0 0.0
  %1507 = vmatprep.subr.mxu0 0.0
  %1508 = vmatpush1.msra.mxu0 0.0
  %1509 = vmatprep.subr.mxu0 0.0
  %1510 = vmatpush1.msra.mxu0 0.0
  %1511 = vmatprep.subr.mxu0 0.0
  %1512 = vmatpush1.msra.mxu0 0.0
  %1513 = vmatprep.subr.mxu0 0.0
  %1514 = vmatpush1.msra.mxu0 0.0
  %1515 = vmatprep.subr.mxu0 0.0
  %1516 = vmatpush1.msra.mxu0 0.0
  %1517 = vmatprep.subr.mxu0 0.0
  %1518 = vmatpush1.msra.mxu0 0.0
  %1519 = vmatprep.subr.mxu0 0.0
  %1520 = vmatpush1.msra.mxu0 0.0
  %1521 = vmatprep.subr.mxu0 0.0
  %1522 = vmatpush1.msra.mxu0 0.0
  %1523 = vmatprep.subr.mxu0 0.0
  %1524 = vmatpush1.msra.mxu0 0.0
  %1525 = vmatprep.subr.mxu0 0.0
  %1526 = vmatpush1.msra.mxu0 0.0
  %1527 = vmatprep.subr.mxu0 0.0
  %1528 = vmatpush1.msra.mxu0 0.0
  %1529 = vmatprep.subr.mxu0 0.0
  %1530 = vmatpush1.msra.mxu0 0.0
  %1531 = vmatprep.subr.mxu0 0.0
  %1532 = vmatpush1.msra.mxu0 0.0
  %1533 = vmatprep.subr.mxu0 0.0
  %1534 = vmatpush1.msra.mxu0 0.0
  %1535 = vmatprep.subr.mxu0 0.0
  %1536 = vmatpush1.msra.mxu0 0.0
  %1537 = vmatprep.subr.mxu0 0.0
  %1538 = vmatpush1.msra.mxu0 0.0
  %1539 = vmatprep.subr.mxu0 0.0
  %1540 = vmatpush1.msra.mxu0 0.0
  %1541 = vmatprep.subr.mxu0 0.0
  %1542 = vmatpush1.msra.mxu0 0.0
  %1543 = vmatprep.subr.mxu0 0.0
  %1544 = vmatpush1.msra.mxu0 0.0
  %1545 = vmatprep.subr.mxu0 0.0
  %1546 = vmatpush1.msra.mxu0 0.0
  %1547 = vmatprep.subr.mxu0 0.0
  %1548 = vmatpush1.msra.mxu0 0.0
  %1549 = vmatprep.subr.mxu0 0.0
  %1550 = vmatpush1.msra.mxu0 0.0
  %1551 = vmatprep.subr.mxu0 0.0
  %1552 = vmatpush1.msra.mxu0 0.0
  %1553 = vmatprep.subr.mxu0 0.0
  %1554 = vmatpush1.msra.mxu0 0.0
  %1555 = vmatprep.subr.mxu0 0.0
  %1556 = vmatpush1.msra.mxu0 0.0
  %1557 = vmatprep.mubr.f32.mxu0 0.0
  %1558 = vmatmul.mubr.f32.gmra.mrb[0].mxu0 %v1491
  %v1559 = vpop.f32.mrb[0].mxu0
  %v1560 = vadd.f32 0.0, %v1559
  %v1561 = vpop.f32.mrb[0].mxu0
  %1562 = vdwg.mxu0
  %v1563 = vlaneseq
  %v1564 = vshrl.u32 %v1563, 7
  %v1565 = vsub.s32 0, %v1564
  %v1566 = vrot.slane %v1487, %v1565
  %v1567 = vmul.f32 %v742, %v1566
  %v1568 = vlaneseq
  %v1569 = vshrl.u32 %v1568, 7
  %v1570 = vsub.s32 0, %v1569
  %v1571 = vrot.slane %v1560, %v1570
  %v1572 = vadd.f32 %v1567, %v1571
  %v1573 = vmul.f32 %v747, %v1566
  %v1574 = vadd.f32 %v1573, %v1571
  %v1575 = vmul.f32 %v748, %v1566
  %v1576 = vadd.f32 %v1575, %v1571
  %v1577 = vmul.f32 %v749, %v1566
  %v1578 = vadd.f32 %v1577, %v1571
  %vm1579 = vcmp.ge.f32.partialorder %v1572, 0.0
  %v1580 = vmul.f32 %v1572, 0.01
  %v1581 = vsel %vm1579, %v1572, %v1580
  %vm1582 = vcmp.ge.f32.partialorder %v1574, 0.0
  %v1583 = vmul.f32 %v1574, 0.01
  %v1584 = vsel %vm1582, %v1574, %v1583
  %vm1585 = vcmp.ge.f32.partialorder %v1576, 0.0
  %v1586 = vmul.f32 %v1576, 0.01
  %v1587 = vsel %vm1585, %v1576, %v1586
  %vm1588 = vcmp.ge.f32.partialorder %v1578, 0.0
  %v1589 = vmul.f32 %v1578, 0.01
  %v1590 = vsel %vm1588, %v1578, %v1589
  %v1591 = vpack.c.bf16 %v1584, %v1581
  %v1592 = vpack.c.bf16 %v1590, %v1587
  %v1595 = vunpack.c.l.b16 %v1591
  %v1596 = vunpack.c.h.b16 %v1591
  %v1597 = vunpack.c.l.b16 %v1592
  %v1598 = vunpack.c.h.b16 %v1592
  %v1599 = vpack.c.b16 %v1595, %v1595
  %v1600 = vpack.c.b16 %v1596, %v1596
  %v1601 = vpack.c.b16 %v1597, %v1597
  %v1602 = vpack.c.b16 %v1598, %v1598
  %vm1607 = vcmask 257024
  %1608 = vst.msk [vmem:[%s7] sm:$0xf] %vm1607, %v1599
  %1609 = vst.msk [vmem:[%s7 + $0x4] sm:$0xf] %vm1607, %v1600
  %1610 = vst.msk [vmem:[%s7 + $0x8] sm:$0xf] %vm1607, %v1601
  %1611 = vst.msk [vmem:[%s7 + $0xc] sm:$0xf] %vm1607, %v1602
  // Predicated region
  $region30: #{vae_forward.12} parent=0 // pred_check
    _
  $region31: #{vae_forward.12} parent=0 // pred_check_branch
    %1613 = sbr.rel (0) target = $region33
  $region32: #{vae_forward.12} parent=0 // pred_region
    _
  $region33: #{vae_forward.12} parent=0 // pred_fallthru
    _
  // Predicated region
  $region34: #{vae_forward.12} parent=0 // pred_check
    _
  $region35: #{vae_forward.12} parent=0 // pred_check_branch
    %1615 = sbr.rel (0) target = $region37
  $region36: #{vae_forward.12} parent=0 // pred_region
    _
  $region37: #{vae_forward.12} parent=0 // pred_fallthru
    _

// kernel: tile.119
$region0: #{tile.119}
  %s0 = inlined_call_operand.vmem [shape: f32[8,3,3], index: 0, kind: input, shape index: {}]
  %s1 = inlined_call_operand.vmem [shape: f32[24,3], index: 1, kind: output, shape index: {}]
  $region1: #{tile.119} parent=0
    #allocation0 [shape = 'u8[4096]{0}', space=vmem, size = 0x1000, scoped, tag = 'scoped mem for output reshape']
    %v2 = vld [vmem:[%s0] ss:$8 sm:$0x7]
    %vm3 = vcmask 23552
    %4 = vst.msk [vmem:[#allocation0] sm:$0x7] %vm3, %v2
    %s5 = scalar_lea.vmem %s0, 7
    %v6 = vld [vmem:[%s5] ss:$8 sm:$0x7]
    %7 = vrot.lane.b32.xlu0 %v6, 21
    %v8 = vpop.permute.xlu0 %7
    %vm9 = vcmask 195752
    %10 = vst.msk [vmem:[#allocation0] sm:$0x7] %vm9, %v8
    %s11 = scalar_lea.vmem %s0, 6
    %v12 = vld [vmem:[%s11] ss:$8 sm:$0x7]
    %13 = vrot.lane.b32.xlu0 %v12, 18
    %v14 = vpop.permute.xlu0 %13
    %vm15 = vcmask 171152
    %16 = vst.msk [vmem:[#allocation0] sm:$0x7] %vm15, %v14
    %s17 = scalar_lea.vmem %s0, 5
    %v18 = vld [vmem:[%s17] ss:$8 sm:$0x7]
    %19 = vrot.lane.b32.xlu0 %v18, 15
    %v20 = vpop.permute.xlu0 %19
    %vm21 = vcmask 146552
    %22 = vst.msk [vmem:[#allocation0] sm:$0x7] %vm21, %v20
    %s23 = scalar_lea.vmem %s0, 4
    %v24 = vld [vmem:[%s23] ss:$8 sm:$0x7]
    %25 = vrot.lane.b32.xlu0 %v24, 12
    %v26 = vpop.permute.xlu0 %25
    %vm27 = vcmask 121952
    %28 = vst.msk [vmem:[#allocation0] sm:$0x7] %vm27, %v26
    %s29 = scalar_lea.vmem %s0, 3
    %v30 = vld [vmem:[%s29] ss:$8 sm:$0x7]
    %31 = vrot.lane.b32.xlu0 %v30, 9
    %v32 = vpop.permute.xlu0 %31
    %vm33 = vcmask 97352
    %34 = vst.msk [vmem:[#allocation0] sm:$0x7] %vm33, %v32
    %s35 = scalar_lea.vmem %s0, 2
    %v36 = vld [vmem:[%s35] ss:$8 sm:$0x7]
    %37 = vrot.lane.b32.xlu0 %v36, 6
    %v38 = vpop.permute.xlu0 %37
    %vm39 = vcmask 72752
    %40 = vst.msk [vmem:[#allocation0] sm:$0x7] %vm39, %v38
    %s41 = scalar_lea.vmem %s0, 1
    %v42 = vld [vmem:[%s41] ss:$8 sm:$0x7]
    %43 = vrot.lane.b32.xlu0 %v42, 3
    %v44 = vpop.permute.xlu0 %43
    %vm45 = vcmask 48152
    %46 = vst.msk [vmem:[#allocation0] sm:$0x7] %vm45, %v44
    %s48 = sshllo.u32 0, 4
    %v50 = vld [vmem:[#allocation0] sm:%s48]
    %s51 = sshllo.u32 0, 4
    %52 = vst [vmem:[%s1] sm:%s51] %v50

// kernel: vae_forward.13
$region0: #{vae_forward.13}
  #allocation0 [shape = 'u32[]', space=smem, size = 0x4, offset = 0x4, fixed_abs, tag = 'smem constant byte address 0x4 - core index']
  #allocation1 [shape = 'u32[144,128]{1,0:T(1,128)}', space=vmem, size = 0x12000, scoped, tag = 'internal scratch']
  %s0 = inlined_call_operand.vmem [shape: bf16[18,72], index: 0, kind: input, shape index: {}]
  %s1 = inlined_call_operand.vmem [shape: bf16[9,64,24], index: 1, kind: input, shape index: {}]
  %s2 = inlined_call_operand.vmem [shape: f32[1,24], index: 2, kind: input, shape index: {}]
  %s3 = inlined_call_operand.vmem [shape: f32[1,3], index: 3, kind: input, shape index: {}]
  %s4 = inlined_call_operand.vmem [shape: f32[1,3], index: 4, kind: input, shape index: {}]
  %s5 = inlined_call_operand.vmem [shape: f32[24,3], index: 5, kind: input, shape index: {}]
  %s6 = inlined_call_operand.vmem [shape: f32[3,24], index: 6, kind: input, shape index: {}]
  %s7 = inlined_call_operand.vmem [shape: f32[64,24], index: 7, kind: output, shape index: {}]
  %s8 = sld [smem:[#allocation0]]
  $region38: #{vae_forward.13} parent=0
    _
  %s10 = ssub.s32 1, %s8
  %s11 = scalar_select 0, %s10, %s8
  // Predicated region
  $region2: #{vae_forward.13} parent=0 // pred_check
    _
  $region3: #{vae_forward.13} parent=0 // pred_check_branch
    %13 = sbr.rel (0) target = $region5
  $region4: #{vae_forward.13} parent=0 // pred_region
    _
  $region5: #{vae_forward.13} parent=0 // pred_fallthru
    _
  // Predicated region
  $region6: #{vae_forward.13} parent=0 // pred_check
    _
  $region7: #{vae_forward.13} parent=0 // pred_check_branch
    %15 = sbr.rel (0) target = $region9
  $region8: #{vae_forward.13} parent=0 // pred_region
    _
  $region9: #{vae_forward.13} parent=0 // pred_fallthru
    _
  // Predicated region
  $region10: #{vae_forward.13} parent=0 // pred_check
    _
  $region11: #{vae_forward.13} parent=0 // pred_check_branch
    %17 = sbr.rel (0) target = $region13
  $region12: #{vae_forward.13} parent=0 // pred_region
    _
  $region13: #{vae_forward.13} parent=0 // pred_fallthru
    _
  // Predicated region
  $region14: #{vae_forward.13} parent=0 // pred_check
    _
  $region15: #{vae_forward.13} parent=0 // pred_check_branch
    %19 = sbr.rel (0) target = $region17
  $region16: #{vae_forward.13} parent=0 // pred_region
    _
  $region17: #{vae_forward.13} parent=0 // pred_fallthru
    _
  // Predicated region
  $region18: #{vae_forward.13} parent=0 // pred_check
    _
  $region19: #{vae_forward.13} parent=0 // pred_check_branch
    %21 = sbr.rel (0) target = $region21
  $region20: #{vae_forward.13} parent=0 // pred_region
    _
  $region21: #{vae_forward.13} parent=0 // pred_fallthru
    _
  // Predicated region
  $region22: #{vae_forward.13} parent=0 // pred_check
    _
  $region23: #{vae_forward.13} parent=0 // pred_check_branch
    %23 = sbr.rel (0) target = $region25
  $region24: #{vae_forward.13} parent=0 // pred_region
    _
  $region25: #{vae_forward.13} parent=0 // pred_fallthru
    _
  // Predicated region
  $region26: #{vae_forward.13} parent=0 // pred_check
    _
  $region27: #{vae_forward.13} parent=0 // pred_check_branch
    %25 = sbr.rel (0) target = $region29
  $region28: #{vae_forward.13} parent=0 // pred_region
    _
  $region29: #{vae_forward.13} parent=0 // pred_fallthru
    _
  %v27 = vld [vmem:[%s0] sm:$0xf]
  %v28 = vld [vmem:[%s0 + $0x4] sm:$0xf]
  %v29 = vld [vmem:[%s0 + $0x8] sm:$0x1]
  %v32 = vunpack.c.l.b16 %v28
  %v33 = vunpack.c.l.b16 %v29
  %v34 = vpack.c.b16 %v33, %v32
  %v36 = vshrl.u32 %v34, 16
  %v38 = vrot.slane %v36, 4
  %v39 = vshll.u32 %v34, 16
  %v41 = vrot.slane %v39, 5
  %v42 = vor.u32 %v38, %v41
  %vm43 = vcmask 1043456
  %v46 = vsel %vm43, %v27, %v42
  %v47 = vld [vmem:[%s1] sm:$0xf]
  %v48 = vld [vmem:[%s1 + $0x4] sm:$0xf]
  %v49 = vld [vmem:[%s1 + $0x8] sm:$0xf]
  %v50 = vld [vmem:[%s1 + $0xc] sm:$0xf]
  %v51 = vld [vmem:[%s1 + $0x10] sm:$0xf]
  %v52 = vld [vmem:[%s1 + $0x14] sm:$0xf]
  %v53 = vld [vmem:[%s1 + $0x18] sm:$0xf]
  %v54 = vld [vmem:[%s1 + $0x1c] sm:$0xf]
  %s55 = scalar_lea.vmem %s1, 32
  %v56 = vld [vmem:[%s55] sm:$0xf]
  %v57 = vld [vmem:[%s55 + $0x4] sm:$0xf]
  %v58 = vld [vmem:[%s55 + $0x8] sm:$0xf]
  %v59 = vld [vmem:[%s55 + $0xc] sm:$0xf]
  %v60 = vld [vmem:[%s55 + $0x10] sm:$0xf]
  %v61 = vld [vmem:[%s55 + $0x14] sm:$0xf]
  %v62 = vld [vmem:[%s55 + $0x18] sm:$0xf]
  %v63 = vld [vmem:[%s55 + $0x1c] sm:$0xf]
  %s64 = scalar_lea.vmem %s1, 64
  %v65 = vld [vmem:[%s64] sm:$0xf]
  %v66 = vld [vmem:[%s64 + $0x4] sm:$0xf]
  %v67 = vld [vmem:[%s64 + $0x8] sm:$0xf]
  %v68 = vld [vmem:[%s64 + $0xc] sm:$0xf]
  %v69 = vld [vmem:[%s64 + $0x10] sm:$0xf]
  %v70 = vld [vmem:[%s64 + $0x14] sm:$0xf]
  %v71 = vld [vmem:[%s64 + $0x18] sm:$0xf]
  %v72 = vld [vmem:[%s64 + $0x1c] sm:$0xf]
  %74 = vrot.lane.b32.xlu0 %v46, 120
  %v75 = vpop.permute.xlu0 %74
  %v84 = vunpack.c.l.b16 %v65
  %v85 = vunpack.c.l.b16 %v66
  %v86 = vunpack.c.l.b16 %v67
  %v87 = vunpack.c.l.b16 %v68
  %v88 = vunpack.c.l.b16 %v69
  %v89 = vunpack.c.l.b16 %v70
  %v90 = vunpack.c.l.b16 %v71
  %v91 = vunpack.c.l.b16 %v72
  %v92 = vpack.c.b16 %v85, %v84
  %v93 = vpack.c.b16 %v87, %v86
  %v94 = vpack.c.b16 %v89, %v88
  %v95 = vpack.c.b16 %v91, %v90
  %vm100 = vcmask 523264
  %v102 = vsel %vm100, %v75, 0
  %104 = vmatprep.subr.bf16.mxu0 0
  %105 = vmatpush1.bf16.msra.mxu0 %v92
  %106 = vmatprep.subr.bf16.mxu0 0
  %107 = vmatpush1.bf16.msra.mxu0 %v93
  %108 = vmatprep.subr.bf16.mxu0 0
  %109 = vmatpush1.bf16.msra.mxu0 %v94
  %110 = vmatprep.subr.bf16.mxu0 0
  %111 = vmatpush1.bf16.msra.mxu0 %v95
  %112 = vmatprep.subr.bf16.mxu0 0
  %113 = vmatpush1.bf16.msra.mxu0 0
  %114 = vmatprep.subr.bf16.mxu0 0
  %115 = vmatpush1.bf16.msra.mxu0 0
  %116 = vmatprep.subr.bf16.mxu0 0
  %117 = vmatpush1.bf16.msra.mxu0 0
  %118 = vmatprep.subr.bf16.mxu0 0
  %119 = vmatpush1.bf16.msra.mxu0 0
  %120 = vmatprep.subr.bf16.mxu0 0
  %121 = vmatpush1.bf16.msra.mxu0 0
  %122 = vmatprep.subr.bf16.mxu0 0
  %123 = vmatpush1.bf16.msra.mxu0 0
  %124 = vmatprep.subr.bf16.mxu0 0
  %125 = vmatpush1.bf16.msra.mxu0 0
  %126 = vmatprep.subr.bf16.mxu0 0
  %127 = vmatpush1.bf16.msra.mxu0 0
  %128 = vmatprep.subr.bf16.mxu0 0
  %129 = vmatpush1.bf16.msra.mxu0 0
  %130 = vmatprep.subr.bf16.mxu0 0
  %131 = vmatpush1.bf16.msra.mxu0 0
  %132 = vmatprep.subr.bf16.mxu0 0
  %133 = vmatpush1.bf16.msra.mxu0 0
  %134 = vmatprep.subr.bf16.mxu0 0
  %135 = vmatpush1.bf16.msra.mxu0 0
  %136 = vmatprep.mubr.bf16.mxu0 0
  %137 = vmatmul.mubr.bf16.gmra.mrb[0].mxu0 %v102
  %v138 = vpop.f32.mrb[0].mxu0
  %v139 = vadd.f32 0.0, %v138
  %v140 = vpop.f32.mrb[0].mxu0
  %v141 = vpop.f32.mrb[0].mxu0
  %v142 = vadd.f32 0.0, %v141
  %v143 = vpop.f32.mrb[0].mxu0
  %144 = vdwg.mxu0
  %v153 = vunpack.c.l.b16 %v56
  %v154 = vunpack.c.l.b16 %v57
  %v155 = vunpack.c.l.b16 %v58
  %v156 = vunpack.c.l.b16 %v59
  %v157 = vunpack.c.l.b16 %v60
  %v158 = vunpack.c.l.b16 %v61
  %v159 = vunpack.c.l.b16 %v62
  %v160 = vunpack.c.l.b16 %v63
  %v161 = vpack.c.b16 %v154, %v153
  %v162 = vpack.c.b16 %v156, %v155
  %v163 = vpack.c.b16 %v158, %v157
  %v164 = vpack.c.b16 %v160, %v159
  %v169 = vsel %vm100, %v46, 0
  %171 = vmatprep.subr.bf16.mxu0 0
  %172 = vmatpush1.bf16.msra.mxu0 %v161
  %173 = vmatprep.subr.bf16.mxu0 0
  %174 = vmatpush1.bf16.msra.mxu0 %v162
  %175 = vmatprep.subr.bf16.mxu0 0
  %176 = vmatpush1.bf16.msra.mxu0 %v163
  %177 = vmatprep.subr.bf16.mxu0 0
  %178 = vmatpush1.bf16.msra.mxu0 %v164
  %179 = vmatprep.subr.bf16.mxu0 0
  %180 = vmatpush1.bf16.msra.mxu0 0
  %181 = vmatprep.subr.bf16.mxu0 0
  %182 = vmatpush1.bf16.msra.mxu0 0
  %183 = vmatprep.subr.bf16.mxu0 0
  %184 = vmatpush1.bf16.msra.mxu0 0
  %185 = vmatprep.subr.bf16.mxu0 0
  %186 = vmatpush1.bf16.msra.mxu0 0
  %187 = vmatprep.subr.bf16.mxu0 0
  %188 = vmatpush1.bf16.msra.mxu0 0
  %189 = vmatprep.subr.bf16.mxu0 0
  %190 = vmatpush1.bf16.msra.mxu0 0
  %191 = vmatprep.subr.bf16.mxu0 0
  %192 = vmatpush1.bf16.msra.mxu0 0
  %193 = vmatprep.subr.bf16.mxu0 0
  %194 = vmatpush1.bf16.msra.mxu0 0
  %195 = vmatprep.subr.bf16.mxu0 0
  %196 = vmatpush1.bf16.msra.mxu0 0
  %197 = vmatprep.subr.bf16.mxu0 0
  %198 = vmatpush1.bf16.msra.mxu0 0
  %199 = vmatprep.subr.bf16.mxu0 0
  %200 = vmatpush1.bf16.msra.mxu0 0
  %201 = vmatprep.subr.bf16.mxu0 0
  %202 = vmatpush1.bf16.msra.mxu0 0
  %203 = vmatprep.mubr.bf16.mxu0 0
  %204 = vmatmul.mubr.bf16.gmra.mrb[0].mxu0 %v169
  %v205 = vpop.f32.mrb[0].mxu0
  %v206 = vadd.f32 %v139, %v205
  %v207 = vpop.f32.mrb[0].mxu0
  %v208 = vpop.f32.mrb[0].mxu0
  %v209 = vadd.f32 %v142, %v208
  %v210 = vpop.f32.mrb[0].mxu0
  %211 = vdwg.mxu0
  %s212 = scalar_lea.vmem %s1, 96
  %v213 = vld [vmem:[%s212] sm:$0xf]
  %v214 = vld [vmem:[%s212 + $0x4] sm:$0xf]
  %v215 = vld [vmem:[%s212 + $0x8] sm:$0xf]
  %v216 = vld [vmem:[%s212 + $0xc] sm:$0xf]
  %v217 = vld [vmem:[%s212 + $0x10] sm:$0xf]
  %v218 = vld [vmem:[%s212 + $0x14] sm:$0xf]
  %v219 = vld [vmem:[%s212 + $0x18] sm:$0xf]
  %v220 = vld [vmem:[%s212 + $0x1c] sm:$0xf]
  %v221 = vld [vmem:[%s0] sm:$0xf]
  %v222 = vld [vmem:[%s0 + $0x4] sm:$0x1]
  %v223 = vld [vmem:[%s0 + $0x4] sm:$0xe]
  %v226 = vunpack.c.l.b16 %v221
  %v227 = vunpack.c.l.b16 %v222
  %v228 = vpack.c.b16 %v227, %v226
  %v230 = vshrl.u32 %v228, 16
  %v232 = vshll.u32 %v228, 16
  %v234 = vrot.slane %v232, 1
  %v235 = vor.u32 %v230, %v234
  %v237 = vunpack.c.l.b16 %v223
  %v238 = vpack.c.b16 %v33, %v237
  %v239 = vrot.slane %v238, 5
  %v242 = vsel %vm43, %v235, %v239
  %s243 = scalar_lea.vmem %s1, 128
  %v244 = vld [vmem:[%s243] sm:$0xf]
  %v245 = vld [vmem:[%s243 + $0x4] sm:$0xf]
  %v246 = vld [vmem:[%s243 + $0x8] sm:$0xf]
  %v247 = vld [vmem:[%s243 + $0xc] sm:$0xf]
  %v248 = vld [vmem:[%s243 + $0x10] sm:$0xf]
  %v249 = vld [vmem:[%s243 + $0x14] sm:$0xf]
  %v250 = vld [vmem:[%s243 + $0x18] sm:$0xf]
  %v251 = vld [vmem:[%s243 + $0x1c] sm:$0xf]
  %v260 = vunpack.c.l.b16 %v244
  %v261 = vunpack.c.l.b16 %v245
  %v262 = vunpack.c.l.b16 %v246
  %v263 = vunpack.c.l.b16 %v247
  %v264 = vunpack.c.l.b16 %v248
  %v265 = vunpack.c.l.b16 %v249
  %v266 = vunpack.c.l.b16 %v250
  %v267 = vunpack.c.l.b16 %v251
  %v268 = vpack.c.b16 %v261, %v260
  %v269 = vpack.c.b16 %v263, %v262
  %v270 = vpack.c.b16 %v265, %v264
  %v271 = vpack.c.b16 %v267, %v266
  %v276 = vsel %vm100, %v242, 0
  %278 = vmatprep.subr.bf16.mxu0 0
  %279 = vmatpush1.bf16.msra.mxu0 %v268
  %280 = vmatprep.subr.bf16.mxu0 0
  %281 = vmatpush1.bf16.msra.mxu0 %v269
  %282 = vmatprep.subr.bf16.mxu0 0
  %283 = vmatpush1.bf16.msra.mxu0 %v270
  %284 = vmatprep.subr.bf16.mxu0 0
  %285 = vmatpush1.bf16.msra.mxu0 %v271
  %286 = vmatprep.subr.bf16.mxu0 0
  %287 = vmatpush1.bf16.msra.mxu0 0
  %288 = vmatprep.subr.bf16.mxu0 0
  %289 = vmatpush1.bf16.msra.mxu0 0
  %290 = vmatprep.subr.bf16.mxu0 0
  %291 = vmatpush1.bf16.msra.mxu0 0
  %292 = vmatprep.subr.bf16.mxu0 0
  %293 = vmatpush1.bf16.msra.mxu0 0
  %294 = vmatprep.subr.bf16.mxu0 0
  %295 = vmatpush1.bf16.msra.mxu0 0
  %296 = vmatprep.subr.bf16.mxu0 0
  %297 = vmatpush1.bf16.msra.mxu0 0
  %298 = vmatprep.subr.bf16.mxu0 0
  %299 = vmatpush1.bf16.msra.mxu0 0
  %300 = vmatprep.subr.bf16.mxu0 0
  %301 = vmatpush1.bf16.msra.mxu0 0
  %302 = vmatprep.subr.bf16.mxu0 0
  %303 = vmatpush1.bf16.msra.mxu0 0
  %304 = vmatprep.subr.bf16.mxu0 0
  %305 = vmatpush1.bf16.msra.mxu0 0
  %306 = vmatprep.subr.bf16.mxu0 0
  %307 = vmatpush1.bf16.msra.mxu0 0
  %308 = vmatprep.subr.bf16.mxu0 0
  %309 = vmatpush1.bf16.msra.mxu0 0
  %310 = vmatprep.mubr.bf16.mxu0 0
  %311 = vmatmul.mubr.bf16.gmra.mrb[0].mxu0 %v276
  %v312 = vpop.f32.mrb[0].mxu0
  %v313 = vadd.f32 0.0, %v312
  %v314 = vpop.f32.mrb[0].mxu0
  %v315 = vpop.f32.mrb[0].mxu0
  %v316 = vadd.f32 0.0, %v315
  %v317 = vpop.f32.mrb[0].mxu0
  %318 = vdwg.mxu0
  %v327 = vunpack.c.l.b16 %v213
  %v328 = vunpack.c.l.b16 %v214
  %v329 = vunpack.c.l.b16 %v215
  %v330 = vunpack.c.l.b16 %v216
  %v331 = vunpack.c.l.b16 %v217
  %v332 = vunpack.c.l.b16 %v218
  %v333 = vunpack.c.l.b16 %v219
  %v334 = vunpack.c.l.b16 %v220
  %v335 = vpack.c.b16 %v328, %v327
  %v336 = vpack.c.b16 %v330, %v329
  %v337 = vpack.c.b16 %v332, %v331
  %v338 = vpack.c.b16 %v334, %v333
  %343 = vmatprep.subr.bf16.mxu0 0
  %344 = vmatpush1.bf16.msra.mxu0 %v335
  %345 = vmatprep.subr.bf16.mxu0 0
  %346 = vmatpush1.bf16.msra.mxu0 %v336
  %347 = vmatprep.subr.bf16.mxu0 0
  %348 = vmatpush1.bf16.msra.mxu0 %v337
  %349 = vmatprep.subr.bf16.mxu0 0
  %350 = vmatpush1.bf16.msra.mxu0 %v338
  %351 = vmatprep.subr.bf16.mxu0 0
  %352 = vmatpush1.bf16.msra.mxu0 0
  %353 = vmatprep.subr.bf16.mxu0 0
  %354 = vmatpush1.bf16.msra.mxu0 0
  %355 = vmatprep.subr.bf16.mxu0 0
  %356 = vmatpush1.bf16.msra.mxu0 0
  %357 = vmatprep.subr.bf16.mxu0 0
  %358 = vmatpush1.bf16.msra.mxu0 0
  %359 = vmatprep.subr.bf16.mxu0 0
  %360 = vmatpush1.bf16.msra.mxu0 0
  %361 = vmatprep.subr.bf16.mxu0 0
  %362 = vmatpush1.bf16.msra.mxu0 0
  %363 = vmatprep.subr.bf16.mxu0 0
  %364 = vmatpush1.bf16.msra.mxu0 0
  %365 = vmatprep.subr.bf16.mxu0 0
  %366 = vmatpush1.bf16.msra.mxu0 0
  %367 = vmatprep.subr.bf16.mxu0 0
  %368 = vmatpush1.bf16.msra.mxu0 0
  %369 = vmatprep.subr.bf16.mxu0 0
  %370 = vmatpush1.bf16.msra.mxu0 0
  %371 = vmatprep.subr.bf16.mxu0 0
  %372 = vmatpush1.bf16.msra.mxu0 0
  %373 = vmatprep.subr.bf16.mxu0 0
  %374 = vmatpush1.bf16.msra.mxu0 0
  %375 = vmatprep.mubr.bf16.mxu0 0
  %376 = vmatmul.mubr.bf16.gmra.mrb[0].mxu0 %v169
  %v377 = vpop.f32.mrb[0].mxu0
  %v378 = vadd.f32 %v313, %v377
  %v379 = vpop.f32.mrb[0].mxu0
  %v380 = vpop.f32.mrb[0].mxu0
  %v381 = vadd.f32 %v316, %v380
  %v382 = vpop.f32.mrb[0].mxu0
  %383 = vdwg.mxu0
  %s384 = scalar_lea.vmem %s1, 160
  %v385 = vld [vmem:[%s384] sm:$0xf]
  %v386 = vld [vmem:[%s384 + $0x4] sm:$0xf]
  %v387 = vld [vmem:[%s384 + $0x8] sm:$0xf]
  %v388 = vld [vmem:[%s384 + $0xc] sm:$0xf]
  %v389 = vld [vmem:[%s384 + $0x10] sm:$0xf]
  %v390 = vld [vmem:[%s384 + $0x14] sm:$0xf]
  %v391 = vld [vmem:[%s384 + $0x18] sm:$0xf]
  %v392 = vld [vmem:[%s384 + $0x1c] sm:$0xf]
  %s393 = scalar_lea.vmem %s1, 192
  %v394 = vld [vmem:[%s393] sm:$0xf]
  %v395 = vld [vmem:[%s393 + $0x4] sm:$0xf]
  %v396 = vld [vmem:[%s393 + $0x8] sm:$0xf]
  %v397 = vld [vmem:[%s393 + $0xc] sm:$0xf]
  %v398 = vld [vmem:[%s393 + $0x10] sm:$0xf]
  %v399 = vld [vmem:[%s393 + $0x14] sm:$0xf]
  %v400 = vld [vmem:[%s393 + $0x18] sm:$0xf]
  %v401 = vld [vmem:[%s393 + $0x1c] sm:$0xf]
  %v410 = vunpack.c.l.b16 %v394
  %v411 = vunpack.c.l.b16 %v395
  %v412 = vunpack.c.l.b16 %v396
  %v413 = vunpack.c.l.b16 %v397
  %v414 = vunpack.c.l.b16 %v398
  %v415 = vunpack.c.l.b16 %v399
  %v416 = vunpack.c.l.b16 %v400
  %v417 = vunpack.c.l.b16 %v401
  %v418 = vpack.c.b16 %v411, %v410
  %v419 = vpack.c.b16 %v413, %v412
  %v420 = vpack.c.b16 %v415, %v414
  %v421 = vpack.c.b16 %v417, %v416
  %426 = vmatprep.subr.bf16.mxu0 0
  %427 = vmatpush1.bf16.msra.mxu0 %v418
  %428 = vmatprep.subr.bf16.mxu0 0
  %429 = vmatpush1.bf16.msra.mxu0 %v419
  %430 = vmatprep.subr.bf16.mxu0 0
  %431 = vmatpush1.bf16.msra.mxu0 %v420
  %432 = vmatprep.subr.bf16.mxu0 0
  %433 = vmatpush1.bf16.msra.mxu0 %v421
  %434 = vmatprep.subr.bf16.mxu0 0
  %435 = vmatpush1.bf16.msra.mxu0 0
  %436 = vmatprep.subr.bf16.mxu0 0
  %437 = vmatpush1.bf16.msra.mxu0 0
  %438 = vmatprep.subr.bf16.mxu0 0
  %439 = vmatpush1.bf16.msra.mxu0 0
  %440 = vmatprep.subr.bf16.mxu0 0
  %441 = vmatpush1.bf16.msra.mxu0 0
  %442 = vmatprep.subr.bf16.mxu0 0
  %443 = vmatpush1.bf16.msra.mxu0 0
  %444 = vmatprep.subr.bf16.mxu0 0
  %445 = vmatpush1.bf16.msra.mxu0 0
  %446 = vmatprep.subr.bf16.mxu0 0
  %447 = vmatpush1.bf16.msra.mxu0 0
  %448 = vmatprep.subr.bf16.mxu0 0
  %449 = vmatpush1.bf16.msra.mxu0 0
  %450 = vmatprep.subr.bf16.mxu0 0
  %451 = vmatpush1.bf16.msra.mxu0 0
  %452 = vmatprep.subr.bf16.mxu0 0
  %453 = vmatpush1.bf16.msra.mxu0 0
  %454 = vmatprep.subr.bf16.mxu0 0
  %455 = vmatpush1.bf16.msra.mxu0 0
  %456 = vmatprep.subr.bf16.mxu0 0
  %457 = vmatpush1.bf16.msra.mxu0 0
  %458 = vmatprep.mubr.bf16.mxu0 0
  %459 = vmatmul.mubr.bf16.gmra.mrb[0].mxu0 %v102
  %v460 = vpop.f32.mrb[0].mxu0
  %v461 = vadd.f32 0.0, %v460
  %v462 = vpop.f32.mrb[0].mxu0
  %v463 = vpop.f32.mrb[0].mxu0
  %v464 = vadd.f32 0.0, %v463
  %v465 = vpop.f32.mrb[0].mxu0
  %466 = vdwg.mxu0
  %v475 = vunpack.c.l.b16 %v385
  %v476 = vunpack.c.l.b16 %v386
  %v477 = vunpack.c.l.b16 %v387
  %v478 = vunpack.c.l.b16 %v388
  %v479 = vunpack.c.l.b16 %v389
  %v480 = vunpack.c.l.b16 %v390
  %v481 = vunpack.c.l.b16 %v391
  %v482 = vunpack.c.l.b16 %v392
  %v483 = vpack.c.b16 %v476, %v475
  %v484 = vpack.c.b16 %v478, %v477
  %v485 = vpack.c.b16 %v480, %v479
  %v486 = vpack.c.b16 %v482, %v481
  %491 = vmatprep.subr.bf16.mxu0 0
  %492 = vmatpush1.bf16.msra.mxu0 %v483
  %493 = vmatprep.subr.bf16.mxu0 0
  %494 = vmatpush1.bf16.msra.mxu0 %v484
  %495 = vmatprep.subr.bf16.mxu0 0
  %496 = vmatpush1.bf16.msra.mxu0 %v485
  %497 = vmatprep.subr.bf16.mxu0 0
  %498 = vmatpush1.bf16.msra.mxu0 %v486
  %499 = vmatprep.subr.bf16.mxu0 0
  %500 = vmatpush1.bf16.msra.mxu0 0
  %501 = vmatprep.subr.bf16.mxu0 0
  %502 = vmatpush1.bf16.msra.mxu0 0
  %503 = vmatprep.subr.bf16.mxu0 0
  %504 = vmatpush1.bf16.msra.mxu0 0
  %505 = vmatprep.subr.bf16.mxu0 0
  %506 = vmatpush1.bf16.msra.mxu0 0
  %507 = vmatprep.subr.bf16.mxu0 0
  %508 = vmatpush1.bf16.msra.mxu0 0
  %509 = vmatprep.subr.bf16.mxu0 0
  %510 = vmatpush1.bf16.msra.mxu0 0
  %511 = vmatprep.subr.bf16.mxu0 0
  %512 = vmatpush1.bf16.msra.mxu0 0
  %513 = vmatprep.subr.bf16.mxu0 0
  %514 = vmatpush1.bf16.msra.mxu0 0
  %515 = vmatprep.subr.bf16.mxu0 0
  %516 = vmatpush1.bf16.msra.mxu0 0
  %517 = vmatprep.subr.bf16.mxu0 0
  %518 = vmatpush1.bf16.msra.mxu0 0
  %519 = vmatprep.subr.bf16.mxu0 0
  %520 = vmatpush1.bf16.msra.mxu0 0
  %521 = vmatprep.subr.bf16.mxu0 0
  %522 = vmatpush1.bf16.msra.mxu0 0
  %523 = vmatprep.mubr.bf16.mxu0 0
  %524 = vmatmul.mubr.bf16.gmra.mrb[0].mxu0 %v169
  %v525 = vpop.f32.mrb[0].mxu0
  %v526 = vadd.f32 %v461, %v525
  %v527 = vpop.f32.mrb[0].mxu0
  %v528 = vpop.f32.mrb[0].mxu0
  %v529 = vadd.f32 %v464, %v528
  %v530 = vpop.f32.mrb[0].mxu0
  %531 = vdwg.mxu0
  %s532 = scalar_lea.vmem %s1, 224
  %v533 = vld [vmem:[%s532] sm:$0xf]
  %v534 = vld [vmem:[%s532 + $0x4] sm:$0xf]
  %v535 = vld [vmem:[%s532 + $0x8] sm:$0xf]
  %v536 = vld [vmem:[%s532 + $0xc] sm:$0xf]
  %v537 = vld [vmem:[%s532 + $0x10] sm:$0xf]
  %v538 = vld [vmem:[%s532 + $0x14] sm:$0xf]
  %v539 = vld [vmem:[%s532 + $0x18] sm:$0xf]
  %v540 = vld [vmem:[%s532 + $0x1c] sm:$0xf]
  %v549 = vunpack.c.l.b16 %v533
  %v550 = vunpack.c.l.b16 %v534
  %v551 = vunpack.c.l.b16 %v535
  %v552 = vunpack.c.l.b16 %v536
  %v553 = vunpack.c.l.b16 %v537
  %v554 = vunpack.c.l.b16 %v538
  %v555 = vunpack.c.l.b16 %v539
  %v556 = vunpack.c.l.b16 %v540
  %v557 = vpack.c.b16 %v550, %v549
  %v558 = vpack.c.b16 %v552, %v551
  %v559 = vpack.c.b16 %v554, %v553
  %v560 = vpack.c.b16 %v556, %v555
  %565 = vmatprep.subr.bf16.mxu0 0
  %566 = vmatpush1.bf16.msra.mxu0 %v557
  %567 = vmatprep.subr.bf16.mxu0 0
  %568 = vmatpush1.bf16.msra.mxu0 %v558
  %569 = vmatprep.subr.bf16.mxu0 0
  %570 = vmatpush1.bf16.msra.mxu0 %v559
  %571 = vmatprep.subr.bf16.mxu0 0
  %572 = vmatpush1.bf16.msra.mxu0 %v560
  %573 = vmatprep.subr.bf16.mxu0 0
  %574 = vmatpush1.bf16.msra.mxu0 0
  %575 = vmatprep.subr.bf16.mxu0 0
  %576 = vmatpush1.bf16.msra.mxu0 0
  %577 = vmatprep.subr.bf16.mxu0 0
  %578 = vmatpush1.bf16.msra.mxu0 0
  %579 = vmatprep.subr.bf16.mxu0 0
  %580 = vmatpush1.bf16.msra.mxu0 0
  %581 = vmatprep.subr.bf16.mxu0 0
  %582 = vmatpush1.bf16.msra.mxu0 0
  %583 = vmatprep.subr.bf16.mxu0 0
  %584 = vmatpush1.bf16.msra.mxu0 0
  %585 = vmatprep.subr.bf16.mxu0 0
  %586 = vmatpush1.bf16.msra.mxu0 0
  %587 = vmatprep.subr.bf16.mxu0 0
  %588 = vmatpush1.bf16.msra.mxu0 0
  %589 = vmatprep.subr.bf16.mxu0 0
  %590 = vmatpush1.bf16.msra.mxu0 0
  %591 = vmatprep.subr.bf16.mxu0 0
  %592 = vmatpush1.bf16.msra.mxu0 0
  %593 = vmatprep.subr.bf16.mxu0 0
  %594 = vmatpush1.bf16.msra.mxu0 0
  %595 = vmatprep.subr.bf16.mxu0 0
  %596 = vmatpush1.bf16.msra.mxu0 0
  %597 = vmatprep.mubr.bf16.mxu0 0
  %598 = vmatmul.mubr.bf16.gmra.mrb[0].mxu0 %v276
  %v599 = vpop.f32.mrb[0].mxu0
  %v600 = vadd.f32 0.0, %v599
  %v601 = vpop.f32.mrb[0].mxu0
  %v602 = vpop.f32.mrb[0].mxu0
  %v603 = vadd.f32 0.0, %v602
  %v604 = vpop.f32.mrb[0].mxu0
  %605 = vdwg.mxu0
  %v606 = vadd.f32 %v526, %v600
  %v607 = vadd.f32 %v529, %v603
  %s608 = scalar_lea.vmem %s1, 256
  %v609 = vld [vmem:[%s608] sm:$0xf]
  %v610 = vld [vmem:[%s608 + $0x4] sm:$0xf]
  %v611 = vld [vmem:[%s608 + $0x8] sm:$0xf]
  %v612 = vld [vmem:[%s608 + $0xc] sm:$0xf]
  %v613 = vld [vmem:[%s608 + $0x10] sm:$0xf]
  %v614 = vld [vmem:[%s608 + $0x14] sm:$0xf]
  %v615 = vld [vmem:[%s608 + $0x18] sm:$0xf]
  %v616 = vld [vmem:[%s608 + $0x1c] sm:$0xf]
  %618 = vrot.lane.b32.xlu0 %v242, 120
  %v619 = vpop.permute.xlu0 %618
  %v628 = vunpack.c.l.b16 %v609
  %v629 = vunpack.c.l.b16 %v610
  %v630 = vunpack.c.l.b16 %v611
  %v631 = vunpack.c.l.b16 %v612
  %v632 = vunpack.c.l.b16 %v613
  %v633 = vunpack.c.l.b16 %v614
  %v634 = vunpack.c.l.b16 %v615
  %v635 = vunpack.c.l.b16 %v616
  %v636 = vpack.c.b16 %v629, %v628
  %v637 = vpack.c.b16 %v631, %v630
  %v638 = vpack.c.b16 %v633, %v632
  %v639 = vpack.c.b16 %v635, %v634
  %v645 = vsel %vm100, %v619, 0
  %647 = vmatprep.subr.bf16.mxu0 0
  %648 = vmatpush1.bf16.msra.mxu0 %v636
  %649 = vmatprep.subr.bf16.mxu0 0
  %650 = vmatpush1.bf16.msra.mxu0 %v637
  %651 = vmatprep.subr.bf16.mxu0 0
  %652 = vmatpush1.bf16.msra.mxu0 %v638
  %653 = vmatprep.subr.bf16.mxu0 0
  %654 = vmatpush1.bf16.msra.mxu0 %v639
  %655 = vmatprep.subr.bf16.mxu0 0
  %656 = vmatpush1.bf16.msra.mxu0 0
  %657 = vmatprep.subr.bf16.mxu0 0
  %658 = vmatpush1.bf16.msra.mxu0 0
  %659 = vmatprep.subr.bf16.mxu0 0
  %660 = vmatpush1.bf16.msra.mxu0 0
  %661 = vmatprep.subr.bf16.mxu0 0
  %662 = vmatpush1.bf16.msra.mxu0 0
  %663 = vmatprep.subr.bf16.mxu0 0
  %664 = vmatpush1.bf16.msra.mxu0 0
  %665 = vmatprep.subr.bf16.mxu0 0
  %666 = vmatpush1.bf16.msra.mxu0 0
  %667 = vmatprep.subr.bf16.mxu0 0
  %668 = vmatpush1.bf16.msra.mxu0 0
  %669 = vmatprep.subr.bf16.mxu0 0
  %670 = vmatpush1.bf16.msra.mxu0 0
  %671 = vmatprep.subr.bf16.mxu0 0
  %672 = vmatpush1.bf16.msra.mxu0 0
  %673 = vmatprep.subr.bf16.mxu0 0
  %674 = vmatpush1.bf16.msra.mxu0 0
  %675 = vmatprep.subr.bf16.mxu0 0
  %676 = vmatpush1.bf16.msra.mxu0 0
  %677 = vmatprep.subr.bf16.mxu0 0
  %678 = vmatpush1.bf16.msra.mxu0 0
  %679 = vmatprep.mubr.bf16.mxu0 0
  %680 = vmatmul.mubr.bf16.gmra.mrb[0].mxu0 %v645
  %v681 = vpop.f32.mrb[0].mxu0
  %v682 = vadd.f32 0.0, %v681
  %v683 = vpop.f32.mrb[0].mxu0
  %v684 = vpop.f32.mrb[0].mxu0
  %v685 = vadd.f32 0.0, %v684
  %v686 = vpop.f32.mrb[0].mxu0
  %687 = vdwg.mxu0
  %v688 = vadd.f32 %v606, %v682
  %v689 = vadd.f32 %v607, %v685
  %v690 = vld [vmem:[%s2] sm:$0x1]
  %v692 = vlaneseq
  %v693 = vshrl.u32 %v692, 7
  %v694 = vsub.s32 0, %v693
  %v695 = vrot.slane %v690, %v694
  %v705 = vunpack.c.l.b16 %v47
  %v706 = vunpack.c.l.b16 %v48
  %v707 = vunpack.c.l.b16 %v49
  %v708 = vunpack.c.l.b16 %v50
  %v709 = vunpack.c.l.b16 %v51
  %v710 = vunpack.c.l.b16 %v52
  %v711 = vunpack.c.l.b16 %v53
  %v712 = vunpack.c.l.b16 %v54
  %v713 = vpack.c.b16 %v706, %v705
  %v714 = vpack.c.b16 %v708, %v707
  %v715 = vpack.c.b16 %v710, %v709
  %v716 = vpack.c.b16 %v712, %v711
  %721 = vmatprep.subr.bf16.mxu0 0
  %722 = vmatpush1.bf16.msra.mxu0 %v713
  %723 = vmatprep.subr.bf16.mxu0 0
  %724 = vmatpush1.bf16.msra.mxu0 %v714
  %725 = vmatprep.subr.bf16.mxu0 0
  %726 = vmatpush1.bf16.msra.mxu0 %v715
  %727 = vmatprep.subr.bf16.mxu0 0
  %728 = vmatpush1.bf16.msra.mxu0 %v716
  %729 = vmatprep.subr.bf16.mxu0 0
  %730 = vmatpush1.bf16.msra.mxu0 0
  %731 = vmatprep.subr.bf16.mxu0 0
  %732 = vmatpush1.bf16.msra.mxu0 0
  %733 = vmatprep.subr.bf16.mxu0 0
  %734 = vmatpush1.bf16.msra.mxu0 0
  %735 = vmatprep.subr.bf16.mxu0 0
  %736 = vmatpush1.bf16.msra.mxu0 0
  %737 = vmatprep.subr.bf16.mxu0 0
  %738 = vmatpush1.bf16.msra.mxu0 0
  %739 = vmatprep.subr.bf16.mxu0 0
  %740 = vmatpush1.bf16.msra.mxu0 0
  %741 = vmatprep.subr.bf16.mxu0 0
  %742 = vmatpush1.bf16.msra.mxu0 0
  %743 = vmatprep.subr.bf16.mxu0 0
  %744 = vmatpush1.bf16.msra.mxu0 0
  %745 = vmatprep.subr.bf16.mxu0 0
  %746 = vmatpush1.bf16.msra.mxu0 0
  %747 = vmatprep.subr.bf16.mxu0 0
  %748 = vmatpush1.bf16.msra.mxu0 0
  %749 = vmatprep.subr.bf16.mxu0 0
  %750 = vmatpush1.bf16.msra.mxu0 0
  %751 = vmatprep.subr.bf16.mxu0 0
  %752 = vmatpush1.bf16.msra.mxu0 0
  %753 = vmatprep.mubr.bf16.mxu0 0
  %754 = vmatmul.mubr.bf16.gmra.mrb[0].mxu0 %v169
  %v755 = vpop.f32.mrb[0].mxu0
  %v756 = vadd.f32 %v695, %v755
  %v757 = vpop.f32.mrb[0].mxu0
  %v758 = vpop.f32.mrb[0].mxu0
  %v759 = vadd.f32 %v695, %v758
  %v760 = vpop.f32.mrb[0].mxu0
  %761 = vdwg.mxu0
  %v762 = vadd.f32 %v206, %v695
  %v763 = vadd.f32 %v209, %v695
  %v764 = vadd.f32 %v378, %v695
  %v765 = vadd.f32 %v381, %v695
  %v766 = vadd.f32 %v688, %v695
  %v767 = vadd.f32 %v689, %v695
  %v768 = vxor.u32 %v756, 2147483648
  %v769 = vxor.u32 %v759, 2147483648
  %v770 = vmul.f32 %v768, 1.442695
  %v771 = vpow.pop %v770
  %v772 = vmul.f32 %v769, 1.442695
  %v773 = vpow.pop %v772
  %v774 = vadd.f32 %v771, 1.0
  %v775 = vadd.f32 %v773, 1.0
  %v776 = vrcp.pop %v774
  %v777 = vmul.f32 1.0, %v776
  %v778 = vrcp.pop %v775
  %v779 = vmul.f32 1.0, %v778
  %v780 = vxor.u32 %v762, 2147483648
  %v781 = vxor.u32 %v763, 2147483648
  %v782 = vmul.f32 %v780, 1.442695
  %v783 = vpow.pop %v782
  %v784 = vmul.f32 %v781, 1.442695
  %v785 = vpow.pop %v784
  %v786 = vadd.f32 %v783, 1.0
  %v787 = vadd.f32 %v785, 1.0
  %v788 = vrcp.pop %v786
  %v789 = vmul.f32 1.0, %v788
  %v790 = vrcp.pop %v787
  %v791 = vmul.f32 1.0, %v790
  %v792 = vxor.u32 %v764, 2147483648
  %v793 = vxor.u32 %v765, 2147483648
  %v794 = vmul.f32 %v792, 1.442695
  %v795 = vpow.pop %v794
  %v796 = vmul.f32 %v793, 1.442695
  %v797 = vpow.pop %v796
  %v798 = vadd.f32 %v795, 1.0
  %v799 = vadd.f32 %v797, 1.0
  %v800 = vrcp.pop %v798
  %v801 = vmul.f32 1.0, %v800
  %v802 = vrcp.pop %v799
  %v803 = vmul.f32 1.0, %v802
  %v804 = vxor.u32 %v766, 2147483648
  %v805 = vxor.u32 %v767, 2147483648
  %v806 = vmul.f32 %v804, 1.442695
  %v807 = vpow.pop %v806
  %v808 = vmul.f32 %v805, 1.442695
  %v809 = vpow.pop %v808
  %v810 = vadd.f32 %v807, 1.0
  %v811 = vadd.f32 %v809, 1.0
  %v812 = vrcp.pop %v810
  %v813 = vmul.f32 1.0, %v812
  %v814 = vrcp.pop %v811
  %v815 = vmul.f32 1.0, %v814
  %vm816 = vcmask 195584
  %817 = vst.msk [vmem:[%s7] sm:$0xff] %vm816, %v777
  %818 = vst.msk [vmem:[%s7 + $0x8] sm:$0xff] %vm816, %v779
  %819 = vst.msk [vmem:[%s7 + $0x10] sm:$0xff] %vm816, %v789
  %820 = vst.msk [vmem:[%s7 + $0x18] sm:$0xff] %vm816, %v791
  %821 = vst.msk [vmem:[%s7 + $0x20] sm:$0xff] %vm816, %v801
  %822 = vst.msk [vmem:[%s7 + $0x28] sm:$0xff] %vm816, %v803
  %823 = vst.msk [vmem:[%s7 + $0x30] sm:$0xff] %vm816, %v813
  %824 = vst.msk [vmem:[%s7 + $0x38] sm:$0xff] %vm816, %v815
  // Predicated region
  $region30: #{vae_forward.13} parent=0 // pred_check
    _
  $region31: #{vae_forward.13} parent=0 // pred_check_branch
    %826 = sbr.rel (0) target = $region33
  $region32: #{vae_forward.13} parent=0 // pred_region
    _
  $region33: #{vae_forward.13} parent=0 // pred_fallthru
    _
  // Predicated region
  $region34: #{vae_forward.13} parent=0 // pred_check
    _
  $region35: #{vae_forward.13} parent=0 // pred_check_branch
    %828 = sbr.rel (0) target = $region37
  $region36: #{vae_forward.13} parent=0 // pred_region
    _
  $region37: #{vae_forward.13} parent=0 // pred_fallthru
    _

</llo_original>
